<compile_context>
chip_gen: v7x
topology: tpu7x:2x2x1
jax: 0.10.0
libtpu: 0.0.40
codegen_flags: <defaults>
</compile_context>

<pallas_src>
from functools import partial

import numpy as np
import jax
import jax.numpy as jnp
from jax.experimental import pallas as pl
from jax.experimental.pallas import tpu as pltpu

INPUT_DIM = 343          # word embedding dim (forced by merge_mlp output = 343)
HIDDEN = 150             # LSTM hidden per direction (300 // 2)
BI = 2 * HIDDEN          # 300
NUM_TAGS = 7

HP = 256                 # padded hidden per direction (lane aligned)
G4 = 4 * HP              # 1024: [i | f | g | o], each gate block 256 lanes
HB = 2 * HP              # 512:  [h_fwd(256) | h_bwd(256)] padded layout
TAGW = 128               # padded tag lane width (lane-dense logits/logp)


# ============================================================================
# Stage 1 kernel: batched BiLSTM_1 over all sentences + max-over-time pooling.
# Sentences are the M dimension of every matmul; gridless single call.
# ============================================================================
def _sentence_kernel(len_ref, xf_ref, xb_ref,
                     wihf_ref, wihb_ref, bf_ref, bb_ref,
                     whhf_ref, whhb_ref,
                     out_ref,
                     xpf_scr, xpb_scr,
                     hf_scr, cf_scr, hb_scr, cb_scr, mf_scr, mb_scr):
    S_pad = len_ref.shape[0]
    T_max = xpf_scr.shape[0]

    # Batched input projections for both directions (one big MXU matmul each),
    # biases folded in.  xf/xb are (T_max*S_pad, 343) bf16, time-major.
    projf = jnp.dot(xf_ref[...], wihf_ref[...],
                    preferred_element_type=jnp.float32) + bf_ref[...]
    projb = jnp.dot(xb_ref[...], wihb_ref[...],
                    preferred_element_type=jnp.float32) + bb_ref[...]
    xpf_scr[...] = projf.reshape(T_max, S_pad, G4)
    xpb_scr[...] = projb.reshape(T_max, S_pad, G4)

    hf_scr[...] = jnp.zeros_like(hf_scr)
    cf_scr[...] = jnp.zeros_like(cf_scr)
    hb_scr[...] = jnp.zeros_like(hb_scr)
    cb_scr[...] = jnp.zeros_like(cb_scr)
    mf_scr[...] = jnp.full_like(mf_scr, -1e30)
    mb_scr[...] = jnp.full_like(mb_scr, -1e30)

    lengths = len_ref[...]                                    # (S_pad, 1) int32

    def cell(gates, c_prev):
        i = jax.nn.sigmoid(gates[:, 0 * HP:1 * HP])
        f = jax.nn.sigmoid(gates[:, 1 * HP:2 * HP])
        g = jnp.tanh(gates[:, 2 * HP:3 * HP])
        o = jax.nn.sigmoid(gates[:, 3 * HP:4 * HP])
        c = f * c_prev + i * g
        h = o * jnp.tanh(c)
        return h, c

    def step(t, carry):
        gf = xpf_scr[t] + jnp.dot(hf_scr[...].astype(jnp.bfloat16), whhf_ref[...],
                                  preferred_element_type=jnp.float32)
        gb = xpb_scr[t] + jnp.dot(hb_scr[...].astype(jnp.bfloat16), whhb_ref[...],
                                  preferred_element_type=jnp.float32)
        hf, cf = cell(gf, cf_scr[...])
        hb, cb = cell(gb, cb_scr[...])
        hf_scr[...] = hf
        cf_scr[...] = cf
        hb_scr[...] = hb
        cb_scr[...] = cb
        valid = lengths > t                                   # (S_pad, 1) bool
        mf_scr[...] = jnp.where(valid, jnp.maximum(mf_scr[...], hf), mf_scr[...])
        mb_scr[...] = jnp.where(valid, jnp.maximum(mb_scr[...], hb), mb_scr[...])
        return carry

    jax.lax.fori_loop(0, T_max, step, 0)

    valid_row = lengths > 0
    out_ref[:, 0:HP] = jnp.where(valid_row, mf_scr[...], 0.0)
    out_ref[:, HP:2 * HP] = jnp.where(valid_row, mb_scr[...], 0.0)


def _sentence_stage(params, lengths2d, xf, xb):
    S_pad = lengths2d.shape[0]
    T_max = xf.shape[0] // S_pad
    vmem = lambda: pl.BlockSpec(memory_space=pltpu.MemorySpace.VMEM)
    return pl.pallas_call(
        _sentence_kernel,
        out_shape=jax.ShapeDtypeStruct((S_pad, HB), jnp.float32),
        in_specs=[vmem() for _ in range(9)],
        out_specs=vmem(),
        scratch_shapes=[
            pltpu.VMEM((T_max, S_pad, G4), jnp.float32),      # fwd projections (+bias)
            pltpu.VMEM((T_max, S_pad, G4), jnp.float32),      # bwd projections (+bias)
            pltpu.VMEM((S_pad, HP), jnp.float32),             # h_fwd
            pltpu.VMEM((S_pad, HP), jnp.float32),             # c_fwd
            pltpu.VMEM((S_pad, HP), jnp.float32),             # h_bwd
            pltpu.VMEM((S_pad, HP), jnp.float32),             # c_bwd
            pltpu.VMEM((S_pad, HP), jnp.float32),             # running max fwd
            pltpu.VMEM((S_pad, HP), jnp.float32),             # running max bwd
        ],
        compiler_params=pltpu.CompilerParams(
            vmem_limit_bytes=32 * 1024 * 1024),
    )(lengths2d, xf, xb,
      params['l1_wih_f'], params['l1_wih_b'],
      params['l1_b_f'], params['l1_b_b'],
      params['l1_whh_f'], params['l1_whh_b'])


# ============================================================================
# Stage 2 kernel: BiLSTM_2 over sentence embeddings + hidden2tag + LogSoftmax.
# Single sequence (length S), dense per-direction weights, lane-dense logp.
# ============================================================================
def _paragraph_kernel(semb_ref, wihf_ref, wihb_ref, bf_ref, bb_ref,
                      whhf_ref, whhb_ref, wtag_ref, btag_ref,
                      outh_ref, logp_ref,
                      xpf_scr, xpb_scr, hf_scr, cf_scr, hb_scr, cb_scr):
    S = semb_ref.shape[0]
    xb16 = semb_ref[...].astype(jnp.bfloat16)                 # (S, 512) padded layout
    xpf_scr[...] = jnp.dot(xb16, wihf_ref[...],
                           preferred_element_type=jnp.float32) + bf_ref[...]
    xpb_scr[...] = jnp.dot(xb16, wihb_ref[...],
                           preferred_element_type=jnp.float32) + bb_ref[...]
    hf_scr[...] = jnp.zeros_like(hf_scr)
    cf_scr[...] = jnp.zeros_like(cf_scr)
    hb_scr[...] = jnp.zeros_like(hb_scr)
    cb_scr[...] = jnp.zeros_like(cb_scr)

    def cell(gates, c_prev):
        i = jax.nn.sigmoid(gates[:, 0 * HP:1 * HP])
        f = jax.nn.sigmoid(gates[:, 1 * HP:2 * HP])
        g = jnp.tanh(gates[:, 2 * HP:3 * HP])
        o = jax.nn.sigmoid(gates[:, 3 * HP:4 * HP])
        c = f * c_prev + i * g
        h = o * jnp.tanh(c)
        return h, c

    def step(t, carry):
        gf = xpf_scr[pl.ds(t, 1), :] + jnp.dot(
            hf_scr[...].astype(jnp.bfloat16), whhf_ref[...],
            preferred_element_type=jnp.float32)
        gb = xpb_scr[pl.ds(S - 1 - t, 1), :] + jnp.dot(
            hb_scr[...].astype(jnp.bfloat16), whhb_ref[...],
            preferred_element_type=jnp.float32)
        hf, cf = cell(gf, cf_scr[...])
        hb, cb = cell(gb, cb_scr[...])
        hf_scr[...] = hf
        cf_scr[...] = cf
        hb_scr[...] = hb
        cb_scr[...] = cb
        # forward hidden of step t -> row t, cols [0:256)
        outh_ref[pl.ds(t, 1), 0:HP] = hf
        # backward hidden at step t corresponds to original position S-1-t
        outh_ref[pl.ds(S - 1 - t, 1), HP:2 * HP] = hb
        return carry

    jax.lax.fori_loop(0, S, step, 0)

    # hidden2tag + log-softmax (pad tag columns carry -1e9 bias -> exp()==0).
    logits = jnp.dot(outh_ref[...].astype(jnp.bfloat16), wtag_ref[...],
                     preferred_element_type=jnp.float32) + btag_ref[...]
    m = jnp.max(logits, axis=-1, keepdims=True)
    sh = logits - m
    logp_ref[...] = sh - jnp.log(jnp.sum(jnp.exp(sh), axis=-1, keepdims=True))


def _paragraph_stage(params, semb):
    S = semb.shape[0]
    vmem = lambda: pl.BlockSpec(memory_space=pltpu.MemorySpace.VMEM)
    return pl.pallas_call(
        _paragraph_kernel,
        out_shape=(jax.ShapeDtypeStruct((S, HB), jnp.float32),
                   jax.ShapeDtypeStruct((S, TAGW), jnp.float32)),
        in_specs=[vmem() for _ in range(9)],
        out_specs=(vmem(), vmem()),
        scratch_shapes=[
            pltpu.VMEM((S, G4), jnp.float32),
            pltpu.VMEM((S, G4), jnp.float32),
            pltpu.VMEM((1, HP), jnp.float32),
            pltpu.VMEM((1, HP), jnp.float32),
            pltpu.VMEM((1, HP), jnp.float32),
            pltpu.VMEM((1, HP), jnp.float32),
        ],
        compiler_params=pltpu.CompilerParams(
            vmem_limit_bytes=32 * 1024 * 1024),
    )(semb,
      params['l2_wih_f'], params['l2_wih_b'], params['l2_b_f'], params['l2_b_b'],
      params['l2_whh_f'], params['l2_whh_b'], params['w_tag'], params['b_tag'])


# ============================================================================
# Whole forward (jitted): merge-MLP + reversal/layout glue in XLA, two kernels.
# ============================================================================
@partial(jax.jit, static_argnames=('s_real',))
def _run_model(params, x_pad, lengths, flags, poss, contrib, *, s_real):
    S_pad, T_max, D = x_pad.shape
    idx = jnp.arange(S_pad)

    # --- merge() as a batched XLA matmul chain, scattered back by flag -------
    avg = contrib @ params['label_emb']                                  # (S_pad, 300)
    word = x_pad[idx, poss, :]                                           # (S_pad, 343)
    h1 = jax.nn.relu(word @ params['w1a'] + avg @ params['w1b'] + params['b1'])
    h2 = jax.nn.relu(h1 @ params['w2'] + params['b2'])
    mw = jax.nn.relu(h2 @ params['w3'] + params['b3'])
    newrow = jnp.where((flags > 0)[:, None], mw, word)
    x_m = x_pad.at[idx, poss, :].set(newrow)

    # --- per-sentence time-reversed copy for the backward direction ----------
    t_idx = jnp.arange(T_max)
    rev_idx = jnp.clip(lengths[:, None] - 1 - t_idx[None, :], 0, T_max - 1)
    step_valid = t_idx[None, :] < lengths[:, None]
    x_rev = jnp.take_along_axis(x_m, rev_idx[:, :, None], axis=1)
    x_rev = jnp.where(step_valid[:, :, None], x_rev, 0.0)

    # time-major bf16 slabs: row block t holds all sentences at step t
    xf = jnp.transpose(x_m, (1, 0, 2)).astype(jnp.bfloat16).reshape(T_max * S_pad, D)
    xb = jnp.transpose(x_rev, (1, 0, 2)).astype(jnp.bfloat16).reshape(T_max * S_pad, D)

    semb_pad = _sentence_stage(params, lengths[:, None].astype(jnp.int32), xf, xb)
    semb = semb_pad[:s_real]                                             # (S, 512)

    outh, logp_pad = _paragraph_stage(params, semb)
    sent_out = jnp.concatenate(
        [outh[:, :HIDDEN], outh[:, HP:HP + HIDDEN]], axis=1)             # (S, 300)
    logp = logp_pad[:, :NUM_TAGS]
    labels = jnp.argmax(logp, axis=1)
    return logp, sent_out, labels


# ============================================================================
# Synthetic statistics dict (stand-in for torch.load('resource/statistic_dict_plus.pt'))
# TODO(synk): real statistic_dict_plus.pt cannot be loaded; deterministic synthetic stats used.
# ============================================================================
SYNTH_MAIN_VERB_CONTRIBUTION = {
    "run": ([0, 0, 0, 0, 0, 0, 0, 12.0],
            [0.40, 0.10, 0.10, 0.10, 0.10, 0.10, 0.10]),
    "see": ([0, 0, 0, 0, 0, 0, 0, 3.0],            # count < 5 -> no merge
            [0.20, 0.20, 0.20, 0.10, 0.10, 0.10, 0.10]),
}


def resolve_contribution(main_verb, main_verb_position):
    """Returns (flag, pos, contribution[7]) mirroring MyModel.merge()."""
    zero = np.zeros(NUM_TAGS, np.float32)
    if main_verb_position == -1:
        return 0, 0, zero
    if main_verb == 'None':
        return 1, main_verb_position, np.array(
            [0.0, 0.0, 0.0, 0.5, 0.5, 0.0, 0.0], np.float32)
    if main_verb not in SYNTH_MAIN_VERB_CONTRIBUTION:
        return 0, 0, zero
    if SYNTH_MAIN_VERB_CONTRIBUTION[main_verb][0][7] < 5:
        return 0, 0, zero
    c = np.array(SYNTH_MAIN_VERB_CONTRIBUTION[main_verb][1], np.float32).copy()
    c[0] = c[0] / 2.0
    return 1, main_verb_position, c


# ============================================================================
# Parameter construction: PyTorch-layout weights -> dense per-direction packed
# layout: gate columns [i | f | g | o], each block HP=256 (real 150 + 0-pad);
# padded hidden rows: [fwd(150) pad(106) | bwd(150) pad(106)].
# ============================================================================
def init_params(key):
    H = HIDDEN

    def rnd(shape, scale=0.1):
        nonlocal key
        key, sub = jax.random.split(key)
        return scale * jax.random.normal(sub, shape, dtype=jnp.float32)

    def pack_cols(w_t):                       # (in_dim, 4H) -> (in_dim, G4)
        out = jnp.zeros((w_t.shape[0], G4), jnp.float32)
        for gi in range(4):
            out = out.at[:, gi * HP:gi * HP + H].set(w_t[:, gi * H:(gi + 1) * H])
        return out

    def pack_bias(b):                          # (4H,) -> (1, G4)
        out = jnp.zeros((G4,), jnp.float32)
        for gi in range(4):
            out = out.at[gi * HP:gi * HP + H].set(b[gi * H:(gi + 1) * H])
        return out[None, :]

    def expand_rows(w):                        # (300, X) -> (HB, X) padded rows
        out = jnp.zeros((HB, w.shape[1]), jnp.float32)
        out = out.at[0:H, :].set(w[0:H, :])
        out = out.at[HP:HP + H, :].set(w[H:2 * H, :])
        return out

    def build_lstm(in_dim, padded_input):
        p = {}
        for d in ('f', 'b'):
            w_ih_t = rnd((in_dim, 4 * H))      # W_ih^T, gate order [i f g o]
            w_hh_t = rnd((H, 4 * H))           # W_hh^T
            b_ih = rnd((4 * H,))
            b_hh = rnd((4 * H,))
            if padded_input:
                w_ih_t = expand_rows(w_ih_t)
            p['wih_' + d] = pack_cols(w_ih_t).astype(jnp.bfloat16)
            whh = jnp.zeros((HP, G4), jnp.float32).at[0:H, :].set(pack_cols(w_hh_t))
            p['whh_' + d] = whh.astype(jnp.bfloat16)
            p['b_' + d] = pack_bias(b_ih + b_hh)
        return p

    params = {}
    params['label_emb'] = rnd((NUM_TAGS, BI), 1.0)            # torch.randn(7, 300)

    # merge_mlp: Linear(643,500)/ReLU/Linear(500,400)/ReLU/Linear(400,343)/ReLU
    w1t = rnd((INPUT_DIM + BI, 500))
    params['w1a'] = w1t[:INPUT_DIM]                            # word part  (343, 500)
    params['w1b'] = w1t[INPUT_DIM:]                            # label part (300, 500)
    params['b1'] = rnd((500,))
    params['w2'] = rnd((500, 400))
    params['b2'] = rnd((400,))
    params['w3'] = rnd((400, INPUT_DIM))
    params['b3'] = rnd((INPUT_DIM,))

    l1 = build_lstm(INPUT_DIM, padded_input=False)             # BiLSTM_1
    l2 = build_lstm(BI, padded_input=True)                     # BiLSTM_2
    for k in ('wih_f', 'wih_b', 'whh_f', 'whh_b', 'b_f', 'b_b'):
        params['l1_' + k] = l1[k]
        params['l2_' + k] = l2[k]

    # hidden2tag: (300, 7) -> padded rows (512, 128); pad tag cols get -1e9 bias
    wtag = expand_rows(rnd((BI, NUM_TAGS)))                    # (512, 7)
    wtag_pad = jnp.zeros((HB, TAGW), jnp.float32).at[:, :NUM_TAGS].set(wtag)
    params['w_tag'] = wtag_pad.astype(jnp.bfloat16)
    btag = jnp.full((TAGW,), -1e9, jnp.float32).at[:NUM_TAGS].set(rnd((NUM_TAGS,)))
    params['b_tag'] = btag[None, :]
    return params, key


# ============================================================================
# Host-side forward (mirrors MyModel.forward; dropout == identity at inference)
# ============================================================================
def forward(params, sentences_list, main_verb_list, main_verb_position_list):
    S = len(sentences_list)
    S_pad = max(8, ((S + 7) // 8) * 8)
    lengths_py = [int(s.shape[0]) for s in sentences_list]
    T_max = max(8, ((max(lengths_py) + 7) // 8) * 8)

    x_pad = np.zeros((S_pad, T_max, INPUT_DIM), np.float32)
    lengths = np.zeros((S_pad,), np.int32)
    flags = np.zeros((S_pad,), np.int32)
    poss = np.zeros((S_pad,), np.int32)
    contrib = np.zeros((S_pad, NUM_TAGS), np.float32)
    for i, sent in enumerate(sentences_list):
        L = lengths_py[i]
        x_pad[i, :L, :] = np.asarray(sent, dtype=np.float32)
        lengths[i] = L
        f, p, c = resolve_contribution(main_verb_list[i], main_verb_position_list[i])
        flags[i], poss[i], contrib[i] = f, p, c

    logp, sent_out, labels = _run_model(
        params,
        jnp.asarray(x_pad),
        jnp.asarray(lengths),
        jnp.asarray(flags),
        jnp.asarray(poss),
        jnp.asarray(contrib),
        s_real=S)

    pre_labels_list_2 = [int(v) for v in np.asarray(jax.device_get(labels))]
    # TODO(synk): second element of the original return ([.., _]) was the LSTM
    # state tuple; returned as None here (unused by callers of this model).
    return ([pre_labels_list_2, []], [logp, None], sent_out)


# ============================================================================
if __name__ == "__main__":
    key = jax.random.PRNGKey(0)
    params, key = init_params(key)

    sentence_lengths = [6, 5, 7, 4]
    keys = jax.random.split(key, len(sentence_lengths))
    sentences_list = [jax.random.normal(k, (L, INPUT_DIM), dtype=jnp.float32)
                      for k, L in zip(keys, sentence_lengths)]
    main_verb_list = ["run", "None", "see", "unknown_verb"]
    main_verb_position_list = [2, 1, 3, -1]

    (pre_labels, _), (log_probs, _), sent_out = forward(
        params, sentences_list, main_verb_list, main_verb_position_list)

    jax.block_until_ready(log_probs)
    jax.block_until_ready(sent_out)
    assert log_probs.shape == (len(sentence_lengths), NUM_TAGS)
    assert sent_out.shape == (len(sentence_lengths), BI)
    assert len(pre_labels) == len(sentence_lengths)
    assert bool(jnp.all(jnp.isfinite(log_probs)))
    assert bool(jnp.all(jnp.isfinite(sent_out)))
    print("KERNEL_OK")
</pallas_src>

<mosaic_0001>
module attributes {stable_mosaic.version = 11 : i64} {
  func.func @_sentence_kernel(%arg0: memref<8x1xi32, #tpu.memory_space<vmem>>, %arg1: memref<64x343xbf16, #tpu.memory_space<vmem>>, %arg2: memref<64x343xbf16, #tpu.memory_space<vmem>>, %arg3: memref<343x1024xbf16, #tpu.memory_space<vmem>>, %arg4: memref<343x1024xbf16, #tpu.memory_space<vmem>>, %arg5: memref<1x1024xf32, #tpu.memory_space<vmem>>, %arg6: memref<1x1024xf32, #tpu.memory_space<vmem>>, %arg7: memref<256x1024xbf16, #tpu.memory_space<vmem>>, %arg8: memref<256x1024xbf16, #tpu.memory_space<vmem>>, %arg9: memref<8x512xf32, #tpu.memory_space<vmem>>, %arg10: memref<8x8x1024xf32, #tpu.memory_space<vmem>>, %arg11: memref<8x8x1024xf32, #tpu.memory_space<vmem>>, %arg12: memref<8x256xf32, #tpu.memory_space<vmem>>, %arg13: memref<8x256xf32, #tpu.memory_space<vmem>>, %arg14: memref<8x256xf32, #tpu.memory_space<vmem>>, %arg15: memref<8x256xf32, #tpu.memory_space<vmem>>, %arg16: memref<8x256xf32, #tpu.memory_space<vmem>>, %arg17: memref<8x256xf32, #tpu.memory_space<vmem>>) attributes {dimension_semantics = [], scalar_prefetch = 0 : i64, scratch_operands = 8 : i64, tpu.core_type = #tpu.core_type<tc>} {
    %c0 = arith.constant 0 : index
    %c0_0 = arith.constant 0 : index
    %0 = vector.load %arg1[%c0, %c0_0] : memref<64x343xbf16, #tpu.memory_space<vmem>>, vector<64x343xbf16>
    %c0_1 = arith.constant 0 : index
    %c0_2 = arith.constant 0 : index
    %1 = vector.load %arg3[%c0_1, %c0_2] : memref<343x1024xbf16, #tpu.memory_space<vmem>>, vector<343x1024xbf16>
    %cst = arith.constant dense<0.000000e+00> : vector<64x1024xf32>
    %2 = tpu.matmul %0, %1, %cst {dimension_numbers = #tpu.dot_dimension_numbers<[1], [0], [0], [1], [0, 0, 1, 1], [], []>} : vector<64x343xbf16>, vector<343x1024xbf16>, vector<64x1024xf32> -> vector<64x1024xf32>
    %c0_3 = arith.constant 0 : index
    %c0_4 = arith.constant 0 : index
    %3 = vector.load %arg5[%c0_3, %c0_4] : memref<1x1024xf32, #tpu.memory_space<vmem>>, vector<1x1024xf32>
    %4 = vector.broadcast %3 : vector<1x1024xf32> to vector<64x1024xf32>
    %5 = arith.addf %2, %4 : vector<64x1024xf32>
    %c0_5 = arith.constant 0 : index
    %c0_6 = arith.constant 0 : index
    %6 = vector.load %arg2[%c0_5, %c0_6] : memref<64x343xbf16, #tpu.memory_space<vmem>>, vector<64x343xbf16>
    %c0_7 = arith.constant 0 : index
    %c0_8 = arith.constant 0 : index
    %7 = vector.load %arg4[%c0_7, %c0_8] : memref<343x1024xbf16, #tpu.memory_space<vmem>>, vector<343x1024xbf16>
    %cst_9 = arith.constant dense<0.000000e+00> : vector<64x1024xf32>
    %8 = tpu.matmul %6, %7, %cst_9 {dimension_numbers = #tpu.dot_dimension_numbers<[1], [0], [0], [1], [0, 0, 1, 1], [], []>} : vector<64x343xbf16>, vector<343x1024xbf16>, vector<64x1024xf32> -> vector<64x1024xf32>
    %c0_10 = arith.constant 0 : index
    %c0_11 = arith.constant 0 : index
    %9 = vector.load %arg6[%c0_10, %c0_11] : memref<1x1024xf32, #tpu.memory_space<vmem>>, vector<1x1024xf32>
    %10 = vector.broadcast %9 : vector<1x1024xf32> to vector<64x1024xf32>
    %11 = arith.addf %8, %10 : vector<64x1024xf32>
    %12 = vector.shape_cast %5 : vector<64x1024xf32> to vector<8x8x1024xf32>
    %c0_12 = arith.constant 0 : index
    %c0_13 = arith.constant 0 : index
    %c0_14 = arith.constant 0 : index
    %13 = vector.load %arg10[%c0_12, %c0_13, %c0_14] : memref<8x8x1024xf32, #tpu.memory_space<vmem>>, vector<8x8x1024xf32>
    tpu.vector_store %arg10[%c0_12, %c0_13, %c0_14], %12 {strides = array<i32>} : memref<8x8x1024xf32, #tpu.memory_space<vmem>>, vector<8x8x1024xf32>,
    %14 = vector.shape_cast %11 : vector<64x1024xf32> to vector<8x8x1024xf32>
    %c0_15 = arith.constant 0 : index
    %c0_16 = arith.constant 0 : index
    %c0_17 = arith.constant 0 : index
    %15 = vector.load %arg11[%c0_15, %c0_16, %c0_17] : memref<8x8x1024xf32, #tpu.memory_space<vmem>>, vector<8x8x1024xf32>
    tpu.vector_store %arg11[%c0_15, %c0_16, %c0_17], %14 {strides = array<i32>} : memref<8x8x1024xf32, #tpu.memory_space<vmem>>, vector<8x8x1024xf32>,
    %cst_18 = arith.constant 0.000000e+00 : f32
    %16 = vector.broadcast %cst_18 : f32 to vector<8x256xf32>
    %c0_19 = arith.constant 0 : index
    %c0_20 = arith.constant 0 : index
    %17 = vector.load %arg12[%c0_19, %c0_20] : memref<8x256xf32, #tpu.memory_space<vmem>>, vector<8x256xf32>
    tpu.vector_store %arg12[%c0_19, %c0_20], %16 {strides = array<i32>} : memref<8x256xf32, #tpu.memory_space<vmem>>, vector<8x256xf32>,
    %cst_21 = arith.constant 0.000000e+00 : f32
    %18 = vector.broadcast %cst_21 : f32 to vector<8x256xf32>
    %c0_22 = arith.constant 0 : index
    %c0_23 = arith.constant 0 : index
    %19 = vector.load %arg13[%c0_22, %c0_23] : memref<8x256xf32, #tpu.memory_space<vmem>>, vector<8x256xf32>
    tpu.vector_store %arg13[%c0_22, %c0_23], %18 {strides = array<i32>} : memref<8x256xf32, #tpu.memory_space<vmem>>, vector<8x256xf32>,
    %cst_24 = arith.constant 0.000000e+00 : f32
    %20 = vector.broadcast %cst_24 : f32 to vector<8x256xf32>
    %c0_25 = arith.constant 0 : index
    %c0_26 = arith.constant 0 : index
    %21 = vector.load %arg14[%c0_25, %c0_26] : memref<8x256xf32, #tpu.memory_space<vmem>>, vector<8x256xf32>
    tpu.vector_store %arg14[%c0_25, %c0_26], %20 {strides = array<i32>} : memref<8x256xf32, #tpu.memory_space<vmem>>, vector<8x256xf32>,
    %cst_27 = arith.constant 0.000000e+00 : f32
    %22 = vector.broadcast %cst_27 : f32 to vector<8x256xf32>
    %c0_28 = arith.constant 0 : index
    %c0_29 = arith.constant 0 : index
    %23 = vector.load %arg15[%c0_28, %c0_29] : memref<8x256xf32, #tpu.memory_space<vmem>>, vector<8x256xf32>
    tpu.vector_store %arg15[%c0_28, %c0_29], %22 {strides = array<i32>} : memref<8x256xf32, #tpu.memory_space<vmem>>, vector<8x256xf32>,
    %cst_30 = arith.constant -1.000000e+30 : f32
    %24 = vector.broadcast %cst_30 : f32 to vector<8x256xf32>
    %c0_31 = arith.constant 0 : index
    %c0_32 = arith.constant 0 : index
    %25 = vector.load %arg16[%c0_31, %c0_32] : memref<8x256xf32, #tpu.memory_space<vmem>>, vector<8x256xf32>
    tpu.vector_store %arg16[%c0_31, %c0_32], %24 {strides = array<i32>} : memref<8x256xf32, #tpu.memory_space<vmem>>, vector<8x256xf32>,
    %cst_33 = arith.constant -1.000000e+30 : f32
    %26 = vector.broadcast %cst_33 : f32 to vector<8x256xf32>
    %c0_34 = arith.constant 0 : index
    %c0_35 = arith.constant 0 : index
    %27 = vector.load %arg17[%c0_34, %c0_35] : memref<8x256xf32, #tpu.memory_space<vmem>>, vector<8x256xf32>
    tpu.vector_store %arg17[%c0_34, %c0_35], %26 {strides = array<i32>} : memref<8x256xf32, #tpu.memory_space<vmem>>, vector<8x256xf32>,
    %c0_36 = arith.constant 0 : index
    %c0_37 = arith.constant 0 : index
    %28 = vector.load %arg0[%c0_36, %c0_37] : memref<8x1xi32, #tpu.memory_space<vmem>>, vector<8x1xi32>
    %c0_i32 = arith.constant 0 : i32
    %c8_i32 = arith.constant 8 : i32
    %29 = arith.addi %c0_i32, %c8_i32 : i32
    %c1_i32 = arith.constant 1 : i32
    scf.for %arg18 = %c0_i32 to %29 step %c1_i32  : i32 {
      %44 = arith.index_cast %arg18 : i32 to index
      %c0_49 = arith.constant 0 : index
      %c0_50 = arith.constant 0 : index
      %45 = vector.load %arg10[%44, %c0_49, %c0_50] : memref<8x8x1024xf32, #tpu.memory_space<vmem>>, vector<1x8x1024xf32>
      %46 = vector.shape_cast %45 : vector<1x8x1024xf32> to vector<8x1024xf32>
      %c0_51 = arith.constant 0 : index
      %c0_52 = arith.constant 0 : index
      %47 = vector.load %arg12[%c0_51, %c0_52] : memref<8x256xf32, #tpu.memory_space<vmem>>, vector<8x256xf32>
      %48 = arith.truncf %47 : vector<8x256xf32> to vector<8x256xbf16>
      %c0_53 = arith.constant 0 : index
      %c0_54 = arith.constant 0 : index
      %49 = vector.load %arg7[%c0_53, %c0_54] : memref<256x1024xbf16, #tpu.memory_space<vmem>>, vector<256x1024xbf16>
      %cst_55 = arith.constant dense<0.000000e+00> : vector<8x1024xf32>
      %50 = tpu.matmul %48, %49, %cst_55 {dimension_numbers = #tpu.dot_dimension_numbers<[1], [0], [0], [1], [0, 0, 1, 1], [], []>} : vector<8x256xbf16>, vector<256x1024xbf16>, vector<8x1024xf32> -> vector<8x1024xf32>
      %51 = arith.addf %46, %50 : vector<8x1024xf32>
      %52 = arith.index_cast %arg18 : i32 to index
      %c0_56 = arith.constant 0 : index
      %c0_57 = arith.constant 0 : index
      %53 = vector.load %arg11[%52, %c0_56, %c0_57] : memref<8x8x1024xf32, #tpu.memory_space<vmem>>, vector<1x8x1024xf32>
      %54 = vector.shape_cast %53 : vector<1x8x1024xf32> to vector<8x1024xf32>
      %c0_58 = arith.constant 0 : index
      %c0_59 = arith.constant 0 : index
      %55 = vector.load %arg14[%c0_58, %c0_59] : memref<8x256xf32, #tpu.memory_space<vmem>>, vector<8x256xf32>
      %56 = arith.truncf %55 : vector<8x256xf32> to vector<8x256xbf16>
      %c0_60 = arith.constant 0 : index
      %c0_61 = arith.constant 0 : index
      %57 = vector.load %arg8[%c0_60, %c0_61] : memref<256x1024xbf16, #tpu.memory_space<vmem>>, vector<256x1024xbf16>
      %cst_62 = arith.constant dense<0.000000e+00> : vector<8x1024xf32>
      %58 = tpu.matmul %56, %57, %cst_62 {dimension_numbers = #tpu.dot_dimension_numbers<[1], [0], [0], [1], [0, 0, 1, 1], [], []>} : vector<8x256xbf16>, vector<256x1024xbf16>, vector<8x1024xf32> -> vector<8x1024xf32>
      %59 = arith.addf %54, %58 : vector<8x1024xf32>
      %c0_63 = arith.constant 0 : index
      %c0_64 = arith.constant 0 : index
      %60 = vector.load %arg13[%c0_63, %c0_64] : memref<8x256xf32, #tpu.memory_space<vmem>>, vector<8x256xf32>
      %61 = vector.extract_strided_slice %51 {offsets = [0, 0], sizes = [8, 256], strides = [1, 1]} : vector<8x1024xf32> to vector<8x256xf32>
      %62 = arith.negf %61 : vector<8x256xf32>
      %63 = math.exp %62 : vector<8x256xf32>
      %cst_65 = arith.constant 1.000000e+00 : f32
      %64 = vector.broadcast %cst_65 : f32 to vector<8x256xf32>
      %65 = arith.addf %64, %63 : vector<8x256xf32>
      %66 = arith.divf %64, %65 : vector<8x256xf32>
      %67 = vector.extract_strided_slice %51 {offsets = [0, 256], sizes = [8, 256], strides = [1, 1]} : vector<8x1024xf32> to vector<8x256xf32>
      %68 = arith.negf %67 : vector<8x256xf32>
      %69 = math.exp %68 : vector<8x256xf32>
      %cst_66 = arith.constant 1.000000e+00 : f32
      %70 = vector.broadcast %cst_66 : f32 to vector<8x256xf32>
      %71 = arith.addf %70, %69 : vector<8x256xf32>
      %72 = arith.divf %70, %71 : vector<8x256xf32>
      %73 = vector.extract_strided_slice %51 {offsets = [0, 512], sizes = [8, 256], strides = [1, 1]} : vector<8x1024xf32> to vector<8x256xf32>
      %74 = math.tanh %73 : vector<8x256xf32>
      %75 = vector.extract_strided_slice %51 {offsets = [0, 768], sizes = [8, 256], strides = [1, 1]} : vector<8x1024xf32> to vector<8x256xf32>
      %76 = arith.negf %75 : vector<8x256xf32>
      %77 = math.exp %76 : vector<8x256xf32>
      %cst_67 = arith.constant 1.000000e+00 : f32
      %78 = vector.broadcast %cst_67 : f32 to vector<8x256xf32>
      %79 = arith.addf %78, %77 : vector<8x256xf32>
      %80 = arith.divf %78, %79 : vector<8x256xf32>
      %81 = arith.mulf %72, %60 : vector<8x256xf32>
      %82 = arith.mulf %66, %74 : vector<8x256xf32>
      %83 = arith.addf %81, %82 : vector<8x256xf32>
      %84 = math.tanh %83 : vector<8x256xf32>
      %85 = arith.mulf %80, %84 : vector<8x256xf32>
      %c0_68 = arith.constant 0 : index
      %c0_69 = arith.constant 0 : index
      %86 = vector.load %arg15[%c0_68, %c0_69] : memref<8x256xf32, #tpu.memory_space<vmem>>, vector<8x256xf32>
      %87 = vector.extract_strided_slice %59 {offsets = [0, 0], sizes = [8, 256], strides = [1, 1]} : vector<8x1024xf32> to vector<8x256xf32>
      %88 = arith.negf %87 : vector<8x256xf32>
      %89 = math.exp %88 : vector<8x256xf32>
      %cst_70 = arith.constant 1.000000e+00 : f32
      %90 = vector.broadcast %cst_70 : f32 to vector<8x256xf32>
      %91 = arith.addf %90, %89 : vector<8x256xf32>
      %92 = arith.divf %90, %91 : vector<8x256xf32>
      %93 = vector.extract_strided_slice %59 {offsets = [0, 256], sizes = [8, 256], strides = [1, 1]} : vector<8x1024xf32> to vector<8x256xf32>
      %94 = arith.negf %93 : vector<8x256xf32>
      %95 = math.exp %94 : vector<8x256xf32>
      %cst_71 = arith.constant 1.000000e+00 : f32
      %96 = vector.broadcast %cst_71 : f32 to vector<8x256xf32>
      %97 = arith.addf %96, %95 : vector<8x256xf32>
      %98 = arith.divf %96, %97 : vector<8x256xf32>
      %99 = vector.extract_strided_slice %59 {offsets = [0, 512], sizes = [8, 256], strides = [1, 1]} : vector<8x1024xf32> to vector<8x256xf32>
      %100 = math.tanh %99 : vector<8x256xf32>
      %101 = vector.extract_strided_slice %59 {offsets = [0, 768], sizes = [8, 256], strides = [1, 1]} : vector<8x1024xf32> to vector<8x256xf32>
      %102 = arith.negf %101 : vector<8x256xf32>
      %103 = math.exp %102 : vector<8x256xf32>
      %cst_72 = arith.constant 1.000000e+00 : f32
      %104 = vector.broadcast %cst_72 : f32 to vector<8x256xf32>
      %105 = arith.addf %104, %103 : vector<8x256xf32>
      %106 = arith.divf %104, %105 : vector<8x256xf32>
      %107 = arith.mulf %98, %86 : vector<8x256xf32>
      %108 = arith.mulf %92, %100 : vector<8x256xf32>
      %109 = arith.addf %107, %108 : vector<8x256xf32>
      %110 = math.tanh %109 : vector<8x256xf32>
      %111 = arith.mulf %106, %110 : vector<8x256xf32>
      %c0_73 = arith.constant 0 : index
      %c0_74 = arith.constant 0 : index
      %112 = vector.load %arg12[%c0_73, %c0_74] : memref<8x256xf32, #tpu.memory_space<vmem>>, vector<8x256xf32>
      tpu.vector_store %arg12[%c0_73, %c0_74], %85 {strides = array<i32>} : memref<8x256xf32, #tpu.memory_space<vmem>>, vector<8x256xf32>,
      %c0_75 = arith.constant 0 : index
      %c0_76 = arith.constant 0 : index
      %113 = vector.load %arg13[%c0_75, %c0_76] : memref<8x256xf32, #tpu.memory_space<vmem>>, vector<8x256xf32>
      tpu.vector_store %arg13[%c0_75, %c0_76], %83 {strides = array<i32>} : memref<8x256xf32, #tpu.memory_space<vmem>>, vector<8x256xf32>,
      %c0_77 = arith.constant 0 : index
      %c0_78 = arith.constant 0 : index
      %114 = vector.load %arg14[%c0_77, %c0_78] : memref<8x256xf32, #tpu.memory_space<vmem>>, vector<8x256xf32>
      tpu.vector_store %arg14[%c0_77, %c0_78], %111 {strides = array<i32>} : memref<8x256xf32, #tpu.memory_space<vmem>>, vector<8x256xf32>,
      %c0_79 = arith.constant 0 : index
      %c0_80 = arith.constant 0 : index
      %115 = vector.load %arg15[%c0_79, %c0_80] : memref<8x256xf32, #tpu.memory_space<vmem>>, vector<8x256xf32>
      tpu.vector_store %arg15[%c0_79, %c0_80], %109 {strides = array<i32>} : memref<8x256xf32, #tpu.memory_space<vmem>>, vector<8x256xf32>,
      %116 = vector.broadcast %arg18 : i32 to vector<8x1xi32>
      %117 = arith.cmpi sgt, %28, %116 : vector<8x1xi32>
      %c0_81 = arith.constant 0 : index
      %c0_82 = arith.constant 0 : index
      %118 = vector.load %arg16[%c0_81, %c0_82] : memref<8x256xf32, #tpu.memory_space<vmem>>, vector<8x256xf32>
      %119 = arith.maximumf %118, %85 : vector<8x256xf32>
      %c0_83 = arith.constant 0 : index
      %c0_84 = arith.constant 0 : index
      %120 = vector.load %arg16[%c0_83, %c0_84] : memref<8x256xf32, #tpu.memory_space<vmem>>, vector<8x256xf32>
      %121 = vector.shape_cast %117 : vector<8x1xi1> to vector<8x1xi1>
      %122 = vector.broadcast %121 : vector<8x1xi1> to vector<8x256xi1>
      %123 = arith.select %122, %119, %120 : vector<8x256xi1>, vector<8x256xf32>
      %c0_85 = arith.constant 0 : index
      %c0_86 = arith.constant 0 : index
      %124 = vector.load %arg16[%c0_85, %c0_86] : memref<8x256xf32, #tpu.memory_space<vmem>>, vector<8x256xf32>
      tpu.vector_store %arg16[%c0_85, %c0_86], %123 {strides = array<i32>} : memref<8x256xf32, #tpu.memory_space<vmem>>, vector<8x256xf32>,
      %c0_87 = arith.constant 0 : index
      %c0_88 = arith.constant 0 : index
      %125 = vector.load %arg17[%c0_87, %c0_88] : memref<8x256xf32, #tpu.memory_space<vmem>>, vector<8x256xf32>
      %126 = arith.maximumf %125, %111 : vector<8x256xf32>
      %c0_89 = arith.constant 0 : index
      %c0_90 = arith.constant 0 : index
      %127 = vector.load %arg17[%c0_89, %c0_90] : memref<8x256xf32, #tpu.memory_space<vmem>>, vector<8x256xf32>
      %128 = vector.shape_cast %117 : vector<8x1xi1> to vector<8x1xi1>
      %129 = vector.broadcast %128 : vector<8x1xi1> to vector<8x256xi1>
      %130 = arith.select %129, %126, %127 : vector<8x256xi1>, vector<8x256xf32>
      %c0_91 = arith.constant 0 : index
      %c0_92 = arith.constant 0 : index
      %131 = vector.load %arg17[%c0_91, %c0_92] : memref<8x256xf32, #tpu.memory_space<vmem>>, vector<8x256xf32>
      tpu.vector_store %arg17[%c0_91, %c0_92], %130 {strides = array<i32>} : memref<8x256xf32, #tpu.memory_space<vmem>>, vector<8x256xf32>,
    }
    %c8_i32_38 = arith.constant 8 : i32
    %c0_i32_39 = arith.constant 0 : i32
    %30 = vector.broadcast %c0_i32_39 : i32 to vector<8x1xi32>
    %31 = arith.cmpi sgt, %28, %30 : vector<8x1xi32>
    %c0_40 = arith.constant 0 : index
    %c0_41 = arith.constant 0 : index
    %32 = vector.load %arg16[%c0_40, %c0_41] : memref<8x256xf32, #tpu.memory_space<vmem>>, vector<8x256xf32>
    %cst_42 = arith.constant 0.000000e+00 : f32
    %33 = vector.shape_cast %31 : vector<8x1xi1> to vector<8x1xi1>
    %34 = vector.broadcast %33 : vector<8x1xi1> to vector<8x256xi1>
    %35 = vector.broadcast %cst_42 : f32 to vector<8x256xf32>
    %36 = arith.select %34, %32, %35 : vector<8x256xi1>, vector<8x256xf32>
    %c0_43 = arith.constant 0 : index
    %c0_44 = arith.constant 0 : index
    %37 = vector.load %arg9[%c0_43, %c0_44] : memref<8x512xf32, #tpu.memory_space<vmem>>, vector<8x256xf32>
    tpu.vector_store %arg9[%c0_43, %c0_44], %36 {strides = array<i32>} : memref<8x512xf32, #tpu.memory_space<vmem>>, vector<8x256xf32>,
    %c0_45 = arith.constant 0 : index
    %c0_46 = arith.constant 0 : index
    %38 = vector.load %arg17[%c0_45, %c0_46] : memref<8x256xf32, #tpu.memory_space<vmem>>, vector<8x256xf32>
    %cst_47 = arith.constant 0.000000e+00 : f32
    %39 = vector.shape_cast %31 : vector<8x1xi1> to vector<8x1xi1>
    %40 = vector.broadcast %39 : vector<8x1xi1> to vector<8x256xi1>
    %41 = vector.broadcast %cst_47 : f32 to vector<8x256xf32>
    %42 = arith.select %40, %38, %41 : vector<8x256xi1>, vector<8x256xf32>
    %c0_48 = arith.constant 0 : index
    %c256 = arith.constant 256 : index
    %43 = vector.load %arg9[%c0_48, %c256] : memref<8x512xf32, #tpu.memory_space<vmem>>, vector<8x256xf32>
    tpu.vector_store %arg9[%c0_48, %c256], %42 {strides = array<i32>} : memref<8x512xf32, #tpu.memory_space<vmem>>, vector<8x256xf32>,
    return
  }
}

module attributes {stable_mosaic.version = 11 : i64} {
  func.func @_paragraph_kernel(%arg0: memref<4x512xf32, #tpu.memory_space<vmem>>, %arg1: memref<512x1024xbf16, #tpu.memory_space<vmem>>, %arg2: memref<512x1024xbf16, #tpu.memory_space<vmem>>, %arg3: memref<1x1024xf32, #tpu.memory_space<vmem>>, %arg4: memref<1x1024xf32, #tpu.memory_space<vmem>>, %arg5: memref<256x1024xbf16, #tpu.memory_space<vmem>>, %arg6: memref<256x1024xbf16, #tpu.memory_space<vmem>>, %arg7: memref<512x128xbf16, #tpu.memory_space<vmem>>, %arg8: memref<1x128xf32, #tpu.memory_space<vmem>>, %arg9: memref<4x512xf32, #tpu.memory_space<vmem>>, %arg10: memref<4x128xf32, #tpu.memory_space<vmem>>, %arg11: memref<4x1024xf32, #tpu.memory_space<vmem>>, %arg12: memref<4x1024xf32, #tpu.memory_space<vmem>>, %arg13: memref<1x256xf32, #tpu.memory_space<vmem>>, %arg14: memref<1x256xf32, #tpu.memory_space<vmem>>, %arg15: memref<1x256xf32, #tpu.memory_space<vmem>>, %arg16: memref<1x256xf32, #tpu.memory_space<vmem>>) attributes {dimension_semantics = [], scalar_prefetch = 0 : i64, scratch_operands = 6 : i64, tpu.core_type = #tpu.core_type<tc>} {
    %c0 = arith.constant 0 : index
    %c0_0 = arith.constant 0 : index
    %0 = vector.load %arg0[%c0, %c0_0] : memref<4x512xf32, #tpu.memory_space<vmem>>, vector<4x512xf32>
    %1 = arith.truncf %0 : vector<4x512xf32> to vector<4x512xbf16>
    %c0_1 = arith.constant 0 : index
    %c0_2 = arith.constant 0 : index
    %2 = vector.load %arg1[%c0_1, %c0_2] : memref<512x1024xbf16, #tpu.memory_space<vmem>>, vector<512x1024xbf16>
    %cst = arith.constant dense<0.000000e+00> : vector<4x1024xf32>
    %3 = tpu.matmul %1, %2, %cst {dimension_numbers = #tpu.dot_dimension_numbers<[1], [0], [0], [1], [0, 0, 1, 1], [], []>} : vector<4x512xbf16>, vector<512x1024xbf16>, vector<4x1024xf32> -> vector<4x1024xf32>
    %c0_3 = arith.constant 0 : index
    %c0_4 = arith.constant 0 : index
    %4 = vector.load %arg3[%c0_3, %c0_4] : memref<1x1024xf32, #tpu.memory_space<vmem>>, vector<1x1024xf32>
    %5 = vector.broadcast %4 : vector<1x1024xf32> to vector<4x1024xf32>
    %6 = arith.addf %3, %5 : vector<4x1024xf32>
    %c0_5 = arith.constant 0 : index
    %c0_6 = arith.constant 0 : index
    %7 = vector.load %arg11[%c0_5, %c0_6] : memref<4x1024xf32, #tpu.memory_space<vmem>>, vector<4x1024xf32>
    tpu.vector_store %arg11[%c0_5, %c0_6], %6 {strides = array<i32>} : memref<4x1024xf32, #tpu.memory_space<vmem>>, vector<4x1024xf32>,
    %c0_7 = arith.constant 0 : index
    %c0_8 = arith.constant 0 : index
    %8 = vector.load %arg2[%c0_7, %c0_8] : memref<512x1024xbf16, #tpu.memory_space<vmem>>, vector<512x1024xbf16>
    %cst_9 = arith.constant dense<0.000000e+00> : vector<4x1024xf32>
    %9 = tpu.matmul %1, %8, %cst_9 {dimension_numbers = #tpu.dot_dimension_numbers<[1], [0], [0], [1], [0, 0, 1, 1], [], []>} : vector<4x512xbf16>, vector<512x1024xbf16>, vector<4x1024xf32> -> vector<4x1024xf32>
    %c0_10 = arith.constant 0 : index
    %c0_11 = arith.constant 0 : index
    %10 = vector.load %arg4[%c0_10, %c0_11] : memref<1x1024xf32, #tpu.memory_space<vmem>>, vector<1x1024xf32>
    %11 = vector.broadcast %10 : vector<1x1024xf32> to vector<4x1024xf32>
    %12 = arith.addf %9, %11 : vector<4x1024xf32>
    %c0_12 = arith.constant 0 : index
    %c0_13 = arith.constant 0 : index
    %13 = vector.load %arg12[%c0_12, %c0_13] : memref<4x1024xf32, #tpu.memory_space<vmem>>, vector<4x1024xf32>
    tpu.vector_store %arg12[%c0_12, %c0_13], %12 {strides = array<i32>} : memref<4x1024xf32, #tpu.memory_space<vmem>>, vector<4x1024xf32>,
    %cst_14 = arith.constant 0.000000e+00 : f32
    %14 = vector.broadcast %cst_14 : f32 to vector<1x256xf32>
    %c0_15 = arith.constant 0 : index
    %c0_16 = arith.constant 0 : index
    %15 = vector.load %arg13[%c0_15, %c0_16] : memref<1x256xf32, #tpu.memory_space<vmem>>, vector<1x256xf32>
    tpu.vector_store %arg13[%c0_15, %c0_16], %14 {strides = array<i32>} : memref<1x256xf32, #tpu.memory_space<vmem>>, vector<1x256xf32>,
    %cst_17 = arith.constant 0.000000e+00 : f32
    %16 = vector.broadcast %cst_17 : f32 to vector<1x256xf32>
    %c0_18 = arith.constant 0 : index
    %c0_19 = arith.constant 0 : index
    %17 = vector.load %arg14[%c0_18, %c0_19] : memref<1x256xf32, #tpu.memory_space<vmem>>, vector<1x256xf32>
    tpu.vector_store %arg14[%c0_18, %c0_19], %16 {strides = array<i32>} : memref<1x256xf32, #tpu.memory_space<vmem>>, vector<1x256xf32>,
    %cst_20 = arith.constant 0.000000e+00 : f32
    %18 = vector.broadcast %cst_20 : f32 to vector<1x256xf32>
    %c0_21 = arith.constant 0 : index
    %c0_22 = arith.constant 0 : index
    %19 = vector.load %arg15[%c0_21, %c0_22] : memref<1x256xf32, #tpu.memory_space<vmem>>, vector<1x256xf32>
    tpu.vector_store %arg15[%c0_21, %c0_22], %18 {strides = array<i32>} : memref<1x256xf32, #tpu.memory_space<vmem>>, vector<1x256xf32>,
    %cst_23 = arith.constant 0.000000e+00 : f32
    %20 = vector.broadcast %cst_23 : f32 to vector<1x256xf32>
    %c0_24 = arith.constant 0 : index
    %c0_25 = arith.constant 0 : index
    %21 = vector.load %arg16[%c0_24, %c0_25] : memref<1x256xf32, #tpu.memory_space<vmem>>, vector<1x256xf32>
    tpu.vector_store %arg16[%c0_24, %c0_25], %20 {strides = array<i32>} : memref<1x256xf32, #tpu.memory_space<vmem>>, vector<1x256xf32>,
    %c0_i32 = arith.constant 0 : i32
    %c4_i32 = arith.constant 4 : i32
    %22 = arith.addi %c0_i32, %c4_i32 : i32
    %c1_i32 = arith.constant 1 : i32
    scf.for %arg17 = %c0_i32 to %22 step %c1_i32  : i32 {
      %41 = arith.index_cast %arg17 : i32 to index
      %c0_38 = arith.constant 0 : index
      %42 = vector.load %arg11[%41, %c0_38] : memref<4x1024xf32, #tpu.memory_space<vmem>>, vector<1x1024xf32>
      %c0_39 = arith.constant 0 : index
      %c0_40 = arith.constant 0 : index
      %43 = vector.load %arg13[%c0_39, %c0_40] : memref<1x256xf32, #tpu.memory_space<vmem>>, vector<1x256xf32>
      %44 = arith.truncf %43 : vector<1x256xf32> to vector<1x256xbf16>
      %c0_41 = arith.constant 0 : index
      %c0_42 = arith.constant 0 : index
      %45 = vector.load %arg5[%c0_41, %c0_42] : memref<256x1024xbf16, #tpu.memory_space<vmem>>, vector<256x1024xbf16>
      %cst_43 = arith.constant dense<0.000000e+00> : vector<1x1024xf32>
      %46 = tpu.matmul %44, %45, %cst_43 {dimension_numbers = #tpu.dot_dimension_numbers<[1], [0], [0], [1], [0, 0, 1, 1], [], []>} : vector<1x256xbf16>, vector<256x1024xbf16>, vector<1x1024xf32> -> vector<1x1024xf32>
      %47 = arith.addf %42, %46 : vector<1x1024xf32>
      %c3_i32 = arith.constant 3 : i32
      %48 = arith.subi %c3_i32, %arg17 : i32
      %49 = arith.index_cast %48 : i32 to index
      %c0_44 = arith.constant 0 : index
      %50 = vector.load %arg12[%49, %c0_44] : memref<4x1024xf32, #tpu.memory_space<vmem>>, vector<1x1024xf32>
      %c0_45 = arith.constant 0 : index
      %c0_46 = arith.constant 0 : index
      %51 = vector.load %arg15[%c0_45, %c0_46] : memref<1x256xf32, #tpu.memory_space<vmem>>, vector<1x256xf32>
      %52 = arith.truncf %51 : vector<1x256xf32> to vector<1x256xbf16>
      %c0_47 = arith.constant 0 : index
      %c0_48 = arith.constant 0 : index
      %53 = vector.load %arg6[%c0_47, %c0_48] : memref<256x1024xbf16, #tpu.memory_space<vmem>>, vector<256x1024xbf16>
      %cst_49 = arith.constant dense<0.000000e+00> : vector<1x1024xf32>
      %54 = tpu.matmul %52, %53, %cst_49 {dimension_numbers = #tpu.dot_dimension_numbers<[1], [0], [0], [1], [0, 0, 1, 1], [], []>} : vector<1x256xbf16>, vector<256x1024xbf16>, vector<1x1024xf32> -> vector<1x1024xf32>
      %55 = arith.addf %50, %54 : vector<1x1024xf32>
      %c0_50 = arith.constant 0 : index
      %c0_51 = arith.constant 0 : index
      %56 = vector.load %arg14[%c0_50, %c0_51] : memref<1x256xf32, #tpu.memory_space<vmem>>, vector<1x256xf32>
      %57 = vector.extract_strided_slice %47 {offsets = [0, 0], sizes = [1, 256], strides = [1, 1]} : vector<1x1024xf32> to vector<1x256xf32>
      %58 = arith.negf %57 : vector<1x256xf32>
      %59 = math.exp %58 : vector<1x256xf32>
      %cst_52 = arith.constant 1.000000e+00 : f32
      %60 = vector.broadcast %cst_52 : f32 to vector<1x256xf32>
      %61 = arith.addf %60, %59 : vector<1x256xf32>
      %62 = arith.divf %60, %61 : vector<1x256xf32>
      %63 = vector.extract_strided_slice %47 {offsets = [0, 256], sizes = [1, 256], strides = [1, 1]} : vector<1x1024xf32> to vector<1x256xf32>
      %64 = arith.negf %63 : vector<1x256xf32>
      %65 = math.exp %64 : vector<1x256xf32>
      %cst_53 = arith.constant 1.000000e+00 : f32
      %66 = vector.broadcast %cst_53 : f32 to vector<1x256xf32>
      %67 = arith.addf %66, %65 : vector<1x256xf32>
      %68 = arith.divf %66, %67 : vector<1x256xf32>
      %69 = vector.extract_strided_slice %47 {offsets = [0, 512], sizes = [1, 256], strides = [1, 1]} : vector<1x1024xf32> to vector<1x256xf32>
      %70 = math.tanh %69 : vector<1x256xf32>
      %71 = vector.extract_strided_slice %47 {offsets = [0, 768], sizes = [1, 256], strides = [1, 1]} : vector<1x1024xf32> to vector<1x256xf32>
      %72 = arith.negf %71 : vector<1x256xf32>
      %73 = math.exp %72 : vector<1x256xf32>
      %cst_54 = arith.constant 1.000000e+00 : f32
      %74 = vector.broadcast %cst_54 : f32 to vector<1x256xf32>
      %75 = arith.addf %74, %73 : vector<1x256xf32>
      %76 = arith.divf %74, %75 : vector<1x256xf32>
      %77 = arith.mulf %68, %56 : vector<1x256xf32>
      %78 = arith.mulf %62, %70 : vector<1x256xf32>
      %79 = arith.addf %77, %78 : vector<1x256xf32>
      %80 = math.tanh %79 : vector<1x256xf32>
      %81 = arith.mulf %76, %80 : vector<1x256xf32>
      %c0_55 = arith.constant 0 : index
      %c0_56 = arith.constant 0 : index
      %82 = vector.load %arg16[%c0_55, %c0_56] : memref<1x256xf32, #tpu.memory_space<vmem>>, vector<1x256xf32>
      %83 = vector.extract_strided_slice %55 {offsets = [0, 0], sizes = [1, 256], strides = [1, 1]} : vector<1x1024xf32> to vector<1x256xf32>
      %84 = arith.negf %83 : vector<1x256xf32>
      %85 = math.exp %84 : vector<1x256xf32>
      %cst_57 = arith.constant 1.000000e+00 : f32
      %86 = vector.broadcast %cst_57 : f32 to vector<1x256xf32>
      %87 = arith.addf %86, %85 : vector<1x256xf32>
      %88 = arith.divf %86, %87 : vector<1x256xf32>
      %89 = vector.extract_strided_slice %55 {offsets = [0, 256], sizes = [1, 256], strides = [1, 1]} : vector<1x1024xf32> to vector<1x256xf32>
      %90 = arith.negf %89 : vector<1x256xf32>
      %91 = math.exp %90 : vector<1x256xf32>
      %cst_58 = arith.constant 1.000000e+00 : f32
      %92 = vector.broadcast %cst_58 : f32 to vector<1x256xf32>
      %93 = arith.addf %92, %91 : vector<1x256xf32>
      %94 = arith.divf %92, %93 : vector<1x256xf32>
      %95 = vector.extract_strided_slice %55 {offsets = [0, 512], sizes = [1, 256], strides = [1, 1]} : vector<1x1024xf32> to vector<1x256xf32>
      %96 = math.tanh %95 : vector<1x256xf32>
      %97 = vector.extract_strided_slice %55 {offsets = [0, 768], sizes = [1, 256], strides = [1, 1]} : vector<1x1024xf32> to vector<1x256xf32>
      %98 = arith.negf %97 : vector<1x256xf32>
      %99 = math.exp %98 : vector<1x256xf32>
      %cst_59 = arith.constant 1.000000e+00 : f32
      %100 = vector.broadcast %cst_59 : f32 to vector<1x256xf32>
      %101 = arith.addf %100, %99 : vector<1x256xf32>
      %102 = arith.divf %100, %101 : vector<1x256xf32>
      %103 = arith.mulf %94, %82 : vector<1x256xf32>
      %104 = arith.mulf %88, %96 : vector<1x256xf32>
      %105 = arith.addf %103, %104 : vector<1x256xf32>
      %106 = math.tanh %105 : vector<1x256xf32>
      %107 = arith.mulf %102, %106 : vector<1x256xf32>
      %c0_60 = arith.constant 0 : index
      %c0_61 = arith.constant 0 : index
      %108 = vector.load %arg13[%c0_60, %c0_61] : memref<1x256xf32, #tpu.memory_space<vmem>>, vector<1x256xf32>
      tpu.vector_store %arg13[%c0_60, %c0_61], %81 {strides = array<i32>} : memref<1x256xf32, #tpu.memory_space<vmem>>, vector<1x256xf32>,
      %c0_62 = arith.constant 0 : index
      %c0_63 = arith.constant 0 : index
      %109 = vector.load %arg14[%c0_62, %c0_63] : memref<1x256xf32, #tpu.memory_space<vmem>>, vector<1x256xf32>
      tpu.vector_store %arg14[%c0_62, %c0_63], %79 {strides = array<i32>} : memref<1x256xf32, #tpu.memory_space<vmem>>, vector<1x256xf32>,
      %c0_64 = arith.constant 0 : index
      %c0_65 = arith.constant 0 : index
      %110 = vector.load %arg15[%c0_64, %c0_65] : memref<1x256xf32, #tpu.memory_space<vmem>>, vector<1x256xf32>
      tpu.vector_store %arg15[%c0_64, %c0_65], %107 {strides = array<i32>} : memref<1x256xf32, #tpu.memory_space<vmem>>, vector<1x256xf32>,
      %c0_66 = arith.constant 0 : index
      %c0_67 = arith.constant 0 : index
      %111 = vector.load %arg16[%c0_66, %c0_67] : memref<1x256xf32, #tpu.memory_space<vmem>>, vector<1x256xf32>
      tpu.vector_store %arg16[%c0_66, %c0_67], %105 {strides = array<i32>} : memref<1x256xf32, #tpu.memory_space<vmem>>, vector<1x256xf32>,
      %112 = arith.index_cast %arg17 : i32 to index
      %c0_68 = arith.constant 0 : index
      %113 = vector.load %arg9[%112, %c0_68] : memref<4x512xf32, #tpu.memory_space<vmem>>, vector<1x256xf32>
      tpu.vector_store %arg9[%112, %c0_68], %81 {strides = array<i32>} : memref<4x512xf32, #tpu.memory_space<vmem>>, vector<1x256xf32>,
      %c3_i32_69 = arith.constant 3 : i32
      %114 = arith.subi %c3_i32_69, %arg17 : i32
      %115 = arith.index_cast %114 : i32 to index
      %c256 = arith.constant 256 : index
      %116 = vector.load %arg9[%115, %c256] : memref<4x512xf32, #tpu.memory_space<vmem>>, vector<1x256xf32>
      tpu.vector_store %arg9[%115, %c256], %107 {strides = array<i32>} : memref<4x512xf32, #tpu.memory_space<vmem>>, vector<1x256xf32>,
    }
    %c4_i32_26 = arith.constant 4 : i32
    %c0_27 = arith.constant 0 : index
    %c0_28 = arith.constant 0 : index
    %23 = vector.load %arg9[%c0_27, %c0_28] : memref<4x512xf32, #tpu.memory_space<vmem>>, vector<4x512xf32>
    %24 = arith.truncf %23 : vector<4x512xf32> to vector<4x512xbf16>
    %c0_29 = arith.constant 0 : index
    %c0_30 = arith.constant 0 : index
    %25 = vector.load %arg7[%c0_29, %c0_30] : memref<512x128xbf16, #tpu.memory_space<vmem>>, vector<512x128xbf16>
    %cst_31 = arith.constant dense<0.000000e+00> : vector<4x128xf32>
    %26 = tpu.matmul %24, %25, %cst_31 {dimension_numbers = #tpu.dot_dimension_numbers<[1], [0], [0], [1], [0, 0, 1, 1], [], []>} : vector<4x512xbf16>, vector<512x128xbf16>, vector<4x128xf32> -> vector<4x128xf32>
    %c0_32 = arith.constant 0 : index
    %c0_33 = arith.constant 0 : index
    %27 = vector.load %arg8[%c0_32, %c0_33] : memref<1x128xf32, #tpu.memory_space<vmem>>, vector<1x128xf32>
    %28 = vector.broadcast %27 : vector<1x128xf32> to vector<4x128xf32>
    %29 = arith.addf %26, %28 : vector<4x128xf32>
    %cst_34 = arith.constant dense<0xFF800000> : vector<4xf32>
    %30 = vector.multi_reduction <maximumf>, %29, %cst_34 [1] : vector<4x128xf32> to vector<4xf32>
    %31 = vector.shape_cast %30 : vector<4xf32> to vector<4x1xf32>
    %32 = vector.broadcast %31 : vector<4x1xf32> to vector<4x128xf32>
    %33 = arith.subf %29, %32 : vector<4x128xf32>
    %34 = math.exp %33 : vector<4x128xf32>
    %cst_35 = arith.constant dense<0.000000e+00> : vector<4xf32>
    %35 = vector.multi_reduction <add>, %34, %cst_35 [1] : vector<4x128xf32> to vector<4xf32>
    %36 = vector.shape_cast %35 : vector<4xf32> to vector<4x1xf32>
    %37 = math.log %36 : vector<4x1xf32>
    %38 = vector.broadcast %37 : vector<4x1xf32> to vector<4x128xf32>
    %39 = arith.subf %33, %38 : vector<4x128xf32>
    %c0_36 = arith.constant 0 : index
    %c0_37 = arith.constant 0 : index
    %40 = vector.load %arg10[%c0_36, %c0_37] : memref<4x128xf32, #tpu.memory_space<vmem>>, vector<4x128xf32>
    tpu.vector_store %arg10[%c0_36, %c0_37], %39 {strides = array<i32>} : memref<4x128xf32, #tpu.memory_space<vmem>>, vector<4x128xf32>,
    return
  }
}

</mosaic_0001>

<llo_original>
// kernel: _run_model.2
$region0: #{_run_model.2}
  #allocation0 [shape = 'u32[]', space=smem, size = 0x4, offset = 0x4, fixed_abs, tag = 'smem constant byte address 0x4 - core index']
  #allocation1 [shape = 'u32[144,128]{1,0:T(1,128)}', space=vmem, size = 0x12000, scoped, tag = 'internal scratch']
  #allocation2 [shape = 'f32[8,8,1024]{2,1,0:T(8,128)}', space=vmem, size = 0x40000, scoped, tag = 'scratch operand']
  #allocation3 [shape = 'f32[8,8,1024]{2,1,0:T(8,128)}', space=vmem, size = 0x40000, scoped, tag = 'scratch operand']
  #allocation4 [shape = 'f32[8,256]{1,0:T(8,128)}', space=vmem, size = 0x2000, scoped, tag = 'scratch operand']
  #allocation5 [shape = 'f32[8,256]{1,0:T(8,128)}', space=vmem, size = 0x2000, scoped, tag = 'scratch operand']
  #allocation6 [shape = 'f32[8,256]{1,0:T(8,128)}', space=vmem, size = 0x2000, scoped, tag = 'scratch operand']
  #allocation7 [shape = 'f32[8,256]{1,0:T(8,128)}', space=vmem, size = 0x2000, scoped, tag = 'scratch operand']
  #allocation8 [shape = 'f32[8,256]{1,0:T(8,128)}', space=vmem, size = 0x2000, scoped, tag = 'scratch operand']
  #allocation9 [shape = 'f32[8,256]{1,0:T(8,128)}', space=vmem, size = 0x2000, scoped, tag = 'scratch operand']
  %s0 = inlined_call_operand.vmem [shape: s32[8,1], index: 0, kind: input, shape index: {}]
  %s1 = inlined_call_operand.vmem [shape: bf16[64,343], index: 1, kind: input, shape index: {}]
  %s2 = inlined_call_operand.vmem [shape: bf16[64,343], index: 2, kind: input, shape index: {}]
  %s3 = inlined_call_operand.vmem [shape: bf16[343,1024], index: 3, kind: input, shape index: {}]
  %s4 = inlined_call_operand.vmem [shape: bf16[343,1024], index: 4, kind: input, shape index: {}]
  %s5 = inlined_call_operand.vmem [shape: f32[1,1024], index: 5, kind: input, shape index: {}]
  %s6 = inlined_call_operand.vmem [shape: f32[1,1024], index: 6, kind: input, shape index: {}]
  %s7 = inlined_call_operand.vmem [shape: bf16[256,1024], index: 7, kind: input, shape index: {}]
  %s8 = inlined_call_operand.vmem [shape: bf16[256,1024], index: 8, kind: input, shape index: {}]
  %s9 = inlined_call_operand.vmem [shape: f32[8,512], index: 9, kind: output, shape index: {}]
  %s10 = sld [smem:[#allocation0]]
  $region53: #{_run_model.2} parent=0
    _
  %s12 = ssub.s32 1, %s10
  %s13 = scalar_select 0, %s12, %s10
  // Predicated region
  $region2: #{_run_model.2} parent=0 // pred_check
    _
  $region3: #{_run_model.2} parent=0 // pred_check_branch
    %15 = sbr.rel (0) target = $region5
  $region4: #{_run_model.2} parent=0 // pred_region
    _
  $region5: #{_run_model.2} parent=0 // pred_fallthru
    _
  // Predicated region
  $region6: #{_run_model.2} parent=0 // pred_check
    _
  $region7: #{_run_model.2} parent=0 // pred_check_branch
    %17 = sbr.rel (0) target = $region9
  $region8: #{_run_model.2} parent=0 // pred_region
    _
  $region9: #{_run_model.2} parent=0 // pred_fallthru
    _
  // Predicated region
  $region10: #{_run_model.2} parent=0 // pred_check
    _
  $region11: #{_run_model.2} parent=0 // pred_check_branch
    %19 = sbr.rel (0) target = $region13
  $region12: #{_run_model.2} parent=0 // pred_region
    _
  $region13: #{_run_model.2} parent=0 // pred_fallthru
    _
  // Predicated region
  $region14: #{_run_model.2} parent=0 // pred_check
    _
  $region15: #{_run_model.2} parent=0 // pred_check_branch
    %21 = sbr.rel (0) target = $region17
  $region16: #{_run_model.2} parent=0 // pred_region
    _
  $region17: #{_run_model.2} parent=0 // pred_fallthru
    _
  // Predicated region
  $region18: #{_run_model.2} parent=0 // pred_check
    _
  $region19: #{_run_model.2} parent=0 // pred_check_branch
    %23 = sbr.rel (0) target = $region21
  $region20: #{_run_model.2} parent=0 // pred_region
    _
  $region21: #{_run_model.2} parent=0 // pred_fallthru
    _
  // Predicated region
  $region22: #{_run_model.2} parent=0 // pred_check
    _
  $region23: #{_run_model.2} parent=0 // pred_check_branch
    %25 = sbr.rel (0) target = $region25
  $region24: #{_run_model.2} parent=0 // pred_region
    _
  $region25: #{_run_model.2} parent=0 // pred_fallthru
    _
  // Predicated region
  $region26: #{_run_model.2} parent=0 // pred_check
    _
  $region27: #{_run_model.2} parent=0 // pred_check_branch
    %27 = sbr.rel (0) target = $region29
  $region28: #{_run_model.2} parent=0 // pred_region
    _
  $region29: #{_run_model.2} parent=0 // pred_fallthru
    _
  // Predicated region
  $region30: #{_run_model.2} parent=0 // pred_check
    _
  $region31: #{_run_model.2} parent=0 // pred_check_branch
    %29 = sbr.rel (0) target = $region33
  $region32: #{_run_model.2} parent=0 // pred_region
    _
  $region33: #{_run_model.2} parent=0 // pred_fallthru
    _
  // Predicated region
  $region34: #{_run_model.2} parent=0 // pred_check
    _
  $region35: #{_run_model.2} parent=0 // pred_check_branch
    %31 = sbr.rel (0) target = $region37
  $region36: #{_run_model.2} parent=0 // pred_region
    _
  $region37: #{_run_model.2} parent=0 // pred_fallthru
    _
  %v33 = vld [vmem:[%s1] sm:$0xff]
  %v34 = vld [vmem:[%s1 + $0x8] sm:$0xf]
  %v35 = vld [vmem:[%s1 + $0xc] sm:$0xff]
  %v36 = vld [vmem:[%s1 + $0x14] sm:$0xf]
  %v37 = vld [vmem:[%s1 + $0x18] sm:$0xff]
  %v38 = vld [vmem:[%s1 + $0x20] sm:$0xf]
  %v39 = vld [vmem:[%s1 + $0x24] sm:$0xff]
  %v40 = vld [vmem:[%s1 + $0x2c] sm:$0xf]
  %v41 = vld [vmem:[%s1 + $0x30] sm:$0xff]
  %v42 = vld [vmem:[%s1 + $0x38] sm:$0xf]
  %v43 = vld [vmem:[%s1 + $0x3c] sm:$0xff]
  %v44 = vld [vmem:[%s1 + $0x44] sm:$0xf]
  %v45 = vld [vmem:[%s1 + $0x48] sm:$0xff]
  %v46 = vld [vmem:[%s1 + $0x50] sm:$0xf]
  %v47 = vld [vmem:[%s1 + $0x54] sm:$0xff]
  %v48 = vld [vmem:[%s1 + $0x5c] sm:$0xf]
  %v49 = vld [vmem:[%s3] sm:$0xff]
  %v50 = vld [vmem:[%s3 + $0x8] sm:$0xff]
  %v51 = vld [vmem:[%s3 + $0x10] sm:$0xff]
  %v52 = vld [vmem:[%s3 + $0x18] sm:$0xff]
  %v53 = vld [vmem:[%s3 + $0x20] sm:$0xff]
  %v54 = vld [vmem:[%s3 + $0x28] sm:$0xff]
  %v55 = vld [vmem:[%s3 + $0x30] sm:$0xff]
  %v56 = vld [vmem:[%s3 + $0x38] sm:$0xff]
  %v57 = vld [vmem:[%s3 + $0x40] sm:$0xff]
  %v58 = vld [vmem:[%s3 + $0x48] sm:$0xff]
  %v59 = vld [vmem:[%s3 + $0x50] sm:$0xff]
  %v60 = vld [vmem:[%s3 + $0x58] sm:$0xff]
  %v61 = vld [vmem:[%s3 + $0x60] sm:$0xff]
  %v62 = vld [vmem:[%s3 + $0x68] sm:$0xff]
  %v63 = vld [vmem:[%s3 + $0x70] sm:$0xff]
  %v64 = vld [vmem:[%s3 + $0x78] sm:$0xff]
  %v65 = vld [vmem:[%s3 + $0x80] sm:$0xff]
  %v66 = vld [vmem:[%s3 + $0x88] sm:$0xff]
  %v67 = vld [vmem:[%s3 + $0x90] sm:$0xff]
  %v68 = vld [vmem:[%s3 + $0x98] sm:$0xff]
  %v69 = vld [vmem:[%s3 + $0xa0] sm:$0xff]
  %v70 = vld [vmem:[%s3 + $0xa8] sm:$0xff]
  %v71 = vld [vmem:[%s3 + $0xb0] sm:$0xff]
  %v72 = vld [vmem:[%s3 + $0xb8] sm:$0xff]
  %v73 = vld [vmem:[%s3 + $0xc0] sm:$0xff]
  %v74 = vld [vmem:[%s3 + $0xc8] sm:$0xff]
  %v75 = vld [vmem:[%s3 + $0xd0] sm:$0xff]
  %v76 = vld [vmem:[%s3 + $0xd8] sm:$0xff]
  %v77 = vld [vmem:[%s3 + $0xe0] sm:$0xff]
  %v78 = vld [vmem:[%s3 + $0xe8] sm:$0xff]
  %v79 = vld [vmem:[%s3 + $0xf0] sm:$0xff]
  %v80 = vld [vmem:[%s3 + $0xf8] sm:$0xff]
  %v81 = vld [vmem:[%s3 + $0x100] sm:$0xff]
  %v82 = vld [vmem:[%s3 + $0x108] sm:$0xff]
  %v83 = vld [vmem:[%s3 + $0x110] sm:$0xff]
  %v84 = vld [vmem:[%s3 + $0x118] sm:$0xff]
  %v85 = vld [vmem:[%s3 + $0x120] sm:$0xff]
  %v86 = vld [vmem:[%s3 + $0x128] sm:$0xff]
  %v87 = vld [vmem:[%s3 + $0x130] sm:$0xff]
  %v88 = vld [vmem:[%s3 + $0x138] sm:$0xff]
  %v89 = vld [vmem:[%s3 + $0x140] sm:$0xff]
  %v90 = vld [vmem:[%s3 + $0x148] sm:$0xff]
  %v91 = vld [vmem:[%s3 + $0x150] sm:$0xff]
  %v92 = vld [vmem:[%s3 + $0x158] sm:$0xff]
  %v93 = vld [vmem:[%s3 + $0x160] sm:$0xff]
  %v94 = vld [vmem:[%s3 + $0x168] sm:$0xff]
  %v95 = vld [vmem:[%s3 + $0x170] sm:$0xff]
  %v96 = vld [vmem:[%s3 + $0x178] sm:$0xff]
  %v97 = vld [vmem:[%s3 + $0x180] sm:$0xff]
  %v98 = vld [vmem:[%s3 + $0x188] sm:$0xff]
  %v99 = vld [vmem:[%s3 + $0x190] sm:$0xff]
  %v100 = vld [vmem:[%s3 + $0x198] sm:$0xff]
  %v101 = vld [vmem:[%s3 + $0x1a0] sm:$0xff]
  %v102 = vld [vmem:[%s3 + $0x1a8] sm:$0xff]
  %v103 = vld [vmem:[%s3 + $0x1b0] sm:$0xff]
  %v104 = vld [vmem:[%s3 + $0x1b8] sm:$0xff]
  %v105 = vld [vmem:[%s3 + $0x1c0] sm:$0xff]
  %v106 = vld [vmem:[%s3 + $0x1c8] sm:$0xff]
  %v107 = vld [vmem:[%s3 + $0x1d0] sm:$0xff]
  %v108 = vld [vmem:[%s3 + $0x1d8] sm:$0xff]
  %v109 = vld [vmem:[%s3 + $0x1e0] sm:$0xff]
  %v110 = vld [vmem:[%s3 + $0x1e8] sm:$0xff]
  %v111 = vld [vmem:[%s3 + $0x1f0] sm:$0xff]
  %v112 = vld [vmem:[%s3 + $0x1f8] sm:$0xff]
  %v113 = vld [vmem:[%s3 + $0x200] sm:$0xff]
  %v114 = vld [vmem:[%s3 + $0x208] sm:$0xff]
  %v115 = vld [vmem:[%s3 + $0x210] sm:$0xff]
  %v116 = vld [vmem:[%s3 + $0x218] sm:$0xff]
  %v117 = vld [vmem:[%s3 + $0x220] sm:$0xff]
  %v118 = vld [vmem:[%s3 + $0x228] sm:$0xff]
  %v119 = vld [vmem:[%s3 + $0x230] sm:$0xff]
  %v120 = vld [vmem:[%s3 + $0x238] sm:$0xff]
  %v121 = vld [vmem:[%s3 + $0x240] sm:$0xff]
  %v122 = vld [vmem:[%s3 + $0x248] sm:$0xff]
  %v123 = vld [vmem:[%s3 + $0x250] sm:$0xff]
  %v124 = vld [vmem:[%s3 + $0x258] sm:$0xff]
  %v125 = vld [vmem:[%s3 + $0x260] sm:$0xff]
  %v126 = vld [vmem:[%s3 + $0x268] sm:$0xff]
  %v127 = vld [vmem:[%s3 + $0x270] sm:$0xff]
  %v128 = vld [vmem:[%s3 + $0x278] sm:$0xff]
  %v129 = vld [vmem:[%s3 + $0x280] sm:$0xff]
  %v130 = vld [vmem:[%s3 + $0x288] sm:$0xff]
  %v131 = vld [vmem:[%s3 + $0x290] sm:$0xff]
  %v132 = vld [vmem:[%s3 + $0x298] sm:$0xff]
  %v133 = vld [vmem:[%s3 + $0x2a0] sm:$0xff]
  %v134 = vld [vmem:[%s3 + $0x2a8] sm:$0xff]
  %v135 = vld [vmem:[%s3 + $0x2b0] sm:$0xff]
  %v136 = vld [vmem:[%s3 + $0x2b8] sm:$0xff]
  %v137 = vld [vmem:[%s3 + $0x2c0] sm:$0xff]
  %v138 = vld [vmem:[%s3 + $0x2c8] sm:$0xff]
  %v139 = vld [vmem:[%s3 + $0x2d0] sm:$0xff]
  %v140 = vld [vmem:[%s3 + $0x2d8] sm:$0xff]
  %v141 = vld [vmem:[%s3 + $0x2e0] sm:$0xff]
  %v142 = vld [vmem:[%s3 + $0x2e8] sm:$0xff]
  %v143 = vld [vmem:[%s3 + $0x2f0] sm:$0xff]
  %v144 = vld [vmem:[%s3 + $0x2f8] sm:$0xff]
  %v145 = vld [vmem:[%s3 + $0x300] sm:$0xff]
  %v146 = vld [vmem:[%s3 + $0x308] sm:$0xff]
  %v147 = vld [vmem:[%s3 + $0x310] sm:$0xff]
  %v148 = vld [vmem:[%s3 + $0x318] sm:$0xff]
  %v149 = vld [vmem:[%s3 + $0x320] sm:$0xff]
  %v150 = vld [vmem:[%s3 + $0x328] sm:$0xff]
  %v151 = vld [vmem:[%s3 + $0x330] sm:$0xff]
  %v152 = vld [vmem:[%s3 + $0x338] sm:$0xff]
  %v153 = vld [vmem:[%s3 + $0x340] sm:$0xff]
  %v154 = vld [vmem:[%s3 + $0x348] sm:$0xff]
  %v155 = vld [vmem:[%s3 + $0x350] sm:$0xff]
  %v156 = vld [vmem:[%s3 + $0x358] sm:$0xff]
  %v157 = vld [vmem:[%s3 + $0x360] sm:$0xff]
  %v158 = vld [vmem:[%s3 + $0x368] sm:$0xff]
  %v159 = vld [vmem:[%s3 + $0x370] sm:$0xff]
  %v160 = vld [vmem:[%s3 + $0x378] sm:$0xff]
  %v161 = vld [vmem:[%s3 + $0x380] sm:$0xff]
  %v162 = vld [vmem:[%s3 + $0x388] sm:$0xff]
  %v163 = vld [vmem:[%s3 + $0x390] sm:$0xff]
  %v164 = vld [vmem:[%s3 + $0x398] sm:$0xff]
  %v165 = vld [vmem:[%s3 + $0x3a0] sm:$0xff]
  %v166 = vld [vmem:[%s3 + $0x3a8] sm:$0xff]
  %v167 = vld [vmem:[%s3 + $0x3b0] sm:$0xff]
  %v168 = vld [vmem:[%s3 + $0x3b8] sm:$0xff]
  %v169 = vld [vmem:[%s3 + $0x3c0] sm:$0xff]
  %v170 = vld [vmem:[%s3 + $0x3c8] sm:$0xff]
  %v171 = vld [vmem:[%s3 + $0x3d0] sm:$0xff]
  %v172 = vld [vmem:[%s3 + $0x3d8] sm:$0xff]
  %v173 = vld [vmem:[%s3 + $0x3e0] sm:$0xff]
  %v174 = vld [vmem:[%s3 + $0x3e8] sm:$0xff]
  %v175 = vld [vmem:[%s3 + $0x3f0] sm:$0xff]
  %v176 = vld [vmem:[%s3 + $0x3f8] sm:$0xff]
  %v177 = vld [vmem:[%s3 + $0x400] sm:$0xff]
  %v178 = vld [vmem:[%s3 + $0x408] sm:$0xff]
  %v179 = vld [vmem:[%s3 + $0x410] sm:$0xff]
  %v180 = vld [vmem:[%s3 + $0x418] sm:$0xff]
  %v181 = vld [vmem:[%s3 + $0x420] sm:$0xff]
  %v182 = vld [vmem:[%s3 + $0x428] sm:$0xff]
  %v183 = vld [vmem:[%s3 + $0x430] sm:$0xff]
  %v184 = vld [vmem:[%s3 + $0x438] sm:$0xff]
  %v185 = vld [vmem:[%s3 + $0x440] sm:$0xff]
  %v186 = vld [vmem:[%s3 + $0x448] sm:$0xff]
  %v187 = vld [vmem:[%s3 + $0x450] sm:$0xff]
  %v188 = vld [vmem:[%s3 + $0x458] sm:$0xff]
  %v189 = vld [vmem:[%s3 + $0x460] sm:$0xff]
  %v190 = vld [vmem:[%s3 + $0x468] sm:$0xff]
  %v191 = vld [vmem:[%s3 + $0x470] sm:$0xff]
  %v192 = vld [vmem:[%s3 + $0x478] sm:$0xff]
  %v193 = vld [vmem:[%s3 + $0x480] sm:$0xff]
  %v194 = vld [vmem:[%s3 + $0x488] sm:$0xff]
  %v195 = vld [vmem:[%s3 + $0x490] sm:$0xff]
  %v196 = vld [vmem:[%s3 + $0x498] sm:$0xff]
  %v197 = vld [vmem:[%s3 + $0x4a0] sm:$0xff]
  %v198 = vld [vmem:[%s3 + $0x4a8] sm:$0xff]
  %v199 = vld [vmem:[%s3 + $0x4b0] sm:$0xff]
  %v200 = vld [vmem:[%s3 + $0x4b8] sm:$0xff]
  %v201 = vld [vmem:[%s3 + $0x4c0] sm:$0xff]
  %v202 = vld [vmem:[%s3 + $0x4c8] sm:$0xff]
  %v203 = vld [vmem:[%s3 + $0x4d0] sm:$0xff]
  %v204 = vld [vmem:[%s3 + $0x4d8] sm:$0xff]
  %v205 = vld [vmem:[%s3 + $0x4e0] sm:$0xff]
  %v206 = vld [vmem:[%s3 + $0x4e8] sm:$0xff]
  %v207 = vld [vmem:[%s3 + $0x4f0] sm:$0xff]
  %v208 = vld [vmem:[%s3 + $0x4f8] sm:$0xff]
  %v209 = vld [vmem:[%s3 + $0x500] sm:$0xff]
  %v210 = vld [vmem:[%s3 + $0x508] sm:$0xff]
  %v211 = vld [vmem:[%s3 + $0x510] sm:$0xff]
  %v212 = vld [vmem:[%s3 + $0x518] sm:$0xff]
  %v213 = vld [vmem:[%s3 + $0x520] sm:$0xff]
  %v214 = vld [vmem:[%s3 + $0x528] sm:$0xff]
  %v215 = vld [vmem:[%s3 + $0x530] sm:$0xff]
  %v216 = vld [vmem:[%s3 + $0x538] sm:$0xff]
  %v217 = vld [vmem:[%s3 + $0x540] sm:$0xff]
  %v218 = vld [vmem:[%s3 + $0x548] sm:$0xff]
  %v219 = vld [vmem:[%s3 + $0x550] sm:$0xff]
  %v220 = vld [vmem:[%s3 + $0x558] sm:$0xff]
  %v221 = vld [vmem:[%s5] sm:$0xff]
  %v223 = vlaneseq
  %v224 = vshrl.u32 %v223, 7
  %v225 = vsub.s32 0, %v224
  %v226 = vrot.slane %v221, %v225
  %v227 = vlaneseq
  %v228 = vshrl.u32 %v227, 7
  %v229 = vsub.s32 1, %v228
  %v230 = vrot.slane %v221, %v229
  %v231 = vlaneseq
  %v232 = vshrl.u32 %v231, 7
  %v233 = vsub.s32 2, %v232
  %v234 = vrot.slane %v221, %v233
  %v235 = vlaneseq
  %v236 = vshrl.u32 %v235, 7
  %v237 = vsub.s32 3, %v236
  %v238 = vrot.slane %v221, %v237
  %v239 = vlaneseq
  %v240 = vshrl.u32 %v239, 7
  %v241 = vsub.s32 4, %v240
  %v242 = vrot.slane %v221, %v241
  %v243 = vlaneseq
  %v244 = vshrl.u32 %v243, 7
  %v245 = vsub.s32 5, %v244
  %v246 = vrot.slane %v221, %v245
  %v247 = vlaneseq
  %v248 = vshrl.u32 %v247, 7
  %v249 = vsub.s32 6, %v248
  %v250 = vrot.slane %v221, %v249
  %v251 = vlaneseq
  %v252 = vshrl.u32 %v251, 7
  %v253 = vsub.s32 7, %v252
  %v254 = vrot.slane %v221, %v253
  %v279 = vunpack.c.l.b16 %v33
  %v280 = vunpack.c.h.b16 %v33
  %v281 = vunpack.c.l.b16 %v34
  %v282 = vunpack.c.l.b16 %v35
  %v283 = vunpack.c.h.b16 %v35
  %v284 = vunpack.c.l.b16 %v36
  %v285 = vunpack.c.l.b16 %v37
  %v286 = vunpack.c.h.b16 %v37
  %v287 = vunpack.c.l.b16 %v38
  %v288 = vunpack.c.l.b16 %v39
  %v289 = vunpack.c.h.b16 %v39
  %v290 = vunpack.c.l.b16 %v40
  %v291 = vunpack.c.l.b16 %v41
  %v292 = vunpack.c.h.b16 %v41
  %v293 = vunpack.c.l.b16 %v42
  %v294 = vunpack.c.l.b16 %v43
  %v295 = vunpack.c.h.b16 %v43
  %v296 = vunpack.c.l.b16 %v44
  %v297 = vunpack.c.l.b16 %v45
  %v298 = vunpack.c.h.b16 %v45
  %v299 = vunpack.c.l.b16 %v46
  %v300 = vunpack.c.l.b16 %v47
  %v301 = vunpack.c.h.b16 %v47
  %v302 = vunpack.c.l.b16 %v48
  %v303 = vpack.c.b16 %v282, %v279
  %v304 = vpack.c.b16 %v283, %v280
  %v305 = vpack.c.b16 %v284, %v281
  %v306 = vpack.c.b16 %v288, %v285
  %v307 = vpack.c.b16 %v289, %v286
  %v308 = vpack.c.b16 %v290, %v287
  %v309 = vpack.c.b16 %v294, %v291
  %v310 = vpack.c.b16 %v295, %v292
  %v311 = vpack.c.b16 %v296, %v293
  %v312 = vpack.c.b16 %v300, %v297
  %v313 = vpack.c.b16 %v301, %v298
  %v314 = vpack.c.b16 %v302, %v299
  %v495 = vunpack.c.l.b16 %v49
  %v496 = vunpack.c.h.b16 %v49
  %v497 = vunpack.c.l.b16 %v50
  %v498 = vunpack.c.h.b16 %v50
  %v499 = vunpack.c.l.b16 %v51
  %v500 = vunpack.c.h.b16 %v51
  %v501 = vunpack.c.l.b16 %v52
  %v502 = vunpack.c.h.b16 %v52
  %v503 = vunpack.c.l.b16 %v53
  %v504 = vunpack.c.h.b16 %v53
  %v505 = vunpack.c.l.b16 %v54
  %v506 = vunpack.c.h.b16 %v54
  %v507 = vunpack.c.l.b16 %v55
  %v508 = vunpack.c.h.b16 %v55
  %v509 = vunpack.c.l.b16 %v56
  %v510 = vunpack.c.h.b16 %v56
  %v511 = vunpack.c.l.b16 %v57
  %v512 = vunpack.c.h.b16 %v57
  %v513 = vunpack.c.l.b16 %v58
  %v514 = vunpack.c.h.b16 %v58
  %v515 = vunpack.c.l.b16 %v59
  %v516 = vunpack.c.h.b16 %v59
  %v517 = vunpack.c.l.b16 %v60
  %v518 = vunpack.c.h.b16 %v60
  %v519 = vunpack.c.l.b16 %v61
  %v520 = vunpack.c.h.b16 %v61
  %v521 = vunpack.c.l.b16 %v62
  %v522 = vunpack.c.h.b16 %v62
  %v523 = vunpack.c.l.b16 %v63
  %v524 = vunpack.c.h.b16 %v63
  %v525 = vunpack.c.l.b16 %v64
  %v526 = vunpack.c.h.b16 %v64
  %v527 = vunpack.c.l.b16 %v65
  %v528 = vunpack.c.h.b16 %v65
  %v529 = vunpack.c.l.b16 %v66
  %v530 = vunpack.c.h.b16 %v66
  %v531 = vunpack.c.l.b16 %v67
  %v532 = vunpack.c.h.b16 %v67
  %v533 = vunpack.c.l.b16 %v68
  %v534 = vunpack.c.h.b16 %v68
  %v535 = vunpack.c.l.b16 %v69
  %v536 = vunpack.c.h.b16 %v69
  %v537 = vunpack.c.l.b16 %v70
  %v538 = vunpack.c.h.b16 %v70
  %v539 = vunpack.c.l.b16 %v71
  %v540 = vunpack.c.h.b16 %v71
  %v541 = vunpack.c.l.b16 %v72
  %v542 = vunpack.c.h.b16 %v72
  %v543 = vunpack.c.l.b16 %v73
  %v544 = vunpack.c.h.b16 %v73
  %v545 = vunpack.c.l.b16 %v74
  %v546 = vunpack.c.h.b16 %v74
  %v547 = vunpack.c.l.b16 %v75
  %v548 = vunpack.c.h.b16 %v75
  %v549 = vunpack.c.l.b16 %v76
  %v550 = vunpack.c.h.b16 %v76
  %v551 = vunpack.c.l.b16 %v77
  %v552 = vunpack.c.h.b16 %v77
  %v553 = vunpack.c.l.b16 %v78
  %v554 = vunpack.c.h.b16 %v78
  %v555 = vunpack.c.l.b16 %v79
  %v556 = vunpack.c.h.b16 %v79
  %v557 = vunpack.c.l.b16 %v80
  %v558 = vunpack.c.h.b16 %v80
  %v559 = vunpack.c.l.b16 %v81
  %v560 = vunpack.c.h.b16 %v81
  %v561 = vunpack.c.l.b16 %v82
  %v562 = vunpack.c.h.b16 %v82
  %v563 = vunpack.c.l.b16 %v83
  %v564 = vunpack.c.h.b16 %v83
  %v565 = vunpack.c.l.b16 %v84
  %v566 = vunpack.c.h.b16 %v84
  %v567 = vunpack.c.l.b16 %v85
  %v568 = vunpack.c.h.b16 %v85
  %v569 = vunpack.c.l.b16 %v86
  %v570 = vunpack.c.h.b16 %v86
  %v571 = vunpack.c.l.b16 %v87
  %v572 = vunpack.c.h.b16 %v87
  %v573 = vunpack.c.l.b16 %v88
  %v574 = vunpack.c.h.b16 %v88
  %v575 = vunpack.c.l.b16 %v89
  %v576 = vunpack.c.h.b16 %v89
  %v577 = vunpack.c.l.b16 %v90
  %v578 = vunpack.c.h.b16 %v90
  %v579 = vunpack.c.l.b16 %v91
  %v580 = vunpack.c.h.b16 %v91
  %v581 = vunpack.c.l.b16 %v92
  %v582 = vunpack.c.h.b16 %v92
  %v583 = vunpack.c.l.b16 %v93
  %v584 = vunpack.c.h.b16 %v93
  %v585 = vunpack.c.l.b16 %v94
  %v586 = vunpack.c.h.b16 %v94
  %v587 = vunpack.c.l.b16 %v95
  %v588 = vunpack.c.h.b16 %v95
  %v589 = vunpack.c.l.b16 %v96
  %v590 = vunpack.c.h.b16 %v96
  %v591 = vunpack.c.l.b16 %v97
  %v592 = vunpack.c.h.b16 %v97
  %v593 = vunpack.c.l.b16 %v98
  %v594 = vunpack.c.h.b16 %v98
  %v595 = vunpack.c.l.b16 %v99
  %v596 = vunpack.c.h.b16 %v99
  %v597 = vunpack.c.l.b16 %v100
  %v598 = vunpack.c.h.b16 %v100
  %v599 = vunpack.c.l.b16 %v101
  %v600 = vunpack.c.h.b16 %v101
  %v601 = vunpack.c.l.b16 %v102
  %v602 = vunpack.c.h.b16 %v102
  %v603 = vunpack.c.l.b16 %v103
  %v604 = vunpack.c.h.b16 %v103
  %v605 = vunpack.c.l.b16 %v104
  %v606 = vunpack.c.h.b16 %v104
  %v607 = vunpack.c.l.b16 %v105
  %v608 = vunpack.c.h.b16 %v105
  %v609 = vunpack.c.l.b16 %v106
  %v610 = vunpack.c.h.b16 %v106
  %v611 = vunpack.c.l.b16 %v107
  %v612 = vunpack.c.h.b16 %v107
  %v613 = vunpack.c.l.b16 %v108
  %v614 = vunpack.c.h.b16 %v108
  %v615 = vunpack.c.l.b16 %v109
  %v616 = vunpack.c.h.b16 %v109
  %v617 = vunpack.c.l.b16 %v110
  %v618 = vunpack.c.h.b16 %v110
  %v619 = vunpack.c.l.b16 %v111
  %v620 = vunpack.c.h.b16 %v111
  %v621 = vunpack.c.l.b16 %v112
  %v622 = vunpack.c.h.b16 %v112
  %v623 = vunpack.c.l.b16 %v113
  %v624 = vunpack.c.h.b16 %v113
  %v625 = vunpack.c.l.b16 %v114
  %v626 = vunpack.c.h.b16 %v114
  %v627 = vunpack.c.l.b16 %v115
  %v628 = vunpack.c.h.b16 %v115
  %v629 = vunpack.c.l.b16 %v116
  %v630 = vunpack.c.h.b16 %v116
  %v631 = vunpack.c.l.b16 %v117
  %v632 = vunpack.c.h.b16 %v117
  %v633 = vunpack.c.l.b16 %v118
  %v634 = vunpack.c.h.b16 %v118
  %v635 = vunpack.c.l.b16 %v119
  %v636 = vunpack.c.h.b16 %v119
  %v637 = vunpack.c.l.b16 %v120
  %v638 = vunpack.c.h.b16 %v120
  %v639 = vunpack.c.l.b16 %v121
  %v640 = vunpack.c.h.b16 %v121
  %v641 = vunpack.c.l.b16 %v122
  %v642 = vunpack.c.h.b16 %v122
  %v643 = vunpack.c.l.b16 %v123
  %v644 = vunpack.c.h.b16 %v123
  %v645 = vunpack.c.l.b16 %v124
  %v646 = vunpack.c.h.b16 %v124
  %v647 = vunpack.c.l.b16 %v125
  %v648 = vunpack.c.h.b16 %v125
  %v649 = vunpack.c.l.b16 %v126
  %v650 = vunpack.c.h.b16 %v126
  %v651 = vunpack.c.l.b16 %v127
  %v652 = vunpack.c.h.b16 %v127
  %v653 = vunpack.c.l.b16 %v128
  %v654 = vunpack.c.h.b16 %v128
  %v655 = vunpack.c.l.b16 %v129
  %v656 = vunpack.c.h.b16 %v129
  %v657 = vunpack.c.l.b16 %v130
  %v658 = vunpack.c.h.b16 %v130
  %v659 = vunpack.c.l.b16 %v131
  %v660 = vunpack.c.h.b16 %v131
  %v661 = vunpack.c.l.b16 %v132
  %v662 = vunpack.c.h.b16 %v132
  %v663 = vunpack.c.l.b16 %v133
  %v664 = vunpack.c.h.b16 %v133
  %v665 = vunpack.c.l.b16 %v134
  %v666 = vunpack.c.h.b16 %v134
  %v667 = vunpack.c.l.b16 %v135
  %v668 = vunpack.c.h.b16 %v135
  %v669 = vunpack.c.l.b16 %v136
  %v670 = vunpack.c.h.b16 %v136
  %v671 = vunpack.c.l.b16 %v137
  %v672 = vunpack.c.h.b16 %v137
  %v673 = vunpack.c.l.b16 %v138
  %v674 = vunpack.c.h.b16 %v138
  %v675 = vunpack.c.l.b16 %v139
  %v676 = vunpack.c.h.b16 %v139
  %v677 = vunpack.c.l.b16 %v140
  %v678 = vunpack.c.h.b16 %v140
  %v679 = vunpack.c.l.b16 %v141
  %v680 = vunpack.c.h.b16 %v141
  %v681 = vunpack.c.l.b16 %v142
  %v682 = vunpack.c.h.b16 %v142
  %v683 = vunpack.c.l.b16 %v143
  %v684 = vunpack.c.h.b16 %v143
  %v685 = vunpack.c.l.b16 %v144
  %v686 = vunpack.c.h.b16 %v144
  %v687 = vunpack.c.l.b16 %v145
  %v688 = vunpack.c.h.b16 %v145
  %v689 = vunpack.c.l.b16 %v146
  %v690 = vunpack.c.h.b16 %v146
  %v691 = vunpack.c.l.b16 %v147
  %v692 = vunpack.c.h.b16 %v147
  %v693 = vunpack.c.l.b16 %v148
  %v694 = vunpack.c.h.b16 %v148
  %v695 = vunpack.c.l.b16 %v149
  %v696 = vunpack.c.h.b16 %v149
  %v697 = vunpack.c.l.b16 %v150
  %v698 = vunpack.c.h.b16 %v150
  %v699 = vunpack.c.l.b16 %v151
  %v700 = vunpack.c.h.b16 %v151
  %v701 = vunpack.c.l.b16 %v152
  %v702 = vunpack.c.h.b16 %v152
  %v703 = vunpack.c.l.b16 %v153
  %v704 = vunpack.c.h.b16 %v153
  %v705 = vunpack.c.l.b16 %v154
  %v706 = vunpack.c.h.b16 %v154
  %v707 = vunpack.c.l.b16 %v155
  %v708 = vunpack.c.h.b16 %v155
  %v709 = vunpack.c.l.b16 %v156
  %v710 = vunpack.c.h.b16 %v156
  %v711 = vunpack.c.l.b16 %v157
  %v712 = vunpack.c.h.b16 %v157
  %v713 = vunpack.c.l.b16 %v158
  %v714 = vunpack.c.h.b16 %v158
  %v715 = vunpack.c.l.b16 %v159
  %v716 = vunpack.c.h.b16 %v159
  %v717 = vunpack.c.l.b16 %v160
  %v718 = vunpack.c.h.b16 %v160
  %v719 = vunpack.c.l.b16 %v161
  %v720 = vunpack.c.h.b16 %v161
  %v721 = vunpack.c.l.b16 %v162
  %v722 = vunpack.c.h.b16 %v162
  %v723 = vunpack.c.l.b16 %v163
  %v724 = vunpack.c.h.b16 %v163
  %v725 = vunpack.c.l.b16 %v164
  %v726 = vunpack.c.h.b16 %v164
  %v727 = vunpack.c.l.b16 %v165
  %v728 = vunpack.c.h.b16 %v165
  %v729 = vunpack.c.l.b16 %v166
  %v730 = vunpack.c.h.b16 %v166
  %v731 = vunpack.c.l.b16 %v167
  %v732 = vunpack.c.h.b16 %v167
  %v733 = vunpack.c.l.b16 %v168
  %v734 = vunpack.c.h.b16 %v168
  %v735 = vunpack.c.l.b16 %v169
  %v736 = vunpack.c.h.b16 %v169
  %v737 = vunpack.c.l.b16 %v170
  %v738 = vunpack.c.h.b16 %v170
  %v739 = vunpack.c.l.b16 %v171
  %v740 = vunpack.c.h.b16 %v171
  %v741 = vunpack.c.l.b16 %v172
  %v742 = vunpack.c.h.b16 %v172
  %v743 = vunpack.c.l.b16 %v173
  %v744 = vunpack.c.h.b16 %v173
  %v745 = vunpack.c.l.b16 %v174
  %v746 = vunpack.c.h.b16 %v174
  %v747 = vunpack.c.l.b16 %v175
  %v748 = vunpack.c.h.b16 %v175
  %v749 = vunpack.c.l.b16 %v176
  %v750 = vunpack.c.h.b16 %v176
  %v751 = vunpack.c.l.b16 %v177
  %v752 = vunpack.c.h.b16 %v177
  %v753 = vunpack.c.l.b16 %v178
  %v754 = vunpack.c.h.b16 %v178
  %v755 = vunpack.c.l.b16 %v179
  %v756 = vunpack.c.h.b16 %v179
  %v757 = vunpack.c.l.b16 %v180
  %v758 = vunpack.c.h.b16 %v180
  %v759 = vunpack.c.l.b16 %v181
  %v760 = vunpack.c.h.b16 %v181
  %v761 = vunpack.c.l.b16 %v182
  %v762 = vunpack.c.h.b16 %v182
  %v763 = vunpack.c.l.b16 %v183
  %v764 = vunpack.c.h.b16 %v183
  %v765 = vunpack.c.l.b16 %v184
  %v766 = vunpack.c.h.b16 %v184
  %v767 = vunpack.c.l.b16 %v185
  %v768 = vunpack.c.h.b16 %v185
  %v769 = vunpack.c.l.b16 %v186
  %v770 = vunpack.c.h.b16 %v186
  %v771 = vunpack.c.l.b16 %v187
  %v772 = vunpack.c.h.b16 %v187
  %v773 = vunpack.c.l.b16 %v188
  %v774 = vunpack.c.h.b16 %v188
  %v775 = vunpack.c.l.b16 %v189
  %v776 = vunpack.c.h.b16 %v189
  %v777 = vunpack.c.l.b16 %v190
  %v778 = vunpack.c.h.b16 %v190
  %v779 = vunpack.c.l.b16 %v191
  %v780 = vunpack.c.h.b16 %v191
  %v781 = vunpack.c.l.b16 %v192
  %v782 = vunpack.c.h.b16 %v192
  %v783 = vunpack.c.l.b16 %v193
  %v784 = vunpack.c.h.b16 %v193
  %v785 = vunpack.c.l.b16 %v194
  %v786 = vunpack.c.h.b16 %v194
  %v787 = vunpack.c.l.b16 %v195
  %v788 = vunpack.c.h.b16 %v195
  %v789 = vunpack.c.l.b16 %v196
  %v790 = vunpack.c.h.b16 %v196
  %v791 = vunpack.c.l.b16 %v197
  %v792 = vunpack.c.h.b16 %v197
  %v793 = vunpack.c.l.b16 %v198
  %v794 = vunpack.c.h.b16 %v198
  %v795 = vunpack.c.l.b16 %v199
  %v796 = vunpack.c.h.b16 %v199
  %v797 = vunpack.c.l.b16 %v200
  %v798 = vunpack.c.h.b16 %v200
  %v799 = vunpack.c.l.b16 %v201
  %v800 = vunpack.c.h.b16 %v201
  %v801 = vunpack.c.l.b16 %v202
  %v802 = vunpack.c.h.b16 %v202
  %v803 = vunpack.c.l.b16 %v203
  %v804 = vunpack.c.h.b16 %v203
  %v805 = vunpack.c.l.b16 %v204
  %v806 = vunpack.c.h.b16 %v204
  %v807 = vunpack.c.l.b16 %v205
  %v808 = vunpack.c.h.b16 %v205
  %v809 = vunpack.c.l.b16 %v206
  %v810 = vunpack.c.h.b16 %v206
  %v811 = vunpack.c.l.b16 %v207
  %v812 = vunpack.c.h.b16 %v207
  %v813 = vunpack.c.l.b16 %v208
  %v814 = vunpack.c.h.b16 %v208
  %v815 = vunpack.c.l.b16 %v209
  %v816 = vunpack.c.h.b16 %v209
  %v817 = vunpack.c.l.b16 %v210
  %v818 = vunpack.c.h.b16 %v210
  %v819 = vunpack.c.l.b16 %v211
  %v820 = vunpack.c.h.b16 %v211
  %v821 = vunpack.c.l.b16 %v212
  %v822 = vunpack.c.h.b16 %v212
  %v823 = vunpack.c.l.b16 %v213
  %v824 = vunpack.c.h.b16 %v213
  %v825 = vunpack.c.l.b16 %v214
  %v826 = vunpack.c.h.b16 %v214
  %v827 = vunpack.c.l.b16 %v215
  %v828 = vunpack.c.h.b16 %v215
  %v829 = vunpack.c.l.b16 %v216
  %v830 = vunpack.c.h.b16 %v216
  %v831 = vunpack.c.l.b16 %v217
  %v832 = vunpack.c.h.b16 %v217
  %v833 = vunpack.c.l.b16 %v218
  %v834 = vunpack.c.h.b16 %v218
  %v835 = vunpack.c.l.b16 %v219
  %v836 = vunpack.c.h.b16 %v219
  %v837 = vunpack.c.l.b16 %v220
  %v838 = vunpack.c.h.b16 %v220
  %v839 = vpack.c.b16 %v503, %v495
  %v840 = vpack.c.b16 %v504, %v496
  %v841 = vpack.c.b16 %v505, %v497
  %v842 = vpack.c.b16 %v506, %v498
  %v843 = vpack.c.b16 %v507, %v499
  %v844 = vpack.c.b16 %v508, %v500
  %v845 = vpack.c.b16 %v509, %v501
  %v846 = vpack.c.b16 %v510, %v502
  %v847 = vpack.c.b16 %v519, %v511
  %v848 = vpack.c.b16 %v520, %v512
  %v849 = vpack.c.b16 %v521, %v513
  %v850 = vpack.c.b16 %v522, %v514
  %v851 = vpack.c.b16 %v523, %v515
  %v852 = vpack.c.b16 %v524, %v516
  %v853 = vpack.c.b16 %v525, %v517
  %v854 = vpack.c.b16 %v526, %v518
  %v855 = vpack.c.b16 %v535, %v527
  %v856 = vpack.c.b16 %v536, %v528
  %v857 = vpack.c.b16 %v537, %v529
  %v858 = vpack.c.b16 %v538, %v530
  %v859 = vpack.c.b16 %v539, %v531
  %v860 = vpack.c.b16 %v540, %v532
  %v861 = vpack.c.b16 %v541, %v533
  %v862 = vpack.c.b16 %v542, %v534
  %v863 = vpack.c.b16 %v551, %v543
  %v864 = vpack.c.b16 %v552, %v544
  %v865 = vpack.c.b16 %v553, %v545
  %v866 = vpack.c.b16 %v554, %v546
  %v867 = vpack.c.b16 %v555, %v547
  %v868 = vpack.c.b16 %v556, %v548
  %v869 = vpack.c.b16 %v557, %v549
  %v870 = vpack.c.b16 %v558, %v550
  %v871 = vpack.c.b16 %v567, %v559
  %v872 = vpack.c.b16 %v568, %v560
  %v873 = vpack.c.b16 %v569, %v561
  %v874 = vpack.c.b16 %v570, %v562
  %v875 = vpack.c.b16 %v571, %v563
  %v876 = vpack.c.b16 %v572, %v564
  %v877 = vpack.c.b16 %v573, %v565
  %v878 = vpack.c.b16 %v574, %v566
  %v879 = vpack.c.b16 %v583, %v575
  %v880 = vpack.c.b16 %v584, %v576
  %v881 = vpack.c.b16 %v585, %v577
  %v882 = vpack.c.b16 %v586, %v578
  %v883 = vpack.c.b16 %v587, %v579
  %v884 = vpack.c.b16 %v588, %v580
  %v885 = vpack.c.b16 %v589, %v581
  %v886 = vpack.c.b16 %v590, %v582
  %v887 = vpack.c.b16 %v599, %v591
  %v888 = vpack.c.b16 %v600, %v592
  %v889 = vpack.c.b16 %v601, %v593
  %v890 = vpack.c.b16 %v602, %v594
  %v891 = vpack.c.b16 %v603, %v595
  %v892 = vpack.c.b16 %v604, %v596
  %v893 = vpack.c.b16 %v605, %v597
  %v894 = vpack.c.b16 %v606, %v598
  %v895 = vpack.c.b16 %v615, %v607
  %v896 = vpack.c.b16 %v616, %v608
  %v897 = vpack.c.b16 %v617, %v609
  %v898 = vpack.c.b16 %v618, %v610
  %v899 = vpack.c.b16 %v619, %v611
  %v900 = vpack.c.b16 %v620, %v612
  %v901 = vpack.c.b16 %v621, %v613
  %v902 = vpack.c.b16 %v622, %v614
  %v903 = vpack.c.b16 %v631, %v623
  %v904 = vpack.c.b16 %v632, %v624
  %v905 = vpack.c.b16 %v633, %v625
  %v906 = vpack.c.b16 %v634, %v626
  %v907 = vpack.c.b16 %v635, %v627
  %v908 = vpack.c.b16 %v636, %v628
  %v909 = vpack.c.b16 %v637, %v629
  %v910 = vpack.c.b16 %v638, %v630
  %v911 = vpack.c.b16 %v647, %v639
  %v912 = vpack.c.b16 %v648, %v640
  %v913 = vpack.c.b16 %v649, %v641
  %v914 = vpack.c.b16 %v650, %v642
  %v915 = vpack.c.b16 %v651, %v643
  %v916 = vpack.c.b16 %v652, %v644
  %v917 = vpack.c.b16 %v653, %v645
  %v918 = vpack.c.b16 %v654, %v646
  %v919 = vpack.c.b16 %v663, %v655
  %v920 = vpack.c.b16 %v664, %v656
  %v921 = vpack.c.b16 %v665, %v657
  %v922 = vpack.c.b16 %v666, %v658
  %v923 = vpack.c.b16 %v667, %v659
  %v924 = vpack.c.b16 %v668, %v660
  %v925 = vpack.c.b16 %v669, %v661
  %v926 = vpack.c.b16 %v670, %v662
  %v927 = vpack.c.b16 %v679, %v671
  %v928 = vpack.c.b16 %v680, %v672
  %v929 = vpack.c.b16 %v681, %v673
  %v930 = vpack.c.b16 %v682, %v674
  %v931 = vpack.c.b16 %v683, %v675
  %v932 = vpack.c.b16 %v684, %v676
  %v933 = vpack.c.b16 %v685, %v677
  %v934 = vpack.c.b16 %v686, %v678
  %v935 = vpack.c.b16 %v695, %v687
  %v936 = vpack.c.b16 %v696, %v688
  %v937 = vpack.c.b16 %v697, %v689
  %v938 = vpack.c.b16 %v698, %v690
  %v939 = vpack.c.b16 %v699, %v691
  %v940 = vpack.c.b16 %v700, %v692
  %v941 = vpack.c.b16 %v701, %v693
  %v942 = vpack.c.b16 %v702, %v694
  %v943 = vpack.c.b16 %v711, %v703
  %v944 = vpack.c.b16 %v712, %v704
  %v945 = vpack.c.b16 %v713, %v705
  %v946 = vpack.c.b16 %v714, %v706
  %v947 = vpack.c.b16 %v715, %v707
  %v948 = vpack.c.b16 %v716, %v708
  %v949 = vpack.c.b16 %v717, %v709
  %v950 = vpack.c.b16 %v718, %v710
  %v951 = vpack.c.b16 %v727, %v719
  %v952 = vpack.c.b16 %v728, %v720
  %v953 = vpack.c.b16 %v729, %v721
  %v954 = vpack.c.b16 %v730, %v722
  %v955 = vpack.c.b16 %v731, %v723
  %v956 = vpack.c.b16 %v732, %v724
  %v957 = vpack.c.b16 %v733, %v725
  %v958 = vpack.c.b16 %v734, %v726
  %v959 = vpack.c.b16 %v743, %v735
  %v960 = vpack.c.b16 %v744, %v736
  %v961 = vpack.c.b16 %v745, %v737
  %v962 = vpack.c.b16 %v746, %v738
  %v963 = vpack.c.b16 %v747, %v739
  %v964 = vpack.c.b16 %v748, %v740
  %v965 = vpack.c.b16 %v749, %v741
  %v966 = vpack.c.b16 %v750, %v742
  %v967 = vpack.c.b16 %v759, %v751
  %v968 = vpack.c.b16 %v760, %v752
  %v969 = vpack.c.b16 %v761, %v753
  %v970 = vpack.c.b16 %v762, %v754
  %v971 = vpack.c.b16 %v763, %v755
  %v972 = vpack.c.b16 %v764, %v756
  %v973 = vpack.c.b16 %v765, %v757
  %v974 = vpack.c.b16 %v766, %v758
  %v975 = vpack.c.b16 %v775, %v767
  %v976 = vpack.c.b16 %v776, %v768
  %v977 = vpack.c.b16 %v777, %v769
  %v978 = vpack.c.b16 %v778, %v770
  %v979 = vpack.c.b16 %v779, %v771
  %v980 = vpack.c.b16 %v780, %v772
  %v981 = vpack.c.b16 %v781, %v773
  %v982 = vpack.c.b16 %v782, %v774
  %v983 = vpack.c.b16 %v791, %v783
  %v984 = vpack.c.b16 %v792, %v784
  %v985 = vpack.c.b16 %v793, %v785
  %v986 = vpack.c.b16 %v794, %v786
  %v987 = vpack.c.b16 %v795, %v787
  %v988 = vpack.c.b16 %v796, %v788
  %v989 = vpack.c.b16 %v797, %v789
  %v990 = vpack.c.b16 %v798, %v790
  %v991 = vpack.c.b16 %v807, %v799
  %v992 = vpack.c.b16 %v808, %v800
  %v993 = vpack.c.b16 %v809, %v801
  %v994 = vpack.c.b16 %v810, %v802
  %v995 = vpack.c.b16 %v811, %v803
  %v996 = vpack.c.b16 %v812, %v804
  %v997 = vpack.c.b16 %v813, %v805
  %v998 = vpack.c.b16 %v814, %v806
  %v999 = vpack.c.b16 %v823, %v815
  %v1000 = vpack.c.b16 %v824, %v816
  %v1001 = vpack.c.b16 %v825, %v817
  %v1002 = vpack.c.b16 %v826, %v818
  %v1003 = vpack.c.b16 %v827, %v819
  %v1004 = vpack.c.b16 %v828, %v820
  %v1005 = vpack.c.b16 %v829, %v821
  %v1006 = vpack.c.b16 %v830, %v822
  %v1007 = vpack.c.b16 %v831, %v831
  %v1008 = vpack.c.b16 %v832, %v832
  %v1009 = vpack.c.b16 %v833, %v833
  %v1010 = vpack.c.b16 %v834, %v834
  %v1011 = vpack.c.b16 %v835, %v835
  %v1012 = vpack.c.b16 %v836, %v836
  %v1013 = vpack.c.b16 %v837, %v837
  %v1014 = vpack.c.b16 %v838, %v838
  %vm1183 = vcmask 711680
  %v1185 = vsel %vm1183, %v305, 0
  %v1188 = vsel %vm1183, %v308, 0
  %v1191 = vsel %vm1183, %v311, 0
  %v1194 = vsel %vm1183, %v314, 0
  %vm1196 = vcmask 1042432
  %vm1197 = vcmask 1043456
  %v1198 = vsel %vm1196, 4294967295, 65535
  %v1199 = vsel %vm1197, %v1198, 0
  %v1201 = vand.u32 %v1007, %v1199
  %v1204 = vand.u32 %v1008, %v1199
  %v1207 = vand.u32 %v1009, %v1199
  %v1210 = vand.u32 %v1010, %v1199
  %v1213 = vand.u32 %v1011, %v1199
  %v1216 = vand.u32 %v1012, %v1199
  %v1219 = vand.u32 %v1013, %v1199
  %v1222 = vand.u32 %v1014, %v1199
  %1224 = vmatprep.subr.bf16.mxu0 %v840
  %1225 = vmatpush1.bf16.msra.mxu0 %v839
  %1226 = vmatprep.subr.bf16.mxu0 %v848
  %1227 = vmatpush1.bf16.msra.mxu0 %v847
  %1228 = vmatprep.subr.bf16.mxu0 %v856
  %1229 = vmatpush1.bf16.msra.mxu0 %v855
  %1230 = vmatprep.subr.bf16.mxu0 %v864
  %1231 = vmatpush1.bf16.msra.mxu0 %v863
  %1232 = vmatprep.subr.bf16.mxu0 %v872
  %1233 = vmatpush1.bf16.msra.mxu0 %v871
  %1234 = vmatprep.subr.bf16.mxu0 %v880
  %1235 = vmatpush1.bf16.msra.mxu0 %v879
  %1236 = vmatprep.subr.bf16.mxu0 %v888
  %1237 = vmatpush1.bf16.msra.mxu0 %v887
  %1238 = vmatprep.subr.bf16.mxu0 %v896
  %1239 = vmatpush1.bf16.msra.mxu0 %v895
  %1240 = vmatprep.subr.bf16.mxu0 %v904
  %1241 = vmatpush1.bf16.msra.mxu0 %v903
  %1242 = vmatprep.subr.bf16.mxu0 %v912
  %1243 = vmatpush1.bf16.msra.mxu0 %v911
  %1244 = vmatprep.subr.bf16.mxu0 %v920
  %1245 = vmatpush1.bf16.msra.mxu0 %v919
  %1246 = vmatprep.subr.bf16.mxu0 %v928
  %1247 = vmatpush1.bf16.msra.mxu0 %v927
  %1248 = vmatprep.subr.bf16.mxu0 %v936
  %1249 = vmatpush1.bf16.msra.mxu0 %v935
  %1250 = vmatprep.subr.bf16.mxu0 %v944
  %1251 = vmatpush1.bf16.msra.mxu0 %v943
  %1252 = vmatprep.subr.bf16.mxu0 %v952
  %1253 = vmatpush1.bf16.msra.mxu0 %v951
  %1254 = vmatprep.subr.bf16.mxu0 %v960
  %1255 = vmatpush1.bf16.msra.mxu0 %v959
  %1256 = vmatprep.mubr.bf16.mxu0 %v304
  %1257 = vmatmul.mubr.bf16.gmra.mrb[0].mxu0 %v303
  %v1258 = vpop.f32.mrb[0].mxu0
  %v1259 = vadd.f32 %v226, %v1258
  %v1260 = vpop.f32.mrb[0].mxu0
  %v1261 = vadd.f32 %v230, %v1260
  %v1262 = vpop.f32.mrb[0].mxu0
  %v1263 = vadd.f32 %v226, %v1262
  %v1264 = vpop.f32.mrb[0].mxu0
  %v1265 = vadd.f32 %v230, %v1264
  %1266 = vmatprep.mubr.bf16.mxu0 %v307
  %1267 = vmatmul.mubr.bf16.gmra.mrb[0].mxu0 %v306
  %v1268 = vpop.f32.mrb[0].mxu0
  %v1269 = vadd.f32 %v226, %v1268
  %v1270 = vpop.f32.mrb[0].mxu0
  %v1271 = vadd.f32 %v230, %v1270
  %v1272 = vpop.f32.mrb[0].mxu0
  %v1273 = vadd.f32 %v226, %v1272
  %v1274 = vpop.f32.mrb[0].mxu0
  %v1275 = vadd.f32 %v230, %v1274
  %1276 = vmatprep.mubr.bf16.mxu0 %v310
  %1277 = vmatmul.mubr.bf16.gmra.mrb[0].mxu0 %v309
  %v1278 = vpop.f32.mrb[0].mxu0
  %v1279 = vadd.f32 %v226, %v1278
  %v1280 = vpop.f32.mrb[0].mxu0
  %v1281 = vadd.f32 %v230, %v1280
  %v1282 = vpop.f32.mrb[0].mxu0
  %v1283 = vadd.f32 %v226, %v1282
  %v1284 = vpop.f32.mrb[0].mxu0
  %v1285 = vadd.f32 %v230, %v1284
  %1286 = vmatprep.mubr.bf16.mxu0 %v313
  %1287 = vmatmul.mubr.bf16.gmra.mrb[0].mxu0 %v312
  %v1288 = vpop.f32.mrb[0].mxu0
  %v1289 = vadd.f32 %v226, %v1288
  %v1290 = vpop.f32.mrb[0].mxu0
  %v1291 = vadd.f32 %v230, %v1290
  %v1292 = vpop.f32.mrb[0].mxu0
  %v1293 = vadd.f32 %v226, %v1292
  %v1294 = vpop.f32.mrb[0].mxu0
  %v1295 = vadd.f32 %v230, %v1294
  %1296 = vdwg.mxu0
  %1297 = vmatprep.subr.bf16.mxu0 %v968
  %1298 = vmatpush1.bf16.msra.mxu0 %v967
  %1299 = vmatprep.subr.bf16.mxu0 %v976
  %1300 = vmatpush1.bf16.msra.mxu0 %v975
  %1301 = vmatprep.subr.bf16.mxu0 %v984
  %1302 = vmatpush1.bf16.msra.mxu0 %v983
  %1303 = vmatprep.subr.bf16.mxu0 %v992
  %1304 = vmatpush1.bf16.msra.mxu0 %v991
  %1305 = vmatprep.subr.bf16.mxu0 %v1000
  %1306 = vmatpush1.bf16.msra.mxu0 %v999
  %1307 = vmatprep.subr.bf16.mxu0 %v1204
  %1308 = vmatpush1.bf16.msra.mxu0 %v1201
  %1309 = vmatprep.subr.bf16.mxu0 0
  %1310 = vmatpush1.bf16.msra.mxu0 0
  %1311 = vmatprep.subr.bf16.mxu0 0
  %1312 = vmatpush1.bf16.msra.mxu0 0
  %1313 = vmatprep.subr.bf16.mxu0 0
  %1314 = vmatpush1.bf16.msra.mxu0 0
  %1315 = vmatprep.subr.bf16.mxu0 0
  %1316 = vmatpush1.bf16.msra.mxu0 0
  %1317 = vmatprep.subr.bf16.mxu0 0
  %1318 = vmatpush1.bf16.msra.mxu0 0
  %1319 = vmatprep.subr.bf16.mxu0 0
  %1320 = vmatpush1.bf16.msra.mxu0 0
  %1321 = vmatprep.subr.bf16.mxu0 0
  %1322 = vmatpush1.bf16.msra.mxu0 0
  %1323 = vmatprep.subr.bf16.mxu0 0
  %1324 = vmatpush1.bf16.msra.mxu0 0
  %1325 = vmatprep.subr.bf16.mxu0 0
  %1326 = vmatpush1.bf16.msra.mxu0 0
  %1327 = vmatprep.subr.bf16.mxu0 0
  %1328 = vmatpush1.bf16.msra.mxu0 0
  %1329 = vmatprep.mubr.bf16.mxu0 0
  %1330 = vmatmul.mubr.bf16.gmra.mrb[0].mxu0 %v1185
  %v1331 = vpop.f32.mrb[0].mxu0
  %v1332 = vadd.f32 %v1259, %v1331
  %v1333 = vpop.f32.mrb[0].mxu0
  %v1334 = vadd.f32 %v1261, %v1333
  %v1335 = vpop.f32.mrb[0].mxu0
  %v1336 = vadd.f32 %v1263, %v1335
  %v1337 = vpop.f32.mrb[0].mxu0
  %v1338 = vadd.f32 %v1265, %v1337
  %1339 = vmatprep.mubr.bf16.mxu0 0
  %1340 = vmatmul.mubr.bf16.gmra.mrb[0].mxu0 %v1188
  %v1341 = vpop.f32.mrb[0].mxu0
  %v1342 = vadd.f32 %v1269, %v1341
  %v1343 = vpop.f32.mrb[0].mxu0
  %v1344 = vadd.f32 %v1271, %v1343
  %v1345 = vpop.f32.mrb[0].mxu0
  %v1346 = vadd.f32 %v1273, %v1345
  %v1347 = vpop.f32.mrb[0].mxu0
  %v1348 = vadd.f32 %v1275, %v1347
  %1349 = vmatprep.mubr.bf16.mxu0 0
  %1350 = vmatmul.mubr.bf16.gmra.mrb[0].mxu0 %v1191
  %v1351 = vpop.f32.mrb[0].mxu0
  %v1352 = vadd.f32 %v1279, %v1351
  %v1353 = vpop.f32.mrb[0].mxu0
  %v1354 = vadd.f32 %v1281, %v1353
  %v1355 = vpop.f32.mrb[0].mxu0
  %v1356 = vadd.f32 %v1283, %v1355
  %v1357 = vpop.f32.mrb[0].mxu0
  %v1358 = vadd.f32 %v1285, %v1357
  %1359 = vmatprep.mubr.bf16.mxu0 0
  %1360 = vmatmul.mubr.bf16.gmra.mrb[0].mxu0 %v1194
  %v1361 = vpop.f32.mrb[0].mxu0
  %v1362 = vadd.f32 %v1289, %v1361
  %v1363 = vpop.f32.mrb[0].mxu0
  %v1364 = vadd.f32 %v1291, %v1363
  %v1365 = vpop.f32.mrb[0].mxu0
  %v1366 = vadd.f32 %v1293, %v1365
  %v1367 = vpop.f32.mrb[0].mxu0
  %v1368 = vadd.f32 %v1295, %v1367
  %1369 = vdwg.mxu0
  %1370 = vmatprep.subr.bf16.mxu0 %v842
  %1371 = vmatpush1.bf16.msra.mxu0 %v841
  %1372 = vmatprep.subr.bf16.mxu0 %v850
  %1373 = vmatpush1.bf16.msra.mxu0 %v849
  %1374 = vmatprep.subr.bf16.mxu0 %v858
  %1375 = vmatpush1.bf16.msra.mxu0 %v857
  %1376 = vmatprep.subr.bf16.mxu0 %v866
  %1377 = vmatpush1.bf16.msra.mxu0 %v865
  %1378 = vmatprep.subr.bf16.mxu0 %v874
  %1379 = vmatpush1.bf16.msra.mxu0 %v873
  %1380 = vmatprep.subr.bf16.mxu0 %v882
  %1381 = vmatpush1.bf16.msra.mxu0 %v881
  %1382 = vmatprep.subr.bf16.mxu0 %v890
  %1383 = vmatpush1.bf16.msra.mxu0 %v889
  %1384 = vmatprep.subr.bf16.mxu0 %v898
  %1385 = vmatpush1.bf16.msra.mxu0 %v897
  %1386 = vmatprep.subr.bf16.mxu0 %v906
  %1387 = vmatpush1.bf16.msra.mxu0 %v905
  %1388 = vmatprep.subr.bf16.mxu0 %v914
  %1389 = vmatpush1.bf16.msra.mxu0 %v913
  %1390 = vmatprep.subr.bf16.mxu0 %v922
  %1391 = vmatpush1.bf16.msra.mxu0 %v921
  %1392 = vmatprep.subr.bf16.mxu0 %v930
  %1393 = vmatpush1.bf16.msra.mxu0 %v929
  %1394 = vmatprep.subr.bf16.mxu0 %v938
  %1395 = vmatpush1.bf16.msra.mxu0 %v937
  %1396 = vmatprep.subr.bf16.mxu0 %v946
  %1397 = vmatpush1.bf16.msra.mxu0 %v945
  %1398 = vmatprep.subr.bf16.mxu0 %v954
  %1399 = vmatpush1.bf16.msra.mxu0 %v953
  %1400 = vmatprep.subr.bf16.mxu0 %v962
  %1401 = vmatpush1.bf16.msra.mxu0 %v961
  %1402 = vmatprep.mubr.bf16.mxu0 %v304
  %1403 = vmatmul.mubr.bf16.gmra.mrb[0].mxu0 %v303
  %v1404 = vpop.f32.mrb[0].mxu0
  %v1405 = vadd.f32 %v234, %v1404
  %v1406 = vpop.f32.mrb[0].mxu0
  %v1407 = vadd.f32 %v238, %v1406
  %v1408 = vpop.f32.mrb[0].mxu0
  %v1409 = vadd.f32 %v234, %v1408
  %v1410 = vpop.f32.mrb[0].mxu0
  %v1411 = vadd.f32 %v238, %v1410
  %1412 = vmatprep.mubr.bf16.mxu0 %v307
  %1413 = vmatmul.mubr.bf16.gmra.mrb[0].mxu0 %v306
  %v1414 = vpop.f32.mrb[0].mxu0
  %v1415 = vadd.f32 %v234, %v1414
  %v1416 = vpop.f32.mrb[0].mxu0
  %v1417 = vadd.f32 %v238, %v1416
  %v1418 = vpop.f32.mrb[0].mxu0
  %v1419 = vadd.f32 %v234, %v1418
  %v1420 = vpop.f32.mrb[0].mxu0
  %v1421 = vadd.f32 %v238, %v1420
  %1422 = vmatprep.mubr.bf16.mxu0 %v310
  %1423 = vmatmul.mubr.bf16.gmra.mrb[0].mxu0 %v309
  %v1424 = vpop.f32.mrb[0].mxu0
  %v1425 = vadd.f32 %v234, %v1424
  %v1426 = vpop.f32.mrb[0].mxu0
  %v1427 = vadd.f32 %v238, %v1426
  %v1428 = vpop.f32.mrb[0].mxu0
  %v1429 = vadd.f32 %v234, %v1428
  %v1430 = vpop.f32.mrb[0].mxu0
  %v1431 = vadd.f32 %v238, %v1430
  %1432 = vmatprep.mubr.bf16.mxu0 %v313
  %1433 = vmatmul.mubr.bf16.gmra.mrb[0].mxu0 %v312
  %v1434 = vpop.f32.mrb[0].mxu0
  %v1435 = vadd.f32 %v234, %v1434
  %v1436 = vpop.f32.mrb[0].mxu0
  %v1437 = vadd.f32 %v238, %v1436
  %v1438 = vpop.f32.mrb[0].mxu0
  %v1439 = vadd.f32 %v234, %v1438
  %v1440 = vpop.f32.mrb[0].mxu0
  %v1441 = vadd.f32 %v238, %v1440
  %1442 = vdwg.mxu0
  %1443 = vmatprep.subr.bf16.mxu0 %v970
  %1444 = vmatpush1.bf16.msra.mxu0 %v969
  %1445 = vmatprep.subr.bf16.mxu0 %v978
  %1446 = vmatpush1.bf16.msra.mxu0 %v977
  %1447 = vmatprep.subr.bf16.mxu0 %v986
  %1448 = vmatpush1.bf16.msra.mxu0 %v985
  %1449 = vmatprep.subr.bf16.mxu0 %v994
  %1450 = vmatpush1.bf16.msra.mxu0 %v993
  %1451 = vmatprep.subr.bf16.mxu0 %v1002
  %1452 = vmatpush1.bf16.msra.mxu0 %v1001
  %1453 = vmatprep.subr.bf16.mxu0 %v1210
  %1454 = vmatpush1.bf16.msra.mxu0 %v1207
  %1455 = vmatprep.subr.bf16.mxu0 0
  %1456 = vmatpush1.bf16.msra.mxu0 0
  %1457 = vmatprep.subr.bf16.mxu0 0
  %1458 = vmatpush1.bf16.msra.mxu0 0
  %1459 = vmatprep.subr.bf16.mxu0 0
  %1460 = vmatpush1.bf16.msra.mxu0 0
  %1461 = vmatprep.subr.bf16.mxu0 0
  %1462 = vmatpush1.bf16.msra.mxu0 0
  %1463 = vmatprep.subr.bf16.mxu0 0
  %1464 = vmatpush1.bf16.msra.mxu0 0
  %1465 = vmatprep.subr.bf16.mxu0 0
  %1466 = vmatpush1.bf16.msra.mxu0 0
  %1467 = vmatprep.subr.bf16.mxu0 0
  %1468 = vmatpush1.bf16.msra.mxu0 0
  %1469 = vmatprep.subr.bf16.mxu0 0
  %1470 = vmatpush1.bf16.msra.mxu0 0
  %1471 = vmatprep.subr.bf16.mxu0 0
  %1472 = vmatpush1.bf16.msra.mxu0 0
  %1473 = vmatprep.subr.bf16.mxu0 0
  %1474 = vmatpush1.bf16.msra.mxu0 0
  %1475 = vmatprep.mubr.bf16.mxu0 0
  %1476 = vmatmul.mubr.bf16.gmra.mrb[0].mxu0 %v1185
  %v1477 = vpop.f32.mrb[0].mxu0
  %v1478 = vadd.f32 %v1405, %v1477
  %v1479 = vpop.f32.mrb[0].mxu0
  %v1480 = vadd.f32 %v1407, %v1479
  %v1481 = vpop.f32.mrb[0].mxu0
  %v1482 = vadd.f32 %v1409, %v1481
  %v1483 = vpop.f32.mrb[0].mxu0
  %v1484 = vadd.f32 %v1411, %v1483
  %1485 = vmatprep.mubr.bf16.mxu0 0
  %1486 = vmatmul.mubr.bf16.gmra.mrb[0].mxu0 %v1188
  %v1487 = vpop.f32.mrb[0].mxu0
  %v1488 = vadd.f32 %v1415, %v1487
  %v1489 = vpop.f32.mrb[0].mxu0
  %v1490 = vadd.f32 %v1417, %v1489
  %v1491 = vpop.f32.mrb[0].mxu0
  %v1492 = vadd.f32 %v1419, %v1491
  %v1493 = vpop.f32.mrb[0].mxu0
  %v1494 = vadd.f32 %v1421, %v1493
  %1495 = vmatprep.mubr.bf16.mxu0 0
  %1496 = vmatmul.mubr.bf16.gmra.mrb[0].mxu0 %v1191
  %v1497 = vpop.f32.mrb[0].mxu0
  %v1498 = vadd.f32 %v1425, %v1497
  %v1499 = vpop.f32.mrb[0].mxu0
  %v1500 = vadd.f32 %v1427, %v1499
  %v1501 = vpop.f32.mrb[0].mxu0
  %v1502 = vadd.f32 %v1429, %v1501
  %v1503 = vpop.f32.mrb[0].mxu0
  %v1504 = vadd.f32 %v1431, %v1503
  %1505 = vmatprep.mubr.bf16.mxu0 0
  %1506 = vmatmul.mubr.bf16.gmra.mrb[0].mxu0 %v1194
  %v1507 = vpop.f32.mrb[0].mxu0
  %v1508 = vadd.f32 %v1435, %v1507
  %v1509 = vpop.f32.mrb[0].mxu0
  %v1510 = vadd.f32 %v1437, %v1509
  %v1511 = vpop.f32.mrb[0].mxu0
  %v1512 = vadd.f32 %v1439, %v1511
  %v1513 = vpop.f32.mrb[0].mxu0
  %v1514 = vadd.f32 %v1441, %v1513
  %1515 = vdwg.mxu0
  %1516 = vmatprep.subr.bf16.mxu0 %v844
  %1517 = vmatpush1.bf16.msra.mxu0 %v843
  %1518 = vmatprep.subr.bf16.mxu0 %v852
  %1519 = vmatpush1.bf16.msra.mxu0 %v851
  %1520 = vmatprep.subr.bf16.mxu0 %v860
  %1521 = vmatpush1.bf16.msra.mxu0 %v859
  %1522 = vmatprep.subr.bf16.mxu0 %v868
  %1523 = vmatpush1.bf16.msra.mxu0 %v867
  %1524 = vmatprep.subr.bf16.mxu0 %v876
  %1525 = vmatpush1.bf16.msra.mxu0 %v875
  %1526 = vmatprep.subr.bf16.mxu0 %v884
  %1527 = vmatpush1.bf16.msra.mxu0 %v883
  %1528 = vmatprep.subr.bf16.mxu0 %v892
  %1529 = vmatpush1.bf16.msra.mxu0 %v891
  %1530 = vmatprep.subr.bf16.mxu0 %v900
  %1531 = vmatpush1.bf16.msra.mxu0 %v899
  %1532 = vmatprep.subr.bf16.mxu0 %v908
  %1533 = vmatpush1.bf16.msra.mxu0 %v907
  %1534 = vmatprep.subr.bf16.mxu0 %v916
  %1535 = vmatpush1.bf16.msra.mxu0 %v915
  %1536 = vmatprep.subr.bf16.mxu0 %v924
  %1537 = vmatpush1.bf16.msra.mxu0 %v923
  %1538 = vmatprep.subr.bf16.mxu0 %v932
  %1539 = vmatpush1.bf16.msra.mxu0 %v931
  %1540 = vmatprep.subr.bf16.mxu0 %v940
  %1541 = vmatpush1.bf16.msra.mxu0 %v939
  %1542 = vmatprep.subr.bf16.mxu0 %v948
  %1543 = vmatpush1.bf16.msra.mxu0 %v947
  %1544 = vmatprep.subr.bf16.mxu0 %v956
  %1545 = vmatpush1.bf16.msra.mxu0 %v955
  %1546 = vmatprep.subr.bf16.mxu0 %v964
  %1547 = vmatpush1.bf16.msra.mxu0 %v963
  %1548 = vmatprep.mubr.bf16.mxu0 %v304
  %1549 = vmatmul.mubr.bf16.gmra.mrb[0].mxu0 %v303
  %v1550 = vpop.f32.mrb[0].mxu0
  %v1551 = vadd.f32 %v242, %v1550
  %v1552 = vpop.f32.mrb[0].mxu0
  %v1553 = vadd.f32 %v246, %v1552
  %v1554 = vpop.f32.mrb[0].mxu0
  %v1555 = vadd.f32 %v242, %v1554
  %v1556 = vpop.f32.mrb[0].mxu0
  %v1557 = vadd.f32 %v246, %v1556
  %1558 = vmatprep.mubr.bf16.mxu0 %v307
  %1559 = vmatmul.mubr.bf16.gmra.mrb[0].mxu0 %v306
  %v1560 = vpop.f32.mrb[0].mxu0
  %v1561 = vadd.f32 %v242, %v1560
  %v1562 = vpop.f32.mrb[0].mxu0
  %v1563 = vadd.f32 %v246, %v1562
  %v1564 = vpop.f32.mrb[0].mxu0
  %v1565 = vadd.f32 %v242, %v1564
  %v1566 = vpop.f32.mrb[0].mxu0
  %v1567 = vadd.f32 %v246, %v1566
  %1568 = vmatprep.mubr.bf16.mxu0 %v310
  %1569 = vmatmul.mubr.bf16.gmra.mrb[0].mxu0 %v309
  %v1570 = vpop.f32.mrb[0].mxu0
  %v1571 = vadd.f32 %v242, %v1570
  %v1572 = vpop.f32.mrb[0].mxu0
  %v1573 = vadd.f32 %v246, %v1572
  %v1574 = vpop.f32.mrb[0].mxu0
  %v1575 = vadd.f32 %v242, %v1574
  %v1576 = vpop.f32.mrb[0].mxu0
  %v1577 = vadd.f32 %v246, %v1576
  %1578 = vmatprep.mubr.bf16.mxu0 %v313
  %1579 = vmatmul.mubr.bf16.gmra.mrb[0].mxu0 %v312
  %v1580 = vpop.f32.mrb[0].mxu0
  %v1581 = vadd.f32 %v242, %v1580
  %v1582 = vpop.f32.mrb[0].mxu0
  %v1583 = vadd.f32 %v246, %v1582
  %v1584 = vpop.f32.mrb[0].mxu0
  %v1585 = vadd.f32 %v242, %v1584
  %v1586 = vpop.f32.mrb[0].mxu0
  %v1587 = vadd.f32 %v246, %v1586
  %1588 = vdwg.mxu0
  %1589 = vmatprep.subr.bf16.mxu0 %v972
  %1590 = vmatpush1.bf16.msra.mxu0 %v971
  %1591 = vmatprep.subr.bf16.mxu0 %v980
  %1592 = vmatpush1.bf16.msra.mxu0 %v979
  %1593 = vmatprep.subr.bf16.mxu0 %v988
  %1594 = vmatpush1.bf16.msra.mxu0 %v987
  %1595 = vmatprep.subr.bf16.mxu0 %v996
  %1596 = vmatpush1.bf16.msra.mxu0 %v995
  %1597 = vmatprep.subr.bf16.mxu0 %v1004
  %1598 = vmatpush1.bf16.msra.mxu0 %v1003
  %1599 = vmatprep.subr.bf16.mxu0 %v1216
  %1600 = vmatpush1.bf16.msra.mxu0 %v1213
  %1601 = vmatprep.subr.bf16.mxu0 0
  %1602 = vmatpush1.bf16.msra.mxu0 0
  %1603 = vmatprep.subr.bf16.mxu0 0
  %1604 = vmatpush1.bf16.msra.mxu0 0
  %1605 = vmatprep.subr.bf16.mxu0 0
  %1606 = vmatpush1.bf16.msra.mxu0 0
  %1607 = vmatprep.subr.bf16.mxu0 0
  %1608 = vmatpush1.bf16.msra.mxu0 0
  %1609 = vmatprep.subr.bf16.mxu0 0
  %1610 = vmatpush1.bf16.msra.mxu0 0
  %1611 = vmatprep.subr.bf16.mxu0 0
  %1612 = vmatpush1.bf16.msra.mxu0 0
  %1613 = vmatprep.subr.bf16.mxu0 0
  %1614 = vmatpush1.bf16.msra.mxu0 0
  %1615 = vmatprep.subr.bf16.mxu0 0
  %1616 = vmatpush1.bf16.msra.mxu0 0
  %1617 = vmatprep.subr.bf16.mxu0 0
  %1618 = vmatpush1.bf16.msra.mxu0 0
  %1619 = vmatprep.subr.bf16.mxu0 0
  %1620 = vmatpush1.bf16.msra.mxu0 0
  %1621 = vmatprep.mubr.bf16.mxu0 0
  %1622 = vmatmul.mubr.bf16.gmra.mrb[0].mxu0 %v1185
  %v1623 = vpop.f32.mrb[0].mxu0
  %v1624 = vadd.f32 %v1551, %v1623
  %v1625 = vpop.f32.mrb[0].mxu0
  %v1626 = vadd.f32 %v1553, %v1625
  %v1627 = vpop.f32.mrb[0].mxu0
  %v1628 = vadd.f32 %v1555, %v1627
  %v1629 = vpop.f32.mrb[0].mxu0
  %v1630 = vadd.f32 %v1557, %v1629
  %1631 = vmatprep.mubr.bf16.mxu0 0
  %1632 = vmatmul.mubr.bf16.gmra.mrb[0].mxu0 %v1188
  %v1633 = vpop.f32.mrb[0].mxu0
  %v1634 = vadd.f32 %v1561, %v1633
  %v1635 = vpop.f32.mrb[0].mxu0
  %v1636 = vadd.f32 %v1563, %v1635
  %v1637 = vpop.f32.mrb[0].mxu0
  %v1638 = vadd.f32 %v1565, %v1637
  %v1639 = vpop.f32.mrb[0].mxu0
  %v1640 = vadd.f32 %v1567, %v1639
  %1641 = vmatprep.mubr.bf16.mxu0 0
  %1642 = vmatmul.mubr.bf16.gmra.mrb[0].mxu0 %v1191
  %v1643 = vpop.f32.mrb[0].mxu0
  %v1644 = vadd.f32 %v1571, %v1643
  %v1645 = vpop.f32.mrb[0].mxu0
  %v1646 = vadd.f32 %v1573, %v1645
  %v1647 = vpop.f32.mrb[0].mxu0
  %v1648 = vadd.f32 %v1575, %v1647
  %v1649 = vpop.f32.mrb[0].mxu0
  %v1650 = vadd.f32 %v1577, %v1649
  %1651 = vmatprep.mubr.bf16.mxu0 0
  %1652 = vmatmul.mubr.bf16.gmra.mrb[0].mxu0 %v1194
  %v1653 = vpop.f32.mrb[0].mxu0
  %v1654 = vadd.f32 %v1581, %v1653
  %v1655 = vpop.f32.mrb[0].mxu0
  %v1656 = vadd.f32 %v1583, %v1655
  %v1657 = vpop.f32.mrb[0].mxu0
  %v1658 = vadd.f32 %v1585, %v1657
  %v1659 = vpop.f32.mrb[0].mxu0
  %v1660 = vadd.f32 %v1587, %v1659
  %1661 = vdwg.mxu0
  %1662 = vmatprep.subr.bf16.mxu0 %v846
  %1663 = vmatpush1.bf16.msra.mxu0 %v845
  %1664 = vmatprep.subr.bf16.mxu0 %v854
  %1665 = vmatpush1.bf16.msra.mxu0 %v853
  %1666 = vmatprep.subr.bf16.mxu0 %v862
  %1667 = vmatpush1.bf16.msra.mxu0 %v861
  %1668 = vmatprep.subr.bf16.mxu0 %v870
  %1669 = vmatpush1.bf16.msra.mxu0 %v869
  %1670 = vmatprep.subr.bf16.mxu0 %v878
  %1671 = vmatpush1.bf16.msra.mxu0 %v877
  %1672 = vmatprep.subr.bf16.mxu0 %v886
  %1673 = vmatpush1.bf16.msra.mxu0 %v885
  %1674 = vmatprep.subr.bf16.mxu0 %v894
  %1675 = vmatpush1.bf16.msra.mxu0 %v893
  %1676 = vmatprep.subr.bf16.mxu0 %v902
  %1677 = vmatpush1.bf16.msra.mxu0 %v901
  %1678 = vmatprep.subr.bf16.mxu0 %v910
  %1679 = vmatpush1.bf16.msra.mxu0 %v909
  %1680 = vmatprep.subr.bf16.mxu0 %v918
  %1681 = vmatpush1.bf16.msra.mxu0 %v917
  %1682 = vmatprep.subr.bf16.mxu0 %v926
  %1683 = vmatpush1.bf16.msra.mxu0 %v925
  %1684 = vmatprep.subr.bf16.mxu0 %v934
  %1685 = vmatpush1.bf16.msra.mxu0 %v933
  %1686 = vmatprep.subr.bf16.mxu0 %v942
  %1687 = vmatpush1.bf16.msra.mxu0 %v941
  %1688 = vmatprep.subr.bf16.mxu0 %v950
  %1689 = vmatpush1.bf16.msra.mxu0 %v949
  %1690 = vmatprep.subr.bf16.mxu0 %v958
  %1691 = vmatpush1.bf16.msra.mxu0 %v957
  %1692 = vmatprep.subr.bf16.mxu0 %v966
  %1693 = vmatpush1.bf16.msra.mxu0 %v965
  %1694 = vmatprep.mubr.bf16.mxu0 %v304
  %1695 = vmatmul.mubr.bf16.gmra.mrb[0].mxu0 %v303
  %v1696 = vpop.f32.mrb[0].mxu0
  %v1697 = vadd.f32 %v250, %v1696
  %v1698 = vpop.f32.mrb[0].mxu0
  %v1699 = vadd.f32 %v254, %v1698
  %v1700 = vpop.f32.mrb[0].mxu0
  %v1701 = vadd.f32 %v250, %v1700
  %v1702 = vpop.f32.mrb[0].mxu0
  %v1703 = vadd.f32 %v254, %v1702
  %1704 = vmatprep.mubr.bf16.mxu0 %v307
  %1705 = vmatmul.mubr.bf16.gmra.mrb[0].mxu0 %v306
  %v1706 = vpop.f32.mrb[0].mxu0
  %v1707 = vadd.f32 %v250, %v1706
  %v1708 = vpop.f32.mrb[0].mxu0
  %v1709 = vadd.f32 %v254, %v1708
  %v1710 = vpop.f32.mrb[0].mxu0
  %v1711 = vadd.f32 %v250, %v1710
  %v1712 = vpop.f32.mrb[0].mxu0
  %v1713 = vadd.f32 %v254, %v1712
  %1714 = vmatprep.mubr.bf16.mxu0 %v310
  %1715 = vmatmul.mubr.bf16.gmra.mrb[0].mxu0 %v309
  %v1716 = vpop.f32.mrb[0].mxu0
  %v1717 = vadd.f32 %v250, %v1716
  %v1718 = vpop.f32.mrb[0].mxu0
  %v1719 = vadd.f32 %v254, %v1718
  %v1720 = vpop.f32.mrb[0].mxu0
  %v1721 = vadd.f32 %v250, %v1720
  %v1722 = vpop.f32.mrb[0].mxu0
  %v1723 = vadd.f32 %v254, %v1722
  %1724 = vmatprep.mubr.bf16.mxu0 %v313
  %1725 = vmatmul.mubr.bf16.gmra.mrb[0].mxu0 %v312
  %v1726 = vpop.f32.mrb[0].mxu0
  %v1727 = vadd.f32 %v250, %v1726
  %v1728 = vpop.f32.mrb[0].mxu0
  %v1729 = vadd.f32 %v254, %v1728
  %v1730 = vpop.f32.mrb[0].mxu0
  %v1731 = vadd.f32 %v250, %v1730
  %v1732 = vpop.f32.mrb[0].mxu0
  %v1733 = vadd.f32 %v254, %v1732
  %1734 = vdwg.mxu0
  %1735 = vmatprep.subr.bf16.mxu0 %v974
  %1736 = vmatpush1.bf16.msra.mxu0 %v973
  %1737 = vmatprep.subr.bf16.mxu0 %v982
  %1738 = vmatpush1.bf16.msra.mxu0 %v981
  %1739 = vmatprep.subr.bf16.mxu0 %v990
  %1740 = vmatpush1.bf16.msra.mxu0 %v989
  %1741 = vmatprep.subr.bf16.mxu0 %v998
  %1742 = vmatpush1.bf16.msra.mxu0 %v997
  %1743 = vmatprep.subr.bf16.mxu0 %v1006
  %1744 = vmatpush1.bf16.msra.mxu0 %v1005
  %1745 = vmatprep.subr.bf16.mxu0 %v1222
  %1746 = vmatpush1.bf16.msra.mxu0 %v1219
  %1747 = vmatprep.subr.bf16.mxu0 0
  %1748 = vmatpush1.bf16.msra.mxu0 0
  %1749 = vmatprep.subr.bf16.mxu0 0
  %1750 = vmatpush1.bf16.msra.mxu0 0
  %1751 = vmatprep.subr.bf16.mxu0 0
  %1752 = vmatpush1.bf16.msra.mxu0 0
  %1753 = vmatprep.subr.bf16.mxu0 0
  %1754 = vmatpush1.bf16.msra.mxu0 0
  %1755 = vmatprep.subr.bf16.mxu0 0
  %1756 = vmatpush1.bf16.msra.mxu0 0
  %1757 = vmatprep.subr.bf16.mxu0 0
  %1758 = vmatpush1.bf16.msra.mxu0 0
  %1759 = vmatprep.subr.bf16.mxu0 0
  %1760 = vmatpush1.bf16.msra.mxu0 0
  %1761 = vmatprep.subr.bf16.mxu0 0
  %1762 = vmatpush1.bf16.msra.mxu0 0
  %1763 = vmatprep.subr.bf16.mxu0 0
  %1764 = vmatpush1.bf16.msra.mxu0 0
  %1765 = vmatprep.subr.bf16.mxu0 0
  %1766 = vmatpush1.bf16.msra.mxu0 0
  %1767 = vmatprep.mubr.bf16.mxu0 0
  %1768 = vmatmul.mubr.bf16.gmra.mrb[0].mxu0 %v1185
  %v1769 = vpop.f32.mrb[0].mxu0
  %v1770 = vadd.f32 %v1697, %v1769
  %v1771 = vpop.f32.mrb[0].mxu0
  %v1772 = vadd.f32 %v1699, %v1771
  %v1773 = vpop.f32.mrb[0].mxu0
  %v1774 = vadd.f32 %v1701, %v1773
  %v1775 = vpop.f32.mrb[0].mxu0
  %v1776 = vadd.f32 %v1703, %v1775
  %1777 = vmatprep.mubr.bf16.mxu0 0
  %1778 = vmatmul.mubr.bf16.gmra.mrb[0].mxu0 %v1188
  %v1779 = vpop.f32.mrb[0].mxu0
  %v1780 = vadd.f32 %v1707, %v1779
  %v1781 = vpop.f32.mrb[0].mxu0
  %v1782 = vadd.f32 %v1709, %v1781
  %v1783 = vpop.f32.mrb[0].mxu0
  %v1784 = vadd.f32 %v1711, %v1783
  %v1785 = vpop.f32.mrb[0].mxu0
  %v1786 = vadd.f32 %v1713, %v1785
  %1787 = vmatprep.mubr.bf16.mxu0 0
  %1788 = vmatmul.mubr.bf16.gmra.mrb[0].mxu0 %v1191
  %v1789 = vpop.f32.mrb[0].mxu0
  %v1790 = vadd.f32 %v1717, %v1789
  %v1791 = vpop.f32.mrb[0].mxu0
  %v1792 = vadd.f32 %v1719, %v1791
  %v1793 = vpop.f32.mrb[0].mxu0
  %v1794 = vadd.f32 %v1721, %v1793
  %v1795 = vpop.f32.mrb[0].mxu0
  %v1796 = vadd.f32 %v1723, %v1795
  %1797 = vmatprep.mubr.bf16.mxu0 0
  %1798 = vmatmul.mubr.bf16.gmra.mrb[0].mxu0 %v1194
  %v1799 = vpop.f32.mrb[0].mxu0
  %v1800 = vadd.f32 %v1727, %v1799
  %v1801 = vpop.f32.mrb[0].mxu0
  %v1802 = vadd.f32 %v1729, %v1801
  %v1803 = vpop.f32.mrb[0].mxu0
  %v1804 = vadd.f32 %v1731, %v1803
  %v1805 = vpop.f32.mrb[0].mxu0
  %v1806 = vadd.f32 %v1733, %v1805
  %1807 = vdwg.mxu0
  %v1808 = vld [vmem:[%s2] sm:$0xff]
  %v1809 = vld [vmem:[%s2 + $0x8] sm:$0xf]
  %v1810 = vld [vmem:[%s2 + $0xc] sm:$0xff]
  %v1811 = vld [vmem:[%s2 + $0x14] sm:$0xf]
  %v1812 = vld [vmem:[%s2 + $0x18] sm:$0xff]
  %v1813 = vld [vmem:[%s2 + $0x20] sm:$0xf]
  %v1814 = vld [vmem:[%s2 + $0x24] sm:$0xff]
  %v1815 = vld [vmem:[%s2 + $0x2c] sm:$0xf]
  %v1816 = vld [vmem:[%s2 + $0x30] sm:$0xff]
  %v1817 = vld [vmem:[%s2 + $0x38] sm:$0xf]
  %v1818 = vld [vmem:[%s2 + $0x3c] sm:$0xff]
  %v1819 = vld [vmem:[%s2 + $0x44] sm:$0xf]
  %v1820 = vld [vmem:[%s2 + $0x48] sm:$0xff]
  %v1821 = vld [vmem:[%s2 + $0x50] sm:$0xf]
  %v1822 = vld [vmem:[%s2 + $0x54] sm:$0xff]
  %v1823 = vld [vmem:[%s2 + $0x5c] sm:$0xf]
  %v1824 = vld [vmem:[%s4] sm:$0xff]
  %v1825 = vld [vmem:[%s4 + $0x8] sm:$0xff]
  %v1826 = vld [vmem:[%s4 + $0x10] sm:$0xff]
  %v1827 = vld [vmem:[%s4 + $0x18] sm:$0xff]
  %v1828 = vld [vmem:[%s4 + $0x20] sm:$0xff]
  %v1829 = vld [vmem:[%s4 + $0x28] sm:$0xff]
  %v1830 = vld [vmem:[%s4 + $0x30] sm:$0xff]
  %v1831 = vld [vmem:[%s4 + $0x38] sm:$0xff]
  %v1832 = vld [vmem:[%s4 + $0x40] sm:$0xff]
  %v1833 = vld [vmem:[%s4 + $0x48] sm:$0xff]
  %v1834 = vld [vmem:[%s4 + $0x50] sm:$0xff]
  %v1835 = vld [vmem:[%s4 + $0x58] sm:$0xff]
  %v1836 = vld [vmem:[%s4 + $0x60] sm:$0xff]
  %v1837 = vld [vmem:[%s4 + $0x68] sm:$0xff]
  %v1838 = vld [vmem:[%s4 + $0x70] sm:$0xff]
  %v1839 = vld [vmem:[%s4 + $0x78] sm:$0xff]
  %v1840 = vld [vmem:[%s4 + $0x80] sm:$0xff]
  %v1841 = vld [vmem:[%s4 + $0x88] sm:$0xff]
  %v1842 = vld [vmem:[%s4 + $0x90] sm:$0xff]
  %v1843 = vld [vmem:[%s4 + $0x98] sm:$0xff]
  %v1844 = vld [vmem:[%s4 + $0xa0] sm:$0xff]
  %v1845 = vld [vmem:[%s4 + $0xa8] sm:$0xff]
  %v1846 = vld [vmem:[%s4 + $0xb0] sm:$0xff]
  %v1847 = vld [vmem:[%s4 + $0xb8] sm:$0xff]
  %v1848 = vld [vmem:[%s4 + $0xc0] sm:$0xff]
  %v1849 = vld [vmem:[%s4 + $0xc8] sm:$0xff]
  %v1850 = vld [vmem:[%s4 + $0xd0] sm:$0xff]
  %v1851 = vld [vmem:[%s4 + $0xd8] sm:$0xff]
  %v1852 = vld [vmem:[%s4 + $0xe0] sm:$0xff]
  %v1853 = vld [vmem:[%s4 + $0xe8] sm:$0xff]
  %v1854 = vld [vmem:[%s4 + $0xf0] sm:$0xff]
  %v1855 = vld [vmem:[%s4 + $0xf8] sm:$0xff]
  %v1856 = vld [vmem:[%s4 + $0x100] sm:$0xff]
  %v1857 = vld [vmem:[%s4 + $0x108] sm:$0xff]
  %v1858 = vld [vmem:[%s4 + $0x110] sm:$0xff]
  %v1859 = vld [vmem:[%s4 + $0x118] sm:$0xff]
  %v1860 = vld [vmem:[%s4 + $0x120] sm:$0xff]
  %v1861 = vld [vmem:[%s4 + $0x128] sm:$0xff]
  %v1862 = vld [vmem:[%s4 + $0x130] sm:$0xff]
  %v1863 = vld [vmem:[%s4 + $0x138] sm:$0xff]
  %v1864 = vld [vmem:[%s4 + $0x140] sm:$0xff]
  %v1865 = vld [vmem:[%s4 + $0x148] sm:$0xff]
  %v1866 = vld [vmem:[%s4 + $0x150] sm:$0xff]
  %v1867 = vld [vmem:[%s4 + $0x158] sm:$0xff]
  %v1868 = vld [vmem:[%s4 + $0x160] sm:$0xff]
  %v1869 = vld [vmem:[%s4 + $0x168] sm:$0xff]
  %v1870 = vld [vmem:[%s4 + $0x170] sm:$0xff]
  %v1871 = vld [vmem:[%s4 + $0x178] sm:$0xff]
  %v1872 = vld [vmem:[%s4 + $0x180] sm:$0xff]
  %v1873 = vld [vmem:[%s4 + $0x188] sm:$0xff]
  %v1874 = vld [vmem:[%s4 + $0x190] sm:$0xff]
  %v1875 = vld [vmem:[%s4 + $0x198] sm:$0xff]
  %v1876 = vld [vmem:[%s4 + $0x1a0] sm:$0xff]
  %v1877 = vld [vmem:[%s4 + $0x1a8] sm:$0xff]
  %v1878 = vld [vmem:[%s4 + $0x1b0] sm:$0xff]
  %v1879 = vld [vmem:[%s4 + $0x1b8] sm:$0xff]
  %v1880 = vld [vmem:[%s4 + $0x1c0] sm:$0xff]
  %v1881 = vld [vmem:[%s4 + $0x1c8] sm:$0xff]
  %v1882 = vld [vmem:[%s4 + $0x1d0] sm:$0xff]
  %v1883 = vld [vmem:[%s4 + $0x1d8] sm:$0xff]
  %v1884 = vld [vmem:[%s4 + $0x1e0] sm:$0xff]
  %v1885 = vld [vmem:[%s4 + $0x1e8] sm:$0xff]
  %v1886 = vld [vmem:[%s4 + $0x1f0] sm:$0xff]
  %v1887 = vld [vmem:[%s4 + $0x1f8] sm:$0xff]
  %v1888 = vld [vmem:[%s4 + $0x200] sm:$0xff]
  %v1889 = vld [vmem:[%s4 + $0x208] sm:$0xff]
  %v1890 = vld [vmem:[%s4 + $0x210] sm:$0xff]
  %v1891 = vld [vmem:[%s4 + $0x218] sm:$0xff]
  %v1892 = vld [vmem:[%s4 + $0x220] sm:$0xff]
  %v1893 = vld [vmem:[%s4 + $0x228] sm:$0xff]
  %v1894 = vld [vmem:[%s4 + $0x230] sm:$0xff]
  %v1895 = vld [vmem:[%s4 + $0x238] sm:$0xff]
  %v1896 = vld [vmem:[%s4 + $0x240] sm:$0xff]
  %v1897 = vld [vmem:[%s4 + $0x248] sm:$0xff]
  %v1898 = vld [vmem:[%s4 + $0x250] sm:$0xff]
  %v1899 = vld [vmem:[%s4 + $0x258] sm:$0xff]
  %v1900 = vld [vmem:[%s4 + $0x260] sm:$0xff]
  %v1901 = vld [vmem:[%s4 + $0x268] sm:$0xff]
  %v1902 = vld [vmem:[%s4 + $0x270] sm:$0xff]
  %v1903 = vld [vmem:[%s4 + $0x278] sm:$0xff]
  %v1904 = vld [vmem:[%s4 + $0x280] sm:$0xff]
  %v1905 = vld [vmem:[%s4 + $0x288] sm:$0xff]
  %v1906 = vld [vmem:[%s4 + $0x290] sm:$0xff]
  %v1907 = vld [vmem:[%s4 + $0x298] sm:$0xff]
  %v1908 = vld [vmem:[%s4 + $0x2a0] sm:$0xff]
  %v1909 = vld [vmem:[%s4 + $0x2a8] sm:$0xff]
  %v1910 = vld [vmem:[%s4 + $0x2b0] sm:$0xff]
  %v1911 = vld [vmem:[%s4 + $0x2b8] sm:$0xff]
  %v1912 = vld [vmem:[%s4 + $0x2c0] sm:$0xff]
  %v1913 = vld [vmem:[%s4 + $0x2c8] sm:$0xff]
  %v1914 = vld [vmem:[%s4 + $0x2d0] sm:$0xff]
  %v1915 = vld [vmem:[%s4 + $0x2d8] sm:$0xff]
  %v1916 = vld [vmem:[%s4 + $0x2e0] sm:$0xff]
  %v1917 = vld [vmem:[%s4 + $0x2e8] sm:$0xff]
  %v1918 = vld [vmem:[%s4 + $0x2f0] sm:$0xff]
  %v1919 = vld [vmem:[%s4 + $0x2f8] sm:$0xff]
  %v1920 = vld [vmem:[%s4 + $0x300] sm:$0xff]
  %v1921 = vld [vmem:[%s4 + $0x308] sm:$0xff]
  %v1922 = vld [vmem:[%s4 + $0x310] sm:$0xff]
  %v1923 = vld [vmem:[%s4 + $0x318] sm:$0xff]
  %v1924 = vld [vmem:[%s4 + $0x320] sm:$0xff]
  %v1925 = vld [vmem:[%s4 + $0x328] sm:$0xff]
  %v1926 = vld [vmem:[%s4 + $0x330] sm:$0xff]
  %v1927 = vld [vmem:[%s4 + $0x338] sm:$0xff]
  %v1928 = vld [vmem:[%s4 + $0x340] sm:$0xff]
  %v1929 = vld [vmem:[%s4 + $0x348] sm:$0xff]
  %v1930 = vld [vmem:[%s4 + $0x350] sm:$0xff]
  %v1931 = vld [vmem:[%s4 + $0x358] sm:$0xff]
  %v1932 = vld [vmem:[%s4 + $0x360] sm:$0xff]
  %v1933 = vld [vmem:[%s4 + $0x368] sm:$0xff]
  %v1934 = vld [vmem:[%s4 + $0x370] sm:$0xff]
  %v1935 = vld [vmem:[%s4 + $0x378] sm:$0xff]
  %v1936 = vld [vmem:[%s4 + $0x380] sm:$0xff]
  %v1937 = vld [vmem:[%s4 + $0x388] sm:$0xff]
  %v1938 = vld [vmem:[%s4 + $0x390] sm:$0xff]
  %v1939 = vld [vmem:[%s4 + $0x398] sm:$0xff]
  %v1940 = vld [vmem:[%s4 + $0x3a0] sm:$0xff]
  %v1941 = vld [vmem:[%s4 + $0x3a8] sm:$0xff]
  %v1942 = vld [vmem:[%s4 + $0x3b0] sm:$0xff]
  %v1943 = vld [vmem:[%s4 + $0x3b8] sm:$0xff]
  %v1944 = vld [vmem:[%s4 + $0x3c0] sm:$0xff]
  %v1945 = vld [vmem:[%s4 + $0x3c8] sm:$0xff]
  %v1946 = vld [vmem:[%s4 + $0x3d0] sm:$0xff]
  %v1947 = vld [vmem:[%s4 + $0x3d8] sm:$0xff]
  %v1948 = vld [vmem:[%s4 + $0x3e0] sm:$0xff]
  %v1949 = vld [vmem:[%s4 + $0x3e8] sm:$0xff]
  %v1950 = vld [vmem:[%s4 + $0x3f0] sm:$0xff]
  %v1951 = vld [vmem:[%s4 + $0x3f8] sm:$0xff]
  %v1952 = vld [vmem:[%s4 + $0x400] sm:$0xff]
  %v1953 = vld [vmem:[%s4 + $0x408] sm:$0xff]
  %v1954 = vld [vmem:[%s4 + $0x410] sm:$0xff]
  %v1955 = vld [vmem:[%s4 + $0x418] sm:$0xff]
  %v1956 = vld [vmem:[%s4 + $0x420] sm:$0xff]
  %v1957 = vld [vmem:[%s4 + $0x428] sm:$0xff]
  %v1958 = vld [vmem:[%s4 + $0x430] sm:$0xff]
  %v1959 = vld [vmem:[%s4 + $0x438] sm:$0xff]
  %v1960 = vld [vmem:[%s4 + $0x440] sm:$0xff]
  %v1961 = vld [vmem:[%s4 + $0x448] sm:$0xff]
  %v1962 = vld [vmem:[%s4 + $0x450] sm:$0xff]
  %v1963 = vld [vmem:[%s4 + $0x458] sm:$0xff]
  %v1964 = vld [vmem:[%s4 + $0x460] sm:$0xff]
  %v1965 = vld [vmem:[%s4 + $0x468] sm:$0xff]
  %v1966 = vld [vmem:[%s4 + $0x470] sm:$0xff]
  %v1967 = vld [vmem:[%s4 + $0x478] sm:$0xff]
  %v1968 = vld [vmem:[%s4 + $0x480] sm:$0xff]
  %v1969 = vld [vmem:[%s4 + $0x488] sm:$0xff]
  %v1970 = vld [vmem:[%s4 + $0x490] sm:$0xff]
  %v1971 = vld [vmem:[%s4 + $0x498] sm:$0xff]
  %v1972 = vld [vmem:[%s4 + $0x4a0] sm:$0xff]
  %v1973 = vld [vmem:[%s4 + $0x4a8] sm:$0xff]
  %v1974 = vld [vmem:[%s4 + $0x4b0] sm:$0xff]
  %v1975 = vld [vmem:[%s4 + $0x4b8] sm:$0xff]
  %v1976 = vld [vmem:[%s4 + $0x4c0] sm:$0xff]
  %v1977 = vld [vmem:[%s4 + $0x4c8] sm:$0xff]
  %v1978 = vld [vmem:[%s4 + $0x4d0] sm:$0xff]
  %v1979 = vld [vmem:[%s4 + $0x4d8] sm:$0xff]
  %v1980 = vld [vmem:[%s4 + $0x4e0] sm:$0xff]
  %v1981 = vld [vmem:[%s4 + $0x4e8] sm:$0xff]
  %v1982 = vld [vmem:[%s4 + $0x4f0] sm:$0xff]
  %v1983 = vld [vmem:[%s4 + $0x4f8] sm:$0xff]
  %v1984 = vld [vmem:[%s4 + $0x500] sm:$0xff]
  %v1985 = vld [vmem:[%s4 + $0x508] sm:$0xff]
  %v1986 = vld [vmem:[%s4 + $0x510] sm:$0xff]
  %v1987 = vld [vmem:[%s4 + $0x518] sm:$0xff]
  %v1988 = vld [vmem:[%s4 + $0x520] sm:$0xff]
  %v1989 = vld [vmem:[%s4 + $0x528] sm:$0xff]
  %v1990 = vld [vmem:[%s4 + $0x530] sm:$0xff]
  %v1991 = vld [vmem:[%s4 + $0x538] sm:$0xff]
  %v1992 = vld [vmem:[%s4 + $0x540] sm:$0xff]
  %v1993 = vld [vmem:[%s4 + $0x548] sm:$0xff]
  %v1994 = vld [vmem:[%s4 + $0x550] sm:$0xff]
  %v1995 = vld [vmem:[%s4 + $0x558] sm:$0xff]
  %v1996 = vld [vmem:[%s6] sm:$0xff]
  %v1998 = vlaneseq
  %v1999 = vshrl.u32 %v1998, 7
  %v2000 = vsub.s32 0, %v1999
  %v2001 = vrot.slane %v1996, %v2000
  %v2002 = vlaneseq
  %v2003 = vshrl.u32 %v2002, 7
  %v2004 = vsub.s32 1, %v2003
  %v2005 = vrot.slane %v1996, %v2004
  %v2006 = vlaneseq
  %v2007 = vshrl.u32 %v2006, 7
  %v2008 = vsub.s32 2, %v2007
  %v2009 = vrot.slane %v1996, %v2008
  %v2010 = vlaneseq
  %v2011 = vshrl.u32 %v2010, 7
  %v2012 = vsub.s32 3, %v2011
  %v2013 = vrot.slane %v1996, %v2012
  %v2014 = vlaneseq
  %v2015 = vshrl.u32 %v2014, 7
  %v2016 = vsub.s32 4, %v2015
  %v2017 = vrot.slane %v1996, %v2016
  %v2018 = vlaneseq
  %v2019 = vshrl.u32 %v2018, 7
  %v2020 = vsub.s32 5, %v2019
  %v2021 = vrot.slane %v1996, %v2020
  %v2022 = vlaneseq
  %v2023 = vshrl.u32 %v2022, 7
  %v2024 = vsub.s32 6, %v2023
  %v2025 = vrot.slane %v1996, %v2024
  %v2026 = vlaneseq
  %v2027 = vshrl.u32 %v2026, 7
  %v2028 = vsub.s32 7, %v2027
  %v2029 = vrot.slane %v1996, %v2028
  %v2054 = vunpack.c.l.b16 %v1808
  %v2055 = vunpack.c.h.b16 %v1808
  %v2056 = vunpack.c.l.b16 %v1809
  %v2057 = vunpack.c.l.b16 %v1810
  %v2058 = vunpack.c.h.b16 %v1810
  %v2059 = vunpack.c.l.b16 %v1811
  %v2060 = vunpack.c.l.b16 %v1812
  %v2061 = vunpack.c.h.b16 %v1812
  %v2062 = vunpack.c.l.b16 %v1813
  %v2063 = vunpack.c.l.b16 %v1814
  %v2064 = vunpack.c.h.b16 %v1814
  %v2065 = vunpack.c.l.b16 %v1815
  %v2066 = vunpack.c.l.b16 %v1816
  %v2067 = vunpack.c.h.b16 %v1816
  %v2068 = vunpack.c.l.b16 %v1817
  %v2069 = vunpack.c.l.b16 %v1818
  %v2070 = vunpack.c.h.b16 %v1818
  %v2071 = vunpack.c.l.b16 %v1819
  %v2072 = vunpack.c.l.b16 %v1820
  %v2073 = vunpack.c.h.b16 %v1820
  %v2074 = vunpack.c.l.b16 %v1821
  %v2075 = vunpack.c.l.b16 %v1822
  %v2076 = vunpack.c.h.b16 %v1822
  %v2077 = vunpack.c.l.b16 %v1823
  %v2078 = vpack.c.b16 %v2057, %v2054
  %v2079 = vpack.c.b16 %v2058, %v2055
  %v2080 = vpack.c.b16 %v2059, %v2056
  %v2081 = vpack.c.b16 %v2063, %v2060
  %v2082 = vpack.c.b16 %v2064, %v2061
  %v2083 = vpack.c.b16 %v2065, %v2062
  %v2084 = vpack.c.b16 %v2069, %v2066
  %v2085 = vpack.c.b16 %v2070, %v2067
  %v2086 = vpack.c.b16 %v2071, %v2068
  %v2087 = vpack.c.b16 %v2075, %v2072
  %v2088 = vpack.c.b16 %v2076, %v2073
  %v2089 = vpack.c.b16 %v2077, %v2074
  %v2270 = vunpack.c.l.b16 %v1824
  %v2271 = vunpack.c.h.b16 %v1824
  %v2272 = vunpack.c.l.b16 %v1825
  %v2273 = vunpack.c.h.b16 %v1825
  %v2274 = vunpack.c.l.b16 %v1826
  %v2275 = vunpack.c.h.b16 %v1826
  %v2276 = vunpack.c.l.b16 %v1827
  %v2277 = vunpack.c.h.b16 %v1827
  %v2278 = vunpack.c.l.b16 %v1828
  %v2279 = vunpack.c.h.b16 %v1828
  %v2280 = vunpack.c.l.b16 %v1829
  %v2281 = vunpack.c.h.b16 %v1829
  %v2282 = vunpack.c.l.b16 %v1830
  %v2283 = vunpack.c.h.b16 %v1830
  %v2284 = vunpack.c.l.b16 %v1831
  %v2285 = vunpack.c.h.b16 %v1831
  %v2286 = vunpack.c.l.b16 %v1832
  %v2287 = vunpack.c.h.b16 %v1832
  %v2288 = vunpack.c.l.b16 %v1833
  %v2289 = vunpack.c.h.b16 %v1833
  %v2290 = vunpack.c.l.b16 %v1834
  %v2291 = vunpack.c.h.b16 %v1834
  %v2292 = vunpack.c.l.b16 %v1835
  %v2293 = vunpack.c.h.b16 %v1835
  %v2294 = vunpack.c.l.b16 %v1836
  %v2295 = vunpack.c.h.b16 %v1836
  %v2296 = vunpack.c.l.b16 %v1837
  %v2297 = vunpack.c.h.b16 %v1837
  %v2298 = vunpack.c.l.b16 %v1838
  %v2299 = vunpack.c.h.b16 %v1838
  %v2300 = vunpack.c.l.b16 %v1839
  %v2301 = vunpack.c.h.b16 %v1839
  %v2302 = vunpack.c.l.b16 %v1840
  %v2303 = vunpack.c.h.b16 %v1840
  %v2304 = vunpack.c.l.b16 %v1841
  %v2305 = vunpack.c.h.b16 %v1841
  %v2306 = vunpack.c.l.b16 %v1842
  %v2307 = vunpack.c.h.b16 %v1842
  %v2308 = vunpack.c.l.b16 %v1843
  %v2309 = vunpack.c.h.b16 %v1843
  %v2310 = vunpack.c.l.b16 %v1844
  %v2311 = vunpack.c.h.b16 %v1844
  %v2312 = vunpack.c.l.b16 %v1845
  %v2313 = vunpack.c.h.b16 %v1845
  %v2314 = vunpack.c.l.b16 %v1846
  %v2315 = vunpack.c.h.b16 %v1846
  %v2316 = vunpack.c.l.b16 %v1847
  %v2317 = vunpack.c.h.b16 %v1847
  %v2318 = vunpack.c.l.b16 %v1848
  %v2319 = vunpack.c.h.b16 %v1848
  %v2320 = vunpack.c.l.b16 %v1849
  %v2321 = vunpack.c.h.b16 %v1849
  %v2322 = vunpack.c.l.b16 %v1850
  %v2323 = vunpack.c.h.b16 %v1850
  %v2324 = vunpack.c.l.b16 %v1851
  %v2325 = vunpack.c.h.b16 %v1851
  %v2326 = vunpack.c.l.b16 %v1852
  %v2327 = vunpack.c.h.b16 %v1852
  %v2328 = vunpack.c.l.b16 %v1853
  %v2329 = vunpack.c.h.b16 %v1853
  %v2330 = vunpack.c.l.b16 %v1854
  %v2331 = vunpack.c.h.b16 %v1854
  %v2332 = vunpack.c.l.b16 %v1855
  %v2333 = vunpack.c.h.b16 %v1855
  %v2334 = vunpack.c.l.b16 %v1856
  %v2335 = vunpack.c.h.b16 %v1856
  %v2336 = vunpack.c.l.b16 %v1857
  %v2337 = vunpack.c.h.b16 %v1857
  %v2338 = vunpack.c.l.b16 %v1858
  %v2339 = vunpack.c.h.b16 %v1858
  %v2340 = vunpack.c.l.b16 %v1859
  %v2341 = vunpack.c.h.b16 %v1859
  %v2342 = vunpack.c.l.b16 %v1860
  %v2343 = vunpack.c.h.b16 %v1860
  %v2344 = vunpack.c.l.b16 %v1861
  %v2345 = vunpack.c.h.b16 %v1861
  %v2346 = vunpack.c.l.b16 %v1862
  %v2347 = vunpack.c.h.b16 %v1862
  %v2348 = vunpack.c.l.b16 %v1863
  %v2349 = vunpack.c.h.b16 %v1863
  %v2350 = vunpack.c.l.b16 %v1864
  %v2351 = vunpack.c.h.b16 %v1864
  %v2352 = vunpack.c.l.b16 %v1865
  %v2353 = vunpack.c.h.b16 %v1865
  %v2354 = vunpack.c.l.b16 %v1866
  %v2355 = vunpack.c.h.b16 %v1866
  %v2356 = vunpack.c.l.b16 %v1867
  %v2357 = vunpack.c.h.b16 %v1867
  %v2358 = vunpack.c.l.b16 %v1868
  %v2359 = vunpack.c.h.b16 %v1868
  %v2360 = vunpack.c.l.b16 %v1869
  %v2361 = vunpack.c.h.b16 %v1869
  %v2362 = vunpack.c.l.b16 %v1870
  %v2363 = vunpack.c.h.b16 %v1870
  %v2364 = vunpack.c.l.b16 %v1871
  %v2365 = vunpack.c.h.b16 %v1871
  %v2366 = vunpack.c.l.b16 %v1872
  %v2367 = vunpack.c.h.b16 %v1872
  %v2368 = vunpack.c.l.b16 %v1873
  %v2369 = vunpack.c.h.b16 %v1873
  %v2370 = vunpack.c.l.b16 %v1874
  %v2371 = vunpack.c.h.b16 %v1874
  %v2372 = vunpack.c.l.b16 %v1875
  %v2373 = vunpack.c.h.b16 %v1875
  %v2374 = vunpack.c.l.b16 %v1876
  %v2375 = vunpack.c.h.b16 %v1876
  %v2376 = vunpack.c.l.b16 %v1877
  %v2377 = vunpack.c.h.b16 %v1877
  %v2378 = vunpack.c.l.b16 %v1878
  %v2379 = vunpack.c.h.b16 %v1878
  %v2380 = vunpack.c.l.b16 %v1879
  %v2381 = vunpack.c.h.b16 %v1879
  %v2382 = vunpack.c.l.b16 %v1880
  %v2383 = vunpack.c.h.b16 %v1880
  %v2384 = vunpack.c.l.b16 %v1881
  %v2385 = vunpack.c.h.b16 %v1881
  %v2386 = vunpack.c.l.b16 %v1882
  %v2387 = vunpack.c.h.b16 %v1882
  %v2388 = vunpack.c.l.b16 %v1883
  %v2389 = vunpack.c.h.b16 %v1883
  %v2390 = vunpack.c.l.b16 %v1884
  %v2391 = vunpack.c.h.b16 %v1884
  %v2392 = vunpack.c.l.b16 %v1885
  %v2393 = vunpack.c.h.b16 %v1885
  %v2394 = vunpack.c.l.b16 %v1886
  %v2395 = vunpack.c.h.b16 %v1886
  %v2396 = vunpack.c.l.b16 %v1887
  %v2397 = vunpack.c.h.b16 %v1887
  %v2398 = vunpack.c.l.b16 %v1888
  %v2399 = vunpack.c.h.b16 %v1888
  %v2400 = vunpack.c.l.b16 %v1889
  %v2401 = vunpack.c.h.b16 %v1889
  %v2402 = vunpack.c.l.b16 %v1890
  %v2403 = vunpack.c.h.b16 %v1890
  %v2404 = vunpack.c.l.b16 %v1891
  %v2405 = vunpack.c.h.b16 %v1891
  %v2406 = vunpack.c.l.b16 %v1892
  %v2407 = vunpack.c.h.b16 %v1892
  %v2408 = vunpack.c.l.b16 %v1893
  %v2409 = vunpack.c.h.b16 %v1893
  %v2410 = vunpack.c.l.b16 %v1894
  %v2411 = vunpack.c.h.b16 %v1894
  %v2412 = vunpack.c.l.b16 %v1895
  %v2413 = vunpack.c.h.b16 %v1895
  %v2414 = vunpack.c.l.b16 %v1896
  %v2415 = vunpack.c.h.b16 %v1896
  %v2416 = vunpack.c.l.b16 %v1897
  %v2417 = vunpack.c.h.b16 %v1897
  %v2418 = vunpack.c.l.b16 %v1898
  %v2419 = vunpack.c.h.b16 %v1898
  %v2420 = vunpack.c.l.b16 %v1899
  %v2421 = vunpack.c.h.b16 %v1899
  %v2422 = vunpack.c.l.b16 %v1900
  %v2423 = vunpack.c.h.b16 %v1900
  %v2424 = vunpack.c.l.b16 %v1901
  %v2425 = vunpack.c.h.b16 %v1901
  %v2426 = vunpack.c.l.b16 %v1902
  %v2427 = vunpack.c.h.b16 %v1902
  %v2428 = vunpack.c.l.b16 %v1903
  %v2429 = vunpack.c.h.b16 %v1903
  %v2430 = vunpack.c.l.b16 %v1904
  %v2431 = vunpack.c.h.b16 %v1904
  %v2432 = vunpack.c.l.b16 %v1905
  %v2433 = vunpack.c.h.b16 %v1905
  %v2434 = vunpack.c.l.b16 %v1906
  %v2435 = vunpack.c.h.b16 %v1906
  %v2436 = vunpack.c.l.b16 %v1907
  %v2437 = vunpack.c.h.b16 %v1907
  %v2438 = vunpack.c.l.b16 %v1908
  %v2439 = vunpack.c.h.b16 %v1908
  %v2440 = vunpack.c.l.b16 %v1909
  %v2441 = vunpack.c.h.b16 %v1909
  %v2442 = vunpack.c.l.b16 %v1910
  %v2443 = vunpack.c.h.b16 %v1910
  %v2444 = vunpack.c.l.b16 %v1911
  %v2445 = vunpack.c.h.b16 %v1911
  %v2446 = vunpack.c.l.b16 %v1912
  %v2447 = vunpack.c.h.b16 %v1912
  %v2448 = vunpack.c.l.b16 %v1913
  %v2449 = vunpack.c.h.b16 %v1913
  %v2450 = vunpack.c.l.b16 %v1914
  %v2451 = vunpack.c.h.b16 %v1914
  %v2452 = vunpack.c.l.b16 %v1915
  %v2453 = vunpack.c.h.b16 %v1915
  %v2454 = vunpack.c.l.b16 %v1916
  %v2455 = vunpack.c.h.b16 %v1916
  %v2456 = vunpack.c.l.b16 %v1917
  %v2457 = vunpack.c.h.b16 %v1917
  %v2458 = vunpack.c.l.b16 %v1918
  %v2459 = vunpack.c.h.b16 %v1918
  %v2460 = vunpack.c.l.b16 %v1919
  %v2461 = vunpack.c.h.b16 %v1919
  %v2462 = vunpack.c.l.b16 %v1920
  %v2463 = vunpack.c.h.b16 %v1920
  %v2464 = vunpack.c.l.b16 %v1921
  %v2465 = vunpack.c.h.b16 %v1921
  %v2466 = vunpack.c.l.b16 %v1922
  %v2467 = vunpack.c.h.b16 %v1922
  %v2468 = vunpack.c.l.b16 %v1923
  %v2469 = vunpack.c.h.b16 %v1923
  %v2470 = vunpack.c.l.b16 %v1924
  %v2471 = vunpack.c.h.b16 %v1924
  %v2472 = vunpack.c.l.b16 %v1925
  %v2473 = vunpack.c.h.b16 %v1925
  %v2474 = vunpack.c.l.b16 %v1926
  %v2475 = vunpack.c.h.b16 %v1926
  %v2476 = vunpack.c.l.b16 %v1927
  %v2477 = vunpack.c.h.b16 %v1927
  %v2478 = vunpack.c.l.b16 %v1928
  %v2479 = vunpack.c.h.b16 %v1928
  %v2480 = vunpack.c.l.b16 %v1929
  %v2481 = vunpack.c.h.b16 %v1929
  %v2482 = vunpack.c.l.b16 %v1930
  %v2483 = vunpack.c.h.b16 %v1930
  %v2484 = vunpack.c.l.b16 %v1931
  %v2485 = vunpack.c.h.b16 %v1931
  %v2486 = vunpack.c.l.b16 %v1932
  %v2487 = vunpack.c.h.b16 %v1932
  %v2488 = vunpack.c.l.b16 %v1933
  %v2489 = vunpack.c.h.b16 %v1933
  %v2490 = vunpack.c.l.b16 %v1934
  %v2491 = vunpack.c.h.b16 %v1934
  %v2492 = vunpack.c.l.b16 %v1935
  %v2493 = vunpack.c.h.b16 %v1935
  %v2494 = vunpack.c.l.b16 %v1936
  %v2495 = vunpack.c.h.b16 %v1936
  %v2496 = vunpack.c.l.b16 %v1937
  %v2497 = vunpack.c.h.b16 %v1937
  %v2498 = vunpack.c.l.b16 %v1938
  %v2499 = vunpack.c.h.b16 %v1938
  %v2500 = vunpack.c.l.b16 %v1939
  %v2501 = vunpack.c.h.b16 %v1939
  %v2502 = vunpack.c.l.b16 %v1940
  %v2503 = vunpack.c.h.b16 %v1940
  %v2504 = vunpack.c.l.b16 %v1941
  %v2505 = vunpack.c.h.b16 %v1941
  %v2506 = vunpack.c.l.b16 %v1942
  %v2507 = vunpack.c.h.b16 %v1942
  %v2508 = vunpack.c.l.b16 %v1943
  %v2509 = vunpack.c.h.b16 %v1943
  %v2510 = vunpack.c.l.b16 %v1944
  %v2511 = vunpack.c.h.b16 %v1944
  %v2512 = vunpack.c.l.b16 %v1945
  %v2513 = vunpack.c.h.b16 %v1945
  %v2514 = vunpack.c.l.b16 %v1946
  %v2515 = vunpack.c.h.b16 %v1946
  %v2516 = vunpack.c.l.b16 %v1947
  %v2517 = vunpack.c.h.b16 %v1947
  %v2518 = vunpack.c.l.b16 %v1948
  %v2519 = vunpack.c.h.b16 %v1948
  %v2520 = vunpack.c.l.b16 %v1949
  %v2521 = vunpack.c.h.b16 %v1949
  %v2522 = vunpack.c.l.b16 %v1950
  %v2523 = vunpack.c.h.b16 %v1950
  %v2524 = vunpack.c.l.b16 %v1951
  %v2525 = vunpack.c.h.b16 %v1951
  %v2526 = vunpack.c.l.b16 %v1952
  %v2527 = vunpack.c.h.b16 %v1952
  %v2528 = vunpack.c.l.b16 %v1953
  %v2529 = vunpack.c.h.b16 %v1953
  %v2530 = vunpack.c.l.b16 %v1954
  %v2531 = vunpack.c.h.b16 %v1954
  %v2532 = vunpack.c.l.b16 %v1955
  %v2533 = vunpack.c.h.b16 %v1955
  %v2534 = vunpack.c.l.b16 %v1956
  %v2535 = vunpack.c.h.b16 %v1956
  %v2536 = vunpack.c.l.b16 %v1957
  %v2537 = vunpack.c.h.b16 %v1957
  %v2538 = vunpack.c.l.b16 %v1958
  %v2539 = vunpack.c.h.b16 %v1958
  %v2540 = vunpack.c.l.b16 %v1959
  %v2541 = vunpack.c.h.b16 %v1959
  %v2542 = vunpack.c.l.b16 %v1960
  %v2543 = vunpack.c.h.b16 %v1960
  %v2544 = vunpack.c.l.b16 %v1961
  %v2545 = vunpack.c.h.b16 %v1961
  %v2546 = vunpack.c.l.b16 %v1962
  %v2547 = vunpack.c.h.b16 %v1962
  %v2548 = vunpack.c.l.b16 %v1963
  %v2549 = vunpack.c.h.b16 %v1963
  %v2550 = vunpack.c.l.b16 %v1964
  %v2551 = vunpack.c.h.b16 %v1964
  %v2552 = vunpack.c.l.b16 %v1965
  %v2553 = vunpack.c.h.b16 %v1965
  %v2554 = vunpack.c.l.b16 %v1966
  %v2555 = vunpack.c.h.b16 %v1966
  %v2556 = vunpack.c.l.b16 %v1967
  %v2557 = vunpack.c.h.b16 %v1967
  %v2558 = vunpack.c.l.b16 %v1968
  %v2559 = vunpack.c.h.b16 %v1968
  %v2560 = vunpack.c.l.b16 %v1969
  %v2561 = vunpack.c.h.b16 %v1969
  %v2562 = vunpack.c.l.b16 %v1970
  %v2563 = vunpack.c.h.b16 %v1970
  %v2564 = vunpack.c.l.b16 %v1971
  %v2565 = vunpack.c.h.b16 %v1971
  %v2566 = vunpack.c.l.b16 %v1972
  %v2567 = vunpack.c.h.b16 %v1972
  %v2568 = vunpack.c.l.b16 %v1973
  %v2569 = vunpack.c.h.b16 %v1973
  %v2570 = vunpack.c.l.b16 %v1974
  %v2571 = vunpack.c.h.b16 %v1974
  %v2572 = vunpack.c.l.b16 %v1975
  %v2573 = vunpack.c.h.b16 %v1975
  %v2574 = vunpack.c.l.b16 %v1976
  %v2575 = vunpack.c.h.b16 %v1976
  %v2576 = vunpack.c.l.b16 %v1977
  %v2577 = vunpack.c.h.b16 %v1977
  %v2578 = vunpack.c.l.b16 %v1978
  %v2579 = vunpack.c.h.b16 %v1978
  %v2580 = vunpack.c.l.b16 %v1979
  %v2581 = vunpack.c.h.b16 %v1979
  %v2582 = vunpack.c.l.b16 %v1980
  %v2583 = vunpack.c.h.b16 %v1980
  %v2584 = vunpack.c.l.b16 %v1981
  %v2585 = vunpack.c.h.b16 %v1981
  %v2586 = vunpack.c.l.b16 %v1982
  %v2587 = vunpack.c.h.b16 %v1982
  %v2588 = vunpack.c.l.b16 %v1983
  %v2589 = vunpack.c.h.b16 %v1983
  %v2590 = vunpack.c.l.b16 %v1984
  %v2591 = vunpack.c.h.b16 %v1984
  %v2592 = vunpack.c.l.b16 %v1985
  %v2593 = vunpack.c.h.b16 %v1985
  %v2594 = vunpack.c.l.b16 %v1986
  %v2595 = vunpack.c.h.b16 %v1986
  %v2596 = vunpack.c.l.b16 %v1987
  %v2597 = vunpack.c.h.b16 %v1987
  %v2598 = vunpack.c.l.b16 %v1988
  %v2599 = vunpack.c.h.b16 %v1988
  %v2600 = vunpack.c.l.b16 %v1989
  %v2601 = vunpack.c.h.b16 %v1989
  %v2602 = vunpack.c.l.b16 %v1990
  %v2603 = vunpack.c.h.b16 %v1990
  %v2604 = vunpack.c.l.b16 %v1991
  %v2605 = vunpack.c.h.b16 %v1991
  %v2606 = vunpack.c.l.b16 %v1992
  %v2607 = vunpack.c.h.b16 %v1992
  %v2608 = vunpack.c.l.b16 %v1993
  %v2609 = vunpack.c.h.b16 %v1993
  %v2610 = vunpack.c.l.b16 %v1994
  %v2611 = vunpack.c.h.b16 %v1994
  %v2612 = vunpack.c.l.b16 %v1995
  %v2613 = vunpack.c.h.b16 %v1995
  %v2614 = vpack.c.b16 %v2278, %v2270
  %v2615 = vpack.c.b16 %v2279, %v2271
  %v2616 = vpack.c.b16 %v2280, %v2272
  %v2617 = vpack.c.b16 %v2281, %v2273
  %v2618 = vpack.c.b16 %v2282, %v2274
  %v2619 = vpack.c.b16 %v2283, %v2275
  %v2620 = vpack.c.b16 %v2284, %v2276
  %v2621 = vpack.c.b16 %v2285, %v2277
  %v2622 = vpack.c.b16 %v2294, %v2286
  %v2623 = vpack.c.b16 %v2295, %v2287
  %v2624 = vpack.c.b16 %v2296, %v2288
  %v2625 = vpack.c.b16 %v2297, %v2289
  %v2626 = vpack.c.b16 %v2298, %v2290
  %v2627 = vpack.c.b16 %v2299, %v2291
  %v2628 = vpack.c.b16 %v2300, %v2292
  %v2629 = vpack.c.b16 %v2301, %v2293
  %v2630 = vpack.c.b16 %v2310, %v2302
  %v2631 = vpack.c.b16 %v2311, %v2303
  %v2632 = vpack.c.b16 %v2312, %v2304
  %v2633 = vpack.c.b16 %v2313, %v2305
  %v2634 = vpack.c.b16 %v2314, %v2306
  %v2635 = vpack.c.b16 %v2315, %v2307
  %v2636 = vpack.c.b16 %v2316, %v2308
  %v2637 = vpack.c.b16 %v2317, %v2309
  %v2638 = vpack.c.b16 %v2326, %v2318
  %v2639 = vpack.c.b16 %v2327, %v2319
  %v2640 = vpack.c.b16 %v2328, %v2320
  %v2641 = vpack.c.b16 %v2329, %v2321
  %v2642 = vpack.c.b16 %v2330, %v2322
  %v2643 = vpack.c.b16 %v2331, %v2323
  %v2644 = vpack.c.b16 %v2332, %v2324
  %v2645 = vpack.c.b16 %v2333, %v2325
  %v2646 = vpack.c.b16 %v2342, %v2334
  %v2647 = vpack.c.b16 %v2343, %v2335
  %v2648 = vpack.c.b16 %v2344, %v2336
  %v2649 = vpack.c.b16 %v2345, %v2337
  %v2650 = vpack.c.b16 %v2346, %v2338
  %v2651 = vpack.c.b16 %v2347, %v2339
  %v2652 = vpack.c.b16 %v2348, %v2340
  %v2653 = vpack.c.b16 %v2349, %v2341
  %v2654 = vpack.c.b16 %v2358, %v2350
  %v2655 = vpack.c.b16 %v2359, %v2351
  %v2656 = vpack.c.b16 %v2360, %v2352
  %v2657 = vpack.c.b16 %v2361, %v2353
  %v2658 = vpack.c.b16 %v2362, %v2354
  %v2659 = vpack.c.b16 %v2363, %v2355
  %v2660 = vpack.c.b16 %v2364, %v2356
  %v2661 = vpack.c.b16 %v2365, %v2357
  %v2662 = vpack.c.b16 %v2374, %v2366
  %v2663 = vpack.c.b16 %v2375, %v2367
  %v2664 = vpack.c.b16 %v2376, %v2368
  %v2665 = vpack.c.b16 %v2377, %v2369
  %v2666 = vpack.c.b16 %v2378, %v2370
  %v2667 = vpack.c.b16 %v2379, %v2371
  %v2668 = vpack.c.b16 %v2380, %v2372
  %v2669 = vpack.c.b16 %v2381, %v2373
  %v2670 = vpack.c.b16 %v2390, %v2382
  %v2671 = vpack.c.b16 %v2391, %v2383
  %v2672 = vpack.c.b16 %v2392, %v2384
  %v2673 = vpack.c.b16 %v2393, %v2385
  %v2674 = vpack.c.b16 %v2394, %v2386
  %v2675 = vpack.c.b16 %v2395, %v2387
  %v2676 = vpack.c.b16 %v2396, %v2388
  %v2677 = vpack.c.b16 %v2397, %v2389
  %v2678 = vpack.c.b16 %v2406, %v2398
  %v2679 = vpack.c.b16 %v2407, %v2399
  %v2680 = vpack.c.b16 %v2408, %v2400
  %v2681 = vpack.c.b16 %v2409, %v2401
  %v2682 = vpack.c.b16 %v2410, %v2402
  %v2683 = vpack.c.b16 %v2411, %v2403
  %v2684 = vpack.c.b16 %v2412, %v2404
  %v2685 = vpack.c.b16 %v2413, %v2405
  %v2686 = vpack.c.b16 %v2422, %v2414
  %v2687 = vpack.c.b16 %v2423, %v2415
  %v2688 = vpack.c.b16 %v2424, %v2416
  %v2689 = vpack.c.b16 %v2425, %v2417
  %v2690 = vpack.c.b16 %v2426, %v2418
  %v2691 = vpack.c.b16 %v2427, %v2419
  %v2692 = vpack.c.b16 %v2428, %v2420
  %v2693 = vpack.c.b16 %v2429, %v2421
  %v2694 = vpack.c.b16 %v2438, %v2430
  %v2695 = vpack.c.b16 %v2439, %v2431
  %v2696 = vpack.c.b16 %v2440, %v2432
  %v2697 = vpack.c.b16 %v2441, %v2433
  %v2698 = vpack.c.b16 %v2442, %v2434
  %v2699 = vpack.c.b16 %v2443, %v2435
  %v2700 = vpack.c.b16 %v2444, %v2436
  %v2701 = vpack.c.b16 %v2445, %v2437
  %v2702 = vpack.c.b16 %v2454, %v2446
  %v2703 = vpack.c.b16 %v2455, %v2447
  %v2704 = vpack.c.b16 %v2456, %v2448
  %v2705 = vpack.c.b16 %v2457, %v2449
  %v2706 = vpack.c.b16 %v2458, %v2450
  %v2707 = vpack.c.b16 %v2459, %v2451
  %v2708 = vpack.c.b16 %v2460, %v2452
  %v2709 = vpack.c.b16 %v2461, %v2453
  %v2710 = vpack.c.b16 %v2470, %v2462
  %v2711 = vpack.c.b16 %v2471, %v2463
  %v2712 = vpack.c.b16 %v2472, %v2464
  %v2713 = vpack.c.b16 %v2473, %v2465
  %v2714 = vpack.c.b16 %v2474, %v2466
  %v2715 = vpack.c.b16 %v2475, %v2467
  %v2716 = vpack.c.b16 %v2476, %v2468
  %v2717 = vpack.c.b16 %v2477, %v2469
  %v2718 = vpack.c.b16 %v2486, %v2478
  %v2719 = vpack.c.b16 %v2487, %v2479
  %v2720 = vpack.c.b16 %v2488, %v2480
  %v2721 = vpack.c.b16 %v2489, %v2481
  %v2722 = vpack.c.b16 %v2490, %v2482
  %v2723 = vpack.c.b16 %v2491, %v2483
  %v2724 = vpack.c.b16 %v2492, %v2484
  %v2725 = vpack.c.b16 %v2493, %v2485
  %v2726 = vpack.c.b16 %v2502, %v2494
  %v2727 = vpack.c.b16 %v2503, %v2495
  %v2728 = vpack.c.b16 %v2504, %v2496
  %v2729 = vpack.c.b16 %v2505, %v2497
  %v2730 = vpack.c.b16 %v2506, %v2498
  %v2731 = vpack.c.b16 %v2507, %v2499
  %v2732 = vpack.c.b16 %v2508, %v2500
  %v2733 = vpack.c.b16 %v2509, %v2501
  %v2734 = vpack.c.b16 %v2518, %v2510
  %v2735 = vpack.c.b16 %v2519, %v2511
  %v2736 = vpack.c.b16 %v2520, %v2512
  %v2737 = vpack.c.b16 %v2521, %v2513
  %v2738 = vpack.c.b16 %v2522, %v2514
  %v2739 = vpack.c.b16 %v2523, %v2515
  %v2740 = vpack.c.b16 %v2524, %v2516
  %v2741 = vpack.c.b16 %v2525, %v2517
  %v2742 = vpack.c.b16 %v2534, %v2526
  %v2743 = vpack.c.b16 %v2535, %v2527
  %v2744 = vpack.c.b16 %v2536, %v2528
  %v2745 = vpack.c.b16 %v2537, %v2529
  %v2746 = vpack.c.b16 %v2538, %v2530
  %v2747 = vpack.c.b16 %v2539, %v2531
  %v2748 = vpack.c.b16 %v2540, %v2532
  %v2749 = vpack.c.b16 %v2541, %v2533
  %v2750 = vpack.c.b16 %v2550, %v2542
  %v2751 = vpack.c.b16 %v2551, %v2543
  %v2752 = vpack.c.b16 %v2552, %v2544
  %v2753 = vpack.c.b16 %v2553, %v2545
  %v2754 = vpack.c.b16 %v2554, %v2546
  %v2755 = vpack.c.b16 %v2555, %v2547
  %v2756 = vpack.c.b16 %v2556, %v2548
  %v2757 = vpack.c.b16 %v2557, %v2549
  %v2758 = vpack.c.b16 %v2566, %v2558
  %v2759 = vpack.c.b16 %v2567, %v2559
  %v2760 = vpack.c.b16 %v2568, %v2560
  %v2761 = vpack.c.b16 %v2569, %v2561
  %v2762 = vpack.c.b16 %v2570, %v2562
  %v2763 = vpack.c.b16 %v2571, %v2563
  %v2764 = vpack.c.b16 %v2572, %v2564
  %v2765 = vpack.c.b16 %v2573, %v2565
  %v2766 = vpack.c.b16 %v2582, %v2574
  %v2767 = vpack.c.b16 %v2583, %v2575
  %v2768 = vpack.c.b16 %v2584, %v2576
  %v2769 = vpack.c.b16 %v2585, %v2577
  %v2770 = vpack.c.b16 %v2586, %v2578
  %v2771 = vpack.c.b16 %v2587, %v2579
  %v2772 = vpack.c.b16 %v2588, %v2580
  %v2773 = vpack.c.b16 %v2589, %v2581
  %v2774 = vpack.c.b16 %v2598, %v2590
  %v2775 = vpack.c.b16 %v2599, %v2591
  %v2776 = vpack.c.b16 %v2600, %v2592
  %v2777 = vpack.c.b16 %v2601, %v2593
  %v2778 = vpack.c.b16 %v2602, %v2594
  %v2779 = vpack.c.b16 %v2603, %v2595
  %v2780 = vpack.c.b16 %v2604, %v2596
  %v2781 = vpack.c.b16 %v2605, %v2597
  %v2782 = vpack.c.b16 %v2606, %v2606
  %v2783 = vpack.c.b16 %v2607, %v2607
  %v2784 = vpack.c.b16 %v2608, %v2608
  %v2785 = vpack.c.b16 %v2609, %v2609
  %v2786 = vpack.c.b16 %v2610, %v2610
  %v2787 = vpack.c.b16 %v2611, %v2611
  %v2788 = vpack.c.b16 %v2612, %v2612
  %v2789 = vpack.c.b16 %v2613, %v2613
  %v2959 = vsel %vm1183, %v2080, 0
  %v2962 = vsel %vm1183, %v2083, 0
  %v2965 = vsel %vm1183, %v2086, 0
  %v2968 = vsel %vm1183, %v2089, 0
  %v2971 = vand.u32 %v2782, %v1199
  %v2974 = vand.u32 %v2783, %v1199
  %v2977 = vand.u32 %v2784, %v1199
  %v2980 = vand.u32 %v2785, %v1199
  %v2983 = vand.u32 %v2786, %v1199
  %v2986 = vand.u32 %v2787, %v1199
  %v2989 = vand.u32 %v2788, %v1199
  %v2992 = vand.u32 %v2789, %v1199
  %2994 = vmatprep.subr.bf16.mxu0 %v2615
  %2995 = vmatpush1.bf16.msra.mxu0 %v2614
  %2996 = vmatprep.subr.bf16.mxu0 %v2623
  %2997 = vmatpush1.bf16.msra.mxu0 %v2622
  %2998 = vmatprep.subr.bf16.mxu0 %v2631
  %2999 = vmatpush1.bf16.msra.mxu0 %v2630
  %3000 = vmatprep.subr.bf16.mxu0 %v2639
  %3001 = vmatpush1.bf16.msra.mxu0 %v2638
  %3002 = vmatprep.subr.bf16.mxu0 %v2647
  %3003 = vmatpush1.bf16.msra.mxu0 %v2646
  %3004 = vmatprep.subr.bf16.mxu0 %v2655
  %3005 = vmatpush1.bf16.msra.mxu0 %v2654
  %3006 = vmatprep.subr.bf16.mxu0 %v2663
  %3007 = vmatpush1.bf16.msra.mxu0 %v2662
  %3008 = vmatprep.subr.bf16.mxu0 %v2671
  %3009 = vmatpush1.bf16.msra.mxu0 %v2670
  %3010 = vmatprep.subr.bf16.mxu0 %v2679
  %3011 = vmatpush1.bf16.msra.mxu0 %v2678
  %3012 = vmatprep.subr.bf16.mxu0 %v2687
  %3013 = vmatpush1.bf16.msra.mxu0 %v2686
  %3014 = vmatprep.subr.bf16.mxu0 %v2695
  %3015 = vmatpush1.bf16.msra.mxu0 %v2694
  %3016 = vmatprep.subr.bf16.mxu0 %v2703
  %3017 = vmatpush1.bf16.msra.mxu0 %v2702
  %3018 = vmatprep.subr.bf16.mxu0 %v2711
  %3019 = vmatpush1.bf16.msra.mxu0 %v2710
  %3020 = vmatprep.subr.bf16.mxu0 %v2719
  %3021 = vmatpush1.bf16.msra.mxu0 %v2718
  %3022 = vmatprep.subr.bf16.mxu0 %v2727
  %3023 = vmatpush1.bf16.msra.mxu0 %v2726
  %3024 = vmatprep.subr.bf16.mxu0 %v2735
  %3025 = vmatpush1.bf16.msra.mxu0 %v2734
  %3026 = vmatprep.mubr.bf16.mxu0 %v2079
  %3027 = vmatmul.mubr.bf16.gmra.mrb[0].mxu0 %v2078
  %v3028 = vpop.f32.mrb[0].mxu0
  %v3029 = vadd.f32 %v2001, %v3028
  %v3030 = vpop.f32.mrb[0].mxu0
  %v3031 = vadd.f32 %v2005, %v3030
  %v3032 = vpop.f32.mrb[0].mxu0
  %v3033 = vadd.f32 %v2001, %v3032
  %v3034 = vpop.f32.mrb[0].mxu0
  %v3035 = vadd.f32 %v2005, %v3034
  %3036 = vmatprep.mubr.bf16.mxu0 %v2082
  %3037 = vmatmul.mubr.bf16.gmra.mrb[0].mxu0 %v2081
  %v3038 = vpop.f32.mrb[0].mxu0
  %v3039 = vadd.f32 %v2001, %v3038
  %v3040 = vpop.f32.mrb[0].mxu0
  %v3041 = vadd.f32 %v2005, %v3040
  %v3042 = vpop.f32.mrb[0].mxu0
  %v3043 = vadd.f32 %v2001, %v3042
  %v3044 = vpop.f32.mrb[0].mxu0
  %v3045 = vadd.f32 %v2005, %v3044
  %3046 = vmatprep.mubr.bf16.mxu0 %v2085
  %3047 = vmatmul.mubr.bf16.gmra.mrb[0].mxu0 %v2084
  %v3048 = vpop.f32.mrb[0].mxu0
  %v3049 = vadd.f32 %v2001, %v3048
  %v3050 = vpop.f32.mrb[0].mxu0
  %v3051 = vadd.f32 %v2005, %v3050
  %v3052 = vpop.f32.mrb[0].mxu0
  %v3053 = vadd.f32 %v2001, %v3052
  %v3054 = vpop.f32.mrb[0].mxu0
  %v3055 = vadd.f32 %v2005, %v3054
  %3056 = vmatprep.mubr.bf16.mxu0 %v2088
  %3057 = vmatmul.mubr.bf16.gmra.mrb[0].mxu0 %v2087
  %v3058 = vpop.f32.mrb[0].mxu0
  %v3059 = vadd.f32 %v2001, %v3058
  %v3060 = vpop.f32.mrb[0].mxu0
  %v3061 = vadd.f32 %v2005, %v3060
  %v3062 = vpop.f32.mrb[0].mxu0
  %v3063 = vadd.f32 %v2001, %v3062
  %v3064 = vpop.f32.mrb[0].mxu0
  %v3065 = vadd.f32 %v2005, %v3064
  %3066 = vdwg.mxu0
  %3067 = vmatprep.subr.bf16.mxu0 %v2743
  %3068 = vmatpush1.bf16.msra.mxu0 %v2742
  %3069 = vmatprep.subr.bf16.mxu0 %v2751
  %3070 = vmatpush1.bf16.msra.mxu0 %v2750
  %3071 = vmatprep.subr.bf16.mxu0 %v2759
  %3072 = vmatpush1.bf16.msra.mxu0 %v2758
  %3073 = vmatprep.subr.bf16.mxu0 %v2767
  %3074 = vmatpush1.bf16.msra.mxu0 %v2766
  %3075 = vmatprep.subr.bf16.mxu0 %v2775
  %3076 = vmatpush1.bf16.msra.mxu0 %v2774
  %3077 = vmatprep.subr.bf16.mxu0 %v2974
  %3078 = vmatpush1.bf16.msra.mxu0 %v2971
  %3079 = vmatprep.subr.bf16.mxu0 0
  %3080 = vmatpush1.bf16.msra.mxu0 0
  %3081 = vmatprep.subr.bf16.mxu0 0
  %3082 = vmatpush1.bf16.msra.mxu0 0
  %3083 = vmatprep.subr.bf16.mxu0 0
  %3084 = vmatpush1.bf16.msra.mxu0 0
  %3085 = vmatprep.subr.bf16.mxu0 0
  %3086 = vmatpush1.bf16.msra.mxu0 0
  %3087 = vmatprep.subr.bf16.mxu0 0
  %3088 = vmatpush1.bf16.msra.mxu0 0
  %3089 = vmatprep.subr.bf16.mxu0 0
  %3090 = vmatpush1.bf16.msra.mxu0 0
  %3091 = vmatprep.subr.bf16.mxu0 0
  %3092 = vmatpush1.bf16.msra.mxu0 0
  %3093 = vmatprep.subr.bf16.mxu0 0
  %3094 = vmatpush1.bf16.msra.mxu0 0
  %3095 = vmatprep.subr.bf16.mxu0 0
  %3096 = vmatpush1.bf16.msra.mxu0 0
  %3097 = vmatprep.subr.bf16.mxu0 0
  %3098 = vmatpush1.bf16.msra.mxu0 0
  %3099 = vmatprep.mubr.bf16.mxu0 0
  %3100 = vmatmul.mubr.bf16.gmra.mrb[0].mxu0 %v2959
  %v3101 = vpop.f32.mrb[0].mxu0
  %v3102 = vadd.f32 %v3029, %v3101
  %v3103 = vpop.f32.mrb[0].mxu0
  %v3104 = vadd.f32 %v3031, %v3103
  %v3105 = vpop.f32.mrb[0].mxu0
  %v3106 = vadd.f32 %v3033, %v3105
  %v3107 = vpop.f32.mrb[0].mxu0
  %v3108 = vadd.f32 %v3035, %v3107
  %3109 = vmatprep.mubr.bf16.mxu0 0
  %3110 = vmatmul.mubr.bf16.gmra.mrb[0].mxu0 %v2962
  %v3111 = vpop.f32.mrb[0].mxu0
  %v3112 = vadd.f32 %v3039, %v3111
  %v3113 = vpop.f32.mrb[0].mxu0
  %v3114 = vadd.f32 %v3041, %v3113
  %v3115 = vpop.f32.mrb[0].mxu0
  %v3116 = vadd.f32 %v3043, %v3115
  %v3117 = vpop.f32.mrb[0].mxu0
  %v3118 = vadd.f32 %v3045, %v3117
  %3119 = vmatprep.mubr.bf16.mxu0 0
  %3120 = vmatmul.mubr.bf16.gmra.mrb[0].mxu0 %v2965
  %v3121 = vpop.f32.mrb[0].mxu0
  %v3122 = vadd.f32 %v3049, %v3121
  %v3123 = vpop.f32.mrb[0].mxu0
  %v3124 = vadd.f32 %v3051, %v3123
  %v3125 = vpop.f32.mrb[0].mxu0
  %v3126 = vadd.f32 %v3053, %v3125
  %v3127 = vpop.f32.mrb[0].mxu0
  %v3128 = vadd.f32 %v3055, %v3127
  %3129 = vmatprep.mubr.bf16.mxu0 0
  %3130 = vmatmul.mubr.bf16.gmra.mrb[0].mxu0 %v2968
  %v3131 = vpop.f32.mrb[0].mxu0
  %v3132 = vadd.f32 %v3059, %v3131
  %v3133 = vpop.f32.mrb[0].mxu0
  %v3134 = vadd.f32 %v3061, %v3133
  %v3135 = vpop.f32.mrb[0].mxu0
  %v3136 = vadd.f32 %v3063, %v3135
  %v3137 = vpop.f32.mrb[0].mxu0
  %v3138 = vadd.f32 %v3065, %v3137
  %3139 = vdwg.mxu0
  %3140 = vmatprep.subr.bf16.mxu0 %v2617
  %3141 = vmatpush1.bf16.msra.mxu0 %v2616
  %3142 = vmatprep.subr.bf16.mxu0 %v2625
  %3143 = vmatpush1.bf16.msra.mxu0 %v2624
  %3144 = vmatprep.subr.bf16.mxu0 %v2633
  %3145 = vmatpush1.bf16.msra.mxu0 %v2632
  %3146 = vmatprep.subr.bf16.mxu0 %v2641
  %3147 = vmatpush1.bf16.msra.mxu0 %v2640
  %3148 = vmatprep.subr.bf16.mxu0 %v2649
  %3149 = vmatpush1.bf16.msra.mxu0 %v2648
  %3150 = vmatprep.subr.bf16.mxu0 %v2657
  %3151 = vmatpush1.bf16.msra.mxu0 %v2656
  %3152 = vmatprep.subr.bf16.mxu0 %v2665
  %3153 = vmatpush1.bf16.msra.mxu0 %v2664
  %3154 = vmatprep.subr.bf16.mxu0 %v2673
  %3155 = vmatpush1.bf16.msra.mxu0 %v2672
  %3156 = vmatprep.subr.bf16.mxu0 %v2681
  %3157 = vmatpush1.bf16.msra.mxu0 %v2680
  %3158 = vmatprep.subr.bf16.mxu0 %v2689
  %3159 = vmatpush1.bf16.msra.mxu0 %v2688
  %3160 = vmatprep.subr.bf16.mxu0 %v2697
  %3161 = vmatpush1.bf16.msra.mxu0 %v2696
  %3162 = vmatprep.subr.bf16.mxu0 %v2705
  %3163 = vmatpush1.bf16.msra.mxu0 %v2704
  %3164 = vmatprep.subr.bf16.mxu0 %v2713
  %3165 = vmatpush1.bf16.msra.mxu0 %v2712
  %3166 = vmatprep.subr.bf16.mxu0 %v2721
  %3167 = vmatpush1.bf16.msra.mxu0 %v2720
  %3168 = vmatprep.subr.bf16.mxu0 %v2729
  %3169 = vmatpush1.bf16.msra.mxu0 %v2728
  %3170 = vmatprep.subr.bf16.mxu0 %v2737
  %3171 = vmatpush1.bf16.msra.mxu0 %v2736
  %3172 = vmatprep.mubr.bf16.mxu0 %v2079
  %3173 = vmatmul.mubr.bf16.gmra.mrb[0].mxu0 %v2078
  %v3174 = vpop.f32.mrb[0].mxu0
  %v3175 = vadd.f32 %v2009, %v3174
  %v3176 = vpop.f32.mrb[0].mxu0
  %v3177 = vadd.f32 %v2013, %v3176
  %v3178 = vpop.f32.mrb[0].mxu0
  %v3179 = vadd.f32 %v2009, %v3178
  %v3180 = vpop.f32.mrb[0].mxu0
  %v3181 = vadd.f32 %v2013, %v3180
  %3182 = vmatprep.mubr.bf16.mxu0 %v2082
  %3183 = vmatmul.mubr.bf16.gmra.mrb[0].mxu0 %v2081
  %v3184 = vpop.f32.mrb[0].mxu0
  %v3185 = vadd.f32 %v2009, %v3184
  %v3186 = vpop.f32.mrb[0].mxu0
  %v3187 = vadd.f32 %v2013, %v3186
  %v3188 = vpop.f32.mrb[0].mxu0
  %v3189 = vadd.f32 %v2009, %v3188
  %v3190 = vpop.f32.mrb[0].mxu0
  %v3191 = vadd.f32 %v2013, %v3190
  %3192 = vmatprep.mubr.bf16.mxu0 %v2085
  %3193 = vmatmul.mubr.bf16.gmra.mrb[0].mxu0 %v2084
  %v3194 = vpop.f32.mrb[0].mxu0
  %v3195 = vadd.f32 %v2009, %v3194
  %v3196 = vpop.f32.mrb[0].mxu0
  %v3197 = vadd.f32 %v2013, %v3196
  %v3198 = vpop.f32.mrb[0].mxu0
  %v3199 = vadd.f32 %v2009, %v3198
  %v3200 = vpop.f32.mrb[0].mxu0
  %v3201 = vadd.f32 %v2013, %v3200
  %3202 = vmatprep.mubr.bf16.mxu0 %v2088
  %3203 = vmatmul.mubr.bf16.gmra.mrb[0].mxu0 %v2087
  %v3204 = vpop.f32.mrb[0].mxu0
  %v3205 = vadd.f32 %v2009, %v3204
  %v3206 = vpop.f32.mrb[0].mxu0
  %v3207 = vadd.f32 %v2013, %v3206
  %v3208 = vpop.f32.mrb[0].mxu0
  %v3209 = vadd.f32 %v2009, %v3208
  %v3210 = vpop.f32.mrb[0].mxu0
  %v3211 = vadd.f32 %v2013, %v3210
  %3212 = vdwg.mxu0
  %3213 = vmatprep.subr.bf16.mxu0 %v2745
  %3214 = vmatpush1.bf16.msra.mxu0 %v2744
  %3215 = vmatprep.subr.bf16.mxu0 %v2753
  %3216 = vmatpush1.bf16.msra.mxu0 %v2752
  %3217 = vmatprep.subr.bf16.mxu0 %v2761
  %3218 = vmatpush1.bf16.msra.mxu0 %v2760
  %3219 = vmatprep.subr.bf16.mxu0 %v2769
  %3220 = vmatpush1.bf16.msra.mxu0 %v2768
  %3221 = vmatprep.subr.bf16.mxu0 %v2777
  %3222 = vmatpush1.bf16.msra.mxu0 %v2776
  %3223 = vmatprep.subr.bf16.mxu0 %v2980
  %3224 = vmatpush1.bf16.msra.mxu0 %v2977
  %3225 = vmatprep.subr.bf16.mxu0 0
  %3226 = vmatpush1.bf16.msra.mxu0 0
  %3227 = vmatprep.subr.bf16.mxu0 0
  %3228 = vmatpush1.bf16.msra.mxu0 0
  %3229 = vmatprep.subr.bf16.mxu0 0
  %3230 = vmatpush1.bf16.msra.mxu0 0
  %3231 = vmatprep.subr.bf16.mxu0 0
  %3232 = vmatpush1.bf16.msra.mxu0 0
  %3233 = vmatprep.subr.bf16.mxu0 0
  %3234 = vmatpush1.bf16.msra.mxu0 0
  %3235 = vmatprep.subr.bf16.mxu0 0
  %3236 = vmatpush1.bf16.msra.mxu0 0
  %3237 = vmatprep.subr.bf16.mxu0 0
  %3238 = vmatpush1.bf16.msra.mxu0 0
  %3239 = vmatprep.subr.bf16.mxu0 0
  %3240 = vmatpush1.bf16.msra.mxu0 0
  %3241 = vmatprep.subr.bf16.mxu0 0
  %3242 = vmatpush1.bf16.msra.mxu0 0
  %3243 = vmatprep.subr.bf16.mxu0 0
  %3244 = vmatpush1.bf16.msra.mxu0 0
  %3245 = vmatprep.mubr.bf16.mxu0 0
  %3246 = vmatmul.mubr.bf16.gmra.mrb[0].mxu0 %v2959
  %v3247 = vpop.f32.mrb[0].mxu0
  %v3248 = vadd.f32 %v3175, %v3247
  %v3249 = vpop.f32.mrb[0].mxu0
  %v3250 = vadd.f32 %v3177, %v3249
  %v3251 = vpop.f32.mrb[0].mxu0
  %v3252 = vadd.f32 %v3179, %v3251
  %v3253 = vpop.f32.mrb[0].mxu0
  %v3254 = vadd.f32 %v3181, %v3253
  %3255 = vmatprep.mubr.bf16.mxu0 0
  %3256 = vmatmul.mubr.bf16.gmra.mrb[0].mxu0 %v2962
  %v3257 = vpop.f32.mrb[0].mxu0
  %v3258 = vadd.f32 %v3185, %v3257
  %v3259 = vpop.f32.mrb[0].mxu0
  %v3260 = vadd.f32 %v3187, %v3259
  %v3261 = vpop.f32.mrb[0].mxu0
  %v3262 = vadd.f32 %v3189, %v3261
  %v3263 = vpop.f32.mrb[0].mxu0
  %v3264 = vadd.f32 %v3191, %v3263
  %3265 = vmatprep.mubr.bf16.mxu0 0
  %3266 = vmatmul.mubr.bf16.gmra.mrb[0].mxu0 %v2965
  %v3267 = vpop.f32.mrb[0].mxu0
  %v3268 = vadd.f32 %v3195, %v3267
  %v3269 = vpop.f32.mrb[0].mxu0
  %v3270 = vadd.f32 %v3197, %v3269
  %v3271 = vpop.f32.mrb[0].mxu0
  %v3272 = vadd.f32 %v3199, %v3271
  %v3273 = vpop.f32.mrb[0].mxu0
  %v3274 = vadd.f32 %v3201, %v3273
  %3275 = vmatprep.mubr.bf16.mxu0 0
  %3276 = vmatmul.mubr.bf16.gmra.mrb[0].mxu0 %v2968
  %v3277 = vpop.f32.mrb[0].mxu0
  %v3278 = vadd.f32 %v3205, %v3277
  %v3279 = vpop.f32.mrb[0].mxu0
  %v3280 = vadd.f32 %v3207, %v3279
  %v3281 = vpop.f32.mrb[0].mxu0
  %v3282 = vadd.f32 %v3209, %v3281
  %v3283 = vpop.f32.mrb[0].mxu0
  %v3284 = vadd.f32 %v3211, %v3283
  %3285 = vdwg.mxu0
  %3286 = vmatprep.subr.bf16.mxu0 %v2619
  %3287 = vmatpush1.bf16.msra.mxu0 %v2618
  %3288 = vmatprep.subr.bf16.mxu0 %v2627
  %3289 = vmatpush1.bf16.msra.mxu0 %v2626
  %3290 = vmatprep.subr.bf16.mxu0 %v2635
  %3291 = vmatpush1.bf16.msra.mxu0 %v2634
  %3292 = vmatprep.subr.bf16.mxu0 %v2643
  %3293 = vmatpush1.bf16.msra.mxu0 %v2642
  %3294 = vmatprep.subr.bf16.mxu0 %v2651
  %3295 = vmatpush1.bf16.msra.mxu0 %v2650
  %3296 = vmatprep.subr.bf16.mxu0 %v2659
  %3297 = vmatpush1.bf16.msra.mxu0 %v2658
  %3298 = vmatprep.subr.bf16.mxu0 %v2667
  %3299 = vmatpush1.bf16.msra.mxu0 %v2666
  %3300 = vmatprep.subr.bf16.mxu0 %v2675
  %3301 = vmatpush1.bf16.msra.mxu0 %v2674
  %3302 = vmatprep.subr.bf16.mxu0 %v2683
  %3303 = vmatpush1.bf16.msra.mxu0 %v2682
  %3304 = vmatprep.subr.bf16.mxu0 %v2691
  %3305 = vmatpush1.bf16.msra.mxu0 %v2690
  %3306 = vmatprep.subr.bf16.mxu0 %v2699
  %3307 = vmatpush1.bf16.msra.mxu0 %v2698
  %3308 = vmatprep.subr.bf16.mxu0 %v2707
  %3309 = vmatpush1.bf16.msra.mxu0 %v2706
  %3310 = vmatprep.subr.bf16.mxu0 %v2715
  %3311 = vmatpush1.bf16.msra.mxu0 %v2714
  %3312 = vmatprep.subr.bf16.mxu0 %v2723
  %3313 = vmatpush1.bf16.msra.mxu0 %v2722
  %3314 = vmatprep.subr.bf16.mxu0 %v2731
  %3315 = vmatpush1.bf16.msra.mxu0 %v2730
  %3316 = vmatprep.subr.bf16.mxu0 %v2739
  %3317 = vmatpush1.bf16.msra.mxu0 %v2738
  %3318 = vmatprep.mubr.bf16.mxu0 %v2079
  %3319 = vmatmul.mubr.bf16.gmra.mrb[0].mxu0 %v2078
  %v3320 = vpop.f32.mrb[0].mxu0
  %v3321 = vadd.f32 %v2017, %v3320
  %v3322 = vpop.f32.mrb[0].mxu0
  %v3323 = vadd.f32 %v2021, %v3322
  %v3324 = vpop.f32.mrb[0].mxu0
  %v3325 = vadd.f32 %v2017, %v3324
  %v3326 = vpop.f32.mrb[0].mxu0
  %v3327 = vadd.f32 %v2021, %v3326
  %3328 = vmatprep.mubr.bf16.mxu0 %v2082
  %3329 = vmatmul.mubr.bf16.gmra.mrb[0].mxu0 %v2081
  %v3330 = vpop.f32.mrb[0].mxu0
  %v3331 = vadd.f32 %v2017, %v3330
  %v3332 = vpop.f32.mrb[0].mxu0
  %v3333 = vadd.f32 %v2021, %v3332
  %v3334 = vpop.f32.mrb[0].mxu0
  %v3335 = vadd.f32 %v2017, %v3334
  %v3336 = vpop.f32.mrb[0].mxu0
  %v3337 = vadd.f32 %v2021, %v3336
  %3338 = vmatprep.mubr.bf16.mxu0 %v2085
  %3339 = vmatmul.mubr.bf16.gmra.mrb[0].mxu0 %v2084
  %v3340 = vpop.f32.mrb[0].mxu0
  %v3341 = vadd.f32 %v2017, %v3340
  %v3342 = vpop.f32.mrb[0].mxu0
  %v3343 = vadd.f32 %v2021, %v3342
  %v3344 = vpop.f32.mrb[0].mxu0
  %v3345 = vadd.f32 %v2017, %v3344
  %v3346 = vpop.f32.mrb[0].mxu0
  %v3347 = vadd.f32 %v2021, %v3346
  %3348 = vmatprep.mubr.bf16.mxu0 %v2088
  %3349 = vmatmul.mubr.bf16.gmra.mrb[0].mxu0 %v2087
  %v3350 = vpop.f32.mrb[0].mxu0
  %v3351 = vadd.f32 %v2017, %v3350
  %v3352 = vpop.f32.mrb[0].mxu0
  %v3353 = vadd.f32 %v2021, %v3352
  %v3354 = vpop.f32.mrb[0].mxu0
  %v3355 = vadd.f32 %v2017, %v3354
  %v3356 = vpop.f32.mrb[0].mxu0
  %v3357 = vadd.f32 %v2021, %v3356
  %3358 = vdwg.mxu0
  %3359 = vmatprep.subr.bf16.mxu0 %v2747
  %3360 = vmatpush1.bf16.msra.mxu0 %v2746
  %3361 = vmatprep.subr.bf16.mxu0 %v2755
  %3362 = vmatpush1.bf16.msra.mxu0 %v2754
  %3363 = vmatprep.subr.bf16.mxu0 %v2763
  %3364 = vmatpush1.bf16.msra.mxu0 %v2762
  %3365 = vmatprep.subr.bf16.mxu0 %v2771
  %3366 = vmatpush1.bf16.msra.mxu0 %v2770
  %3367 = vmatprep.subr.bf16.mxu0 %v2779
  %3368 = vmatpush1.bf16.msra.mxu0 %v2778
  %3369 = vmatprep.subr.bf16.mxu0 %v2986
  %3370 = vmatpush1.bf16.msra.mxu0 %v2983
  %3371 = vmatprep.subr.bf16.mxu0 0
  %3372 = vmatpush1.bf16.msra.mxu0 0
  %3373 = vmatprep.subr.bf16.mxu0 0
  %3374 = vmatpush1.bf16.msra.mxu0 0
  %3375 = vmatprep.subr.bf16.mxu0 0
  %3376 = vmatpush1.bf16.msra.mxu0 0
  %3377 = vmatprep.subr.bf16.mxu0 0
  %3378 = vmatpush1.bf16.msra.mxu0 0
  %3379 = vmatprep.subr.bf16.mxu0 0
  %3380 = vmatpush1.bf16.msra.mxu0 0
  %3381 = vmatprep.subr.bf16.mxu0 0
  %3382 = vmatpush1.bf16.msra.mxu0 0
  %3383 = vmatprep.subr.bf16.mxu0 0
  %3384 = vmatpush1.bf16.msra.mxu0 0
  %3385 = vmatprep.subr.bf16.mxu0 0
  %3386 = vmatpush1.bf16.msra.mxu0 0
  %3387 = vmatprep.subr.bf16.mxu0 0
  %3388 = vmatpush1.bf16.msra.mxu0 0
  %3389 = vmatprep.subr.bf16.mxu0 0
  %3390 = vmatpush1.bf16.msra.mxu0 0
  %3391 = vmatprep.mubr.bf16.mxu0 0
  %3392 = vmatmul.mubr.bf16.gmra.mrb[0].mxu0 %v2959
  %v3393 = vpop.f32.mrb[0].mxu0
  %v3394 = vadd.f32 %v3321, %v3393
  %v3395 = vpop.f32.mrb[0].mxu0
  %v3396 = vadd.f32 %v3323, %v3395
  %v3397 = vpop.f32.mrb[0].mxu0
  %v3398 = vadd.f32 %v3325, %v3397
  %v3399 = vpop.f32.mrb[0].mxu0
  %v3400 = vadd.f32 %v3327, %v3399
  %3401 = vmatprep.mubr.bf16.mxu0 0
  %3402 = vmatmul.mubr.bf16.gmra.mrb[0].mxu0 %v2962
  %v3403 = vpop.f32.mrb[0].mxu0
  %v3404 = vadd.f32 %v3331, %v3403
  %v3405 = vpop.f32.mrb[0].mxu0
  %v3406 = vadd.f32 %v3333, %v3405
  %v3407 = vpop.f32.mrb[0].mxu0
  %v3408 = vadd.f32 %v3335, %v3407
  %v3409 = vpop.f32.mrb[0].mxu0
  %v3410 = vadd.f32 %v3337, %v3409
  %3411 = vmatprep.mubr.bf16.mxu0 0
  %3412 = vmatmul.mubr.bf16.gmra.mrb[0].mxu0 %v2965
  %v3413 = vpop.f32.mrb[0].mxu0
  %v3414 = vadd.f32 %v3341, %v3413
  %v3415 = vpop.f32.mrb[0].mxu0
  %v3416 = vadd.f32 %v3343, %v3415
  %v3417 = vpop.f32.mrb[0].mxu0
  %v3418 = vadd.f32 %v3345, %v3417
  %v3419 = vpop.f32.mrb[0].mxu0
  %v3420 = vadd.f32 %v3347, %v3419
  %3421 = vmatprep.mubr.bf16.mxu0 0
  %3422 = vmatmul.mubr.bf16.gmra.mrb[0].mxu0 %v2968
  %v3423 = vpop.f32.mrb[0].mxu0
  %v3424 = vadd.f32 %v3351, %v3423
  %v3425 = vpop.f32.mrb[0].mxu0
  %v3426 = vadd.f32 %v3353, %v3425
  %v3427 = vpop.f32.mrb[0].mxu0
  %v3428 = vadd.f32 %v3355, %v3427
  %v3429 = vpop.f32.mrb[0].mxu0
  %v3430 = vadd.f32 %v3357, %v3429
  %3431 = vdwg.mxu0
  %3432 = vmatprep.subr.bf16.mxu0 %v2621
  %3433 = vmatpush1.bf16.msra.mxu0 %v2620
  %3434 = vmatprep.subr.bf16.mxu0 %v2629
  %3435 = vmatpush1.bf16.msra.mxu0 %v2628
  %3436 = vmatprep.subr.bf16.mxu0 %v2637
  %3437 = vmatpush1.bf16.msra.mxu0 %v2636
  %3438 = vmatprep.subr.bf16.mxu0 %v2645
  %3439 = vmatpush1.bf16.msra.mxu0 %v2644
  %3440 = vmatprep.subr.bf16.mxu0 %v2653
  %3441 = vmatpush1.bf16.msra.mxu0 %v2652
  %3442 = vmatprep.subr.bf16.mxu0 %v2661
  %3443 = vmatpush1.bf16.msra.mxu0 %v2660
  %3444 = vmatprep.subr.bf16.mxu0 %v2669
  %3445 = vmatpush1.bf16.msra.mxu0 %v2668
  %3446 = vmatprep.subr.bf16.mxu0 %v2677
  %3447 = vmatpush1.bf16.msra.mxu0 %v2676
  %3448 = vmatprep.subr.bf16.mxu0 %v2685
  %3449 = vmatpush1.bf16.msra.mxu0 %v2684
  %3450 = vmatprep.subr.bf16.mxu0 %v2693
  %3451 = vmatpush1.bf16.msra.mxu0 %v2692
  %3452 = vmatprep.subr.bf16.mxu0 %v2701
  %3453 = vmatpush1.bf16.msra.mxu0 %v2700
  %3454 = vmatprep.subr.bf16.mxu0 %v2709
  %3455 = vmatpush1.bf16.msra.mxu0 %v2708
  %3456 = vmatprep.subr.bf16.mxu0 %v2717
  %3457 = vmatpush1.bf16.msra.mxu0 %v2716
  %3458 = vmatprep.subr.bf16.mxu0 %v2725
  %3459 = vmatpush1.bf16.msra.mxu0 %v2724
  %3460 = vmatprep.subr.bf16.mxu0 %v2733
  %3461 = vmatpush1.bf16.msra.mxu0 %v2732
  %3462 = vmatprep.subr.bf16.mxu0 %v2741
  %3463 = vmatpush1.bf16.msra.mxu0 %v2740
  %3464 = vmatprep.mubr.bf16.mxu0 %v2079
  %3465 = vmatmul.mubr.bf16.gmra.mrb[0].mxu0 %v2078
  %v3466 = vpop.f32.mrb[0].mxu0
  %v3467 = vadd.f32 %v2025, %v3466
  %v3468 = vpop.f32.mrb[0].mxu0
  %v3469 = vadd.f32 %v2029, %v3468
  %v3470 = vpop.f32.mrb[0].mxu0
  %v3471 = vadd.f32 %v2025, %v3470
  %v3472 = vpop.f32.mrb[0].mxu0
  %v3473 = vadd.f32 %v2029, %v3472
  %3474 = vmatprep.mubr.bf16.mxu0 %v2082
  %3475 = vmatmul.mubr.bf16.gmra.mrb[0].mxu0 %v2081
  %v3476 = vpop.f32.mrb[0].mxu0
  %v3477 = vadd.f32 %v2025, %v3476
  %v3478 = vpop.f32.mrb[0].mxu0
  %v3479 = vadd.f32 %v2029, %v3478
  %v3480 = vpop.f32.mrb[0].mxu0
  %v3481 = vadd.f32 %v2025, %v3480
  %v3482 = vpop.f32.mrb[0].mxu0
  %v3483 = vadd.f32 %v2029, %v3482
  %3484 = vmatprep.mubr.bf16.mxu0 %v2085
  %3485 = vmatmul.mubr.bf16.gmra.mrb[0].mxu0 %v2084
  %v3486 = vpop.f32.mrb[0].mxu0
  %v3487 = vadd.f32 %v2025, %v3486
  %v3488 = vpop.f32.mrb[0].mxu0
  %v3489 = vadd.f32 %v2029, %v3488
  %v3490 = vpop.f32.mrb[0].mxu0
  %v3491 = vadd.f32 %v2025, %v3490
  %v3492 = vpop.f32.mrb[0].mxu0
  %v3493 = vadd.f32 %v2029, %v3492
  %3494 = vmatprep.mubr.bf16.mxu0 %v2088
  %3495 = vmatmul.mubr.bf16.gmra.mrb[0].mxu0 %v2087
  %v3496 = vpop.f32.mrb[0].mxu0
  %v3497 = vadd.f32 %v2025, %v3496
  %v3498 = vpop.f32.mrb[0].mxu0
  %v3499 = vadd.f32 %v2029, %v3498
  %v3500 = vpop.f32.mrb[0].mxu0
  %v3501 = vadd.f32 %v2025, %v3500
  %v3502 = vpop.f32.mrb[0].mxu0
  %v3503 = vadd.f32 %v2029, %v3502
  %3504 = vdwg.mxu0
  %3505 = vmatprep.subr.bf16.mxu0 %v2749
  %3506 = vmatpush1.bf16.msra.mxu0 %v2748
  %3507 = vmatprep.subr.bf16.mxu0 %v2757
  %3508 = vmatpush1.bf16.msra.mxu0 %v2756
  %3509 = vmatprep.subr.bf16.mxu0 %v2765
  %3510 = vmatpush1.bf16.msra.mxu0 %v2764
  %3511 = vmatprep.subr.bf16.mxu0 %v2773
  %3512 = vmatpush1.bf16.msra.mxu0 %v2772
  %3513 = vmatprep.subr.bf16.mxu0 %v2781
  %3514 = vmatpush1.bf16.msra.mxu0 %v2780
  %3515 = vmatprep.subr.bf16.mxu0 %v2992
  %3516 = vmatpush1.bf16.msra.mxu0 %v2989
  %3517 = vmatprep.subr.bf16.mxu0 0
  %3518 = vmatpush1.bf16.msra.mxu0 0
  %3519 = vmatprep.subr.bf16.mxu0 0
  %3520 = vmatpush1.bf16.msra.mxu0 0
  %3521 = vmatprep.subr.bf16.mxu0 0
  %3522 = vmatpush1.bf16.msra.mxu0 0
  %3523 = vmatprep.subr.bf16.mxu0 0
  %3524 = vmatpush1.bf16.msra.mxu0 0
  %3525 = vmatprep.subr.bf16.mxu0 0
  %3526 = vmatpush1.bf16.msra.mxu0 0
  %3527 = vmatprep.subr.bf16.mxu0 0
  %3528 = vmatpush1.bf16.msra.mxu0 0
  %3529 = vmatprep.subr.bf16.mxu0 0
  %3530 = vmatpush1.bf16.msra.mxu0 0
  %3531 = vmatprep.subr.bf16.mxu0 0
  %3532 = vmatpush1.bf16.msra.mxu0 0
  %3533 = vmatprep.subr.bf16.mxu0 0
  %3534 = vmatpush1.bf16.msra.mxu0 0
  %3535 = vmatprep.subr.bf16.mxu0 0
  %3536 = vmatpush1.bf16.msra.mxu0 0
  %3537 = vmatprep.mubr.bf16.mxu0 0
  %3538 = vmatmul.mubr.bf16.gmra.mrb[0].mxu0 %v2959
  %v3539 = vpop.f32.mrb[0].mxu0
  %v3540 = vadd.f32 %v3467, %v3539
  %v3541 = vpop.f32.mrb[0].mxu0
  %v3542 = vadd.f32 %v3469, %v3541
  %v3543 = vpop.f32.mrb[0].mxu0
  %v3544 = vadd.f32 %v3471, %v3543
  %v3545 = vpop.f32.mrb[0].mxu0
  %v3546 = vadd.f32 %v3473, %v3545
  %3547 = vmatprep.mubr.bf16.mxu0 0
  %3548 = vmatmul.mubr.bf16.gmra.mrb[0].mxu0 %v2962
  %v3549 = vpop.f32.mrb[0].mxu0
  %v3550 = vadd.f32 %v3477, %v3549
  %v3551 = vpop.f32.mrb[0].mxu0
  %v3552 = vadd.f32 %v3479, %v3551
  %v3553 = vpop.f32.mrb[0].mxu0
  %v3554 = vadd.f32 %v3481, %v3553
  %v3555 = vpop.f32.mrb[0].mxu0
  %v3556 = vadd.f32 %v3483, %v3555
  %3557 = vmatprep.mubr.bf16.mxu0 0
  %3558 = vmatmul.mubr.bf16.gmra.mrb[0].mxu0 %v2965
  %v3559 = vpop.f32.mrb[0].mxu0
  %v3560 = vadd.f32 %v3487, %v3559
  %v3561 = vpop.f32.mrb[0].mxu0
  %v3562 = vadd.f32 %v3489, %v3561
  %v3563 = vpop.f32.mrb[0].mxu0
  %v3564 = vadd.f32 %v3491, %v3563
  %v3565 = vpop.f32.mrb[0].mxu0
  %v3566 = vadd.f32 %v3493, %v3565
  %3567 = vmatprep.mubr.bf16.mxu0 0
  %3568 = vmatmul.mubr.bf16.gmra.mrb[0].mxu0 %v2968
  %v3569 = vpop.f32.mrb[0].mxu0
  %v3570 = vadd.f32 %v3497, %v3569
  %v3571 = vpop.f32.mrb[0].mxu0
  %v3572 = vadd.f32 %v3499, %v3571
  %v3573 = vpop.f32.mrb[0].mxu0
  %v3574 = vadd.f32 %v3501, %v3573
  %v3575 = vpop.f32.mrb[0].mxu0
  %v3576 = vadd.f32 %v3503, %v3575
  %3577 = vdwg.mxu0
  %3578 = vst [vmem:[#allocation2] sm:$0xff] %v1332
  %3579 = vst [vmem:[#allocation2 + $0x8] sm:$0xff] %v1334
  %3580 = vst [vmem:[#allocation2 + $0x10] sm:$0xff] %v1478
  %3581 = vst [vmem:[#allocation2 + $0x18] sm:$0xff] %v1480
  %3582 = vst [vmem:[#allocation2 + $0x20] sm:$0xff] %v1624
  %3583 = vst [vmem:[#allocation2 + $0x28] sm:$0xff] %v1626
  %3584 = vst [vmem:[#allocation2 + $0x30] sm:$0xff] %v1770
  %3585 = vst [vmem:[#allocation2 + $0x38] sm:$0xff] %v1772
  %3586 = vst [vmem:[#allocation2 + $0x40] sm:$0xff] %v1336
  %3587 = vst [vmem:[#allocation2 + $0x48] sm:$0xff] %v1338
  %3588 = vst [vmem:[#allocation2 + $0x50] sm:$0xff] %v1482
  %3589 = vst [vmem:[#allocation2 + $0x58] sm:$0xff] %v1484
  %3590 = vst [vmem:[#allocation2 + $0x60] sm:$0xff] %v1628
  %3591 = vst [vmem:[#allocation2 + $0x68] sm:$0xff] %v1630
  %3592 = vst [vmem:[#allocation2 + $0x70] sm:$0xff] %v1774
  %3593 = vst [vmem:[#allocation2 + $0x78] sm:$0xff] %v1776
  %3594 = vst [vmem:[#allocation2 + $0x80] sm:$0xff] %v1342
  %3595 = vst [vmem:[#allocation2 + $0x88] sm:$0xff] %v1344
  %3596 = vst [vmem:[#allocation2 + $0x90] sm:$0xff] %v1488
  %3597 = vst [vmem:[#allocation2 + $0x98] sm:$0xff] %v1490
  %3598 = vst [vmem:[#allocation2 + $0xa0] sm:$0xff] %v1634
  %3599 = vst [vmem:[#allocation2 + $0xa8] sm:$0xff] %v1636
  %3600 = vst [vmem:[#allocation2 + $0xb0] sm:$0xff] %v1780
  %3601 = vst [vmem:[#allocation2 + $0xb8] sm:$0xff] %v1782
  %3602 = vst [vmem:[#allocation2 + $0xc0] sm:$0xff] %v1346
  %3603 = vst [vmem:[#allocation2 + $0xc8] sm:$0xff] %v1348
  %3604 = vst [vmem:[#allocation2 + $0xd0] sm:$0xff] %v1492
  %3605 = vst [vmem:[#allocation2 + $0xd8] sm:$0xff] %v1494
  %3606 = vst [vmem:[#allocation2 + $0xe0] sm:$0xff] %v1638
  %3607 = vst [vmem:[#allocation2 + $0xe8] sm:$0xff] %v1640
  %3608 = vst [vmem:[#allocation2 + $0xf0] sm:$0xff] %v1784
  %3609 = vst [vmem:[#allocation2 + $0xf8] sm:$0xff] %v1786
  %3610 = vst [vmem:[#allocation2 + $0x100] sm:$0xff] %v1352
  %3611 = vst [vmem:[#allocation2 + $0x108] sm:$0xff] %v1354
  %3612 = vst [vmem:[#allocation2 + $0x110] sm:$0xff] %v1498
  %3613 = vst [vmem:[#allocation2 + $0x118] sm:$0xff] %v1500
  %3614 = vst [vmem:[#allocation2 + $0x120] sm:$0xff] %v1644
  %3615 = vst [vmem:[#allocation2 + $0x128] sm:$0xff] %v1646
  %3616 = vst [vmem:[#allocation2 + $0x130] sm:$0xff] %v1790
  %3617 = vst [vmem:[#allocation2 + $0x138] sm:$0xff] %v1792
  %3618 = vst [vmem:[#allocation2 + $0x140] sm:$0xff] %v1356
  %3619 = vst [vmem:[#allocation2 + $0x148] sm:$0xff] %v1358
  %3620 = vst [vmem:[#allocation2 + $0x150] sm:$0xff] %v1502
  %3621 = vst [vmem:[#allocation2 + $0x158] sm:$0xff] %v1504
  %3622 = vst [vmem:[#allocation2 + $0x160] sm:$0xff] %v1648
  %3623 = vst [vmem:[#allocation2 + $0x168] sm:$0xff] %v1650
  %3624 = vst [vmem:[#allocation2 + $0x170] sm:$0xff] %v1794
  %3625 = vst [vmem:[#allocation2 + $0x178] sm:$0xff] %v1796
  %3626 = vst [vmem:[#allocation2 + $0x180] sm:$0xff] %v1362
  %3627 = vst [vmem:[#allocation2 + $0x188] sm:$0xff] %v1364
  %3628 = vst [vmem:[#allocation2 + $0x190] sm:$0xff] %v1508
  %3629 = vst [vmem:[#allocation2 + $0x198] sm:$0xff] %v1510
  %3630 = vst [vmem:[#allocation2 + $0x1a0] sm:$0xff] %v1654
  %3631 = vst [vmem:[#allocation2 + $0x1a8] sm:$0xff] %v1656
  %3632 = vst [vmem:[#allocation2 + $0x1b0] sm:$0xff] %v1800
  %3633 = vst [vmem:[#allocation2 + $0x1b8] sm:$0xff] %v1802
  %3634 = vst [vmem:[#allocation2 + $0x1c0] sm:$0xff] %v1366
  %3635 = vst [vmem:[#allocation2 + $0x1c8] sm:$0xff] %v1368
  %3636 = vst [vmem:[#allocation2 + $0x1d0] sm:$0xff] %v1512
  %3637 = vst [vmem:[#allocation2 + $0x1d8] sm:$0xff] %v1514
  %3638 = vst [vmem:[#allocation2 + $0x1e0] sm:$0xff] %v1658
  %3639 = vst [vmem:[#allocation2 + $0x1e8] sm:$0xff] %v1660
  %3640 = vst [vmem:[#allocation2 + $0x1f0] sm:$0xff] %v1804
  %3641 = vst [vmem:[#allocation2 + $0x1f8] sm:$0xff] %v1806
  %3642 = vst [vmem:[#allocation3] sm:$0xff] %v3102
  %3643 = vst [vmem:[#allocation3 + $0x8] sm:$0xff] %v3104
  %3644 = vst [vmem:[#allocation3 + $0x10] sm:$0xff] %v3248
  %3645 = vst [vmem:[#allocation3 + $0x18] sm:$0xff] %v3250
  %3646 = vst [vmem:[#allocation3 + $0x20] sm:$0xff] %v3394
  %3647 = vst [vmem:[#allocation3 + $0x28] sm:$0xff] %v3396
  %3648 = vst [vmem:[#allocation3 + $0x30] sm:$0xff] %v3540
  %3649 = vst [vmem:[#allocation3 + $0x38] sm:$0xff] %v3542
  %3650 = vst [vmem:[#allocation3 + $0x40] sm:$0xff] %v3106
  %3651 = vst [vmem:[#allocation3 + $0x48] sm:$0xff] %v3108
  %3652 = vst [vmem:[#allocation3 + $0x50] sm:$0xff] %v3252
  %3653 = vst [vmem:[#allocation3 + $0x58] sm:$0xff] %v3254
  %3654 = vst [vmem:[#allocation3 + $0x60] sm:$0xff] %v3398
  %3655 = vst [vmem:[#allocation3 + $0x68] sm:$0xff] %v3400
  %3656 = vst [vmem:[#allocation3 + $0x70] sm:$0xff] %v3544
  %3657 = vst [vmem:[#allocation3 + $0x78] sm:$0xff] %v3546
  %3658 = vst [vmem:[#allocation3 + $0x80] sm:$0xff] %v3112
  %3659 = vst [vmem:[#allocation3 + $0x88] sm:$0xff] %v3114
  %3660 = vst [vmem:[#allocation3 + $0x90] sm:$0xff] %v3258
  %3661 = vst [vmem:[#allocation3 + $0x98] sm:$0xff] %v3260
  %3662 = vst [vmem:[#allocation3 + $0xa0] sm:$0xff] %v3404
  %3663 = vst [vmem:[#allocation3 + $0xa8] sm:$0xff] %v3406
  %3664 = vst [vmem:[#allocation3 + $0xb0] sm:$0xff] %v3550
  %3665 = vst [vmem:[#allocation3 + $0xb8] sm:$0xff] %v3552
  %3666 = vst [vmem:[#allocation3 + $0xc0] sm:$0xff] %v3116
  %3667 = vst [vmem:[#allocation3 + $0xc8] sm:$0xff] %v3118
  %3668 = vst [vmem:[#allocation3 + $0xd0] sm:$0xff] %v3262
  %3669 = vst [vmem:[#allocation3 + $0xd8] sm:$0xff] %v3264
  %3670 = vst [vmem:[#allocation3 + $0xe0] sm:$0xff] %v3408
  %3671 = vst [vmem:[#allocation3 + $0xe8] sm:$0xff] %v3410
  %3672 = vst [vmem:[#allocation3 + $0xf0] sm:$0xff] %v3554
  %3673 = vst [vmem:[#allocation3 + $0xf8] sm:$0xff] %v3556
  %3674 = vst [vmem:[#allocation3 + $0x100] sm:$0xff] %v3122
  %3675 = vst [vmem:[#allocation3 + $0x108] sm:$0xff] %v3124
  %3676 = vst [vmem:[#allocation3 + $0x110] sm:$0xff] %v3268
  %3677 = vst [vmem:[#allocation3 + $0x118] sm:$0xff] %v3270
  %3678 = vst [vmem:[#allocation3 + $0x120] sm:$0xff] %v3414
  %3679 = vst [vmem:[#allocation3 + $0x128] sm:$0xff] %v3416
  %3680 = vst [vmem:[#allocation3 + $0x130] sm:$0xff] %v3560
  %3681 = vst [vmem:[#allocation3 + $0x138] sm:$0xff] %v3562
  %3682 = vst [vmem:[#allocation3 + $0x140] sm:$0xff] %v3126
  %3683 = vst [vmem:[#allocation3 + $0x148] sm:$0xff] %v3128
  %3684 = vst [vmem:[#allocation3 + $0x150] sm:$0xff] %v3272
  %3685 = vst [vmem:[#allocation3 + $0x158] sm:$0xff] %v3274
  %3686 = vst [vmem:[#allocation3 + $0x160] sm:$0xff] %v3418
  %3687 = vst [vmem:[#allocation3 + $0x168] sm:$0xff] %v3420
  %3688 = vst [vmem:[#allocation3 + $0x170] sm:$0xff] %v3564
  %3689 = vst [vmem:[#allocation3 + $0x178] sm:$0xff] %v3566
  %3690 = vst [vmem:[#allocation3 + $0x180] sm:$0xff] %v3132
  %3691 = vst [vmem:[#allocation3 + $0x188] sm:$0xff] %v3134
  %3692 = vst [vmem:[#allocation3 + $0x190] sm:$0xff] %v3278
  %3693 = vst [vmem:[#allocation3 + $0x198] sm:$0xff] %v3280
  %3694 = vst [vmem:[#allocation3 + $0x1a0] sm:$0xff] %v3424
  %3695 = vst [vmem:[#allocation3 + $0x1a8] sm:$0xff] %v3426
  %3696 = vst [vmem:[#allocation3 + $0x1b0] sm:$0xff] %v3570
  %3697 = vst [vmem:[#allocation3 + $0x1b8] sm:$0xff] %v3572
  %3698 = vst [vmem:[#allocation3 + $0x1c0] sm:$0xff] %v3136
  %3699 = vst [vmem:[#allocation3 + $0x1c8] sm:$0xff] %v3138
  %3700 = vst [vmem:[#allocation3 + $0x1d0] sm:$0xff] %v3282
  %3701 = vst [vmem:[#allocation3 + $0x1d8] sm:$0xff] %v3284
  %3702 = vst [vmem:[#allocation3 + $0x1e0] sm:$0xff] %v3428
  %3703 = vst [vmem:[#allocation3 + $0x1e8] sm:$0xff] %v3430
  %3704 = vst [vmem:[#allocation3 + $0x1f0] sm:$0xff] %v3574
  %3705 = vst [vmem:[#allocation3 + $0x1f8] sm:$0xff] %v3576
  %3706 = vst [vmem:[#allocation4] sm:$0xff] 0.0
  %3707 = vst [vmem:[#allocation4 + $0x8] sm:$0xff] 0.0
  %3708 = vst [vmem:[#allocation5] sm:$0xff] 0.0
  %3709 = vst [vmem:[#allocation5 + $0x8] sm:$0xff] 0.0
  %3710 = vst [vmem:[#allocation6] sm:$0xff] 0.0
  %3711 = vst [vmem:[#allocation6 + $0x8] sm:$0xff] 0.0
  %3712 = vst [vmem:[#allocation7] sm:$0xff] 0.0
  %3713 = vst [vmem:[#allocation7 + $0x8] sm:$0xff] 0.0
  %3714 = vst [vmem:[#allocation8] sm:$0xff] -1e+30
  %3715 = vst [vmem:[#allocation8 + $0x8] sm:$0xff] -1e+30
  %3716 = vst [vmem:[#allocation9] sm:$0xff] -1e+30
  %3717 = vst [vmem:[#allocation9 + $0x8] sm:$0xff] -1e+30
  %v3718 = vld [vmem:[%s0] sm:$0xff]
  loop: start=0, step=1, limit=8
  $region38: #{_run_model.2} parent=0 // loop_pre_header
    _
  $region39: #{_run_model.2} parent=0 // loop_header
    %s3720 = sphi 0, %s3724
    %p3721 = scmp.ge.s32.totalorder %s3720, 8
  $region40: #{_run_model.2} parent=0 // loop_header_branch
    %3723 = sbr.rel (%p3721) target = $region44
  $region41: #{_run_model.2} parent=0 // loop_body
    %s3725 = smul.u32 %s3720, 8
    %s3726 = smul.addr %s3725, 8
    %s3727 = scalar_lea.vmem [#allocation2], %s3726
    %v3728 = vld [vmem:[%s3727] sm:$0xff]
    %v3729 = vld [vmem:[%s3727 + $0x8] sm:$0xff]
    %v3730 = vld [vmem:[%s3727 + $0x10] sm:$0xff]
    %v3731 = vld [vmem:[%s3727 + $0x18] sm:$0xff]
    %v3732 = vld [vmem:[%s3727 + $0x20] sm:$0xff]
    %v3733 = vld [vmem:[%s3727 + $0x28] sm:$0xff]
    %v3734 = vld [vmem:[%s3727 + $0x30] sm:$0xff]
    %v3735 = vld [vmem:[%s3727 + $0x38] sm:$0xff]
    %v3736 = vld [vmem:[#allocation4] sm:$0xff]
    %v3737 = vld [vmem:[#allocation4 + $0x8] sm:$0xff]
    %v3738 = vpack.c.bf16 %v3736, %v3736
    %v3739 = vpack.c.bf16 %v3737, %v3737
    %v3740 = vld [vmem:[%s7] sm:$0xff]
    %v3741 = vld [vmem:[%s7 + $0x8] sm:$0xff]
    %v3742 = vld [vmem:[%s7 + $0x10] sm:$0xff]
    %v3743 = vld [vmem:[%s7 + $0x18] sm:$0xff]
    %v3744 = vld [vmem:[%s7 + $0x20] sm:$0xff]
    %v3745 = vld [vmem:[%s7 + $0x28] sm:$0xff]
    %v3746 = vld [vmem:[%s7 + $0x30] sm:$0xff]
    %v3747 = vld [vmem:[%s7 + $0x38] sm:$0xff]
    %v3748 = vld [vmem:[%s7 + $0x40] sm:$0xff]
    %v3749 = vld [vmem:[%s7 + $0x48] sm:$0xff]
    %v3750 = vld [vmem:[%s7 + $0x50] sm:$0xff]
    %v3751 = vld [vmem:[%s7 + $0x58] sm:$0xff]
    %v3752 = vld [vmem:[%s7 + $0x60] sm:$0xff]
    %v3753 = vld [vmem:[%s7 + $0x68] sm:$0xff]
    %v3754 = vld [vmem:[%s7 + $0x70] sm:$0xff]
    %v3755 = vld [vmem:[%s7 + $0x78] sm:$0xff]
    %v3756 = vld [vmem:[%s7 + $0x80] sm:$0xff]
    %v3757 = vld [vmem:[%s7 + $0x88] sm:$0xff]
    %v3758 = vld [vmem:[%s7 + $0x90] sm:$0xff]
    %v3759 = vld [vmem:[%s7 + $0x98] sm:$0xff]
    %v3760 = vld [vmem:[%s7 + $0xa0] sm:$0xff]
    %v3761 = vld [vmem:[%s7 + $0xa8] sm:$0xff]
    %v3762 = vld [vmem:[%s7 + $0xb0] sm:$0xff]
    %v3763 = vld [vmem:[%s7 + $0xb8] sm:$0xff]
    %v3764 = vld [vmem:[%s7 + $0xc0] sm:$0xff]
    %v3765 = vld [vmem:[%s7 + $0xc8] sm:$0xff]
    %v3766 = vld [vmem:[%s7 + $0xd0] sm:$0xff]
    %v3767 = vld [vmem:[%s7 + $0xd8] sm:$0xff]
    %v3768 = vld [vmem:[%s7 + $0xe0] sm:$0xff]
    %v3769 = vld [vmem:[%s7 + $0xe8] sm:$0xff]
    %v3770 = vld [vmem:[%s7 + $0xf0] sm:$0xff]
    %v3771 = vld [vmem:[%s7 + $0xf8] sm:$0xff]
    %v3772 = vld [vmem:[%s7 + $0x100] sm:$0xff]
    %v3773 = vld [vmem:[%s7 + $0x108] sm:$0xff]
    %v3774 = vld [vmem:[%s7 + $0x110] sm:$0xff]
    %v3775 = vld [vmem:[%s7 + $0x118] sm:$0xff]
    %v3776 = vld [vmem:[%s7 + $0x120] sm:$0xff]
    %v3777 = vld [vmem:[%s7 + $0x128] sm:$0xff]
    %v3778 = vld [vmem:[%s7 + $0x130] sm:$0xff]
    %v3779 = vld [vmem:[%s7 + $0x138] sm:$0xff]
    %v3780 = vld [vmem:[%s7 + $0x140] sm:$0xff]
    %v3781 = vld [vmem:[%s7 + $0x148] sm:$0xff]
    %v3782 = vld [vmem:[%s7 + $0x150] sm:$0xff]
    %v3783 = vld [vmem:[%s7 + $0x158] sm:$0xff]
    %v3784 = vld [vmem:[%s7 + $0x160] sm:$0xff]
    %v3785 = vld [vmem:[%s7 + $0x168] sm:$0xff]
    %v3786 = vld [vmem:[%s7 + $0x170] sm:$0xff]
    %v3787 = vld [vmem:[%s7 + $0x178] sm:$0xff]
    %v3788 = vld [vmem:[%s7 + $0x180] sm:$0xff]
    %v3789 = vld [vmem:[%s7 + $0x188] sm:$0xff]
    %v3790 = vld [vmem:[%s7 + $0x190] sm:$0xff]
    %v3791 = vld [vmem:[%s7 + $0x198] sm:$0xff]
    %v3792 = vld [vmem:[%s7 + $0x1a0] sm:$0xff]
    %v3793 = vld [vmem:[%s7 + $0x1a8] sm:$0xff]
    %v3794 = vld [vmem:[%s7 + $0x1b0] sm:$0xff]
    %v3795 = vld [vmem:[%s7 + $0x1b8] sm:$0xff]
    %v3796 = vld [vmem:[%s7 + $0x1c0] sm:$0xff]
    %v3797 = vld [vmem:[%s7 + $0x1c8] sm:$0xff]
    %v3798 = vld [vmem:[%s7 + $0x1d0] sm:$0xff]
    %v3799 = vld [vmem:[%s7 + $0x1d8] sm:$0xff]
    %v3800 = vld [vmem:[%s7 + $0x1e0] sm:$0xff]
    %v3801 = vld [vmem:[%s7 + $0x1e8] sm:$0xff]
    %v3802 = vld [vmem:[%s7 + $0x1f0] sm:$0xff]
    %v3803 = vld [vmem:[%s7 + $0x1f8] sm:$0xff]
    %v3804 = vld [vmem:[%s7 + $0x200] sm:$0xff]
    %v3805 = vld [vmem:[%s7 + $0x208] sm:$0xff]
    %v3806 = vld [vmem:[%s7 + $0x210] sm:$0xff]
    %v3807 = vld [vmem:[%s7 + $0x218] sm:$0xff]
    %v3808 = vld [vmem:[%s7 + $0x220] sm:$0xff]
    %v3809 = vld [vmem:[%s7 + $0x228] sm:$0xff]
    %v3810 = vld [vmem:[%s7 + $0x230] sm:$0xff]
    %v3811 = vld [vmem:[%s7 + $0x238] sm:$0xff]
    %v3812 = vld [vmem:[%s7 + $0x240] sm:$0xff]
    %v3813 = vld [vmem:[%s7 + $0x248] sm:$0xff]
    %v3814 = vld [vmem:[%s7 + $0x250] sm:$0xff]
    %v3815 = vld [vmem:[%s7 + $0x258] sm:$0xff]
    %v3816 = vld [vmem:[%s7 + $0x260] sm:$0xff]
    %v3817 = vld [vmem:[%s7 + $0x268] sm:$0xff]
    %v3818 = vld [vmem:[%s7 + $0x270] sm:$0xff]
    %v3819 = vld [vmem:[%s7 + $0x278] sm:$0xff]
    %v3820 = vld [vmem:[%s7 + $0x280] sm:$0xff]
    %v3821 = vld [vmem:[%s7 + $0x288] sm:$0xff]
    %v3822 = vld [vmem:[%s7 + $0x290] sm:$0xff]
    %v3823 = vld [vmem:[%s7 + $0x298] sm:$0xff]
    %v3824 = vld [vmem:[%s7 + $0x2a0] sm:$0xff]
    %v3825 = vld [vmem:[%s7 + $0x2a8] sm:$0xff]
    %v3826 = vld [vmem:[%s7 + $0x2b0] sm:$0xff]
    %v3827 = vld [vmem:[%s7 + $0x2b8] sm:$0xff]
    %v3828 = vld [vmem:[%s7 + $0x2c0] sm:$0xff]
    %v3829 = vld [vmem:[%s7 + $0x2c8] sm:$0xff]
    %v3830 = vld [vmem:[%s7 + $0x2d0] sm:$0xff]
    %v3831 = vld [vmem:[%s7 + $0x2d8] sm:$0xff]
    %v3832 = vld [vmem:[%s7 + $0x2e0] sm:$0xff]
    %v3833 = vld [vmem:[%s7 + $0x2e8] sm:$0xff]
    %v3834 = vld [vmem:[%s7 + $0x2f0] sm:$0xff]
    %v3835 = vld [vmem:[%s7 + $0x2f8] sm:$0xff]
    %v3836 = vld [vmem:[%s7 + $0x300] sm:$0xff]
    %v3837 = vld [vmem:[%s7 + $0x308] sm:$0xff]
    %v3838 = vld [vmem:[%s7 + $0x310] sm:$0xff]
    %v3839 = vld [vmem:[%s7 + $0x318] sm:$0xff]
    %v3840 = vld [vmem:[%s7 + $0x320] sm:$0xff]
    %v3841 = vld [vmem:[%s7 + $0x328] sm:$0xff]
    %v3842 = vld [vmem:[%s7 + $0x330] sm:$0xff]
    %v3843 = vld [vmem:[%s7 + $0x338] sm:$0xff]
    %v3844 = vld [vmem:[%s7 + $0x340] sm:$0xff]
    %v3845 = vld [vmem:[%s7 + $0x348] sm:$0xff]
    %v3846 = vld [vmem:[%s7 + $0x350] sm:$0xff]
    %v3847 = vld [vmem:[%s7 + $0x358] sm:$0xff]
    %v3848 = vld [vmem:[%s7 + $0x360] sm:$0xff]
    %v3849 = vld [vmem:[%s7 + $0x368] sm:$0xff]
    %v3850 = vld [vmem:[%s7 + $0x370] sm:$0xff]
    %v3851 = vld [vmem:[%s7 + $0x378] sm:$0xff]
    %v3852 = vld [vmem:[%s7 + $0x380] sm:$0xff]
    %v3853 = vld [vmem:[%s7 + $0x388] sm:$0xff]
    %v3854 = vld [vmem:[%s7 + $0x390] sm:$0xff]
    %v3855 = vld [vmem:[%s7 + $0x398] sm:$0xff]
    %v3856 = vld [vmem:[%s7 + $0x3a0] sm:$0xff]
    %v3857 = vld [vmem:[%s7 + $0x3a8] sm:$0xff]
    %v3858 = vld [vmem:[%s7 + $0x3b0] sm:$0xff]
    %v3859 = vld [vmem:[%s7 + $0x3b8] sm:$0xff]
    %v3860 = vld [vmem:[%s7 + $0x3c0] sm:$0xff]
    %v3861 = vld [vmem:[%s7 + $0x3c8] sm:$0xff]
    %v3862 = vld [vmem:[%s7 + $0x3d0] sm:$0xff]
    %v3863 = vld [vmem:[%s7 + $0x3d8] sm:$0xff]
    %v3864 = vld [vmem:[%s7 + $0x3e0] sm:$0xff]
    %v3865 = vld [vmem:[%s7 + $0x3e8] sm:$0xff]
    %v3866 = vld [vmem:[%s7 + $0x3f0] sm:$0xff]
    %v3867 = vld [vmem:[%s7 + $0x3f8] sm:$0xff]
    %v3996 = vunpack.c.l.b16 %v3740
    %v3997 = vunpack.c.h.b16 %v3740
    %v3998 = vunpack.c.l.b16 %v3741
    %v3999 = vunpack.c.h.b16 %v3741
    %v4000 = vunpack.c.l.b16 %v3742
    %v4001 = vunpack.c.h.b16 %v3742
    %v4002 = vunpack.c.l.b16 %v3743
    %v4003 = vunpack.c.h.b16 %v3743
    %v4004 = vunpack.c.l.b16 %v3744
    %v4005 = vunpack.c.h.b16 %v3744
    %v4006 = vunpack.c.l.b16 %v3745
    %v4007 = vunpack.c.h.b16 %v3745
    %v4008 = vunpack.c.l.b16 %v3746
    %v4009 = vunpack.c.h.b16 %v3746
    %v4010 = vunpack.c.l.b16 %v3747
    %v4011 = vunpack.c.h.b16 %v3747
    %v4012 = vunpack.c.l.b16 %v3748
    %v4013 = vunpack.c.h.b16 %v3748
    %v4014 = vunpack.c.l.b16 %v3749
    %v4015 = vunpack.c.h.b16 %v3749
    %v4016 = vunpack.c.l.b16 %v3750
    %v4017 = vunpack.c.h.b16 %v3750
    %v4018 = vunpack.c.l.b16 %v3751
    %v4019 = vunpack.c.h.b16 %v3751
    %v4020 = vunpack.c.l.b16 %v3752
    %v4021 = vunpack.c.h.b16 %v3752
    %v4022 = vunpack.c.l.b16 %v3753
    %v4023 = vunpack.c.h.b16 %v3753
    %v4024 = vunpack.c.l.b16 %v3754
    %v4025 = vunpack.c.h.b16 %v3754
    %v4026 = vunpack.c.l.b16 %v3755
    %v4027 = vunpack.c.h.b16 %v3755
    %v4028 = vunpack.c.l.b16 %v3756
    %v4029 = vunpack.c.h.b16 %v3756
    %v4030 = vunpack.c.l.b16 %v3757
    %v4031 = vunpack.c.h.b16 %v3757
    %v4032 = vunpack.c.l.b16 %v3758
    %v4033 = vunpack.c.h.b16 %v3758
    %v4034 = vunpack.c.l.b16 %v3759
    %v4035 = vunpack.c.h.b16 %v3759
    %v4036 = vunpack.c.l.b16 %v3760
    %v4037 = vunpack.c.h.b16 %v3760
    %v4038 = vunpack.c.l.b16 %v3761
    %v4039 = vunpack.c.h.b16 %v3761
    %v4040 = vunpack.c.l.b16 %v3762
    %v4041 = vunpack.c.h.b16 %v3762
    %v4042 = vunpack.c.l.b16 %v3763
    %v4043 = vunpack.c.h.b16 %v3763
    %v4044 = vunpack.c.l.b16 %v3764
    %v4045 = vunpack.c.h.b16 %v3764
    %v4046 = vunpack.c.l.b16 %v3765
    %v4047 = vunpack.c.h.b16 %v3765
    %v4048 = vunpack.c.l.b16 %v3766
    %v4049 = vunpack.c.h.b16 %v3766
    %v4050 = vunpack.c.l.b16 %v3767
    %v4051 = vunpack.c.h.b16 %v3767
    %v4052 = vunpack.c.l.b16 %v3768
    %v4053 = vunpack.c.h.b16 %v3768
    %v4054 = vunpack.c.l.b16 %v3769
    %v4055 = vunpack.c.h.b16 %v3769
    %v4056 = vunpack.c.l.b16 %v3770
    %v4057 = vunpack.c.h.b16 %v3770
    %v4058 = vunpack.c.l.b16 %v3771
    %v4059 = vunpack.c.h.b16 %v3771
    %v4060 = vunpack.c.l.b16 %v3772
    %v4061 = vunpack.c.h.b16 %v3772
    %v4062 = vunpack.c.l.b16 %v3773
    %v4063 = vunpack.c.h.b16 %v3773
    %v4064 = vunpack.c.l.b16 %v3774
    %v4065 = vunpack.c.h.b16 %v3774
    %v4066 = vunpack.c.l.b16 %v3775
    %v4067 = vunpack.c.h.b16 %v3775
    %v4068 = vunpack.c.l.b16 %v3776
    %v4069 = vunpack.c.h.b16 %v3776
    %v4070 = vunpack.c.l.b16 %v3777
    %v4071 = vunpack.c.h.b16 %v3777
    %v4072 = vunpack.c.l.b16 %v3778
    %v4073 = vunpack.c.h.b16 %v3778
    %v4074 = vunpack.c.l.b16 %v3779
    %v4075 = vunpack.c.h.b16 %v3779
    %v4076 = vunpack.c.l.b16 %v3780
    %v4077 = vunpack.c.h.b16 %v3780
    %v4078 = vunpack.c.l.b16 %v3781
    %v4079 = vunpack.c.h.b16 %v3781
    %v4080 = vunpack.c.l.b16 %v3782
    %v4081 = vunpack.c.h.b16 %v3782
    %v4082 = vunpack.c.l.b16 %v3783
    %v4083 = vunpack.c.h.b16 %v3783
    %v4084 = vunpack.c.l.b16 %v3784
    %v4085 = vunpack.c.h.b16 %v3784
    %v4086 = vunpack.c.l.b16 %v3785
    %v4087 = vunpack.c.h.b16 %v3785
    %v4088 = vunpack.c.l.b16 %v3786
    %v4089 = vunpack.c.h.b16 %v3786
    %v4090 = vunpack.c.l.b16 %v3787
    %v4091 = vunpack.c.h.b16 %v3787
    %v4092 = vunpack.c.l.b16 %v3788
    %v4093 = vunpack.c.h.b16 %v3788
    %v4094 = vunpack.c.l.b16 %v3789
    %v4095 = vunpack.c.h.b16 %v3789
    %v4096 = vunpack.c.l.b16 %v3790
    %v4097 = vunpack.c.h.b16 %v3790
    %v4098 = vunpack.c.l.b16 %v3791
    %v4099 = vunpack.c.h.b16 %v3791
    %v4100 = vunpack.c.l.b16 %v3792
    %v4101 = vunpack.c.h.b16 %v3792
    %v4102 = vunpack.c.l.b16 %v3793
    %v4103 = vunpack.c.h.b16 %v3793
    %v4104 = vunpack.c.l.b16 %v3794
    %v4105 = vunpack.c.h.b16 %v3794
    %v4106 = vunpack.c.l.b16 %v3795
    %v4107 = vunpack.c.h.b16 %v3795
    %v4108 = vunpack.c.l.b16 %v3796
    %v4109 = vunpack.c.h.b16 %v3796
    %v4110 = vunpack.c.l.b16 %v3797
    %v4111 = vunpack.c.h.b16 %v3797
    %v4112 = vunpack.c.l.b16 %v3798
    %v4113 = vunpack.c.h.b16 %v3798
    %v4114 = vunpack.c.l.b16 %v3799
    %v4115 = vunpack.c.h.b16 %v3799
    %v4116 = vunpack.c.l.b16 %v3800
    %v4117 = vunpack.c.h.b16 %v3800
    %v4118 = vunpack.c.l.b16 %v3801
    %v4119 = vunpack.c.h.b16 %v3801
    %v4120 = vunpack.c.l.b16 %v3802
    %v4121 = vunpack.c.h.b16 %v3802
    %v4122 = vunpack.c.l.b16 %v3803
    %v4123 = vunpack.c.h.b16 %v3803
    %v4124 = vunpack.c.l.b16 %v3804
    %v4125 = vunpack.c.h.b16 %v3804
    %v4126 = vunpack.c.l.b16 %v3805
    %v4127 = vunpack.c.h.b16 %v3805
    %v4128 = vunpack.c.l.b16 %v3806
    %v4129 = vunpack.c.h.b16 %v3806
    %v4130 = vunpack.c.l.b16 %v3807
    %v4131 = vunpack.c.h.b16 %v3807
    %v4132 = vunpack.c.l.b16 %v3808
    %v4133 = vunpack.c.h.b16 %v3808
    %v4134 = vunpack.c.l.b16 %v3809
    %v4135 = vunpack.c.h.b16 %v3809
    %v4136 = vunpack.c.l.b16 %v3810
    %v4137 = vunpack.c.h.b16 %v3810
    %v4138 = vunpack.c.l.b16 %v3811
    %v4139 = vunpack.c.h.b16 %v3811
    %v4140 = vunpack.c.l.b16 %v3812
    %v4141 = vunpack.c.h.b16 %v3812
    %v4142 = vunpack.c.l.b16 %v3813
    %v4143 = vunpack.c.h.b16 %v3813
    %v4144 = vunpack.c.l.b16 %v3814
    %v4145 = vunpack.c.h.b16 %v3814
    %v4146 = vunpack.c.l.b16 %v3815
    %v4147 = vunpack.c.h.b16 %v3815
    %v4148 = vunpack.c.l.b16 %v3816
    %v4149 = vunpack.c.h.b16 %v3816
    %v4150 = vunpack.c.l.b16 %v3817
    %v4151 = vunpack.c.h.b16 %v3817
    %v4152 = vunpack.c.l.b16 %v3818
    %v4153 = vunpack.c.h.b16 %v3818
    %v4154 = vunpack.c.l.b16 %v3819
    %v4155 = vunpack.c.h.b16 %v3819
    %v4156 = vunpack.c.l.b16 %v3820
    %v4157 = vunpack.c.h.b16 %v3820
    %v4158 = vunpack.c.l.b16 %v3821
    %v4159 = vunpack.c.h.b16 %v3821
    %v4160 = vunpack.c.l.b16 %v3822
    %v4161 = vunpack.c.h.b16 %v3822
    %v4162 = vunpack.c.l.b16 %v3823
    %v4163 = vunpack.c.h.b16 %v3823
    %v4164 = vunpack.c.l.b16 %v3824
    %v4165 = vunpack.c.h.b16 %v3824
    %v4166 = vunpack.c.l.b16 %v3825
    %v4167 = vunpack.c.h.b16 %v3825
    %v4168 = vunpack.c.l.b16 %v3826
    %v4169 = vunpack.c.h.b16 %v3826
    %v4170 = vunpack.c.l.b16 %v3827
    %v4171 = vunpack.c.h.b16 %v3827
    %v4172 = vunpack.c.l.b16 %v3828
    %v4173 = vunpack.c.h.b16 %v3828
    %v4174 = vunpack.c.l.b16 %v3829
    %v4175 = vunpack.c.h.b16 %v3829
    %v4176 = vunpack.c.l.b16 %v3830
    %v4177 = vunpack.c.h.b16 %v3830
    %v4178 = vunpack.c.l.b16 %v3831
    %v4179 = vunpack.c.h.b16 %v3831
    %v4180 = vunpack.c.l.b16 %v3832
    %v4181 = vunpack.c.h.b16 %v3832
    %v4182 = vunpack.c.l.b16 %v3833
    %v4183 = vunpack.c.h.b16 %v3833
    %v4184 = vunpack.c.l.b16 %v3834
    %v4185 = vunpack.c.h.b16 %v3834
    %v4186 = vunpack.c.l.b16 %v3835
    %v4187 = vunpack.c.h.b16 %v3835
    %v4188 = vunpack.c.l.b16 %v3836
    %v4189 = vunpack.c.h.b16 %v3836
    %v4190 = vunpack.c.l.b16 %v3837
    %v4191 = vunpack.c.h.b16 %v3837
    %v4192 = vunpack.c.l.b16 %v3838
    %v4193 = vunpack.c.h.b16 %v3838
    %v4194 = vunpack.c.l.b16 %v3839
    %v4195 = vunpack.c.h.b16 %v3839
    %v4196 = vunpack.c.l.b16 %v3840
    %v4197 = vunpack.c.h.b16 %v3840
    %v4198 = vunpack.c.l.b16 %v3841
    %v4199 = vunpack.c.h.b16 %v3841
    %v4200 = vunpack.c.l.b16 %v3842
    %v4201 = vunpack.c.h.b16 %v3842
    %v4202 = vunpack.c.l.b16 %v3843
    %v4203 = vunpack.c.h.b16 %v3843
    %v4204 = vunpack.c.l.b16 %v3844
    %v4205 = vunpack.c.h.b16 %v3844
    %v4206 = vunpack.c.l.b16 %v3845
    %v4207 = vunpack.c.h.b16 %v3845
    %v4208 = vunpack.c.l.b16 %v3846
    %v4209 = vunpack.c.h.b16 %v3846
    %v4210 = vunpack.c.l.b16 %v3847
    %v4211 = vunpack.c.h.b16 %v3847
    %v4212 = vunpack.c.l.b16 %v3848
    %v4213 = vunpack.c.h.b16 %v3848
    %v4214 = vunpack.c.l.b16 %v3849
    %v4215 = vunpack.c.h.b16 %v3849
    %v4216 = vunpack.c.l.b16 %v3850
    %v4217 = vunpack.c.h.b16 %v3850
    %v4218 = vunpack.c.l.b16 %v3851
    %v4219 = vunpack.c.h.b16 %v3851
    %v4220 = vunpack.c.l.b16 %v3852
    %v4221 = vunpack.c.h.b16 %v3852
    %v4222 = vunpack.c.l.b16 %v3853
    %v4223 = vunpack.c.h.b16 %v3853
    %v4224 = vunpack.c.l.b16 %v3854
    %v4225 = vunpack.c.h.b16 %v3854
    %v4226 = vunpack.c.l.b16 %v3855
    %v4227 = vunpack.c.h.b16 %v3855
    %v4228 = vunpack.c.l.b16 %v3856
    %v4229 = vunpack.c.h.b16 %v3856
    %v4230 = vunpack.c.l.b16 %v3857
    %v4231 = vunpack.c.h.b16 %v3857
    %v4232 = vunpack.c.l.b16 %v3858
    %v4233 = vunpack.c.h.b16 %v3858
    %v4234 = vunpack.c.l.b16 %v3859
    %v4235 = vunpack.c.h.b16 %v3859
    %v4236 = vunpack.c.l.b16 %v3860
    %v4237 = vunpack.c.h.b16 %v3860
    %v4238 = vunpack.c.l.b16 %v3861
    %v4239 = vunpack.c.h.b16 %v3861
    %v4240 = vunpack.c.l.b16 %v3862
    %v4241 = vunpack.c.h.b16 %v3862
    %v4242 = vunpack.c.l.b16 %v3863
    %v4243 = vunpack.c.h.b16 %v3863
    %v4244 = vunpack.c.l.b16 %v3864
    %v4245 = vunpack.c.h.b16 %v3864
    %v4246 = vunpack.c.l.b16 %v3865
    %v4247 = vunpack.c.h.b16 %v3865
    %v4248 = vunpack.c.l.b16 %v3866
    %v4249 = vunpack.c.h.b16 %v3866
    %v4250 = vunpack.c.l.b16 %v3867
    %v4251 = vunpack.c.h.b16 %v3867
    %v4252 = vpack.c.b16 %v4004, %v3996
    %v4253 = vpack.c.b16 %v4005, %v3997
    %v4254 = vpack.c.b16 %v4006, %v3998
    %v4255 = vpack.c.b16 %v4007, %v3999
    %v4256 = vpack.c.b16 %v4008, %v4000
    %v4257 = vpack.c.b16 %v4009, %v4001
    %v4258 = vpack.c.b16 %v4010, %v4002
    %v4259 = vpack.c.b16 %v4011, %v4003
    %v4260 = vpack.c.b16 %v4020, %v4012
    %v4261 = vpack.c.b16 %v4021, %v4013
    %v4262 = vpack.c.b16 %v4022, %v4014
    %v4263 = vpack.c.b16 %v4023, %v4015
    %v4264 = vpack.c.b16 %v4024, %v4016
    %v4265 = vpack.c.b16 %v4025, %v4017
    %v4266 = vpack.c.b16 %v4026, %v4018
    %v4267 = vpack.c.b16 %v4027, %v4019
    %v4268 = vpack.c.b16 %v4036, %v4028
    %v4269 = vpack.c.b16 %v4037, %v4029
    %v4270 = vpack.c.b16 %v4038, %v4030
    %v4271 = vpack.c.b16 %v4039, %v4031
    %v4272 = vpack.c.b16 %v4040, %v4032
    %v4273 = vpack.c.b16 %v4041, %v4033
    %v4274 = vpack.c.b16 %v4042, %v4034
    %v4275 = vpack.c.b16 %v4043, %v4035
    %v4276 = vpack.c.b16 %v4052, %v4044
    %v4277 = vpack.c.b16 %v4053, %v4045
    %v4278 = vpack.c.b16 %v4054, %v4046
    %v4279 = vpack.c.b16 %v4055, %v4047
    %v4280 = vpack.c.b16 %v4056, %v4048
    %v4281 = vpack.c.b16 %v4057, %v4049
    %v4282 = vpack.c.b16 %v4058, %v4050
    %v4283 = vpack.c.b16 %v4059, %v4051
    %v4284 = vpack.c.b16 %v4068, %v4060
    %v4285 = vpack.c.b16 %v4069, %v4061
    %v4286 = vpack.c.b16 %v4070, %v4062
    %v4287 = vpack.c.b16 %v4071, %v4063
    %v4288 = vpack.c.b16 %v4072, %v4064
    %v4289 = vpack.c.b16 %v4073, %v4065
    %v4290 = vpack.c.b16 %v4074, %v4066
    %v4291 = vpack.c.b16 %v4075, %v4067
    %v4292 = vpack.c.b16 %v4084, %v4076
    %v4293 = vpack.c.b16 %v4085, %v4077
    %v4294 = vpack.c.b16 %v4086, %v4078
    %v4295 = vpack.c.b16 %v4087, %v4079
    %v4296 = vpack.c.b16 %v4088, %v4080
    %v4297 = vpack.c.b16 %v4089, %v4081
    %v4298 = vpack.c.b16 %v4090, %v4082
    %v4299 = vpack.c.b16 %v4091, %v4083
    %v4300 = vpack.c.b16 %v4100, %v4092
    %v4301 = vpack.c.b16 %v4101, %v4093
    %v4302 = vpack.c.b16 %v4102, %v4094
    %v4303 = vpack.c.b16 %v4103, %v4095
    %v4304 = vpack.c.b16 %v4104, %v4096
    %v4305 = vpack.c.b16 %v4105, %v4097
    %v4306 = vpack.c.b16 %v4106, %v4098
    %v4307 = vpack.c.b16 %v4107, %v4099
    %v4308 = vpack.c.b16 %v4116, %v4108
    %v4309 = vpack.c.b16 %v4117, %v4109
    %v4310 = vpack.c.b16 %v4118, %v4110
    %v4311 = vpack.c.b16 %v4119, %v4111
    %v4312 = vpack.c.b16 %v4120, %v4112
    %v4313 = vpack.c.b16 %v4121, %v4113
    %v4314 = vpack.c.b16 %v4122, %v4114
    %v4315 = vpack.c.b16 %v4123, %v4115
    %v4316 = vpack.c.b16 %v4132, %v4124
    %v4317 = vpack.c.b16 %v4133, %v4125
    %v4318 = vpack.c.b16 %v4134, %v4126
    %v4319 = vpack.c.b16 %v4135, %v4127
    %v4320 = vpack.c.b16 %v4136, %v4128
    %v4321 = vpack.c.b16 %v4137, %v4129
    %v4322 = vpack.c.b16 %v4138, %v4130
    %v4323 = vpack.c.b16 %v4139, %v4131
    %v4324 = vpack.c.b16 %v4148, %v4140
    %v4325 = vpack.c.b16 %v4149, %v4141
    %v4326 = vpack.c.b16 %v4150, %v4142
    %v4327 = vpack.c.b16 %v4151, %v4143
    %v4328 = vpack.c.b16 %v4152, %v4144
    %v4329 = vpack.c.b16 %v4153, %v4145
    %v4330 = vpack.c.b16 %v4154, %v4146
    %v4331 = vpack.c.b16 %v4155, %v4147
    %v4332 = vpack.c.b16 %v4164, %v4156
    %v4333 = vpack.c.b16 %v4165, %v4157
    %v4334 = vpack.c.b16 %v4166, %v4158
    %v4335 = vpack.c.b16 %v4167, %v4159
    %v4336 = vpack.c.b16 %v4168, %v4160
    %v4337 = vpack.c.b16 %v4169, %v4161
    %v4338 = vpack.c.b16 %v4170, %v4162
    %v4339 = vpack.c.b16 %v4171, %v4163
    %v4340 = vpack.c.b16 %v4180, %v4172
    %v4341 = vpack.c.b16 %v4181, %v4173
    %v4342 = vpack.c.b16 %v4182, %v4174
    %v4343 = vpack.c.b16 %v4183, %v4175
    %v4344 = vpack.c.b16 %v4184, %v4176
    %v4345 = vpack.c.b16 %v4185, %v4177
    %v4346 = vpack.c.b16 %v4186, %v4178
    %v4347 = vpack.c.b16 %v4187, %v4179
    %v4348 = vpack.c.b16 %v4196, %v4188
    %v4349 = vpack.c.b16 %v4197, %v4189
    %v4350 = vpack.c.b16 %v4198, %v4190
    %v4351 = vpack.c.b16 %v4199, %v4191
    %v4352 = vpack.c.b16 %v4200, %v4192
    %v4353 = vpack.c.b16 %v4201, %v4193
    %v4354 = vpack.c.b16 %v4202, %v4194
    %v4355 = vpack.c.b16 %v4203, %v4195
    %v4356 = vpack.c.b16 %v4212, %v4204
    %v4357 = vpack.c.b16 %v4213, %v4205
    %v4358 = vpack.c.b16 %v4214, %v4206
    %v4359 = vpack.c.b16 %v4215, %v4207
    %v4360 = vpack.c.b16 %v4216, %v4208
    %v4361 = vpack.c.b16 %v4217, %v4209
    %v4362 = vpack.c.b16 %v4218, %v4210
    %v4363 = vpack.c.b16 %v4219, %v4211
    %v4364 = vpack.c.b16 %v4228, %v4220
    %v4365 = vpack.c.b16 %v4229, %v4221
    %v4366 = vpack.c.b16 %v4230, %v4222
    %v4367 = vpack.c.b16 %v4231, %v4223
    %v4368 = vpack.c.b16 %v4232, %v4224
    %v4369 = vpack.c.b16 %v4233, %v4225
    %v4370 = vpack.c.b16 %v4234, %v4226
    %v4371 = vpack.c.b16 %v4235, %v4227
    %v4372 = vpack.c.b16 %v4244, %v4236
    %v4373 = vpack.c.b16 %v4245, %v4237
    %v4374 = vpack.c.b16 %v4246, %v4238
    %v4375 = vpack.c.b16 %v4247, %v4239
    %v4376 = vpack.c.b16 %v4248, %v4240
    %v4377 = vpack.c.b16 %v4249, %v4241
    %v4378 = vpack.c.b16 %v4250, %v4242
    %v4379 = vpack.c.b16 %v4251, %v4243
    %4508 = vmatprep.subr.bf16.mxu0 %v4253
    %4509 = vmatpush1.bf16.msra.mxu0 %v4252
    %4510 = vmatprep.subr.bf16.mxu0 %v4261
    %4511 = vmatpush1.bf16.msra.mxu0 %v4260
    %4512 = vmatprep.subr.bf16.mxu0 %v4269
    %4513 = vmatpush1.bf16.msra.mxu0 %v4268
    %4514 = vmatprep.subr.bf16.mxu0 %v4277
    %4515 = vmatpush1.bf16.msra.mxu0 %v4276
    %4516 = vmatprep.subr.bf16.mxu0 %v4285
    %4517 = vmatpush1.bf16.msra.mxu0 %v4284
    %4518 = vmatprep.subr.bf16.mxu0 %v4293
    %4519 = vmatpush1.bf16.msra.mxu0 %v4292
    %4520 = vmatprep.subr.bf16.mxu0 %v4301
    %4521 = vmatpush1.bf16.msra.mxu0 %v4300
    %4522 = vmatprep.subr.bf16.mxu0 %v4309
    %4523 = vmatpush1.bf16.msra.mxu0 %v4308
    %4524 = vmatprep.subr.bf16.mxu0 %v4317
    %4525 = vmatpush1.bf16.msra.mxu0 %v4316
    %4526 = vmatprep.subr.bf16.mxu0 %v4325
    %4527 = vmatpush1.bf16.msra.mxu0 %v4324
    %4528 = vmatprep.subr.bf16.mxu0 %v4333
    %4529 = vmatpush1.bf16.msra.mxu0 %v4332
    %4530 = vmatprep.subr.bf16.mxu0 %v4341
    %4531 = vmatpush1.bf16.msra.mxu0 %v4340
    %4532 = vmatprep.subr.bf16.mxu0 %v4349
    %4533 = vmatpush1.bf16.msra.mxu0 %v4348
    %4534 = vmatprep.subr.bf16.mxu0 %v4357
    %4535 = vmatpush1.bf16.msra.mxu0 %v4356
    %4536 = vmatprep.subr.bf16.mxu0 %v4365
    %4537 = vmatpush1.bf16.msra.mxu0 %v4364
    %4538 = vmatprep.subr.bf16.mxu0 %v4373
    %4539 = vmatpush1.bf16.msra.mxu0 %v4372
    %4540 = vmatprep.mubr.bf16.mxu0 %v3739
    %4541 = vmatmul.mubr.bf16.gmra.mrb[0].mxu0 %v3738
    %v4542 = vpop.f32.mrb[0].mxu0
    %v4543 = vadd.f32 0.0, %v4542
    %v4544 = vpop.f32.mrb[0].mxu0
    %v4545 = vadd.f32 0.0, %v4544
    %v4546 = vpop.f32.mrb[0].mxu0
    %v4547 = vpop.f32.mrb[0].mxu0
    %4548 = vdwg.mxu0
    %4549 = vmatprep.subr.bf16.mxu0 %v4255
    %4550 = vmatpush1.bf16.msra.mxu0 %v4254
    %4551 = vmatprep.subr.bf16.mxu0 %v4263
    %4552 = vmatpush1.bf16.msra.mxu0 %v4262
    %4553 = vmatprep.subr.bf16.mxu0 %v4271
    %4554 = vmatpush1.bf16.msra.mxu0 %v4270
    %4555 = vmatprep.subr.bf16.mxu0 %v4279
    %4556 = vmatpush1.bf16.msra.mxu0 %v4278
    %4557 = vmatprep.subr.bf16.mxu0 %v4287
    %4558 = vmatpush1.bf16.msra.mxu0 %v4286
    %4559 = vmatprep.subr.bf16.mxu0 %v4295
    %4560 = vmatpush1.bf16.msra.mxu0 %v4294
    %4561 = vmatprep.subr.bf16.mxu0 %v4303
    %4562 = vmatpush1.bf16.msra.mxu0 %v4302
    %4563 = vmatprep.subr.bf16.mxu0 %v4311
    %4564 = vmatpush1.bf16.msra.mxu0 %v4310
    %4565 = vmatprep.subr.bf16.mxu0 %v4319
    %4566 = vmatpush1.bf16.msra.mxu0 %v4318
    %4567 = vmatprep.subr.bf16.mxu0 %v4327
    %4568 = vmatpush1.bf16.msra.mxu0 %v4326
    %4569 = vmatprep.subr.bf16.mxu0 %v4335
    %4570 = vmatpush1.bf16.msra.mxu0 %v4334
    %4571 = vmatprep.subr.bf16.mxu0 %v4343
    %4572 = vmatpush1.bf16.msra.mxu0 %v4342
    %4573 = vmatprep.subr.bf16.mxu0 %v4351
    %4574 = vmatpush1.bf16.msra.mxu0 %v4350
    %4575 = vmatprep.subr.bf16.mxu0 %v4359
    %4576 = vmatpush1.bf16.msra.mxu0 %v4358
    %4577 = vmatprep.subr.bf16.mxu0 %v4367
    %4578 = vmatpush1.bf16.msra.mxu0 %v4366
    %4579 = vmatprep.subr.bf16.mxu0 %v4375
    %4580 = vmatpush1.bf16.msra.mxu0 %v4374
    %4581 = vmatprep.mubr.bf16.mxu0 %v3739
    %4582 = vmatmul.mubr.bf16.gmra.mrb[0].mxu0 %v3738
    %v4583 = vpop.f32.mrb[0].mxu0
    %v4584 = vadd.f32 0.0, %v4583
    %v4585 = vpop.f32.mrb[0].mxu0
    %v4586 = vadd.f32 0.0, %v4585
    %v4587 = vpop.f32.mrb[0].mxu0
    %v4588 = vpop.f32.mrb[0].mxu0
    %4589 = vdwg.mxu0
    %4590 = vmatprep.subr.bf16.mxu0 %v4257
    %4591 = vmatpush1.bf16.msra.mxu0 %v4256
    %4592 = vmatprep.subr.bf16.mxu0 %v4265
    %4593 = vmatpush1.bf16.msra.mxu0 %v4264
    %4594 = vmatprep.subr.bf16.mxu0 %v4273
    %4595 = vmatpush1.bf16.msra.mxu0 %v4272
    %4596 = vmatprep.subr.bf16.mxu0 %v4281
    %4597 = vmatpush1.bf16.msra.mxu0 %v4280
    %4598 = vmatprep.subr.bf16.mxu0 %v4289
    %4599 = vmatpush1.bf16.msra.mxu0 %v4288
    %4600 = vmatprep.subr.bf16.mxu0 %v4297
    %4601 = vmatpush1.bf16.msra.mxu0 %v4296
    %4602 = vmatprep.subr.bf16.mxu0 %v4305
    %4603 = vmatpush1.bf16.msra.mxu0 %v4304
    %4604 = vmatprep.subr.bf16.mxu0 %v4313
    %4605 = vmatpush1.bf16.msra.mxu0 %v4312
    %4606 = vmatprep.subr.bf16.mxu0 %v4321
    %4607 = vmatpush1.bf16.msra.mxu0 %v4320
    %4608 = vmatprep.subr.bf16.mxu0 %v4329
    %4609 = vmatpush1.bf16.msra.mxu0 %v4328
    %4610 = vmatprep.subr.bf16.mxu0 %v4337
    %4611 = vmatpush1.bf16.msra.mxu0 %v4336
    %4612 = vmatprep.subr.bf16.mxu0 %v4345
    %4613 = vmatpush1.bf16.msra.mxu0 %v4344
    %4614 = vmatprep.subr.bf16.mxu0 %v4353
    %4615 = vmatpush1.bf16.msra.mxu0 %v4352
    %4616 = vmatprep.subr.bf16.mxu0 %v4361
    %4617 = vmatpush1.bf16.msra.mxu0 %v4360
    %4618 = vmatprep.subr.bf16.mxu0 %v4369
    %4619 = vmatpush1.bf16.msra.mxu0 %v4368
    %4620 = vmatprep.subr.bf16.mxu0 %v4377
    %4621 = vmatpush1.bf16.msra.mxu0 %v4376
    %4622 = vmatprep.mubr.bf16.mxu0 %v3739
    %4623 = vmatmul.mubr.bf16.gmra.mrb[0].mxu0 %v3738
    %v4624 = vpop.f32.mrb[0].mxu0
    %v4625 = vadd.f32 0.0, %v4624
    %v4626 = vpop.f32.mrb[0].mxu0
    %v4627 = vadd.f32 0.0, %v4626
    %v4628 = vpop.f32.mrb[0].mxu0
    %v4629 = vpop.f32.mrb[0].mxu0
    %4630 = vdwg.mxu0
    %4631 = vmatprep.subr.bf16.mxu0 %v4259
    %4632 = vmatpush1.bf16.msra.mxu0 %v4258
    %4633 = vmatprep.subr.bf16.mxu0 %v4267
    %4634 = vmatpush1.bf16.msra.mxu0 %v4266
    %4635 = vmatprep.subr.bf16.mxu0 %v4275
    %4636 = vmatpush1.bf16.msra.mxu0 %v4274
    %4637 = vmatprep.subr.bf16.mxu0 %v4283
    %4638 = vmatpush1.bf16.msra.mxu0 %v4282
    %4639 = vmatprep.subr.bf16.mxu0 %v4291
    %4640 = vmatpush1.bf16.msra.mxu0 %v4290
    %4641 = vmatprep.subr.bf16.mxu0 %v4299
    %4642 = vmatpush1.bf16.msra.mxu0 %v4298
    %4643 = vmatprep.subr.bf16.mxu0 %v4307
    %4644 = vmatpush1.bf16.msra.mxu0 %v4306
    %4645 = vmatprep.subr.bf16.mxu0 %v4315
    %4646 = vmatpush1.bf16.msra.mxu0 %v4314
    %4647 = vmatprep.subr.bf16.mxu0 %v4323
    %4648 = vmatpush1.bf16.msra.mxu0 %v4322
    %4649 = vmatprep.subr.bf16.mxu0 %v4331
    %4650 = vmatpush1.bf16.msra.mxu0 %v4330
    %4651 = vmatprep.subr.bf16.mxu0 %v4339
    %4652 = vmatpush1.bf16.msra.mxu0 %v4338
    %4653 = vmatprep.subr.bf16.mxu0 %v4347
    %4654 = vmatpush1.bf16.msra.mxu0 %v4346
    %4655 = vmatprep.subr.bf16.mxu0 %v4355
    %4656 = vmatpush1.bf16.msra.mxu0 %v4354
    %4657 = vmatprep.subr.bf16.mxu0 %v4363
    %4658 = vmatpush1.bf16.msra.mxu0 %v4362
    %4659 = vmatprep.subr.bf16.mxu0 %v4371
    %4660 = vmatpush1.bf16.msra.mxu0 %v4370
    %4661 = vmatprep.subr.bf16.mxu0 %v4379
    %4662 = vmatpush1.bf16.msra.mxu0 %v4378
    %4663 = vmatprep.mubr.bf16.mxu0 %v3739
    %4664 = vmatmul.mubr.bf16.gmra.mrb[0].mxu0 %v3738
    %v4665 = vpop.f32.mrb[0].mxu0
    %v4666 = vadd.f32 0.0, %v4665
    %v4667 = vpop.f32.mrb[0].mxu0
    %v4668 = vadd.f32 0.0, %v4667
    %v4669 = vpop.f32.mrb[0].mxu0
    %v4670 = vpop.f32.mrb[0].mxu0
    %4671 = vdwg.mxu0
    %v4672 = vadd.f32 %v3728, %v4543
    %v4673 = vadd.f32 %v3729, %v4545
    %v4674 = vadd.f32 %v3730, %v4584
    %v4675 = vadd.f32 %v3731, %v4586
    %v4676 = vadd.f32 %v3732, %v4625
    %v4677 = vadd.f32 %v3733, %v4627
    %v4678 = vadd.f32 %v3734, %v4666
    %v4679 = vadd.f32 %v3735, %v4668
    %s4680 = smul.addr %s3725, 8
    %s4681 = scalar_lea.vmem [#allocation3], %s4680
    %v4682 = vld [vmem:[%s4681] sm:$0xff]
    %v4683 = vld [vmem:[%s4681 + $0x8] sm:$0xff]
    %v4684 = vld [vmem:[%s4681 + $0x10] sm:$0xff]
    %v4685 = vld [vmem:[%s4681 + $0x18] sm:$0xff]
    %v4686 = vld [vmem:[%s4681 + $0x20] sm:$0xff]
    %v4687 = vld [vmem:[%s4681 + $0x28] sm:$0xff]
    %v4688 = vld [vmem:[%s4681 + $0x30] sm:$0xff]
    %v4689 = vld [vmem:[%s4681 + $0x38] sm:$0xff]
    %v4690 = vld [vmem:[#allocation6] sm:$0xff]
    %v4691 = vld [vmem:[#allocation6 + $0x8] sm:$0xff]
    %v4692 = vpack.c.bf16 %v4690, %v4690
    %v4693 = vpack.c.bf16 %v4691, %v4691
    %v4694 = vld [vmem:[%s8] sm:$0xff]
    %v4695 = vld [vmem:[%s8 + $0x8] sm:$0xff]
    %v4696 = vld [vmem:[%s8 + $0x10] sm:$0xff]
    %v4697 = vld [vmem:[%s8 + $0x18] sm:$0xff]
    %v4698 = vld [vmem:[%s8 + $0x20] sm:$0xff]
    %v4699 = vld [vmem:[%s8 + $0x28] sm:$0xff]
    %v4700 = vld [vmem:[%s8 + $0x30] sm:$0xff]
    %v4701 = vld [vmem:[%s8 + $0x38] sm:$0xff]
    %v4702 = vld [vmem:[%s8 + $0x40] sm:$0xff]
    %v4703 = vld [vmem:[%s8 + $0x48] sm:$0xff]
    %v4704 = vld [vmem:[%s8 + $0x50] sm:$0xff]
    %v4705 = vld [vmem:[%s8 + $0x58] sm:$0xff]
    %v4706 = vld [vmem:[%s8 + $0x60] sm:$0xff]
    %v4707 = vld [vmem:[%s8 + $0x68] sm:$0xff]
    %v4708 = vld [vmem:[%s8 + $0x70] sm:$0xff]
    %v4709 = vld [vmem:[%s8 + $0x78] sm:$0xff]
    %v4710 = vld [vmem:[%s8 + $0x80] sm:$0xff]
    %v4711 = vld [vmem:[%s8 + $0x88] sm:$0xff]
    %v4712 = vld [vmem:[%s8 + $0x90] sm:$0xff]
    %v4713 = vld [vmem:[%s8 + $0x98] sm:$0xff]
    %v4714 = vld [vmem:[%s8 + $0xa0] sm:$0xff]
    %v4715 = vld [vmem:[%s8 + $0xa8] sm:$0xff]
    %v4716 = vld [vmem:[%s8 + $0xb0] sm:$0xff]
    %v4717 = vld [vmem:[%s8 + $0xb8] sm:$0xff]
    %v4718 = vld [vmem:[%s8 + $0xc0] sm:$0xff]
    %v4719 = vld [vmem:[%s8 + $0xc8] sm:$0xff]
    %v4720 = vld [vmem:[%s8 + $0xd0] sm:$0xff]
    %v4721 = vld [vmem:[%s8 + $0xd8] sm:$0xff]
    %v4722 = vld [vmem:[%s8 + $0xe0] sm:$0xff]
    %v4723 = vld [vmem:[%s8 + $0xe8] sm:$0xff]
    %v4724 = vld [vmem:[%s8 + $0xf0] sm:$0xff]
    %v4725 = vld [vmem:[%s8 + $0xf8] sm:$0xff]
    %v4726 = vld [vmem:[%s8 + $0x100] sm:$0xff]
    %v4727 = vld [vmem:[%s8 + $0x108] sm:$0xff]
    %v4728 = vld [vmem:[%s8 + $0x110] sm:$0xff]
    %v4729 = vld [vmem:[%s8 + $0x118] sm:$0xff]
    %v4730 = vld [vmem:[%s8 + $0x120] sm:$0xff]
    %v4731 = vld [vmem:[%s8 + $0x128] sm:$0xff]
    %v4732 = vld [vmem:[%s8 + $0x130] sm:$0xff]
    %v4733 = vld [vmem:[%s8 + $0x138] sm:$0xff]
    %v4734 = vld [vmem:[%s8 + $0x140] sm:$0xff]
    %v4735 = vld [vmem:[%s8 + $0x148] sm:$0xff]
    %v4736 = vld [vmem:[%s8 + $0x150] sm:$0xff]
    %v4737 = vld [vmem:[%s8 + $0x158] sm:$0xff]
    %v4738 = vld [vmem:[%s8 + $0x160] sm:$0xff]
    %v4739 = vld [vmem:[%s8 + $0x168] sm:$0xff]
    %v4740 = vld [vmem:[%s8 + $0x170] sm:$0xff]
    %v4741 = vld [vmem:[%s8 + $0x178] sm:$0xff]
    %v4742 = vld [vmem:[%s8 + $0x180] sm:$0xff]
    %v4743 = vld [vmem:[%s8 + $0x188] sm:$0xff]
    %v4744 = vld [vmem:[%s8 + $0x190] sm:$0xff]
    %v4745 = vld [vmem:[%s8 + $0x198] sm:$0xff]
    %v4746 = vld [vmem:[%s8 + $0x1a0] sm:$0xff]
    %v4747 = vld [vmem:[%s8 + $0x1a8] sm:$0xff]
    %v4748 = vld [vmem:[%s8 + $0x1b0] sm:$0xff]
    %v4749 = vld [vmem:[%s8 + $0x1b8] sm:$0xff]
    %v4750 = vld [vmem:[%s8 + $0x1c0] sm:$0xff]
    %v4751 = vld [vmem:[%s8 + $0x1c8] sm:$0xff]
    %v4752 = vld [vmem:[%s8 + $0x1d0] sm:$0xff]
    %v4753 = vld [vmem:[%s8 + $0x1d8] sm:$0xff]
    %v4754 = vld [vmem:[%s8 + $0x1e0] sm:$0xff]
    %v4755 = vld [vmem:[%s8 + $0x1e8] sm:$0xff]
    %v4756 = vld [vmem:[%s8 + $0x1f0] sm:$0xff]
    %v4757 = vld [vmem:[%s8 + $0x1f8] sm:$0xff]
    %v4758 = vld [vmem:[%s8 + $0x200] sm:$0xff]
    %v4759 = vld [vmem:[%s8 + $0x208] sm:$0xff]
    %v4760 = vld [vmem:[%s8 + $0x210] sm:$0xff]
    %v4761 = vld [vmem:[%s8 + $0x218] sm:$0xff]
    %v4762 = vld [vmem:[%s8 + $0x220] sm:$0xff]
    %v4763 = vld [vmem:[%s8 + $0x228] sm:$0xff]
    %v4764 = vld [vmem:[%s8 + $0x230] sm:$0xff]
    %v4765 = vld [vmem:[%s8 + $0x238] sm:$0xff]
    %v4766 = vld [vmem:[%s8 + $0x240] sm:$0xff]
    %v4767 = vld [vmem:[%s8 + $0x248] sm:$0xff]
    %v4768 = vld [vmem:[%s8 + $0x250] sm:$0xff]
    %v4769 = vld [vmem:[%s8 + $0x258] sm:$0xff]
    %v4770 = vld [vmem:[%s8 + $0x260] sm:$0xff]
    %v4771 = vld [vmem:[%s8 + $0x268] sm:$0xff]
    %v4772 = vld [vmem:[%s8 + $0x270] sm:$0xff]
    %v4773 = vld [vmem:[%s8 + $0x278] sm:$0xff]
    %v4774 = vld [vmem:[%s8 + $0x280] sm:$0xff]
    %v4775 = vld [vmem:[%s8 + $0x288] sm:$0xff]
    %v4776 = vld [vmem:[%s8 + $0x290] sm:$0xff]
    %v4777 = vld [vmem:[%s8 + $0x298] sm:$0xff]
    %v4778 = vld [vmem:[%s8 + $0x2a0] sm:$0xff]
    %v4779 = vld [vmem:[%s8 + $0x2a8] sm:$0xff]
    %v4780 = vld [vmem:[%s8 + $0x2b0] sm:$0xff]
    %v4781 = vld [vmem:[%s8 + $0x2b8] sm:$0xff]
    %v4782 = vld [vmem:[%s8 + $0x2c0] sm:$0xff]
    %v4783 = vld [vmem:[%s8 + $0x2c8] sm:$0xff]
    %v4784 = vld [vmem:[%s8 + $0x2d0] sm:$0xff]
    %v4785 = vld [vmem:[%s8 + $0x2d8] sm:$0xff]
    %v4786 = vld [vmem:[%s8 + $0x2e0] sm:$0xff]
    %v4787 = vld [vmem:[%s8 + $0x2e8] sm:$0xff]
    %v4788 = vld [vmem:[%s8 + $0x2f0] sm:$0xff]
    %v4789 = vld [vmem:[%s8 + $0x2f8] sm:$0xff]
    %v4790 = vld [vmem:[%s8 + $0x300] sm:$0xff]
    %v4791 = vld [vmem:[%s8 + $0x308] sm:$0xff]
    %v4792 = vld [vmem:[%s8 + $0x310] sm:$0xff]
    %v4793 = vld [vmem:[%s8 + $0x318] sm:$0xff]
    %v4794 = vld [vmem:[%s8 + $0x320] sm:$0xff]
    %v4795 = vld [vmem:[%s8 + $0x328] sm:$0xff]
    %v4796 = vld [vmem:[%s8 + $0x330] sm:$0xff]
    %v4797 = vld [vmem:[%s8 + $0x338] sm:$0xff]
    %v4798 = vld [vmem:[%s8 + $0x340] sm:$0xff]
    %v4799 = vld [vmem:[%s8 + $0x348] sm:$0xff]
    %v4800 = vld [vmem:[%s8 + $0x350] sm:$0xff]
    %v4801 = vld [vmem:[%s8 + $0x358] sm:$0xff]
    %v4802 = vld [vmem:[%s8 + $0x360] sm:$0xff]
    %v4803 = vld [vmem:[%s8 + $0x368] sm:$0xff]
    %v4804 = vld [vmem:[%s8 + $0x370] sm:$0xff]
    %v4805 = vld [vmem:[%s8 + $0x378] sm:$0xff]
    %v4806 = vld [vmem:[%s8 + $0x380] sm:$0xff]
    %v4807 = vld [vmem:[%s8 + $0x388] sm:$0xff]
    %v4808 = vld [vmem:[%s8 + $0x390] sm:$0xff]
    %v4809 = vld [vmem:[%s8 + $0x398] sm:$0xff]
    %v4810 = vld [vmem:[%s8 + $0x3a0] sm:$0xff]
    %v4811 = vld [vmem:[%s8 + $0x3a8] sm:$0xff]
    %v4812 = vld [vmem:[%s8 + $0x3b0] sm:$0xff]
    %v4813 = vld [vmem:[%s8 + $0x3b8] sm:$0xff]
    %v4814 = vld [vmem:[%s8 + $0x3c0] sm:$0xff]
    %v4815 = vld [vmem:[%s8 + $0x3c8] sm:$0xff]
    %v4816 = vld [vmem:[%s8 + $0x3d0] sm:$0xff]
    %v4817 = vld [vmem:[%s8 + $0x3d8] sm:$0xff]
    %v4818 = vld [vmem:[%s8 + $0x3e0] sm:$0xff]
    %v4819 = vld [vmem:[%s8 + $0x3e8] sm:$0xff]
    %v4820 = vld [vmem:[%s8 + $0x3f0] sm:$0xff]
    %v4821 = vld [vmem:[%s8 + $0x3f8] sm:$0xff]
    %v4950 = vunpack.c.l.b16 %v4694
    %v4951 = vunpack.c.h.b16 %v4694
    %v4952 = vunpack.c.l.b16 %v4695
    %v4953 = vunpack.c.h.b16 %v4695
    %v4954 = vunpack.c.l.b16 %v4696
    %v4955 = vunpack.c.h.b16 %v4696
    %v4956 = vunpack.c.l.b16 %v4697
    %v4957 = vunpack.c.h.b16 %v4697
    %v4958 = vunpack.c.l.b16 %v4698
    %v4959 = vunpack.c.h.b16 %v4698
    %v4960 = vunpack.c.l.b16 %v4699
    %v4961 = vunpack.c.h.b16 %v4699
    %v4962 = vunpack.c.l.b16 %v4700
    %v4963 = vunpack.c.h.b16 %v4700
    %v4964 = vunpack.c.l.b16 %v4701
    %v4965 = vunpack.c.h.b16 %v4701
    %v4966 = vunpack.c.l.b16 %v4702
    %v4967 = vunpack.c.h.b16 %v4702
    %v4968 = vunpack.c.l.b16 %v4703
    %v4969 = vunpack.c.h.b16 %v4703
    %v4970 = vunpack.c.l.b16 %v4704
    %v4971 = vunpack.c.h.b16 %v4704
    %v4972 = vunpack.c.l.b16 %v4705
    %v4973 = vunpack.c.h.b16 %v4705
    %v4974 = vunpack.c.l.b16 %v4706
    %v4975 = vunpack.c.h.b16 %v4706
    %v4976 = vunpack.c.l.b16 %v4707
    %v4977 = vunpack.c.h.b16 %v4707
    %v4978 = vunpack.c.l.b16 %v4708
    %v4979 = vunpack.c.h.b16 %v4708
    %v4980 = vunpack.c.l.b16 %v4709
    %v4981 = vunpack.c.h.b16 %v4709
    %v4982 = vunpack.c.l.b16 %v4710
    %v4983 = vunpack.c.h.b16 %v4710
    %v4984 = vunpack.c.l.b16 %v4711
    %v4985 = vunpack.c.h.b16 %v4711
    %v4986 = vunpack.c.l.b16 %v4712
    %v4987 = vunpack.c.h.b16 %v4712
    %v4988 = vunpack.c.l.b16 %v4713
    %v4989 = vunpack.c.h.b16 %v4713
    %v4990 = vunpack.c.l.b16 %v4714
    %v4991 = vunpack.c.h.b16 %v4714
    %v4992 = vunpack.c.l.b16 %v4715
    %v4993 = vunpack.c.h.b16 %v4715
    %v4994 = vunpack.c.l.b16 %v4716
    %v4995 = vunpack.c.h.b16 %v4716
    %v4996 = vunpack.c.l.b16 %v4717
    %v4997 = vunpack.c.h.b16 %v4717
    %v4998 = vunpack.c.l.b16 %v4718
    %v4999 = vunpack.c.h.b16 %v4718
    %v5000 = vunpack.c.l.b16 %v4719
    %v5001 = vunpack.c.h.b16 %v4719
    %v5002 = vunpack.c.l.b16 %v4720
    %v5003 = vunpack.c.h.b16 %v4720
    %v5004 = vunpack.c.l.b16 %v4721
    %v5005 = vunpack.c.h.b16 %v4721
    %v5006 = vunpack.c.l.b16 %v4722
    %v5007 = vunpack.c.h.b16 %v4722
    %v5008 = vunpack.c.l.b16 %v4723
    %v5009 = vunpack.c.h.b16 %v4723
    %v5010 = vunpack.c.l.b16 %v4724
    %v5011 = vunpack.c.h.b16 %v4724
    %v5012 = vunpack.c.l.b16 %v4725
    %v5013 = vunpack.c.h.b16 %v4725
    %v5014 = vunpack.c.l.b16 %v4726
    %v5015 = vunpack.c.h.b16 %v4726
    %v5016 = vunpack.c.l.b16 %v4727
    %v5017 = vunpack.c.h.b16 %v4727
    %v5018 = vunpack.c.l.b16 %v4728
    %v5019 = vunpack.c.h.b16 %v4728
    %v5020 = vunpack.c.l.b16 %v4729
    %v5021 = vunpack.c.h.b16 %v4729
    %v5022 = vunpack.c.l.b16 %v4730
    %v5023 = vunpack.c.h.b16 %v4730
    %v5024 = vunpack.c.l.b16 %v4731
    %v5025 = vunpack.c.h.b16 %v4731
    %v5026 = vunpack.c.l.b16 %v4732
    %v5027 = vunpack.c.h.b16 %v4732
    %v5028 = vunpack.c.l.b16 %v4733
    %v5029 = vunpack.c.h.b16 %v4733
    %v5030 = vunpack.c.l.b16 %v4734
    %v5031 = vunpack.c.h.b16 %v4734
    %v5032 = vunpack.c.l.b16 %v4735
    %v5033 = vunpack.c.h.b16 %v4735
    %v5034 = vunpack.c.l.b16 %v4736
    %v5035 = vunpack.c.h.b16 %v4736
    %v5036 = vunpack.c.l.b16 %v4737
    %v5037 = vunpack.c.h.b16 %v4737
    %v5038 = vunpack.c.l.b16 %v4738
    %v5039 = vunpack.c.h.b16 %v4738
    %v5040 = vunpack.c.l.b16 %v4739
    %v5041 = vunpack.c.h.b16 %v4739
    %v5042 = vunpack.c.l.b16 %v4740
    %v5043 = vunpack.c.h.b16 %v4740
    %v5044 = vunpack.c.l.b16 %v4741
    %v5045 = vunpack.c.h.b16 %v4741
    %v5046 = vunpack.c.l.b16 %v4742
    %v5047 = vunpack.c.h.b16 %v4742
    %v5048 = vunpack.c.l.b16 %v4743
    %v5049 = vunpack.c.h.b16 %v4743
    %v5050 = vunpack.c.l.b16 %v4744
    %v5051 = vunpack.c.h.b16 %v4744
    %v5052 = vunpack.c.l.b16 %v4745
    %v5053 = vunpack.c.h.b16 %v4745
    %v5054 = vunpack.c.l.b16 %v4746
    %v5055 = vunpack.c.h.b16 %v4746
    %v5056 = vunpack.c.l.b16 %v4747
    %v5057 = vunpack.c.h.b16 %v4747
    %v5058 = vunpack.c.l.b16 %v4748
    %v5059 = vunpack.c.h.b16 %v4748
    %v5060 = vunpack.c.l.b16 %v4749
    %v5061 = vunpack.c.h.b16 %v4749
    %v5062 = vunpack.c.l.b16 %v4750
    %v5063 = vunpack.c.h.b16 %v4750
    %v5064 = vunpack.c.l.b16 %v4751
    %v5065 = vunpack.c.h.b16 %v4751
    %v5066 = vunpack.c.l.b16 %v4752
    %v5067 = vunpack.c.h.b16 %v4752
    %v5068 = vunpack.c.l.b16 %v4753
    %v5069 = vunpack.c.h.b16 %v4753
    %v5070 = vunpack.c.l.b16 %v4754
    %v5071 = vunpack.c.h.b16 %v4754
    %v5072 = vunpack.c.l.b16 %v4755
    %v5073 = vunpack.c.h.b16 %v4755
    %v5074 = vunpack.c.l.b16 %v4756
    %v5075 = vunpack.c.h.b16 %v4756
    %v5076 = vunpack.c.l.b16 %v4757
    %v5077 = vunpack.c.h.b16 %v4757
    %v5078 = vunpack.c.l.b16 %v4758
    %v5079 = vunpack.c.h.b16 %v4758
    %v5080 = vunpack.c.l.b16 %v4759
    %v5081 = vunpack.c.h.b16 %v4759
    %v5082 = vunpack.c.l.b16 %v4760
    %v5083 = vunpack.c.h.b16 %v4760
    %v5084 = vunpack.c.l.b16 %v4761
    %v5085 = vunpack.c.h.b16 %v4761
    %v5086 = vunpack.c.l.b16 %v4762
    %v5087 = vunpack.c.h.b16 %v4762
    %v5088 = vunpack.c.l.b16 %v4763
    %v5089 = vunpack.c.h.b16 %v4763
    %v5090 = vunpack.c.l.b16 %v4764
    %v5091 = vunpack.c.h.b16 %v4764
    %v5092 = vunpack.c.l.b16 %v4765
    %v5093 = vunpack.c.h.b16 %v4765
    %v5094 = vunpack.c.l.b16 %v4766
    %v5095 = vunpack.c.h.b16 %v4766
    %v5096 = vunpack.c.l.b16 %v4767
    %v5097 = vunpack.c.h.b16 %v4767
    %v5098 = vunpack.c.l.b16 %v4768
    %v5099 = vunpack.c.h.b16 %v4768
    %v5100 = vunpack.c.l.b16 %v4769
    %v5101 = vunpack.c.h.b16 %v4769
    %v5102 = vunpack.c.l.b16 %v4770
    %v5103 = vunpack.c.h.b16 %v4770
    %v5104 = vunpack.c.l.b16 %v4771
    %v5105 = vunpack.c.h.b16 %v4771
    %v5106 = vunpack.c.l.b16 %v4772
    %v5107 = vunpack.c.h.b16 %v4772
    %v5108 = vunpack.c.l.b16 %v4773
    %v5109 = vunpack.c.h.b16 %v4773
    %v5110 = vunpack.c.l.b16 %v4774
    %v5111 = vunpack.c.h.b16 %v4774
    %v5112 = vunpack.c.l.b16 %v4775
    %v5113 = vunpack.c.h.b16 %v4775
    %v5114 = vunpack.c.l.b16 %v4776
    %v5115 = vunpack.c.h.b16 %v4776
    %v5116 = vunpack.c.l.b16 %v4777
    %v5117 = vunpack.c.h.b16 %v4777
    %v5118 = vunpack.c.l.b16 %v4778
    %v5119 = vunpack.c.h.b16 %v4778
    %v5120 = vunpack.c.l.b16 %v4779
    %v5121 = vunpack.c.h.b16 %v4779
    %v5122 = vunpack.c.l.b16 %v4780
    %v5123 = vunpack.c.h.b16 %v4780
    %v5124 = vunpack.c.l.b16 %v4781
    %v5125 = vunpack.c.h.b16 %v4781
    %v5126 = vunpack.c.l.b16 %v4782
    %v5127 = vunpack.c.h.b16 %v4782
    %v5128 = vunpack.c.l.b16 %v4783
    %v5129 = vunpack.c.h.b16 %v4783
    %v5130 = vunpack.c.l.b16 %v4784
    %v5131 = vunpack.c.h.b16 %v4784
    %v5132 = vunpack.c.l.b16 %v4785
    %v5133 = vunpack.c.h.b16 %v4785
    %v5134 = vunpack.c.l.b16 %v4786
    %v5135 = vunpack.c.h.b16 %v4786
    %v5136 = vunpack.c.l.b16 %v4787
    %v5137 = vunpack.c.h.b16 %v4787
    %v5138 = vunpack.c.l.b16 %v4788
    %v5139 = vunpack.c.h.b16 %v4788
    %v5140 = vunpack.c.l.b16 %v4789
    %v5141 = vunpack.c.h.b16 %v4789
    %v5142 = vunpack.c.l.b16 %v4790
    %v5143 = vunpack.c.h.b16 %v4790
    %v5144 = vunpack.c.l.b16 %v4791
    %v5145 = vunpack.c.h.b16 %v4791
    %v5146 = vunpack.c.l.b16 %v4792
    %v5147 = vunpack.c.h.b16 %v4792
    %v5148 = vunpack.c.l.b16 %v4793
    %v5149 = vunpack.c.h.b16 %v4793
    %v5150 = vunpack.c.l.b16 %v4794
    %v5151 = vunpack.c.h.b16 %v4794
    %v5152 = vunpack.c.l.b16 %v4795
    %v5153 = vunpack.c.h.b16 %v4795
    %v5154 = vunpack.c.l.b16 %v4796
    %v5155 = vunpack.c.h.b16 %v4796
    %v5156 = vunpack.c.l.b16 %v4797
    %v5157 = vunpack.c.h.b16 %v4797
    %v5158 = vunpack.c.l.b16 %v4798
    %v5159 = vunpack.c.h.b16 %v4798
    %v5160 = vunpack.c.l.b16 %v4799
    %v5161 = vunpack.c.h.b16 %v4799
    %v5162 = vunpack.c.l.b16 %v4800
    %v5163 = vunpack.c.h.b16 %v4800
    %v5164 = vunpack.c.l.b16 %v4801
    %v5165 = vunpack.c.h.b16 %v4801
    %v5166 = vunpack.c.l.b16 %v4802
    %v5167 = vunpack.c.h.b16 %v4802
    %v5168 = vunpack.c.l.b16 %v4803
    %v5169 = vunpack.c.h.b16 %v4803
    %v5170 = vunpack.c.l.b16 %v4804
    %v5171 = vunpack.c.h.b16 %v4804
    %v5172 = vunpack.c.l.b16 %v4805
    %v5173 = vunpack.c.h.b16 %v4805
    %v5174 = vunpack.c.l.b16 %v4806
    %v5175 = vunpack.c.h.b16 %v4806
    %v5176 = vunpack.c.l.b16 %v4807
    %v5177 = vunpack.c.h.b16 %v4807
    %v5178 = vunpack.c.l.b16 %v4808
    %v5179 = vunpack.c.h.b16 %v4808
    %v5180 = vunpack.c.l.b16 %v4809
    %v5181 = vunpack.c.h.b16 %v4809
    %v5182 = vunpack.c.l.b16 %v4810
    %v5183 = vunpack.c.h.b16 %v4810
    %v5184 = vunpack.c.l.b16 %v4811
    %v5185 = vunpack.c.h.b16 %v4811
    %v5186 = vunpack.c.l.b16 %v4812
    %v5187 = vunpack.c.h.b16 %v4812
    %v5188 = vunpack.c.l.b16 %v4813
    %v5189 = vunpack.c.h.b16 %v4813
    %v5190 = vunpack.c.l.b16 %v4814
    %v5191 = vunpack.c.h.b16 %v4814
    %v5192 = vunpack.c.l.b16 %v4815
    %v5193 = vunpack.c.h.b16 %v4815
    %v5194 = vunpack.c.l.b16 %v4816
    %v5195 = vunpack.c.h.b16 %v4816
    %v5196 = vunpack.c.l.b16 %v4817
    %v5197 = vunpack.c.h.b16 %v4817
    %v5198 = vunpack.c.l.b16 %v4818
    %v5199 = vunpack.c.h.b16 %v4818
    %v5200 = vunpack.c.l.b16 %v4819
    %v5201 = vunpack.c.h.b16 %v4819
    %v5202 = vunpack.c.l.b16 %v4820
    %v5203 = vunpack.c.h.b16 %v4820
    %v5204 = vunpack.c.l.b16 %v4821
    %v5205 = vunpack.c.h.b16 %v4821
    %v5206 = vpack.c.b16 %v4958, %v4950
    %v5207 = vpack.c.b16 %v4959, %v4951
    %v5208 = vpack.c.b16 %v4960, %v4952
    %v5209 = vpack.c.b16 %v4961, %v4953
    %v5210 = vpack.c.b16 %v4962, %v4954
    %v5211 = vpack.c.b16 %v4963, %v4955
    %v5212 = vpack.c.b16 %v4964, %v4956
    %v5213 = vpack.c.b16 %v4965, %v4957
    %v5214 = vpack.c.b16 %v4974, %v4966
    %v5215 = vpack.c.b16 %v4975, %v4967
    %v5216 = vpack.c.b16 %v4976, %v4968
    %v5217 = vpack.c.b16 %v4977, %v4969
    %v5218 = vpack.c.b16 %v4978, %v4970
    %v5219 = vpack.c.b16 %v4979, %v4971
    %v5220 = vpack.c.b16 %v4980, %v4972
    %v5221 = vpack.c.b16 %v4981, %v4973
    %v5222 = vpack.c.b16 %v4990, %v4982
    %v5223 = vpack.c.b16 %v4991, %v4983
    %v5224 = vpack.c.b16 %v4992, %v4984
    %v5225 = vpack.c.b16 %v4993, %v4985
    %v5226 = vpack.c.b16 %v4994, %v4986
    %v5227 = vpack.c.b16 %v4995, %v4987
    %v5228 = vpack.c.b16 %v4996, %v4988
    %v5229 = vpack.c.b16 %v4997, %v4989
    %v5230 = vpack.c.b16 %v5006, %v4998
    %v5231 = vpack.c.b16 %v5007, %v4999
    %v5232 = vpack.c.b16 %v5008, %v5000
    %v5233 = vpack.c.b16 %v5009, %v5001
    %v5234 = vpack.c.b16 %v5010, %v5002
    %v5235 = vpack.c.b16 %v5011, %v5003
    %v5236 = vpack.c.b16 %v5012, %v5004
    %v5237 = vpack.c.b16 %v5013, %v5005
    %v5238 = vpack.c.b16 %v5022, %v5014
    %v5239 = vpack.c.b16 %v5023, %v5015
    %v5240 = vpack.c.b16 %v5024, %v5016
    %v5241 = vpack.c.b16 %v5025, %v5017
    %v5242 = vpack.c.b16 %v5026, %v5018
    %v5243 = vpack.c.b16 %v5027, %v5019
    %v5244 = vpack.c.b16 %v5028, %v5020
    %v5245 = vpack.c.b16 %v5029, %v5021
    %v5246 = vpack.c.b16 %v5038, %v5030
    %v5247 = vpack.c.b16 %v5039, %v5031
    %v5248 = vpack.c.b16 %v5040, %v5032
    %v5249 = vpack.c.b16 %v5041, %v5033
    %v5250 = vpack.c.b16 %v5042, %v5034
    %v5251 = vpack.c.b16 %v5043, %v5035
    %v5252 = vpack.c.b16 %v5044, %v5036
    %v5253 = vpack.c.b16 %v5045, %v5037
    %v5254 = vpack.c.b16 %v5054, %v5046
    %v5255 = vpack.c.b16 %v5055, %v5047
    %v5256 = vpack.c.b16 %v5056, %v5048
    %v5257 = vpack.c.b16 %v5057, %v5049
    %v5258 = vpack.c.b16 %v5058, %v5050
    %v5259 = vpack.c.b16 %v5059, %v5051
    %v5260 = vpack.c.b16 %v5060, %v5052
    %v5261 = vpack.c.b16 %v5061, %v5053
    %v5262 = vpack.c.b16 %v5070, %v5062
    %v5263 = vpack.c.b16 %v5071, %v5063
    %v5264 = vpack.c.b16 %v5072, %v5064
    %v5265 = vpack.c.b16 %v5073, %v5065
    %v5266 = vpack.c.b16 %v5074, %v5066
    %v5267 = vpack.c.b16 %v5075, %v5067
    %v5268 = vpack.c.b16 %v5076, %v5068
    %v5269 = vpack.c.b16 %v5077, %v5069
    %v5270 = vpack.c.b16 %v5086, %v5078
    %v5271 = vpack.c.b16 %v5087, %v5079
    %v5272 = vpack.c.b16 %v5088, %v5080
    %v5273 = vpack.c.b16 %v5089, %v5081
    %v5274 = vpack.c.b16 %v5090, %v5082
    %v5275 = vpack.c.b16 %v5091, %v5083
    %v5276 = vpack.c.b16 %v5092, %v5084
    %v5277 = vpack.c.b16 %v5093, %v5085
    %v5278 = vpack.c.b16 %v5102, %v5094
    %v5279 = vpack.c.b16 %v5103, %v5095
    %v5280 = vpack.c.b16 %v5104, %v5096
    %v5281 = vpack.c.b16 %v5105, %v5097
    %v5282 = vpack.c.b16 %v5106, %v5098
    %v5283 = vpack.c.b16 %v5107, %v5099
    %v5284 = vpack.c.b16 %v5108, %v5100
    %v5285 = vpack.c.b16 %v5109, %v5101
    %v5286 = vpack.c.b16 %v5118, %v5110
    %v5287 = vpack.c.b16 %v5119, %v5111
    %v5288 = vpack.c.b16 %v5120, %v5112
    %v5289 = vpack.c.b16 %v5121, %v5113
    %v5290 = vpack.c.b16 %v5122, %v5114
    %v5291 = vpack.c.b16 %v5123, %v5115
    %v5292 = vpack.c.b16 %v5124, %v5116
    %v5293 = vpack.c.b16 %v5125, %v5117
    %v5294 = vpack.c.b16 %v5134, %v5126
    %v5295 = vpack.c.b16 %v5135, %v5127
    %v5296 = vpack.c.b16 %v5136, %v5128
    %v5297 = vpack.c.b16 %v5137, %v5129
    %v5298 = vpack.c.b16 %v5138, %v5130
    %v5299 = vpack.c.b16 %v5139, %v5131
    %v5300 = vpack.c.b16 %v5140, %v5132
    %v5301 = vpack.c.b16 %v5141, %v5133
    %v5302 = vpack.c.b16 %v5150, %v5142
    %v5303 = vpack.c.b16 %v5151, %v5143
    %v5304 = vpack.c.b16 %v5152, %v5144
    %v5305 = vpack.c.b16 %v5153, %v5145
    %v5306 = vpack.c.b16 %v5154, %v5146
    %v5307 = vpack.c.b16 %v5155, %v5147
    %v5308 = vpack.c.b16 %v5156, %v5148
    %v5309 = vpack.c.b16 %v5157, %v5149
    %v5310 = vpack.c.b16 %v5166, %v5158
    %v5311 = vpack.c.b16 %v5167, %v5159
    %v5312 = vpack.c.b16 %v5168, %v5160
    %v5313 = vpack.c.b16 %v5169, %v5161
    %v5314 = vpack.c.b16 %v5170, %v5162
    %v5315 = vpack.c.b16 %v5171, %v5163
    %v5316 = vpack.c.b16 %v5172, %v5164
    %v5317 = vpack.c.b16 %v5173, %v5165
    %v5318 = vpack.c.b16 %v5182, %v5174
    %v5319 = vpack.c.b16 %v5183, %v5175
    %v5320 = vpack.c.b16 %v5184, %v5176
    %v5321 = vpack.c.b16 %v5185, %v5177
    %v5322 = vpack.c.b16 %v5186, %v5178
    %v5323 = vpack.c.b16 %v5187, %v5179
    %v5324 = vpack.c.b16 %v5188, %v5180
    %v5325 = vpack.c.b16 %v5189, %v5181
    %v5326 = vpack.c.b16 %v5198, %v5190
    %v5327 = vpack.c.b16 %v5199, %v5191
    %v5328 = vpack.c.b16 %v5200, %v5192
    %v5329 = vpack.c.b16 %v5201, %v5193
    %v5330 = vpack.c.b16 %v5202, %v5194
    %v5331 = vpack.c.b16 %v5203, %v5195
    %v5332 = vpack.c.b16 %v5204, %v5196
    %v5333 = vpack.c.b16 %v5205, %v5197
    %5462 = vmatprep.subr.bf16.mxu0 %v5207
    %5463 = vmatpush1.bf16.msra.mxu0 %v5206
    %5464 = vmatprep.subr.bf16.mxu0 %v5215
    %5465 = vmatpush1.bf16.msra.mxu0 %v5214
    %5466 = vmatprep.subr.bf16.mxu0 %v5223
    %5467 = vmatpush1.bf16.msra.mxu0 %v5222
    %5468 = vmatprep.subr.bf16.mxu0 %v5231
    %5469 = vmatpush1.bf16.msra.mxu0 %v5230
    %5470 = vmatprep.subr.bf16.mxu0 %v5239
    %5471 = vmatpush1.bf16.msra.mxu0 %v5238
    %5472 = vmatprep.subr.bf16.mxu0 %v5247
    %5473 = vmatpush1.bf16.msra.mxu0 %v5246
    %5474 = vmatprep.subr.bf16.mxu0 %v5255
    %5475 = vmatpush1.bf16.msra.mxu0 %v5254
    %5476 = vmatprep.subr.bf16.mxu0 %v5263
    %5477 = vmatpush1.bf16.msra.mxu0 %v5262
    %5478 = vmatprep.subr.bf16.mxu0 %v5271
    %5479 = vmatpush1.bf16.msra.mxu0 %v5270
    %5480 = vmatprep.subr.bf16.mxu0 %v5279
    %5481 = vmatpush1.bf16.msra.mxu0 %v5278
    %5482 = vmatprep.subr.bf16.mxu0 %v5287
    %5483 = vmatpush1.bf16.msra.mxu0 %v5286
    %5484 = vmatprep.subr.bf16.mxu0 %v5295
    %5485 = vmatpush1.bf16.msra.mxu0 %v5294
    %5486 = vmatprep.subr.bf16.mxu0 %v5303
    %5487 = vmatpush1.bf16.msra.mxu0 %v5302
    %5488 = vmatprep.subr.bf16.mxu0 %v5311
    %5489 = vmatpush1.bf16.msra.mxu0 %v5310
    %5490 = vmatprep.subr.bf16.mxu0 %v5319
    %5491 = vmatpush1.bf16.msra.mxu0 %v5318
    %5492 = vmatprep.subr.bf16.mxu0 %v5327
    %5493 = vmatpush1.bf16.msra.mxu0 %v5326
    %5494 = vmatprep.mubr.bf16.mxu0 %v4693
    %5495 = vmatmul.mubr.bf16.gmra.mrb[0].mxu0 %v4692
    %v5496 = vpop.f32.mrb[0].mxu0
    %v5497 = vadd.f32 0.0, %v5496
    %v5498 = vpop.f32.mrb[0].mxu0
    %v5499 = vadd.f32 0.0, %v5498
    %v5500 = vpop.f32.mrb[0].mxu0
    %v5501 = vpop.f32.mrb[0].mxu0
    %5502 = vdwg.mxu0
    %5503 = vmatprep.subr.bf16.mxu0 %v5209
    %5504 = vmatpush1.bf16.msra.mxu0 %v5208
    %5505 = vmatprep.subr.bf16.mxu0 %v5217
    %5506 = vmatpush1.bf16.msra.mxu0 %v5216
    %5507 = vmatprep.subr.bf16.mxu0 %v5225
    %5508 = vmatpush1.bf16.msra.mxu0 %v5224
    %5509 = vmatprep.subr.bf16.mxu0 %v5233
    %5510 = vmatpush1.bf16.msra.mxu0 %v5232
    %5511 = vmatprep.subr.bf16.mxu0 %v5241
    %5512 = vmatpush1.bf16.msra.mxu0 %v5240
    %5513 = vmatprep.subr.bf16.mxu0 %v5249
    %5514 = vmatpush1.bf16.msra.mxu0 %v5248
    %5515 = vmatprep.subr.bf16.mxu0 %v5257
    %5516 = vmatpush1.bf16.msra.mxu0 %v5256
    %5517 = vmatprep.subr.bf16.mxu0 %v5265
    %5518 = vmatpush1.bf16.msra.mxu0 %v5264
    %5519 = vmatprep.subr.bf16.mxu0 %v5273
    %5520 = vmatpush1.bf16.msra.mxu0 %v5272
    %5521 = vmatprep.subr.bf16.mxu0 %v5281
    %5522 = vmatpush1.bf16.msra.mxu0 %v5280
    %5523 = vmatprep.subr.bf16.mxu0 %v5289
    %5524 = vmatpush1.bf16.msra.mxu0 %v5288
    %5525 = vmatprep.subr.bf16.mxu0 %v5297
    %5526 = vmatpush1.bf16.msra.mxu0 %v5296
    %5527 = vmatprep.subr.bf16.mxu0 %v5305
    %5528 = vmatpush1.bf16.msra.mxu0 %v5304
    %5529 = vmatprep.subr.bf16.mxu0 %v5313
    %5530 = vmatpush1.bf16.msra.mxu0 %v5312
    %5531 = vmatprep.subr.bf16.mxu0 %v5321
    %5532 = vmatpush1.bf16.msra.mxu0 %v5320
    %5533 = vmatprep.subr.bf16.mxu0 %v5329
    %5534 = vmatpush1.bf16.msra.mxu0 %v5328
    %5535 = vmatprep.mubr.bf16.mxu0 %v4693
    %5536 = vmatmul.mubr.bf16.gmra.mrb[0].mxu0 %v4692
    %v5537 = vpop.f32.mrb[0].mxu0
    %v5538 = vadd.f32 0.0, %v5537
    %v5539 = vpop.f32.mrb[0].mxu0
    %v5540 = vadd.f32 0.0, %v5539
    %v5541 = vpop.f32.mrb[0].mxu0
    %v5542 = vpop.f32.mrb[0].mxu0
    %5543 = vdwg.mxu0
    %5544 = vmatprep.subr.bf16.mxu0 %v5211
    %5545 = vmatpush1.bf16.msra.mxu0 %v5210
    %5546 = vmatprep.subr.bf16.mxu0 %v5219
    %5547 = vmatpush1.bf16.msra.mxu0 %v5218
    %5548 = vmatprep.subr.bf16.mxu0 %v5227
    %5549 = vmatpush1.bf16.msra.mxu0 %v5226
    %5550 = vmatprep.subr.bf16.mxu0 %v5235
    %5551 = vmatpush1.bf16.msra.mxu0 %v5234
    %5552 = vmatprep.subr.bf16.mxu0 %v5243
    %5553 = vmatpush1.bf16.msra.mxu0 %v5242
    %5554 = vmatprep.subr.bf16.mxu0 %v5251
    %5555 = vmatpush1.bf16.msra.mxu0 %v5250
    %5556 = vmatprep.subr.bf16.mxu0 %v5259
    %5557 = vmatpush1.bf16.msra.mxu0 %v5258
    %5558 = vmatprep.subr.bf16.mxu0 %v5267
    %5559 = vmatpush1.bf16.msra.mxu0 %v5266
    %5560 = vmatprep.subr.bf16.mxu0 %v5275
    %5561 = vmatpush1.bf16.msra.mxu0 %v5274
    %5562 = vmatprep.subr.bf16.mxu0 %v5283
    %5563 = vmatpush1.bf16.msra.mxu0 %v5282
    %5564 = vmatprep.subr.bf16.mxu0 %v5291
    %5565 = vmatpush1.bf16.msra.mxu0 %v5290
    %5566 = vmatprep.subr.bf16.mxu0 %v5299
    %5567 = vmatpush1.bf16.msra.mxu0 %v5298
    %5568 = vmatprep.subr.bf16.mxu0 %v5307
    %5569 = vmatpush1.bf16.msra.mxu0 %v5306
    %5570 = vmatprep.subr.bf16.mxu0 %v5315
    %5571 = vmatpush1.bf16.msra.mxu0 %v5314
    %5572 = vmatprep.subr.bf16.mxu0 %v5323
    %5573 = vmatpush1.bf16.msra.mxu0 %v5322
    %5574 = vmatprep.subr.bf16.mxu0 %v5331
    %5575 = vmatpush1.bf16.msra.mxu0 %v5330
    %5576 = vmatprep.mubr.bf16.mxu0 %v4693
    %5577 = vmatmul.mubr.bf16.gmra.mrb[0].mxu0 %v4692
    %v5578 = vpop.f32.mrb[0].mxu0
    %v5579 = vadd.f32 0.0, %v5578
    %v5580 = vpop.f32.mrb[0].mxu0
    %v5581 = vadd.f32 0.0, %v5580
    %v5582 = vpop.f32.mrb[0].mxu0
    %v5583 = vpop.f32.mrb[0].mxu0
    %5584 = vdwg.mxu0
    %5585 = vmatprep.subr.bf16.mxu0 %v5213
    %5586 = vmatpush1.bf16.msra.mxu0 %v5212
    %5587 = vmatprep.subr.bf16.mxu0 %v5221
    %5588 = vmatpush1.bf16.msra.mxu0 %v5220
    %5589 = vmatprep.subr.bf16.mxu0 %v5229
    %5590 = vmatpush1.bf16.msra.mxu0 %v5228
    %5591 = vmatprep.subr.bf16.mxu0 %v5237
    %5592 = vmatpush1.bf16.msra.mxu0 %v5236
    %5593 = vmatprep.subr.bf16.mxu0 %v5245
    %5594 = vmatpush1.bf16.msra.mxu0 %v5244
    %5595 = vmatprep.subr.bf16.mxu0 %v5253
    %5596 = vmatpush1.bf16.msra.mxu0 %v5252
    %5597 = vmatprep.subr.bf16.mxu0 %v5261
    %5598 = vmatpush1.bf16.msra.mxu0 %v5260
    %5599 = vmatprep.subr.bf16.mxu0 %v5269
    %5600 = vmatpush1.bf16.msra.mxu0 %v5268
    %5601 = vmatprep.subr.bf16.mxu0 %v5277
    %5602 = vmatpush1.bf16.msra.mxu0 %v5276
    %5603 = vmatprep.subr.bf16.mxu0 %v5285
    %5604 = vmatpush1.bf16.msra.mxu0 %v5284
    %5605 = vmatprep.subr.bf16.mxu0 %v5293
    %5606 = vmatpush1.bf16.msra.mxu0 %v5292
    %5607 = vmatprep.subr.bf16.mxu0 %v5301
    %5608 = vmatpush1.bf16.msra.mxu0 %v5300
    %5609 = vmatprep.subr.bf16.mxu0 %v5309
    %5610 = vmatpush1.bf16.msra.mxu0 %v5308
    %5611 = vmatprep.subr.bf16.mxu0 %v5317
    %5612 = vmatpush1.bf16.msra.mxu0 %v5316
    %5613 = vmatprep.subr.bf16.mxu0 %v5325
    %5614 = vmatpush1.bf16.msra.mxu0 %v5324
    %5615 = vmatprep.subr.bf16.mxu0 %v5333
    %5616 = vmatpush1.bf16.msra.mxu0 %v5332
    %5617 = vmatprep.mubr.bf16.mxu0 %v4693
    %5618 = vmatmul.mubr.bf16.gmra.mrb[0].mxu0 %v4692
    %v5619 = vpop.f32.mrb[0].mxu0
    %v5620 = vadd.f32 0.0, %v5619
    %v5621 = vpop.f32.mrb[0].mxu0
    %v5622 = vadd.f32 0.0, %v5621
    %v5623 = vpop.f32.mrb[0].mxu0
    %v5624 = vpop.f32.mrb[0].mxu0
    %5625 = vdwg.mxu0
    %v5626 = vadd.f32 %v4682, %v5497
    %v5627 = vadd.f32 %v4683, %v5499
    %v5628 = vadd.f32 %v4684, %v5538
    %v5629 = vadd.f32 %v4685, %v5540
    %v5630 = vadd.f32 %v4686, %v5579
    %v5631 = vadd.f32 %v4687, %v5581
    %v5632 = vadd.f32 %v4688, %v5620
    %v5633 = vadd.f32 %v4689, %v5622
    %v5634 = vld [vmem:[#allocation5] sm:$0xff]
    %v5635 = vld [vmem:[#allocation5 + $0x8] sm:$0xff]
    %v5636 = vxor.u32 %v4672, 2147483648
    %v5637 = vxor.u32 %v4673, 2147483648
    %v5638 = vmul.f32 %v5636, 1.442695
    %v5639 = vpow.pop %v5638
    %v5640 = vmul.f32 %v5637, 1.442695
    %v5641 = vpow.pop %v5640
    %v5642 = vadd.f32 %v5639, 1.0
    %v5643 = vadd.f32 %v5641, 1.0
    %v5644 = vrcp.pop %v5642
    %v5645 = vmul.f32 1.0, %v5644
    %v5646 = vrcp.pop %v5643
    %v5647 = vmul.f32 1.0, %v5646
    %v5648 = vxor.u32 %v4674, 2147483648
    %v5649 = vxor.u32 %v4675, 2147483648
    %v5650 = vmul.f32 %v5648, 1.442695
    %v5651 = vpow.pop %v5650
    %v5652 = vmul.f32 %v5649, 1.442695
    %v5653 = vpow.pop %v5652
    %v5654 = vadd.f32 %v5651, 1.0
    %v5655 = vadd.f32 %v5653, 1.0
    %v5656 = vrcp.pop %v5654
    %v5657 = vmul.f32 1.0, %v5656
    %v5658 = vrcp.pop %v5655
    %v5659 = vmul.f32 1.0, %v5658
    %v5660 = vtanh.pop %v4676
    %v5661 = vtanh.pop %v4677
    %v5662 = vxor.u32 %v4678, 2147483648
    %v5663 = vxor.u32 %v4679, 2147483648
    %v5664 = vmul.f32 %v5662, 1.442695
    %v5665 = vpow.pop %v5664
    %v5666 = vmul.f32 %v5663, 1.442695
    %v5667 = vpow.pop %v5666
    %v5668 = vadd.f32 %v5665, 1.0
    %v5669 = vadd.f32 %v5667, 1.0
    %v5670 = vrcp.pop %v5668
    %v5671 = vmul.f32 1.0, %v5670
    %v5672 = vrcp.pop %v5669
    %v5673 = vmul.f32 1.0, %v5672
    %v5674 = vmul.f32 %v5657, %v5634
    %v5675 = vmul.f32 %v5659, %v5635
    %v5676 = vmul.f32 %v5645, %v5660
    %v5677 = vmul.f32 %v5647, %v5661
    %v5678 = vadd.f32 %v5674, %v5676
    %v5679 = vadd.f32 %v5675, %v5677
    %v5680 = vtanh.pop %v5678
    %v5681 = vtanh.pop %v5679
    %v5682 = vmul.f32 %v5671, %v5680
    %v5683 = vmul.f32 %v5673, %v5681
    %v5684 = vld [vmem:[#allocation7] sm:$0xff]
    %v5685 = vld [vmem:[#allocation7 + $0x8] sm:$0xff]
    %v5686 = vxor.u32 %v5626, 2147483648
    %v5687 = vxor.u32 %v5627, 2147483648
    %v5688 = vmul.f32 %v5686, 1.442695
    %v5689 = vpow.pop %v5688
    %v5690 = vmul.f32 %v5687, 1.442695
    %v5691 = vpow.pop %v5690
    %v5692 = vadd.f32 %v5689, 1.0
    %v5693 = vadd.f32 %v5691, 1.0
    %v5694 = vrcp.pop %v5692
    %v5695 = vmul.f32 1.0, %v5694
    %v5696 = vrcp.pop %v5693
    %v5697 = vmul.f32 1.0, %v5696
    %v5698 = vxor.u32 %v5628, 2147483648
    %v5699 = vxor.u32 %v5629, 2147483648
    %v5700 = vmul.f32 %v5698, 1.442695
    %v5701 = vpow.pop %v5700
    %v5702 = vmul.f32 %v5699, 1.442695
    %v5703 = vpow.pop %v5702
    %v5704 = vadd.f32 %v5701, 1.0
    %v5705 = vadd.f32 %v5703, 1.0
    %v5706 = vrcp.pop %v5704
    %v5707 = vmul.f32 1.0, %v5706
    %v5708 = vrcp.pop %v5705
    %v5709 = vmul.f32 1.0, %v5708
    %v5710 = vtanh.pop %v5630
    %v5711 = vtanh.pop %v5631
    %v5712 = vxor.u32 %v5632, 2147483648
    %v5713 = vxor.u32 %v5633, 2147483648
    %v5714 = vmul.f32 %v5712, 1.442695
    %v5715 = vpow.pop %v5714
    %v5716 = vmul.f32 %v5713, 1.442695
    %v5717 = vpow.pop %v5716
    %v5718 = vadd.f32 %v5715, 1.0
    %v5719 = vadd.f32 %v5717, 1.0
    %v5720 = vrcp.pop %v5718
    %v5721 = vmul.f32 1.0, %v5720
    %v5722 = vrcp.pop %v5719
    %v5723 = vmul.f32 1.0, %v5722
    %v5724 = vmul.f32 %v5707, %v5684
    %v5725 = vmul.f32 %v5709, %v5685
    %v5726 = vmul.f32 %v5695, %v5710
    %v5727 = vmul.f32 %v5697, %v5711
    %v5728 = vadd.f32 %v5724, %v5726
    %v5729 = vadd.f32 %v5725, %v5727
    %v5730 = vtanh.pop %v5728
    %v5731 = vtanh.pop %v5729
    %v5732 = vmul.f32 %v5721, %v5730
    %v5733 = vmul.f32 %v5723, %v5731
    %5734 = vst [vmem:[#allocation4] sm:$0xff] %v5682
    %5735 = vst [vmem:[#allocation4 + $0x8] sm:$0xff] %v5683
    %5736 = vst [vmem:[#allocation5] sm:$0xff] %v5678
    %5737 = vst [vmem:[#allocation5 + $0x8] sm:$0xff] %v5679
    %5738 = vst [vmem:[#allocation6] sm:$0xff] %v5732
    %5739 = vst [vmem:[#allocation6 + $0x8] sm:$0xff] %v5733
    %5740 = vst [vmem:[#allocation7] sm:$0xff] %v5728
    %5741 = vst [vmem:[#allocation7 + $0x8] sm:$0xff] %v5729
    %v5742 = vstv %s3720
    %vm5743 = vcmp.gt.s32.totalorder %v3718, %v5742
    %v5744 = vld [vmem:[#allocation8] sm:$0xff]
    %v5745 = vld [vmem:[#allocation8 + $0x8] sm:$0xff]
    %v5746 = vmax.f32 %v5744, %v5682
    %v5747 = vmax.f32 %v5745, %v5683
    %v5748 = vsel %vm5743, 1, 0
    %5749 = vset.pattern.permute.xlu0 0
    %5750 = vperm.xlu0 %5749, %v5748
    %v5751 = vpop.permute.xlu0 %5750
    %vm5752 = vcmp.eq.s32.totalorder %v5751, 1
    %v5753 = vsel %vm5752, %v5746, %v5744
    %v5754 = vsel %vm5752, %v5747, %v5745
    %5755 = vst [vmem:[#allocation8] sm:$0xff] %v5753
    %5756 = vst [vmem:[#allocation8 + $0x8] sm:$0xff] %v5754
    %v5757 = vld [vmem:[#allocation9] sm:$0xff]
    %v5758 = vld [vmem:[#allocation9 + $0x8] sm:$0xff]
    %v5759 = vmax.f32 %v5757, %v5732
    %v5760 = vmax.f32 %v5758, %v5733
    %v5761 = vsel %vm5752, %v5759, %v5757
    %v5762 = vsel %vm5752, %v5760, %v5758
    %5763 = vst [vmem:[#allocation9] sm:$0xff] %v5761
    %5764 = vst [vmem:[#allocation9 + $0x8] sm:$0xff] %v5762
  $region42: #{_run_model.2} parent=0 // loop_footer
    %s3724 = sadd.s32 1, %s3720
  $region43: #{_run_model.2} parent=0 // loop_footer_branch
    %3719 = sbr.rel target = $region39
  $region44: #{_run_model.2} parent=0 // loop_exit
    _
  %vm5765 = vcmp.gt.s32.totalorder %v3718, 0
  %v5766 = vld [vmem:[#allocation8] sm:$0xff]
  %v5767 = vld [vmem:[#allocation8 + $0x8] sm:$0xff]
  %v5768 = vsel %vm5765, 1, 0
  %5769 = vset.pattern.permute.xlu0 0
  %5770 = vperm.xlu0 %5769, %v5768
  %v5771 = vpop.permute.xlu0 %5770
  %vm5772 = vcmp.eq.s32.totalorder %v5771, 1
  %v5773 = vsel %vm5772, %v5766, 0.0
  %v5774 = vsel %vm5772, %v5767, 0.0
  %5775 = vst [vmem:[%s9] sm:$0xff] %v5773
  %5776 = vst [vmem:[%s9 + $0x8] sm:$0xff] %v5774
  %v5777 = vld [vmem:[#allocation9] sm:$0xff]
  %v5778 = vld [vmem:[#allocation9 + $0x8] sm:$0xff]
  %v5779 = vsel %vm5772, %v5777, 0.0
  %v5780 = vsel %vm5772, %v5778, 0.0
  %5781 = vst [vmem:[%s9 + $0x10] sm:$0xff] %v5779
  %5782 = vst [vmem:[%s9 + $0x18] sm:$0xff] %v5780
  // Predicated region
  $region45: #{_run_model.2} parent=0 // pred_check
    _
  $region46: #{_run_model.2} parent=0 // pred_check_branch
    %5784 = sbr.rel (0) target = $region48
  $region47: #{_run_model.2} parent=0 // pred_region
    _
  $region48: #{_run_model.2} parent=0 // pred_fallthru
    _
  // Predicated region
  $region49: #{_run_model.2} parent=0 // pred_check
    _
  $region50: #{_run_model.2} parent=0 // pred_check_branch
    %5786 = sbr.rel (0) target = $region52
  $region51: #{_run_model.2} parent=0 // pred_region
    _
  $region52: #{_run_model.2} parent=0 // pred_fallthru
    _

// kernel: _run_model.3
$region0: #{_run_model.3}
  #allocation0 [shape = 'u32[]', space=smem, size = 0x4, offset = 0x4, fixed_abs, tag = 'smem constant byte address 0x4 - core index']
  #allocation1 [shape = 'u32[144,128]{1,0:T(1,128)}', space=vmem, size = 0x12000, scoped, tag = 'internal scratch']
  #allocation2 [shape = 'f32[4,1024]{1,0:T(4,128)}', space=vmem, size = 0x4000, scoped, tag = 'scratch operand']
  #allocation3 [shape = 'f32[4,1024]{1,0:T(4,128)}', space=vmem, size = 0x4000, scoped, tag = 'scratch operand']
  #allocation4 [shape = 'f32[1,256]{1,0:T(1,128)}', space=vmem, size = 0x400, scoped, tag = 'scratch operand']
  #allocation5 [shape = 'f32[1,256]{1,0:T(1,128)}', space=vmem, size = 0x400, scoped, tag = 'scratch operand']
  #allocation6 [shape = 'f32[1,256]{1,0:T(1,128)}', space=vmem, size = 0x400, scoped, tag = 'scratch operand']
  #allocation7 [shape = 'f32[1,256]{1,0:T(1,128)}', space=vmem, size = 0x400, scoped, tag = 'scratch operand']
  %s0 = inlined_call_operand.vmem [shape: f32[4,512], index: 0, kind: input, shape index: {}]
  %s1 = inlined_call_operand.vmem [shape: bf16[512,1024], index: 1, kind: input, shape index: {}]
  %s2 = inlined_call_operand.vmem [shape: bf16[512,1024], index: 2, kind: input, shape index: {}]
  %s3 = inlined_call_operand.vmem [shape: f32[1,1024], index: 3, kind: input, shape index: {}]
  %s4 = inlined_call_operand.vmem [shape: f32[1,1024], index: 4, kind: input, shape index: {}]
  %s5 = inlined_call_operand.vmem [shape: bf16[256,1024], index: 5, kind: input, shape index: {}]
  %s6 = inlined_call_operand.hbm [shape: bf16[256,1024], index: 6, kind: input, shape index: {}]
  %s7 = inlined_call_operand.vmem [shape: bf16[512,128], index: 7, kind: input, shape index: {}]
  %s8 = inlined_call_operand.vmem [shape: f32[1,128], index: 8, kind: input, shape index: {}]
  %s9 = inlined_call_operand.vmem [shape: f32[4,512], index: 9, kind: output, shape index: {0}]
  %s10 = inlined_call_operand.vmem [shape: f32[4,128], index: 10, kind: output, shape index: {1}]
  %11 = xla_tuple %s9, %s10
  %s12 = sld [smem:[#allocation0]]
  $region65: #{_run_model.3} parent=0
    _
  %s14 = ssub.s32 1, %s12
  %s15 = scalar_select 0, %s14, %s12
  $region1: #{_run_model.3} parent=0
    #allocation8 [shape = 'u8[524288]{0}', space=vmem, size = 0x80000, scoped, tag = 'input window, operand 6, single buffered']
    #allocation9 [shape = 's32[1]{0}', space=sflag, size = 0x4, scoped, tag = 'scoped memory for _run_model.3']
    %16 = vsyncpa [#allocation9], 0
    // Predicated region
    $region2: #{_run_model.3} parent=1 // pred_check
      _
    $region3: #{_run_model.3} parent=1 // pred_check_branch
      %18 = sbr.rel (0) target = $region5
    $region4: #{_run_model.3} parent=1 // pred_region
      _
    $region5: #{_run_model.3} parent=1 // pred_fallthru
      _
    // Predicated region
    $region6: #{_run_model.3} parent=1 // pred_check
      _
    $region7: #{_run_model.3} parent=1 // pred_check_branch
      %20 = sbr.rel (0) target = $region9
    $region8: #{_run_model.3} parent=1 // pred_region
      _
    $region9: #{_run_model.3} parent=1 // pred_fallthru
      _
    // Predicated region
    $region10: #{_run_model.3} parent=1 // pred_check
      _
    $region11: #{_run_model.3} parent=1 // pred_check_branch
      %22 = sbr.rel (0) target = $region13
    $region12: #{_run_model.3} parent=1 // pred_region
      _
    $region13: #{_run_model.3} parent=1 // pred_fallthru
      _
    // Predicated region
    $region14: #{_run_model.3} parent=1 // pred_check
      _
    $region15: #{_run_model.3} parent=1 // pred_check_branch
      %24 = sbr.rel (0) target = $region17
    $region16: #{_run_model.3} parent=1 // pred_region
      _
    $region17: #{_run_model.3} parent=1 // pred_fallthru
      _
    // Predicated region
    $region18: #{_run_model.3} parent=1 // pred_check
      _
    $region19: #{_run_model.3} parent=1 // pred_check_branch
      %26 = sbr.rel (0) target = $region21
    $region20: #{_run_model.3} parent=1 // pred_region
      _
    $region21: #{_run_model.3} parent=1 // pred_fallthru
      _
    // Predicated region
    $region22: #{_run_model.3} parent=1 // pred_check
      _
    $region23: #{_run_model.3} parent=1 // pred_check_branch
      %28 = sbr.rel (0) target = $region25
    $region24: #{_run_model.3} parent=1 // pred_region
      _
    $region25: #{_run_model.3} parent=1 // pred_fallthru
      _
    // Predicated region
    $region26: #{_run_model.3} parent=1 // pred_check
      _
    $region27: #{_run_model.3} parent=1 // pred_check_branch
      %30 = sbr.rel (0) target = $region29
    $region28: #{_run_model.3} parent=1 // pred_region
      %s32 = ssub.s32 16384, 16384
      %33 = vsyncadd [#allocation9], %s32
      %s34 = sshll.u32 [#allocation8], 4
      %s35 = int_to_ptr.vmem [resolvable:$true] %s34
      %40 = dma.hbm_to_vmem [thread:$0]  %s6, 16384, %s35, [#allocation9], 512, 512, 32
    $region29: #{_run_model.3} parent=1 // pred_fallthru
      _
    // Predicated region
    $region30: #{_run_model.3} parent=1 // pred_check
      _
    $region31: #{_run_model.3} parent=1 // pred_check_branch
      %42 = sbr.rel (0) target = $region33
    $region32: #{_run_model.3} parent=1 // pred_region
      _
    $region33: #{_run_model.3} parent=1 // pred_fallthru
      _
    // Predicated region
    $region34: #{_run_model.3} parent=1 // pred_check
      _
    $region35: #{_run_model.3} parent=1 // pred_check_branch
      %44 = sbr.rel (0) target = $region37
    $region36: #{_run_model.3} parent=1 // pred_region
      _
    $region37: #{_run_model.3} parent=1 // pred_fallthru
      _
    // Predicated region
    $region38: #{_run_model.3} parent=1 // pred_check
      _
    $region39: #{_run_model.3} parent=1 // pred_check_branch
      %46 = sbr.rel (0) target = $region41
    $region40: #{_run_model.3} parent=1 // pred_region
      %47 = dma.done [#allocation9], 16384
    $region41: #{_run_model.3} parent=1 // pred_fallthru
      _
    %v49 = vld [vmem:[%s0] sm:$0xff]
    %v50 = vld [vmem:[%s0 + $0x8] sm:$0xff]
    %v53 = vcombine.high %v49, %v49
    %v54 = vcombine.high %v50, %v50
    %v57 = vpack.c.bf16 %v49, %v49
    %v58 = vpack.c.bf16 %v53, %v53
    %v59 = vpack.c.bf16 %v50, %v50
    %v60 = vpack.c.bf16 %v54, %v54
    %v61 = vld [vmem:[%s1] sm:$0xff]
    %v62 = vld [vmem:[%s1 + $0x8] sm:$0xff]
    %v63 = vld [vmem:[%s1 + $0x10] sm:$0xff]
    %v64 = vld [vmem:[%s1 + $0x18] sm:$0xff]
    %v65 = vld [vmem:[%s1 + $0x20] sm:$0xff]
    %v66 = vld [vmem:[%s1 + $0x28] sm:$0xff]
    %v67 = vld [vmem:[%s1 + $0x30] sm:$0xff]
    %v68 = vld [vmem:[%s1 + $0x38] sm:$0xff]
    %v69 = vld [vmem:[%s1 + $0x40] sm:$0xff]
    %v70 = vld [vmem:[%s1 + $0x48] sm:$0xff]
    %v71 = vld [vmem:[%s1 + $0x50] sm:$0xff]
    %v72 = vld [vmem:[%s1 + $0x58] sm:$0xff]
    %v73 = vld [vmem:[%s1 + $0x60] sm:$0xff]
    %v74 = vld [vmem:[%s1 + $0x68] sm:$0xff]
    %v75 = vld [vmem:[%s1 + $0x70] sm:$0xff]
    %v76 = vld [vmem:[%s1 + $0x78] sm:$0xff]
    %v77 = vld [vmem:[%s1 + $0x80] sm:$0xff]
    %v78 = vld [vmem:[%s1 + $0x88] sm:$0xff]
    %v79 = vld [vmem:[%s1 + $0x90] sm:$0xff]
    %v80 = vld [vmem:[%s1 + $0x98] sm:$0xff]
    %v81 = vld [vmem:[%s1 + $0xa0] sm:$0xff]
    %v82 = vld [vmem:[%s1 + $0xa8] sm:$0xff]
    %v83 = vld [vmem:[%s1 + $0xb0] sm:$0xff]
    %v84 = vld [vmem:[%s1 + $0xb8] sm:$0xff]
    %v85 = vld [vmem:[%s1 + $0xc0] sm:$0xff]
    %v86 = vld [vmem:[%s1 + $0xc8] sm:$0xff]
    %v87 = vld [vmem:[%s1 + $0xd0] sm:$0xff]
    %v88 = vld [vmem:[%s1 + $0xd8] sm:$0xff]
    %v89 = vld [vmem:[%s1 + $0xe0] sm:$0xff]
    %v90 = vld [vmem:[%s1 + $0xe8] sm:$0xff]
    %v91 = vld [vmem:[%s1 + $0xf0] sm:$0xff]
    %v92 = vld [vmem:[%s1 + $0xf8] sm:$0xff]
    %v93 = vld [vmem:[%s1 + $0x100] sm:$0xff]
    %v94 = vld [vmem:[%s1 + $0x108] sm:$0xff]
    %v95 = vld [vmem:[%s1 + $0x110] sm:$0xff]
    %v96 = vld [vmem:[%s1 + $0x118] sm:$0xff]
    %v97 = vld [vmem:[%s1 + $0x120] sm:$0xff]
    %v98 = vld [vmem:[%s1 + $0x128] sm:$0xff]
    %v99 = vld [vmem:[%s1 + $0x130] sm:$0xff]
    %v100 = vld [vmem:[%s1 + $0x138] sm:$0xff]
    %v101 = vld [vmem:[%s1 + $0x140] sm:$0xff]
    %v102 = vld [vmem:[%s1 + $0x148] sm:$0xff]
    %v103 = vld [vmem:[%s1 + $0x150] sm:$0xff]
    %v104 = vld [vmem:[%s1 + $0x158] sm:$0xff]
    %v105 = vld [vmem:[%s1 + $0x160] sm:$0xff]
    %v106 = vld [vmem:[%s1 + $0x168] sm:$0xff]
    %v107 = vld [vmem:[%s1 + $0x170] sm:$0xff]
    %v108 = vld [vmem:[%s1 + $0x178] sm:$0xff]
    %v109 = vld [vmem:[%s1 + $0x180] sm:$0xff]
    %v110 = vld [vmem:[%s1 + $0x188] sm:$0xff]
    %v111 = vld [vmem:[%s1 + $0x190] sm:$0xff]
    %v112 = vld [vmem:[%s1 + $0x198] sm:$0xff]
    %v113 = vld [vmem:[%s1 + $0x1a0] sm:$0xff]
    %v114 = vld [vmem:[%s1 + $0x1a8] sm:$0xff]
    %v115 = vld [vmem:[%s1 + $0x1b0] sm:$0xff]
    %v116 = vld [vmem:[%s1 + $0x1b8] sm:$0xff]
    %v117 = vld [vmem:[%s1 + $0x1c0] sm:$0xff]
    %v118 = vld [vmem:[%s1 + $0x1c8] sm:$0xff]
    %v119 = vld [vmem:[%s1 + $0x1d0] sm:$0xff]
    %v120 = vld [vmem:[%s1 + $0x1d8] sm:$0xff]
    %v121 = vld [vmem:[%s1 + $0x1e0] sm:$0xff]
    %v122 = vld [vmem:[%s1 + $0x1e8] sm:$0xff]
    %v123 = vld [vmem:[%s1 + $0x1f0] sm:$0xff]
    %v124 = vld [vmem:[%s1 + $0x1f8] sm:$0xff]
    %v125 = vld [vmem:[%s1 + $0x200] sm:$0xff]
    %v126 = vld [vmem:[%s1 + $0x208] sm:$0xff]
    %v127 = vld [vmem:[%s1 + $0x210] sm:$0xff]
    %v128 = vld [vmem:[%s1 + $0x218] sm:$0xff]
    %v129 = vld [vmem:[%s1 + $0x220] sm:$0xff]
    %v130 = vld [vmem:[%s1 + $0x228] sm:$0xff]
    %v131 = vld [vmem:[%s1 + $0x230] sm:$0xff]
    %v132 = vld [vmem:[%s1 + $0x238] sm:$0xff]
    %v133 = vld [vmem:[%s1 + $0x240] sm:$0xff]
    %v134 = vld [vmem:[%s1 + $0x248] sm:$0xff]
    %v135 = vld [vmem:[%s1 + $0x250] sm:$0xff]
    %v136 = vld [vmem:[%s1 + $0x258] sm:$0xff]
    %v137 = vld [vmem:[%s1 + $0x260] sm:$0xff]
    %v138 = vld [vmem:[%s1 + $0x268] sm:$0xff]
    %v139 = vld [vmem:[%s1 + $0x270] sm:$0xff]
    %v140 = vld [vmem:[%s1 + $0x278] sm:$0xff]
    %v141 = vld [vmem:[%s1 + $0x280] sm:$0xff]
    %v142 = vld [vmem:[%s1 + $0x288] sm:$0xff]
    %v143 = vld [vmem:[%s1 + $0x290] sm:$0xff]
    %v144 = vld [vmem:[%s1 + $0x298] sm:$0xff]
    %v145 = vld [vmem:[%s1 + $0x2a0] sm:$0xff]
    %v146 = vld [vmem:[%s1 + $0x2a8] sm:$0xff]
    %v147 = vld [vmem:[%s1 + $0x2b0] sm:$0xff]
    %v148 = vld [vmem:[%s1 + $0x2b8] sm:$0xff]
    %v149 = vld [vmem:[%s1 + $0x2c0] sm:$0xff]
    %v150 = vld [vmem:[%s1 + $0x2c8] sm:$0xff]
    %v151 = vld [vmem:[%s1 + $0x2d0] sm:$0xff]
    %v152 = vld [vmem:[%s1 + $0x2d8] sm:$0xff]
    %v153 = vld [vmem:[%s1 + $0x2e0] sm:$0xff]
    %v154 = vld [vmem:[%s1 + $0x2e8] sm:$0xff]
    %v155 = vld [vmem:[%s1 + $0x2f0] sm:$0xff]
    %v156 = vld [vmem:[%s1 + $0x2f8] sm:$0xff]
    %v157 = vld [vmem:[%s1 + $0x300] sm:$0xff]
    %v158 = vld [vmem:[%s1 + $0x308] sm:$0xff]
    %v159 = vld [vmem:[%s1 + $0x310] sm:$0xff]
    %v160 = vld [vmem:[%s1 + $0x318] sm:$0xff]
    %v161 = vld [vmem:[%s1 + $0x320] sm:$0xff]
    %v162 = vld [vmem:[%s1 + $0x328] sm:$0xff]
    %v163 = vld [vmem:[%s1 + $0x330] sm:$0xff]
    %v164 = vld [vmem:[%s1 + $0x338] sm:$0xff]
    %v165 = vld [vmem:[%s1 + $0x340] sm:$0xff]
    %v166 = vld [vmem:[%s1 + $0x348] sm:$0xff]
    %v167 = vld [vmem:[%s1 + $0x350] sm:$0xff]
    %v168 = vld [vmem:[%s1 + $0x358] sm:$0xff]
    %v169 = vld [vmem:[%s1 + $0x360] sm:$0xff]
    %v170 = vld [vmem:[%s1 + $0x368] sm:$0xff]
    %v171 = vld [vmem:[%s1 + $0x370] sm:$0xff]
    %v172 = vld [vmem:[%s1 + $0x378] sm:$0xff]
    %v173 = vld [vmem:[%s1 + $0x380] sm:$0xff]
    %v174 = vld [vmem:[%s1 + $0x388] sm:$0xff]
    %v175 = vld [vmem:[%s1 + $0x390] sm:$0xff]
    %v176 = vld [vmem:[%s1 + $0x398] sm:$0xff]
    %v177 = vld [vmem:[%s1 + $0x3a0] sm:$0xff]
    %v178 = vld [vmem:[%s1 + $0x3a8] sm:$0xff]
    %v179 = vld [vmem:[%s1 + $0x3b0] sm:$0xff]
    %v180 = vld [vmem:[%s1 + $0x3b8] sm:$0xff]
    %v181 = vld [vmem:[%s1 + $0x3c0] sm:$0xff]
    %v182 = vld [vmem:[%s1 + $0x3c8] sm:$0xff]
    %v183 = vld [vmem:[%s1 + $0x3d0] sm:$0xff]
    %v184 = vld [vmem:[%s1 + $0x3d8] sm:$0xff]
    %v185 = vld [vmem:[%s1 + $0x3e0] sm:$0xff]
    %v186 = vld [vmem:[%s1 + $0x3e8] sm:$0xff]
    %v187 = vld [vmem:[%s1 + $0x3f0] sm:$0xff]
    %v188 = vld [vmem:[%s1 + $0x3f8] sm:$0xff]
    %v189 = vld [vmem:[%s1 + $0x400] sm:$0xff]
    %v190 = vld [vmem:[%s1 + $0x408] sm:$0xff]
    %v191 = vld [vmem:[%s1 + $0x410] sm:$0xff]
    %v192 = vld [vmem:[%s1 + $0x418] sm:$0xff]
    %v193 = vld [vmem:[%s1 + $0x420] sm:$0xff]
    %v194 = vld [vmem:[%s1 + $0x428] sm:$0xff]
    %v195 = vld [vmem:[%s1 + $0x430] sm:$0xff]
    %v196 = vld [vmem:[%s1 + $0x438] sm:$0xff]
    %v197 = vld [vmem:[%s1 + $0x440] sm:$0xff]
    %v198 = vld [vmem:[%s1 + $0x448] sm:$0xff]
    %v199 = vld [vmem:[%s1 + $0x450] sm:$0xff]
    %v200 = vld [vmem:[%s1 + $0x458] sm:$0xff]
    %v201 = vld [vmem:[%s1 + $0x460] sm:$0xff]
    %v202 = vld [vmem:[%s1 + $0x468] sm:$0xff]
    %v203 = vld [vmem:[%s1 + $0x470] sm:$0xff]
    %v204 = vld [vmem:[%s1 + $0x478] sm:$0xff]
    %v205 = vld [vmem:[%s1 + $0x480] sm:$0xff]
    %v206 = vld [vmem:[%s1 + $0x488] sm:$0xff]
    %v207 = vld [vmem:[%s1 + $0x490] sm:$0xff]
    %v208 = vld [vmem:[%s1 + $0x498] sm:$0xff]
    %v209 = vld [vmem:[%s1 + $0x4a0] sm:$0xff]
    %v210 = vld [vmem:[%s1 + $0x4a8] sm:$0xff]
    %v211 = vld [vmem:[%s1 + $0x4b0] sm:$0xff]
    %v212 = vld [vmem:[%s1 + $0x4b8] sm:$0xff]
    %v213 = vld [vmem:[%s1 + $0x4c0] sm:$0xff]
    %v214 = vld [vmem:[%s1 + $0x4c8] sm:$0xff]
    %v215 = vld [vmem:[%s1 + $0x4d0] sm:$0xff]
    %v216 = vld [vmem:[%s1 + $0x4d8] sm:$0xff]
    %v217 = vld [vmem:[%s1 + $0x4e0] sm:$0xff]
    %v218 = vld [vmem:[%s1 + $0x4e8] sm:$0xff]
    %v219 = vld [vmem:[%s1 + $0x4f0] sm:$0xff]
    %v220 = vld [vmem:[%s1 + $0x4f8] sm:$0xff]
    %v221 = vld [vmem:[%s1 + $0x500] sm:$0xff]
    %v222 = vld [vmem:[%s1 + $0x508] sm:$0xff]
    %v223 = vld [vmem:[%s1 + $0x510] sm:$0xff]
    %v224 = vld [vmem:[%s1 + $0x518] sm:$0xff]
    %v225 = vld [vmem:[%s1 + $0x520] sm:$0xff]
    %v226 = vld [vmem:[%s1 + $0x528] sm:$0xff]
    %v227 = vld [vmem:[%s1 + $0x530] sm:$0xff]
    %v228 = vld [vmem:[%s1 + $0x538] sm:$0xff]
    %v229 = vld [vmem:[%s1 + $0x540] sm:$0xff]
    %v230 = vld [vmem:[%s1 + $0x548] sm:$0xff]
    %v231 = vld [vmem:[%s1 + $0x550] sm:$0xff]
    %v232 = vld [vmem:[%s1 + $0x558] sm:$0xff]
    %v233 = vld [vmem:[%s1 + $0x560] sm:$0xff]
    %v234 = vld [vmem:[%s1 + $0x568] sm:$0xff]
    %v235 = vld [vmem:[%s1 + $0x570] sm:$0xff]
    %v236 = vld [vmem:[%s1 + $0x578] sm:$0xff]
    %v237 = vld [vmem:[%s1 + $0x580] sm:$0xff]
    %v238 = vld [vmem:[%s1 + $0x588] sm:$0xff]
    %v239 = vld [vmem:[%s1 + $0x590] sm:$0xff]
    %v240 = vld [vmem:[%s1 + $0x598] sm:$0xff]
    %v241 = vld [vmem:[%s1 + $0x5a0] sm:$0xff]
    %v242 = vld [vmem:[%s1 + $0x5a8] sm:$0xff]
    %v243 = vld [vmem:[%s1 + $0x5b0] sm:$0xff]
    %v244 = vld [vmem:[%s1 + $0x5b8] sm:$0xff]
    %v245 = vld [vmem:[%s1 + $0x5c0] sm:$0xff]
    %v246 = vld [vmem:[%s1 + $0x5c8] sm:$0xff]
    %v247 = vld [vmem:[%s1 + $0x5d0] sm:$0xff]
    %v248 = vld [vmem:[%s1 + $0x5d8] sm:$0xff]
    %v249 = vld [vmem:[%s1 + $0x5e0] sm:$0xff]
    %v250 = vld [vmem:[%s1 + $0x5e8] sm:$0xff]
    %v251 = vld [vmem:[%s1 + $0x5f0] sm:$0xff]
    %v252 = vld [vmem:[%s1 + $0x5f8] sm:$0xff]
    %v253 = vld [vmem:[%s1 + $0x600] sm:$0xff]
    %v254 = vld [vmem:[%s1 + $0x608] sm:$0xff]
    %v255 = vld [vmem:[%s1 + $0x610] sm:$0xff]
    %v256 = vld [vmem:[%s1 + $0x618] sm:$0xff]
    %v257 = vld [vmem:[%s1 + $0x620] sm:$0xff]
    %v258 = vld [vmem:[%s1 + $0x628] sm:$0xff]
    %v259 = vld [vmem:[%s1 + $0x630] sm:$0xff]
    %v260 = vld [vmem:[%s1 + $0x638] sm:$0xff]
    %v261 = vld [vmem:[%s1 + $0x640] sm:$0xff]
    %v262 = vld [vmem:[%s1 + $0x648] sm:$0xff]
    %v263 = vld [vmem:[%s1 + $0x650] sm:$0xff]
    %v264 = vld [vmem:[%s1 + $0x658] sm:$0xff]
    %v265 = vld [vmem:[%s1 + $0x660] sm:$0xff]
    %v266 = vld [vmem:[%s1 + $0x668] sm:$0xff]
    %v267 = vld [vmem:[%s1 + $0x670] sm:$0xff]
    %v268 = vld [vmem:[%s1 + $0x678] sm:$0xff]
    %v269 = vld [vmem:[%s1 + $0x680] sm:$0xff]
    %v270 = vld [vmem:[%s1 + $0x688] sm:$0xff]
    %v271 = vld [vmem:[%s1 + $0x690] sm:$0xff]
    %v272 = vld [vmem:[%s1 + $0x698] sm:$0xff]
    %v273 = vld [vmem:[%s1 + $0x6a0] sm:$0xff]
    %v274 = vld [vmem:[%s1 + $0x6a8] sm:$0xff]
    %v275 = vld [vmem:[%s1 + $0x6b0] sm:$0xff]
    %v276 = vld [vmem:[%s1 + $0x6b8] sm:$0xff]
    %v277 = vld [vmem:[%s1 + $0x6c0] sm:$0xff]
    %v278 = vld [vmem:[%s1 + $0x6c8] sm:$0xff]
    %v279 = vld [vmem:[%s1 + $0x6d0] sm:$0xff]
    %v280 = vld [vmem:[%s1 + $0x6d8] sm:$0xff]
    %v281 = vld [vmem:[%s1 + $0x6e0] sm:$0xff]
    %v282 = vld [vmem:[%s1 + $0x6e8] sm:$0xff]
    %v283 = vld [vmem:[%s1 + $0x6f0] sm:$0xff]
    %v284 = vld [vmem:[%s1 + $0x6f8] sm:$0xff]
    %v285 = vld [vmem:[%s1 + $0x700] sm:$0xff]
    %v286 = vld [vmem:[%s1 + $0x708] sm:$0xff]
    %v287 = vld [vmem:[%s1 + $0x710] sm:$0xff]
    %v288 = vld [vmem:[%s1 + $0x718] sm:$0xff]
    %v289 = vld [vmem:[%s1 + $0x720] sm:$0xff]
    %v290 = vld [vmem:[%s1 + $0x728] sm:$0xff]
    %v291 = vld [vmem:[%s1 + $0x730] sm:$0xff]
    %v292 = vld [vmem:[%s1 + $0x738] sm:$0xff]
    %v293 = vld [vmem:[%s1 + $0x740] sm:$0xff]
    %v294 = vld [vmem:[%s1 + $0x748] sm:$0xff]
    %v295 = vld [vmem:[%s1 + $0x750] sm:$0xff]
    %v296 = vld [vmem:[%s1 + $0x758] sm:$0xff]
    %v297 = vld [vmem:[%s1 + $0x760] sm:$0xff]
    %v298 = vld [vmem:[%s1 + $0x768] sm:$0xff]
    %v299 = vld [vmem:[%s1 + $0x770] sm:$0xff]
    %v300 = vld [vmem:[%s1 + $0x778] sm:$0xff]
    %v301 = vld [vmem:[%s1 + $0x780] sm:$0xff]
    %v302 = vld [vmem:[%s1 + $0x788] sm:$0xff]
    %v303 = vld [vmem:[%s1 + $0x790] sm:$0xff]
    %v304 = vld [vmem:[%s1 + $0x798] sm:$0xff]
    %v305 = vld [vmem:[%s1 + $0x7a0] sm:$0xff]
    %v306 = vld [vmem:[%s1 + $0x7a8] sm:$0xff]
    %v307 = vld [vmem:[%s1 + $0x7b0] sm:$0xff]
    %v308 = vld [vmem:[%s1 + $0x7b8] sm:$0xff]
    %v309 = vld [vmem:[%s1 + $0x7c0] sm:$0xff]
    %v310 = vld [vmem:[%s1 + $0x7c8] sm:$0xff]
    %v311 = vld [vmem:[%s1 + $0x7d0] sm:$0xff]
    %v312 = vld [vmem:[%s1 + $0x7d8] sm:$0xff]
    %v313 = vld [vmem:[%s1 + $0x7e0] sm:$0xff]
    %v314 = vld [vmem:[%s1 + $0x7e8] sm:$0xff]
    %v315 = vld [vmem:[%s1 + $0x7f0] sm:$0xff]
    %v316 = vld [vmem:[%s1 + $0x7f8] sm:$0xff]
    %v317 = vld [vmem:[%s3] sm:$0xff]
    %v319 = vlaneseq
    %v320 = vshrl.u32 %v319, 7
    %v321 = vsub.s32 0, %v320
    %v322 = vrot.slane %v317, %v321
    %v323 = vlaneseq
    %v324 = vshrl.u32 %v323, 7
    %v325 = vsub.s32 1, %v324
    %v326 = vrot.slane %v317, %v325
    %v327 = vlaneseq
    %v328 = vshrl.u32 %v327, 7
    %v329 = vsub.s32 2, %v328
    %v330 = vrot.slane %v317, %v329
    %v331 = vlaneseq
    %v332 = vshrl.u32 %v331, 7
    %v333 = vsub.s32 3, %v332
    %v334 = vrot.slane %v317, %v333
    %v335 = vlaneseq
    %v336 = vshrl.u32 %v335, 7
    %v337 = vsub.s32 4, %v336
    %v338 = vrot.slane %v317, %v337
    %v339 = vlaneseq
    %v340 = vshrl.u32 %v339, 7
    %v341 = vsub.s32 5, %v340
    %v342 = vrot.slane %v317, %v341
    %v343 = vlaneseq
    %v344 = vshrl.u32 %v343, 7
    %v345 = vsub.s32 6, %v344
    %v346 = vrot.slane %v317, %v345
    %v347 = vlaneseq
    %v348 = vshrl.u32 %v347, 7
    %v349 = vsub.s32 7, %v348
    %v350 = vrot.slane %v317, %v349
    %v615 = vunpack.c.l.b16 %v61
    %v616 = vunpack.c.h.b16 %v61
    %v617 = vunpack.c.l.b16 %v62
    %v618 = vunpack.c.h.b16 %v62
    %v619 = vunpack.c.l.b16 %v63
    %v620 = vunpack.c.h.b16 %v63
    %v621 = vunpack.c.l.b16 %v64
    %v622 = vunpack.c.h.b16 %v64
    %v623 = vunpack.c.l.b16 %v65
    %v624 = vunpack.c.h.b16 %v65
    %v625 = vunpack.c.l.b16 %v66
    %v626 = vunpack.c.h.b16 %v66
    %v627 = vunpack.c.l.b16 %v67
    %v628 = vunpack.c.h.b16 %v67
    %v629 = vunpack.c.l.b16 %v68
    %v630 = vunpack.c.h.b16 %v68
    %v631 = vunpack.c.l.b16 %v69
    %v632 = vunpack.c.h.b16 %v69
    %v633 = vunpack.c.l.b16 %v70
    %v634 = vunpack.c.h.b16 %v70
    %v635 = vunpack.c.l.b16 %v71
    %v636 = vunpack.c.h.b16 %v71
    %v637 = vunpack.c.l.b16 %v72
    %v638 = vunpack.c.h.b16 %v72
    %v639 = vunpack.c.l.b16 %v73
    %v640 = vunpack.c.h.b16 %v73
    %v641 = vunpack.c.l.b16 %v74
    %v642 = vunpack.c.h.b16 %v74
    %v643 = vunpack.c.l.b16 %v75
    %v644 = vunpack.c.h.b16 %v75
    %v645 = vunpack.c.l.b16 %v76
    %v646 = vunpack.c.h.b16 %v76
    %v647 = vunpack.c.l.b16 %v77
    %v648 = vunpack.c.h.b16 %v77
    %v649 = vunpack.c.l.b16 %v78
    %v650 = vunpack.c.h.b16 %v78
    %v651 = vunpack.c.l.b16 %v79
    %v652 = vunpack.c.h.b16 %v79
    %v653 = vunpack.c.l.b16 %v80
    %v654 = vunpack.c.h.b16 %v80
    %v655 = vunpack.c.l.b16 %v81
    %v656 = vunpack.c.h.b16 %v81
    %v657 = vunpack.c.l.b16 %v82
    %v658 = vunpack.c.h.b16 %v82
    %v659 = vunpack.c.l.b16 %v83
    %v660 = vunpack.c.h.b16 %v83
    %v661 = vunpack.c.l.b16 %v84
    %v662 = vunpack.c.h.b16 %v84
    %v663 = vunpack.c.l.b16 %v85
    %v664 = vunpack.c.h.b16 %v85
    %v665 = vunpack.c.l.b16 %v86
    %v666 = vunpack.c.h.b16 %v86
    %v667 = vunpack.c.l.b16 %v87
    %v668 = vunpack.c.h.b16 %v87
    %v669 = vunpack.c.l.b16 %v88
    %v670 = vunpack.c.h.b16 %v88
    %v671 = vunpack.c.l.b16 %v89
    %v672 = vunpack.c.h.b16 %v89
    %v673 = vunpack.c.l.b16 %v90
    %v674 = vunpack.c.h.b16 %v90
    %v675 = vunpack.c.l.b16 %v91
    %v676 = vunpack.c.h.b16 %v91
    %v677 = vunpack.c.l.b16 %v92
    %v678 = vunpack.c.h.b16 %v92
    %v679 = vunpack.c.l.b16 %v93
    %v680 = vunpack.c.h.b16 %v93
    %v681 = vunpack.c.l.b16 %v94
    %v682 = vunpack.c.h.b16 %v94
    %v683 = vunpack.c.l.b16 %v95
    %v684 = vunpack.c.h.b16 %v95
    %v685 = vunpack.c.l.b16 %v96
    %v686 = vunpack.c.h.b16 %v96
    %v687 = vunpack.c.l.b16 %v97
    %v688 = vunpack.c.h.b16 %v97
    %v689 = vunpack.c.l.b16 %v98
    %v690 = vunpack.c.h.b16 %v98
    %v691 = vunpack.c.l.b16 %v99
    %v692 = vunpack.c.h.b16 %v99
    %v693 = vunpack.c.l.b16 %v100
    %v694 = vunpack.c.h.b16 %v100
    %v695 = vunpack.c.l.b16 %v101
    %v696 = vunpack.c.h.b16 %v101
    %v697 = vunpack.c.l.b16 %v102
    %v698 = vunpack.c.h.b16 %v102
    %v699 = vunpack.c.l.b16 %v103
    %v700 = vunpack.c.h.b16 %v103
    %v701 = vunpack.c.l.b16 %v104
    %v702 = vunpack.c.h.b16 %v104
    %v703 = vunpack.c.l.b16 %v105
    %v704 = vunpack.c.h.b16 %v105
    %v705 = vunpack.c.l.b16 %v106
    %v706 = vunpack.c.h.b16 %v106
    %v707 = vunpack.c.l.b16 %v107
    %v708 = vunpack.c.h.b16 %v107
    %v709 = vunpack.c.l.b16 %v108
    %v710 = vunpack.c.h.b16 %v108
    %v711 = vunpack.c.l.b16 %v109
    %v712 = vunpack.c.h.b16 %v109
    %v713 = vunpack.c.l.b16 %v110
    %v714 = vunpack.c.h.b16 %v110
    %v715 = vunpack.c.l.b16 %v111
    %v716 = vunpack.c.h.b16 %v111
    %v717 = vunpack.c.l.b16 %v112
    %v718 = vunpack.c.h.b16 %v112
    %v719 = vunpack.c.l.b16 %v113
    %v720 = vunpack.c.h.b16 %v113
    %v721 = vunpack.c.l.b16 %v114
    %v722 = vunpack.c.h.b16 %v114
    %v723 = vunpack.c.l.b16 %v115
    %v724 = vunpack.c.h.b16 %v115
    %v725 = vunpack.c.l.b16 %v116
    %v726 = vunpack.c.h.b16 %v116
    %v727 = vunpack.c.l.b16 %v117
    %v728 = vunpack.c.h.b16 %v117
    %v729 = vunpack.c.l.b16 %v118
    %v730 = vunpack.c.h.b16 %v118
    %v731 = vunpack.c.l.b16 %v119
    %v732 = vunpack.c.h.b16 %v119
    %v733 = vunpack.c.l.b16 %v120
    %v734 = vunpack.c.h.b16 %v120
    %v735 = vunpack.c.l.b16 %v121
    %v736 = vunpack.c.h.b16 %v121
    %v737 = vunpack.c.l.b16 %v122
    %v738 = vunpack.c.h.b16 %v122
    %v739 = vunpack.c.l.b16 %v123
    %v740 = vunpack.c.h.b16 %v123
    %v741 = vunpack.c.l.b16 %v124
    %v742 = vunpack.c.h.b16 %v124
    %v743 = vunpack.c.l.b16 %v125
    %v744 = vunpack.c.h.b16 %v125
    %v745 = vunpack.c.l.b16 %v126
    %v746 = vunpack.c.h.b16 %v126
    %v747 = vunpack.c.l.b16 %v127
    %v748 = vunpack.c.h.b16 %v127
    %v749 = vunpack.c.l.b16 %v128
    %v750 = vunpack.c.h.b16 %v128
    %v751 = vunpack.c.l.b16 %v129
    %v752 = vunpack.c.h.b16 %v129
    %v753 = vunpack.c.l.b16 %v130
    %v754 = vunpack.c.h.b16 %v130
    %v755 = vunpack.c.l.b16 %v131
    %v756 = vunpack.c.h.b16 %v131
    %v757 = vunpack.c.l.b16 %v132
    %v758 = vunpack.c.h.b16 %v132
    %v759 = vunpack.c.l.b16 %v133
    %v760 = vunpack.c.h.b16 %v133
    %v761 = vunpack.c.l.b16 %v134
    %v762 = vunpack.c.h.b16 %v134
    %v763 = vunpack.c.l.b16 %v135
    %v764 = vunpack.c.h.b16 %v135
    %v765 = vunpack.c.l.b16 %v136
    %v766 = vunpack.c.h.b16 %v136
    %v767 = vunpack.c.l.b16 %v137
    %v768 = vunpack.c.h.b16 %v137
    %v769 = vunpack.c.l.b16 %v138
    %v770 = vunpack.c.h.b16 %v138
    %v771 = vunpack.c.l.b16 %v139
    %v772 = vunpack.c.h.b16 %v139
    %v773 = vunpack.c.l.b16 %v140
    %v774 = vunpack.c.h.b16 %v140
    %v775 = vunpack.c.l.b16 %v141
    %v776 = vunpack.c.h.b16 %v141
    %v777 = vunpack.c.l.b16 %v142
    %v778 = vunpack.c.h.b16 %v142
    %v779 = vunpack.c.l.b16 %v143
    %v780 = vunpack.c.h.b16 %v143
    %v781 = vunpack.c.l.b16 %v144
    %v782 = vunpack.c.h.b16 %v144
    %v783 = vunpack.c.l.b16 %v145
    %v784 = vunpack.c.h.b16 %v145
    %v785 = vunpack.c.l.b16 %v146
    %v786 = vunpack.c.h.b16 %v146
    %v787 = vunpack.c.l.b16 %v147
    %v788 = vunpack.c.h.b16 %v147
    %v789 = vunpack.c.l.b16 %v148
    %v790 = vunpack.c.h.b16 %v148
    %v791 = vunpack.c.l.b16 %v149
    %v792 = vunpack.c.h.b16 %v149
    %v793 = vunpack.c.l.b16 %v150
    %v794 = vunpack.c.h.b16 %v150
    %v795 = vunpack.c.l.b16 %v151
    %v796 = vunpack.c.h.b16 %v151
    %v797 = vunpack.c.l.b16 %v152
    %v798 = vunpack.c.h.b16 %v152
    %v799 = vunpack.c.l.b16 %v153
    %v800 = vunpack.c.h.b16 %v153
    %v801 = vunpack.c.l.b16 %v154
    %v802 = vunpack.c.h.b16 %v154
    %v803 = vunpack.c.l.b16 %v155
    %v804 = vunpack.c.h.b16 %v155
    %v805 = vunpack.c.l.b16 %v156
    %v806 = vunpack.c.h.b16 %v156
    %v807 = vunpack.c.l.b16 %v157
    %v808 = vunpack.c.h.b16 %v157
    %v809 = vunpack.c.l.b16 %v158
    %v810 = vunpack.c.h.b16 %v158
    %v811 = vunpack.c.l.b16 %v159
    %v812 = vunpack.c.h.b16 %v159
    %v813 = vunpack.c.l.b16 %v160
    %v814 = vunpack.c.h.b16 %v160
    %v815 = vunpack.c.l.b16 %v161
    %v816 = vunpack.c.h.b16 %v161
    %v817 = vunpack.c.l.b16 %v162
    %v818 = vunpack.c.h.b16 %v162
    %v819 = vunpack.c.l.b16 %v163
    %v820 = vunpack.c.h.b16 %v163
    %v821 = vunpack.c.l.b16 %v164
    %v822 = vunpack.c.h.b16 %v164
    %v823 = vunpack.c.l.b16 %v165
    %v824 = vunpack.c.h.b16 %v165
    %v825 = vunpack.c.l.b16 %v166
    %v826 = vunpack.c.h.b16 %v166
    %v827 = vunpack.c.l.b16 %v167
    %v828 = vunpack.c.h.b16 %v167
    %v829 = vunpack.c.l.b16 %v168
    %v830 = vunpack.c.h.b16 %v168
    %v831 = vunpack.c.l.b16 %v169
    %v832 = vunpack.c.h.b16 %v169
    %v833 = vunpack.c.l.b16 %v170
    %v834 = vunpack.c.h.b16 %v170
    %v835 = vunpack.c.l.b16 %v171
    %v836 = vunpack.c.h.b16 %v171
    %v837 = vunpack.c.l.b16 %v172
    %v838 = vunpack.c.h.b16 %v172
    %v839 = vunpack.c.l.b16 %v173
    %v840 = vunpack.c.h.b16 %v173
    %v841 = vunpack.c.l.b16 %v174
    %v842 = vunpack.c.h.b16 %v174
    %v843 = vunpack.c.l.b16 %v175
    %v844 = vunpack.c.h.b16 %v175
    %v845 = vunpack.c.l.b16 %v176
    %v846 = vunpack.c.h.b16 %v176
    %v847 = vunpack.c.l.b16 %v177
    %v848 = vunpack.c.h.b16 %v177
    %v849 = vunpack.c.l.b16 %v178
    %v850 = vunpack.c.h.b16 %v178
    %v851 = vunpack.c.l.b16 %v179
    %v852 = vunpack.c.h.b16 %v179
    %v853 = vunpack.c.l.b16 %v180
    %v854 = vunpack.c.h.b16 %v180
    %v855 = vunpack.c.l.b16 %v181
    %v856 = vunpack.c.h.b16 %v181
    %v857 = vunpack.c.l.b16 %v182
    %v858 = vunpack.c.h.b16 %v182
    %v859 = vunpack.c.l.b16 %v183
    %v860 = vunpack.c.h.b16 %v183
    %v861 = vunpack.c.l.b16 %v184
    %v862 = vunpack.c.h.b16 %v184
    %v863 = vunpack.c.l.b16 %v185
    %v864 = vunpack.c.h.b16 %v185
    %v865 = vunpack.c.l.b16 %v186
    %v866 = vunpack.c.h.b16 %v186
    %v867 = vunpack.c.l.b16 %v187
    %v868 = vunpack.c.h.b16 %v187
    %v869 = vunpack.c.l.b16 %v188
    %v870 = vunpack.c.h.b16 %v188
    %v871 = vunpack.c.l.b16 %v189
    %v872 = vunpack.c.h.b16 %v189
    %v873 = vunpack.c.l.b16 %v190
    %v874 = vunpack.c.h.b16 %v190
    %v875 = vunpack.c.l.b16 %v191
    %v876 = vunpack.c.h.b16 %v191
    %v877 = vunpack.c.l.b16 %v192
    %v878 = vunpack.c.h.b16 %v192
    %v879 = vunpack.c.l.b16 %v193
    %v880 = vunpack.c.h.b16 %v193
    %v881 = vunpack.c.l.b16 %v194
    %v882 = vunpack.c.h.b16 %v194
    %v883 = vunpack.c.l.b16 %v195
    %v884 = vunpack.c.h.b16 %v195
    %v885 = vunpack.c.l.b16 %v196
    %v886 = vunpack.c.h.b16 %v196
    %v887 = vunpack.c.l.b16 %v197
    %v888 = vunpack.c.h.b16 %v197
    %v889 = vunpack.c.l.b16 %v198
    %v890 = vunpack.c.h.b16 %v198
    %v891 = vunpack.c.l.b16 %v199
    %v892 = vunpack.c.h.b16 %v199
    %v893 = vunpack.c.l.b16 %v200
    %v894 = vunpack.c.h.b16 %v200
    %v895 = vunpack.c.l.b16 %v201
    %v896 = vunpack.c.h.b16 %v201
    %v897 = vunpack.c.l.b16 %v202
    %v898 = vunpack.c.h.b16 %v202
    %v899 = vunpack.c.l.b16 %v203
    %v900 = vunpack.c.h.b16 %v203
    %v901 = vunpack.c.l.b16 %v204
    %v902 = vunpack.c.h.b16 %v204
    %v903 = vunpack.c.l.b16 %v205
    %v904 = vunpack.c.h.b16 %v205
    %v905 = vunpack.c.l.b16 %v206
    %v906 = vunpack.c.h.b16 %v206
    %v907 = vunpack.c.l.b16 %v207
    %v908 = vunpack.c.h.b16 %v207
    %v909 = vunpack.c.l.b16 %v208
    %v910 = vunpack.c.h.b16 %v208
    %v911 = vunpack.c.l.b16 %v209
    %v912 = vunpack.c.h.b16 %v209
    %v913 = vunpack.c.l.b16 %v210
    %v914 = vunpack.c.h.b16 %v210
    %v915 = vunpack.c.l.b16 %v211
    %v916 = vunpack.c.h.b16 %v211
    %v917 = vunpack.c.l.b16 %v212
    %v918 = vunpack.c.h.b16 %v212
    %v919 = vunpack.c.l.b16 %v213
    %v920 = vunpack.c.h.b16 %v213
    %v921 = vunpack.c.l.b16 %v214
    %v922 = vunpack.c.h.b16 %v214
    %v923 = vunpack.c.l.b16 %v215
    %v924 = vunpack.c.h.b16 %v215
    %v925 = vunpack.c.l.b16 %v216
    %v926 = vunpack.c.h.b16 %v216
    %v927 = vunpack.c.l.b16 %v217
    %v928 = vunpack.c.h.b16 %v217
    %v929 = vunpack.c.l.b16 %v218
    %v930 = vunpack.c.h.b16 %v218
    %v931 = vunpack.c.l.b16 %v219
    %v932 = vunpack.c.h.b16 %v219
    %v933 = vunpack.c.l.b16 %v220
    %v934 = vunpack.c.h.b16 %v220
    %v935 = vunpack.c.l.b16 %v221
    %v936 = vunpack.c.h.b16 %v221
    %v937 = vunpack.c.l.b16 %v222
    %v938 = vunpack.c.h.b16 %v222
    %v939 = vunpack.c.l.b16 %v223
    %v940 = vunpack.c.h.b16 %v223
    %v941 = vunpack.c.l.b16 %v224
    %v942 = vunpack.c.h.b16 %v224
    %v943 = vunpack.c.l.b16 %v225
    %v944 = vunpack.c.h.b16 %v225
    %v945 = vunpack.c.l.b16 %v226
    %v946 = vunpack.c.h.b16 %v226
    %v947 = vunpack.c.l.b16 %v227
    %v948 = vunpack.c.h.b16 %v227
    %v949 = vunpack.c.l.b16 %v228
    %v950 = vunpack.c.h.b16 %v228
    %v951 = vunpack.c.l.b16 %v229
    %v952 = vunpack.c.h.b16 %v229
    %v953 = vunpack.c.l.b16 %v230
    %v954 = vunpack.c.h.b16 %v230
    %v955 = vunpack.c.l.b16 %v231
    %v956 = vunpack.c.h.b16 %v231
    %v957 = vunpack.c.l.b16 %v232
    %v958 = vunpack.c.h.b16 %v232
    %v959 = vunpack.c.l.b16 %v233
    %v960 = vunpack.c.h.b16 %v233
    %v961 = vunpack.c.l.b16 %v234
    %v962 = vunpack.c.h.b16 %v234
    %v963 = vunpack.c.l.b16 %v235
    %v964 = vunpack.c.h.b16 %v235
    %v965 = vunpack.c.l.b16 %v236
    %v966 = vunpack.c.h.b16 %v236
    %v967 = vunpack.c.l.b16 %v237
    %v968 = vunpack.c.h.b16 %v237
    %v969 = vunpack.c.l.b16 %v238
    %v970 = vunpack.c.h.b16 %v238
    %v971 = vunpack.c.l.b16 %v239
    %v972 = vunpack.c.h.b16 %v239
    %v973 = vunpack.c.l.b16 %v240
    %v974 = vunpack.c.h.b16 %v240
    %v975 = vunpack.c.l.b16 %v241
    %v976 = vunpack.c.h.b16 %v241
    %v977 = vunpack.c.l.b16 %v242
    %v978 = vunpack.c.h.b16 %v242
    %v979 = vunpack.c.l.b16 %v243
    %v980 = vunpack.c.h.b16 %v243
    %v981 = vunpack.c.l.b16 %v244
    %v982 = vunpack.c.h.b16 %v244
    %v983 = vunpack.c.l.b16 %v245
    %v984 = vunpack.c.h.b16 %v245
    %v985 = vunpack.c.l.b16 %v246
    %v986 = vunpack.c.h.b16 %v246
    %v987 = vunpack.c.l.b16 %v247
    %v988 = vunpack.c.h.b16 %v247
    %v989 = vunpack.c.l.b16 %v248
    %v990 = vunpack.c.h.b16 %v248
    %v991 = vunpack.c.l.b16 %v249
    %v992 = vunpack.c.h.b16 %v249
    %v993 = vunpack.c.l.b16 %v250
    %v994 = vunpack.c.h.b16 %v250
    %v995 = vunpack.c.l.b16 %v251
    %v996 = vunpack.c.h.b16 %v251
    %v997 = vunpack.c.l.b16 %v252
    %v998 = vunpack.c.h.b16 %v252
    %v999 = vunpack.c.l.b16 %v253
    %v1000 = vunpack.c.h.b16 %v253
    %v1001 = vunpack.c.l.b16 %v254
    %v1002 = vunpack.c.h.b16 %v254
    %v1003 = vunpack.c.l.b16 %v255
    %v1004 = vunpack.c.h.b16 %v255
    %v1005 = vunpack.c.l.b16 %v256
    %v1006 = vunpack.c.h.b16 %v256
    %v1007 = vunpack.c.l.b16 %v257
    %v1008 = vunpack.c.h.b16 %v257
    %v1009 = vunpack.c.l.b16 %v258
    %v1010 = vunpack.c.h.b16 %v258
    %v1011 = vunpack.c.l.b16 %v259
    %v1012 = vunpack.c.h.b16 %v259
    %v1013 = vunpack.c.l.b16 %v260
    %v1014 = vunpack.c.h.b16 %v260
    %v1015 = vunpack.c.l.b16 %v261
    %v1016 = vunpack.c.h.b16 %v261
    %v1017 = vunpack.c.l.b16 %v262
    %v1018 = vunpack.c.h.b16 %v262
    %v1019 = vunpack.c.l.b16 %v263
    %v1020 = vunpack.c.h.b16 %v263
    %v1021 = vunpack.c.l.b16 %v264
    %v1022 = vunpack.c.h.b16 %v264
    %v1023 = vunpack.c.l.b16 %v265
    %v1024 = vunpack.c.h.b16 %v265
    %v1025 = vunpack.c.l.b16 %v266
    %v1026 = vunpack.c.h.b16 %v266
    %v1027 = vunpack.c.l.b16 %v267
    %v1028 = vunpack.c.h.b16 %v267
    %v1029 = vunpack.c.l.b16 %v268
    %v1030 = vunpack.c.h.b16 %v268
    %v1031 = vunpack.c.l.b16 %v269
    %v1032 = vunpack.c.h.b16 %v269
    %v1033 = vunpack.c.l.b16 %v270
    %v1034 = vunpack.c.h.b16 %v270
    %v1035 = vunpack.c.l.b16 %v271
    %v1036 = vunpack.c.h.b16 %v271
    %v1037 = vunpack.c.l.b16 %v272
    %v1038 = vunpack.c.h.b16 %v272
    %v1039 = vunpack.c.l.b16 %v273
    %v1040 = vunpack.c.h.b16 %v273
    %v1041 = vunpack.c.l.b16 %v274
    %v1042 = vunpack.c.h.b16 %v274
    %v1043 = vunpack.c.l.b16 %v275
    %v1044 = vunpack.c.h.b16 %v275
    %v1045 = vunpack.c.l.b16 %v276
    %v1046 = vunpack.c.h.b16 %v276
    %v1047 = vunpack.c.l.b16 %v277
    %v1048 = vunpack.c.h.b16 %v277
    %v1049 = vunpack.c.l.b16 %v278
    %v1050 = vunpack.c.h.b16 %v278
    %v1051 = vunpack.c.l.b16 %v279
    %v1052 = vunpack.c.h.b16 %v279
    %v1053 = vunpack.c.l.b16 %v280
    %v1054 = vunpack.c.h.b16 %v280
    %v1055 = vunpack.c.l.b16 %v281
    %v1056 = vunpack.c.h.b16 %v281
    %v1057 = vunpack.c.l.b16 %v282
    %v1058 = vunpack.c.h.b16 %v282
    %v1059 = vunpack.c.l.b16 %v283
    %v1060 = vunpack.c.h.b16 %v283
    %v1061 = vunpack.c.l.b16 %v284
    %v1062 = vunpack.c.h.b16 %v284
    %v1063 = vunpack.c.l.b16 %v285
    %v1064 = vunpack.c.h.b16 %v285
    %v1065 = vunpack.c.l.b16 %v286
    %v1066 = vunpack.c.h.b16 %v286
    %v1067 = vunpack.c.l.b16 %v287
    %v1068 = vunpack.c.h.b16 %v287
    %v1069 = vunpack.c.l.b16 %v288
    %v1070 = vunpack.c.h.b16 %v288
    %v1071 = vunpack.c.l.b16 %v289
    %v1072 = vunpack.c.h.b16 %v289
    %v1073 = vunpack.c.l.b16 %v290
    %v1074 = vunpack.c.h.b16 %v290
    %v1075 = vunpack.c.l.b16 %v291
    %v1076 = vunpack.c.h.b16 %v291
    %v1077 = vunpack.c.l.b16 %v292
    %v1078 = vunpack.c.h.b16 %v292
    %v1079 = vunpack.c.l.b16 %v293
    %v1080 = vunpack.c.h.b16 %v293
    %v1081 = vunpack.c.l.b16 %v294
    %v1082 = vunpack.c.h.b16 %v294
    %v1083 = vunpack.c.l.b16 %v295
    %v1084 = vunpack.c.h.b16 %v295
    %v1085 = vunpack.c.l.b16 %v296
    %v1086 = vunpack.c.h.b16 %v296
    %v1087 = vunpack.c.l.b16 %v297
    %v1088 = vunpack.c.h.b16 %v297
    %v1089 = vunpack.c.l.b16 %v298
    %v1090 = vunpack.c.h.b16 %v298
    %v1091 = vunpack.c.l.b16 %v299
    %v1092 = vunpack.c.h.b16 %v299
    %v1093 = vunpack.c.l.b16 %v300
    %v1094 = vunpack.c.h.b16 %v300
    %v1095 = vunpack.c.l.b16 %v301
    %v1096 = vunpack.c.h.b16 %v301
    %v1097 = vunpack.c.l.b16 %v302
    %v1098 = vunpack.c.h.b16 %v302
    %v1099 = vunpack.c.l.b16 %v303
    %v1100 = vunpack.c.h.b16 %v303
    %v1101 = vunpack.c.l.b16 %v304
    %v1102 = vunpack.c.h.b16 %v304
    %v1103 = vunpack.c.l.b16 %v305
    %v1104 = vunpack.c.h.b16 %v305
    %v1105 = vunpack.c.l.b16 %v306
    %v1106 = vunpack.c.h.b16 %v306
    %v1107 = vunpack.c.l.b16 %v307
    %v1108 = vunpack.c.h.b16 %v307
    %v1109 = vunpack.c.l.b16 %v308
    %v1110 = vunpack.c.h.b16 %v308
    %v1111 = vunpack.c.l.b16 %v309
    %v1112 = vunpack.c.h.b16 %v309
    %v1113 = vunpack.c.l.b16 %v310
    %v1114 = vunpack.c.h.b16 %v310
    %v1115 = vunpack.c.l.b16 %v311
    %v1116 = vunpack.c.h.b16 %v311
    %v1117 = vunpack.c.l.b16 %v312
    %v1118 = vunpack.c.h.b16 %v312
    %v1119 = vunpack.c.l.b16 %v313
    %v1120 = vunpack.c.h.b16 %v313
    %v1121 = vunpack.c.l.b16 %v314
    %v1122 = vunpack.c.h.b16 %v314
    %v1123 = vunpack.c.l.b16 %v315
    %v1124 = vunpack.c.h.b16 %v315
    %v1125 = vunpack.c.l.b16 %v316
    %v1126 = vunpack.c.h.b16 %v316
    %v1127 = vpack.c.b16 %v623, %v615
    %v1128 = vpack.c.b16 %v624, %v616
    %v1129 = vpack.c.b16 %v625, %v617
    %v1130 = vpack.c.b16 %v626, %v618
    %v1131 = vpack.c.b16 %v627, %v619
    %v1132 = vpack.c.b16 %v628, %v620
    %v1133 = vpack.c.b16 %v629, %v621
    %v1134 = vpack.c.b16 %v630, %v622
    %v1135 = vpack.c.b16 %v639, %v631
    %v1136 = vpack.c.b16 %v640, %v632
    %v1137 = vpack.c.b16 %v641, %v633
    %v1138 = vpack.c.b16 %v642, %v634
    %v1139 = vpack.c.b16 %v643, %v635
    %v1140 = vpack.c.b16 %v644, %v636
    %v1141 = vpack.c.b16 %v645, %v637
    %v1142 = vpack.c.b16 %v646, %v638
    %v1143 = vpack.c.b16 %v655, %v647
    %v1144 = vpack.c.b16 %v656, %v648
    %v1145 = vpack.c.b16 %v657, %v649
    %v1146 = vpack.c.b16 %v658, %v650
    %v1147 = vpack.c.b16 %v659, %v651
    %v1148 = vpack.c.b16 %v660, %v652
    %v1149 = vpack.c.b16 %v661, %v653
    %v1150 = vpack.c.b16 %v662, %v654
    %v1151 = vpack.c.b16 %v671, %v663
    %v1152 = vpack.c.b16 %v672, %v664
    %v1153 = vpack.c.b16 %v673, %v665
    %v1154 = vpack.c.b16 %v674, %v666
    %v1155 = vpack.c.b16 %v675, %v667
    %v1156 = vpack.c.b16 %v676, %v668
    %v1157 = vpack.c.b16 %v677, %v669
    %v1158 = vpack.c.b16 %v678, %v670
    %v1159 = vpack.c.b16 %v687, %v679
    %v1160 = vpack.c.b16 %v688, %v680
    %v1161 = vpack.c.b16 %v689, %v681
    %v1162 = vpack.c.b16 %v690, %v682
    %v1163 = vpack.c.b16 %v691, %v683
    %v1164 = vpack.c.b16 %v692, %v684
    %v1165 = vpack.c.b16 %v693, %v685
    %v1166 = vpack.c.b16 %v694, %v686
    %v1167 = vpack.c.b16 %v703, %v695
    %v1168 = vpack.c.b16 %v704, %v696
    %v1169 = vpack.c.b16 %v705, %v697
    %v1170 = vpack.c.b16 %v706, %v698
    %v1171 = vpack.c.b16 %v707, %v699
    %v1172 = vpack.c.b16 %v708, %v700
    %v1173 = vpack.c.b16 %v709, %v701
    %v1174 = vpack.c.b16 %v710, %v702
    %v1175 = vpack.c.b16 %v719, %v711
    %v1176 = vpack.c.b16 %v720, %v712
    %v1177 = vpack.c.b16 %v721, %v713
    %v1178 = vpack.c.b16 %v722, %v714
    %v1179 = vpack.c.b16 %v723, %v715
    %v1180 = vpack.c.b16 %v724, %v716
    %v1181 = vpack.c.b16 %v725, %v717
    %v1182 = vpack.c.b16 %v726, %v718
    %v1183 = vpack.c.b16 %v735, %v727
    %v1184 = vpack.c.b16 %v736, %v728
    %v1185 = vpack.c.b16 %v737, %v729
    %v1186 = vpack.c.b16 %v738, %v730
    %v1187 = vpack.c.b16 %v739, %v731
    %v1188 = vpack.c.b16 %v740, %v732
    %v1189 = vpack.c.b16 %v741, %v733
    %v1190 = vpack.c.b16 %v742, %v734
    %v1191 = vpack.c.b16 %v751, %v743
    %v1192 = vpack.c.b16 %v752, %v744
    %v1193 = vpack.c.b16 %v753, %v745
    %v1194 = vpack.c.b16 %v754, %v746
    %v1195 = vpack.c.b16 %v755, %v747
    %v1196 = vpack.c.b16 %v756, %v748
    %v1197 = vpack.c.b16 %v757, %v749
    %v1198 = vpack.c.b16 %v758, %v750
    %v1199 = vpack.c.b16 %v767, %v759
    %v1200 = vpack.c.b16 %v768, %v760
    %v1201 = vpack.c.b16 %v769, %v761
    %v1202 = vpack.c.b16 %v770, %v762
    %v1203 = vpack.c.b16 %v771, %v763
    %v1204 = vpack.c.b16 %v772, %v764
    %v1205 = vpack.c.b16 %v773, %v765
    %v1206 = vpack.c.b16 %v774, %v766
    %v1207 = vpack.c.b16 %v783, %v775
    %v1208 = vpack.c.b16 %v784, %v776
    %v1209 = vpack.c.b16 %v785, %v777
    %v1210 = vpack.c.b16 %v786, %v778
    %v1211 = vpack.c.b16 %v787, %v779
    %v1212 = vpack.c.b16 %v788, %v780
    %v1213 = vpack.c.b16 %v789, %v781
    %v1214 = vpack.c.b16 %v790, %v782
    %v1215 = vpack.c.b16 %v799, %v791
    %v1216 = vpack.c.b16 %v800, %v792
    %v1217 = vpack.c.b16 %v801, %v793
    %v1218 = vpack.c.b16 %v802, %v794
    %v1219 = vpack.c.b16 %v803, %v795
    %v1220 = vpack.c.b16 %v804, %v796
    %v1221 = vpack.c.b16 %v805, %v797
    %v1222 = vpack.c.b16 %v806, %v798
    %v1223 = vpack.c.b16 %v815, %v807
    %v1224 = vpack.c.b16 %v816, %v808
    %v1225 = vpack.c.b16 %v817, %v809
    %v1226 = vpack.c.b16 %v818, %v810
    %v1227 = vpack.c.b16 %v819, %v811
    %v1228 = vpack.c.b16 %v820, %v812
    %v1229 = vpack.c.b16 %v821, %v813
    %v1230 = vpack.c.b16 %v822, %v814
    %v1231 = vpack.c.b16 %v831, %v823
    %v1232 = vpack.c.b16 %v832, %v824
    %v1233 = vpack.c.b16 %v833, %v825
    %v1234 = vpack.c.b16 %v834, %v826
    %v1235 = vpack.c.b16 %v835, %v827
    %v1236 = vpack.c.b16 %v836, %v828
    %v1237 = vpack.c.b16 %v837, %v829
    %v1238 = vpack.c.b16 %v838, %v830
    %v1239 = vpack.c.b16 %v847, %v839
    %v1240 = vpack.c.b16 %v848, %v840
    %v1241 = vpack.c.b16 %v849, %v841
    %v1242 = vpack.c.b16 %v850, %v842
    %v1243 = vpack.c.b16 %v851, %v843
    %v1244 = vpack.c.b16 %v852, %v844
    %v1245 = vpack.c.b16 %v853, %v845
    %v1246 = vpack.c.b16 %v854, %v846
    %v1247 = vpack.c.b16 %v863, %v855
    %v1248 = vpack.c.b16 %v864, %v856
    %v1249 = vpack.c.b16 %v865, %v857
    %v1250 = vpack.c.b16 %v866, %v858
    %v1251 = vpack.c.b16 %v867, %v859
    %v1252 = vpack.c.b16 %v868, %v860
    %v1253 = vpack.c.b16 %v869, %v861
    %v1254 = vpack.c.b16 %v870, %v862
    %v1255 = vpack.c.b16 %v879, %v871
    %v1256 = vpack.c.b16 %v880, %v872
    %v1257 = vpack.c.b16 %v881, %v873
    %v1258 = vpack.c.b16 %v882, %v874
    %v1259 = vpack.c.b16 %v883, %v875
    %v1260 = vpack.c.b16 %v884, %v876
    %v1261 = vpack.c.b16 %v885, %v877
    %v1262 = vpack.c.b16 %v886, %v878
    %v1263 = vpack.c.b16 %v895, %v887
    %v1264 = vpack.c.b16 %v896, %v888
    %v1265 = vpack.c.b16 %v897, %v889
    %v1266 = vpack.c.b16 %v898, %v890
    %v1267 = vpack.c.b16 %v899, %v891
    %v1268 = vpack.c.b16 %v900, %v892
    %v1269 = vpack.c.b16 %v901, %v893
    %v1270 = vpack.c.b16 %v902, %v894
    %v1271 = vpack.c.b16 %v911, %v903
    %v1272 = vpack.c.b16 %v912, %v904
    %v1273 = vpack.c.b16 %v913, %v905
    %v1274 = vpack.c.b16 %v914, %v906
    %v1275 = vpack.c.b16 %v915, %v907
    %v1276 = vpack.c.b16 %v916, %v908
    %v1277 = vpack.c.b16 %v917, %v909
    %v1278 = vpack.c.b16 %v918, %v910
    %v1279 = vpack.c.b16 %v927, %v919
    %v1280 = vpack.c.b16 %v928, %v920
    %v1281 = vpack.c.b16 %v929, %v921
    %v1282 = vpack.c.b16 %v930, %v922
    %v1283 = vpack.c.b16 %v931, %v923
    %v1284 = vpack.c.b16 %v932, %v924
    %v1285 = vpack.c.b16 %v933, %v925
    %v1286 = vpack.c.b16 %v934, %v926
    %v1287 = vpack.c.b16 %v943, %v935
    %v1288 = vpack.c.b16 %v944, %v936
    %v1289 = vpack.c.b16 %v945, %v937
    %v1290 = vpack.c.b16 %v946, %v938
    %v1291 = vpack.c.b16 %v947, %v939
    %v1292 = vpack.c.b16 %v948, %v940
    %v1293 = vpack.c.b16 %v949, %v941
    %v1294 = vpack.c.b16 %v950, %v942
    %v1295 = vpack.c.b16 %v959, %v951
    %v1296 = vpack.c.b16 %v960, %v952
    %v1297 = vpack.c.b16 %v961, %v953
    %v1298 = vpack.c.b16 %v962, %v954
    %v1299 = vpack.c.b16 %v963, %v955
    %v1300 = vpack.c.b16 %v964, %v956
    %v1301 = vpack.c.b16 %v965, %v957
    %v1302 = vpack.c.b16 %v966, %v958
    %v1303 = vpack.c.b16 %v975, %v967
    %v1304 = vpack.c.b16 %v976, %v968
    %v1305 = vpack.c.b16 %v977, %v969
    %v1306 = vpack.c.b16 %v978, %v970
    %v1307 = vpack.c.b16 %v979, %v971
    %v1308 = vpack.c.b16 %v980, %v972
    %v1309 = vpack.c.b16 %v981, %v973
    %v1310 = vpack.c.b16 %v982, %v974
    %v1311 = vpack.c.b16 %v991, %v983
    %v1312 = vpack.c.b16 %v992, %v984
    %v1313 = vpack.c.b16 %v993, %v985
    %v1314 = vpack.c.b16 %v994, %v986
    %v1315 = vpack.c.b16 %v995, %v987
    %v1316 = vpack.c.b16 %v996, %v988
    %v1317 = vpack.c.b16 %v997, %v989
    %v1318 = vpack.c.b16 %v998, %v990
    %v1319 = vpack.c.b16 %v1007, %v999
    %v1320 = vpack.c.b16 %v1008, %v1000
    %v1321 = vpack.c.b16 %v1009, %v1001
    %v1322 = vpack.c.b16 %v1010, %v1002
    %v1323 = vpack.c.b16 %v1011, %v1003
    %v1324 = vpack.c.b16 %v1012, %v1004
    %v1325 = vpack.c.b16 %v1013, %v1005
    %v1326 = vpack.c.b16 %v1014, %v1006
    %v1327 = vpack.c.b16 %v1023, %v1015
    %v1328 = vpack.c.b16 %v1024, %v1016
    %v1329 = vpack.c.b16 %v1025, %v1017
    %v1330 = vpack.c.b16 %v1026, %v1018
    %v1331 = vpack.c.b16 %v1027, %v1019
    %v1332 = vpack.c.b16 %v1028, %v1020
    %v1333 = vpack.c.b16 %v1029, %v1021
    %v1334 = vpack.c.b16 %v1030, %v1022
    %v1335 = vpack.c.b16 %v1039, %v1031
    %v1336 = vpack.c.b16 %v1040, %v1032
    %v1337 = vpack.c.b16 %v1041, %v1033
    %v1338 = vpack.c.b16 %v1042, %v1034
    %v1339 = vpack.c.b16 %v1043, %v1035
    %v1340 = vpack.c.b16 %v1044, %v1036
    %v1341 = vpack.c.b16 %v1045, %v1037
    %v1342 = vpack.c.b16 %v1046, %v1038
    %v1343 = vpack.c.b16 %v1055, %v1047
    %v1344 = vpack.c.b16 %v1056, %v1048
    %v1345 = vpack.c.b16 %v1057, %v1049
    %v1346 = vpack.c.b16 %v1058, %v1050
    %v1347 = vpack.c.b16 %v1059, %v1051
    %v1348 = vpack.c.b16 %v1060, %v1052
    %v1349 = vpack.c.b16 %v1061, %v1053
    %v1350 = vpack.c.b16 %v1062, %v1054
    %v1351 = vpack.c.b16 %v1071, %v1063
    %v1352 = vpack.c.b16 %v1072, %v1064
    %v1353 = vpack.c.b16 %v1073, %v1065
    %v1354 = vpack.c.b16 %v1074, %v1066
    %v1355 = vpack.c.b16 %v1075, %v1067
    %v1356 = vpack.c.b16 %v1076, %v1068
    %v1357 = vpack.c.b16 %v1077, %v1069
    %v1358 = vpack.c.b16 %v1078, %v1070
    %v1359 = vpack.c.b16 %v1087, %v1079
    %v1360 = vpack.c.b16 %v1088, %v1080
    %v1361 = vpack.c.b16 %v1089, %v1081
    %v1362 = vpack.c.b16 %v1090, %v1082
    %v1363 = vpack.c.b16 %v1091, %v1083
    %v1364 = vpack.c.b16 %v1092, %v1084
    %v1365 = vpack.c.b16 %v1093, %v1085
    %v1366 = vpack.c.b16 %v1094, %v1086
    %v1367 = vpack.c.b16 %v1103, %v1095
    %v1368 = vpack.c.b16 %v1104, %v1096
    %v1369 = vpack.c.b16 %v1105, %v1097
    %v1370 = vpack.c.b16 %v1106, %v1098
    %v1371 = vpack.c.b16 %v1107, %v1099
    %v1372 = vpack.c.b16 %v1108, %v1100
    %v1373 = vpack.c.b16 %v1109, %v1101
    %v1374 = vpack.c.b16 %v1110, %v1102
    %v1375 = vpack.c.b16 %v1119, %v1111
    %v1376 = vpack.c.b16 %v1120, %v1112
    %v1377 = vpack.c.b16 %v1121, %v1113
    %v1378 = vpack.c.b16 %v1122, %v1114
    %v1379 = vpack.c.b16 %v1123, %v1115
    %v1380 = vpack.c.b16 %v1124, %v1116
    %v1381 = vpack.c.b16 %v1125, %v1117
    %v1382 = vpack.c.b16 %v1126, %v1118
    %1639 = vmatprep.subr.bf16.mxu0 %v1128
    %1640 = vmatpush1.bf16.msra.mxu0 %v1127
    %1641 = vmatprep.subr.bf16.mxu0 %v1136
    %1642 = vmatpush1.bf16.msra.mxu0 %v1135
    %1643 = vmatprep.subr.bf16.mxu0 %v1144
    %1644 = vmatpush1.bf16.msra.mxu0 %v1143
    %1645 = vmatprep.subr.bf16.mxu0 %v1152
    %1646 = vmatpush1.bf16.msra.mxu0 %v1151
    %1647 = vmatprep.subr.bf16.mxu0 %v1160
    %1648 = vmatpush1.bf16.msra.mxu0 %v1159
    %1649 = vmatprep.subr.bf16.mxu0 %v1168
    %1650 = vmatpush1.bf16.msra.mxu0 %v1167
    %1651 = vmatprep.subr.bf16.mxu0 %v1176
    %1652 = vmatpush1.bf16.msra.mxu0 %v1175
    %1653 = vmatprep.subr.bf16.mxu0 %v1184
    %1654 = vmatpush1.bf16.msra.mxu0 %v1183
    %1655 = vmatprep.subr.bf16.mxu0 %v1192
    %1656 = vmatpush1.bf16.msra.mxu0 %v1191
    %1657 = vmatprep.subr.bf16.mxu0 %v1200
    %1658 = vmatpush1.bf16.msra.mxu0 %v1199
    %1659 = vmatprep.subr.bf16.mxu0 %v1208
    %1660 = vmatpush1.bf16.msra.mxu0 %v1207
    %1661 = vmatprep.subr.bf16.mxu0 %v1216
    %1662 = vmatpush1.bf16.msra.mxu0 %v1215
    %1663 = vmatprep.subr.bf16.mxu0 %v1224
    %1664 = vmatpush1.bf16.msra.mxu0 %v1223
    %1665 = vmatprep.subr.bf16.mxu0 %v1232
    %1666 = vmatpush1.bf16.msra.mxu0 %v1231
    %1667 = vmatprep.subr.bf16.mxu0 %v1240
    %1668 = vmatpush1.bf16.msra.mxu0 %v1239
    %1669 = vmatprep.subr.bf16.mxu0 %v1248
    %1670 = vmatpush1.bf16.msra.mxu0 %v1247
    %1671 = vmatprep.mubr.bf16.mxu0 %v58
    %1672 = vmatmul.mubr.bf16.gmra.mrb[0].mxu0 %v57
    %v1673 = vpop.f32.mrb[0].mxu0
    %v1674 = vadd.f32 %v322, %v1673
    %v1675 = vpop.f32.mrb[0].mxu0
    %v1676 = vadd.f32 %v326, %v1675
    %v1677 = vpop.f32.mrb[0].mxu0
    %v1678 = vpop.f32.mrb[0].mxu0
    %1679 = vdwg.mxu0
    %1680 = vmatprep.subr.bf16.mxu0 %v1256
    %1681 = vmatpush1.bf16.msra.mxu0 %v1255
    %1682 = vmatprep.subr.bf16.mxu0 %v1264
    %1683 = vmatpush1.bf16.msra.mxu0 %v1263
    %1684 = vmatprep.subr.bf16.mxu0 %v1272
    %1685 = vmatpush1.bf16.msra.mxu0 %v1271
    %1686 = vmatprep.subr.bf16.mxu0 %v1280
    %1687 = vmatpush1.bf16.msra.mxu0 %v1279
    %1688 = vmatprep.subr.bf16.mxu0 %v1288
    %1689 = vmatpush1.bf16.msra.mxu0 %v1287
    %1690 = vmatprep.subr.bf16.mxu0 %v1296
    %1691 = vmatpush1.bf16.msra.mxu0 %v1295
    %1692 = vmatprep.subr.bf16.mxu0 %v1304
    %1693 = vmatpush1.bf16.msra.mxu0 %v1303
    %1694 = vmatprep.subr.bf16.mxu0 %v1312
    %1695 = vmatpush1.bf16.msra.mxu0 %v1311
    %1696 = vmatprep.subr.bf16.mxu0 %v1320
    %1697 = vmatpush1.bf16.msra.mxu0 %v1319
    %1698 = vmatprep.subr.bf16.mxu0 %v1328
    %1699 = vmatpush1.bf16.msra.mxu0 %v1327
    %1700 = vmatprep.subr.bf16.mxu0 %v1336
    %1701 = vmatpush1.bf16.msra.mxu0 %v1335
    %1702 = vmatprep.subr.bf16.mxu0 %v1344
    %1703 = vmatpush1.bf16.msra.mxu0 %v1343
    %1704 = vmatprep.subr.bf16.mxu0 %v1352
    %1705 = vmatpush1.bf16.msra.mxu0 %v1351
    %1706 = vmatprep.subr.bf16.mxu0 %v1360
    %1707 = vmatpush1.bf16.msra.mxu0 %v1359
    %1708 = vmatprep.subr.bf16.mxu0 %v1368
    %1709 = vmatpush1.bf16.msra.mxu0 %v1367
    %1710 = vmatprep.subr.bf16.mxu0 %v1376
    %1711 = vmatpush1.bf16.msra.mxu0 %v1375
    %1712 = vmatprep.mubr.bf16.mxu0 %v60
    %1713 = vmatmul.mubr.bf16.gmra.mrb[0].mxu0 %v59
    %v1714 = vpop.f32.mrb[0].mxu0
    %v1715 = vadd.f32 %v1674, %v1714
    %v1716 = vpop.f32.mrb[0].mxu0
    %v1717 = vadd.f32 %v1676, %v1716
    %v1718 = vpop.f32.mrb[0].mxu0
    %v1719 = vpop.f32.mrb[0].mxu0
    %1720 = vdwg.mxu0
    %1721 = vmatprep.subr.bf16.mxu0 %v1130
    %1722 = vmatpush1.bf16.msra.mxu0 %v1129
    %1723 = vmatprep.subr.bf16.mxu0 %v1138
    %1724 = vmatpush1.bf16.msra.mxu0 %v1137
    %1725 = vmatprep.subr.bf16.mxu0 %v1146
    %1726 = vmatpush1.bf16.msra.mxu0 %v1145
    %1727 = vmatprep.subr.bf16.mxu0 %v1154
    %1728 = vmatpush1.bf16.msra.mxu0 %v1153
    %1729 = vmatprep.subr.bf16.mxu0 %v1162
    %1730 = vmatpush1.bf16.msra.mxu0 %v1161
    %1731 = vmatprep.subr.bf16.mxu0 %v1170
    %1732 = vmatpush1.bf16.msra.mxu0 %v1169
    %1733 = vmatprep.subr.bf16.mxu0 %v1178
    %1734 = vmatpush1.bf16.msra.mxu0 %v1177
    %1735 = vmatprep.subr.bf16.mxu0 %v1186
    %1736 = vmatpush1.bf16.msra.mxu0 %v1185
    %1737 = vmatprep.subr.bf16.mxu0 %v1194
    %1738 = vmatpush1.bf16.msra.mxu0 %v1193
    %1739 = vmatprep.subr.bf16.mxu0 %v1202
    %1740 = vmatpush1.bf16.msra.mxu0 %v1201
    %1741 = vmatprep.subr.bf16.mxu0 %v1210
    %1742 = vmatpush1.bf16.msra.mxu0 %v1209
    %1743 = vmatprep.subr.bf16.mxu0 %v1218
    %1744 = vmatpush1.bf16.msra.mxu0 %v1217
    %1745 = vmatprep.subr.bf16.mxu0 %v1226
    %1746 = vmatpush1.bf16.msra.mxu0 %v1225
    %1747 = vmatprep.subr.bf16.mxu0 %v1234
    %1748 = vmatpush1.bf16.msra.mxu0 %v1233
    %1749 = vmatprep.subr.bf16.mxu0 %v1242
    %1750 = vmatpush1.bf16.msra.mxu0 %v1241
    %1751 = vmatprep.subr.bf16.mxu0 %v1250
    %1752 = vmatpush1.bf16.msra.mxu0 %v1249
    %1753 = vmatprep.mubr.bf16.mxu0 %v58
    %1754 = vmatmul.mubr.bf16.gmra.mrb[0].mxu0 %v57
    %v1755 = vpop.f32.mrb[0].mxu0
    %v1756 = vadd.f32 %v330, %v1755
    %v1757 = vpop.f32.mrb[0].mxu0
    %v1758 = vadd.f32 %v334, %v1757
    %v1759 = vpop.f32.mrb[0].mxu0
    %v1760 = vpop.f32.mrb[0].mxu0
    %1761 = vdwg.mxu0
    %1762 = vmatprep.subr.bf16.mxu0 %v1258
    %1763 = vmatpush1.bf16.msra.mxu0 %v1257
    %1764 = vmatprep.subr.bf16.mxu0 %v1266
    %1765 = vmatpush1.bf16.msra.mxu0 %v1265
    %1766 = vmatprep.subr.bf16.mxu0 %v1274
    %1767 = vmatpush1.bf16.msra.mxu0 %v1273
    %1768 = vmatprep.subr.bf16.mxu0 %v1282
    %1769 = vmatpush1.bf16.msra.mxu0 %v1281
    %1770 = vmatprep.subr.bf16.mxu0 %v1290
    %1771 = vmatpush1.bf16.msra.mxu0 %v1289
    %1772 = vmatprep.subr.bf16.mxu0 %v1298
    %1773 = vmatpush1.bf16.msra.mxu0 %v1297
    %1774 = vmatprep.subr.bf16.mxu0 %v1306
    %1775 = vmatpush1.bf16.msra.mxu0 %v1305
    %1776 = vmatprep.subr.bf16.mxu0 %v1314
    %1777 = vmatpush1.bf16.msra.mxu0 %v1313
    %1778 = vmatprep.subr.bf16.mxu0 %v1322
    %1779 = vmatpush1.bf16.msra.mxu0 %v1321
    %1780 = vmatprep.subr.bf16.mxu0 %v1330
    %1781 = vmatpush1.bf16.msra.mxu0 %v1329
    %1782 = vmatprep.subr.bf16.mxu0 %v1338
    %1783 = vmatpush1.bf16.msra.mxu0 %v1337
    %1784 = vmatprep.subr.bf16.mxu0 %v1346
    %1785 = vmatpush1.bf16.msra.mxu0 %v1345
    %1786 = vmatprep.subr.bf16.mxu0 %v1354
    %1787 = vmatpush1.bf16.msra.mxu0 %v1353
    %1788 = vmatprep.subr.bf16.mxu0 %v1362
    %1789 = vmatpush1.bf16.msra.mxu0 %v1361
    %1790 = vmatprep.subr.bf16.mxu0 %v1370
    %1791 = vmatpush1.bf16.msra.mxu0 %v1369
    %1792 = vmatprep.subr.bf16.mxu0 %v1378
    %1793 = vmatpush1.bf16.msra.mxu0 %v1377
    %1794 = vmatprep.mubr.bf16.mxu0 %v60
    %1795 = vmatmul.mubr.bf16.gmra.mrb[0].mxu0 %v59
    %v1796 = vpop.f32.mrb[0].mxu0
    %v1797 = vadd.f32 %v1756, %v1796
    %v1798 = vpop.f32.mrb[0].mxu0
    %v1799 = vadd.f32 %v1758, %v1798
    %v1800 = vpop.f32.mrb[0].mxu0
    %v1801 = vpop.f32.mrb[0].mxu0
    %1802 = vdwg.mxu0
    %1803 = vmatprep.subr.bf16.mxu0 %v1132
    %1804 = vmatpush1.bf16.msra.mxu0 %v1131
    %1805 = vmatprep.subr.bf16.mxu0 %v1140
    %1806 = vmatpush1.bf16.msra.mxu0 %v1139
    %1807 = vmatprep.subr.bf16.mxu0 %v1148
    %1808 = vmatpush1.bf16.msra.mxu0 %v1147
    %1809 = vmatprep.subr.bf16.mxu0 %v1156
    %1810 = vmatpush1.bf16.msra.mxu0 %v1155
    %1811 = vmatprep.subr.bf16.mxu0 %v1164
    %1812 = vmatpush1.bf16.msra.mxu0 %v1163
    %1813 = vmatprep.subr.bf16.mxu0 %v1172
    %1814 = vmatpush1.bf16.msra.mxu0 %v1171
    %1815 = vmatprep.subr.bf16.mxu0 %v1180
    %1816 = vmatpush1.bf16.msra.mxu0 %v1179
    %1817 = vmatprep.subr.bf16.mxu0 %v1188
    %1818 = vmatpush1.bf16.msra.mxu0 %v1187
    %1819 = vmatprep.subr.bf16.mxu0 %v1196
    %1820 = vmatpush1.bf16.msra.mxu0 %v1195
    %1821 = vmatprep.subr.bf16.mxu0 %v1204
    %1822 = vmatpush1.bf16.msra.mxu0 %v1203
    %1823 = vmatprep.subr.bf16.mxu0 %v1212
    %1824 = vmatpush1.bf16.msra.mxu0 %v1211
    %1825 = vmatprep.subr.bf16.mxu0 %v1220
    %1826 = vmatpush1.bf16.msra.mxu0 %v1219
    %1827 = vmatprep.subr.bf16.mxu0 %v1228
    %1828 = vmatpush1.bf16.msra.mxu0 %v1227
    %1829 = vmatprep.subr.bf16.mxu0 %v1236
    %1830 = vmatpush1.bf16.msra.mxu0 %v1235
    %1831 = vmatprep.subr.bf16.mxu0 %v1244
    %1832 = vmatpush1.bf16.msra.mxu0 %v1243
    %1833 = vmatprep.subr.bf16.mxu0 %v1252
    %1834 = vmatpush1.bf16.msra.mxu0 %v1251
    %1835 = vmatprep.mubr.bf16.mxu0 %v58
    %1836 = vmatmul.mubr.bf16.gmra.mrb[0].mxu0 %v57
    %v1837 = vpop.f32.mrb[0].mxu0
    %v1838 = vadd.f32 %v338, %v1837
    %v1839 = vpop.f32.mrb[0].mxu0
    %v1840 = vadd.f32 %v342, %v1839
    %v1841 = vpop.f32.mrb[0].mxu0
    %v1842 = vpop.f32.mrb[0].mxu0
    %1843 = vdwg.mxu0
    %1844 = vmatprep.subr.bf16.mxu0 %v1260
    %1845 = vmatpush1.bf16.msra.mxu0 %v1259
    %1846 = vmatprep.subr.bf16.mxu0 %v1268
    %1847 = vmatpush1.bf16.msra.mxu0 %v1267
    %1848 = vmatprep.subr.bf16.mxu0 %v1276
    %1849 = vmatpush1.bf16.msra.mxu0 %v1275
    %1850 = vmatprep.subr.bf16.mxu0 %v1284
    %1851 = vmatpush1.bf16.msra.mxu0 %v1283
    %1852 = vmatprep.subr.bf16.mxu0 %v1292
    %1853 = vmatpush1.bf16.msra.mxu0 %v1291
    %1854 = vmatprep.subr.bf16.mxu0 %v1300
    %1855 = vmatpush1.bf16.msra.mxu0 %v1299
    %1856 = vmatprep.subr.bf16.mxu0 %v1308
    %1857 = vmatpush1.bf16.msra.mxu0 %v1307
    %1858 = vmatprep.subr.bf16.mxu0 %v1316
    %1859 = vmatpush1.bf16.msra.mxu0 %v1315
    %1860 = vmatprep.subr.bf16.mxu0 %v1324
    %1861 = vmatpush1.bf16.msra.mxu0 %v1323
    %1862 = vmatprep.subr.bf16.mxu0 %v1332
    %1863 = vmatpush1.bf16.msra.mxu0 %v1331
    %1864 = vmatprep.subr.bf16.mxu0 %v1340
    %1865 = vmatpush1.bf16.msra.mxu0 %v1339
    %1866 = vmatprep.subr.bf16.mxu0 %v1348
    %1867 = vmatpush1.bf16.msra.mxu0 %v1347
    %1868 = vmatprep.subr.bf16.mxu0 %v1356
    %1869 = vmatpush1.bf16.msra.mxu0 %v1355
    %1870 = vmatprep.subr.bf16.mxu0 %v1364
    %1871 = vmatpush1.bf16.msra.mxu0 %v1363
    %1872 = vmatprep.subr.bf16.mxu0 %v1372
    %1873 = vmatpush1.bf16.msra.mxu0 %v1371
    %1874 = vmatprep.subr.bf16.mxu0 %v1380
    %1875 = vmatpush1.bf16.msra.mxu0 %v1379
    %1876 = vmatprep.mubr.bf16.mxu0 %v60
    %1877 = vmatmul.mubr.bf16.gmra.mrb[0].mxu0 %v59
    %v1878 = vpop.f32.mrb[0].mxu0
    %v1879 = vadd.f32 %v1838, %v1878
    %v1880 = vpop.f32.mrb[0].mxu0
    %v1881 = vadd.f32 %v1840, %v1880
    %v1882 = vpop.f32.mrb[0].mxu0
    %v1883 = vpop.f32.mrb[0].mxu0
    %1884 = vdwg.mxu0
    %1885 = vmatprep.subr.bf16.mxu0 %v1134
    %1886 = vmatpush1.bf16.msra.mxu0 %v1133
    %1887 = vmatprep.subr.bf16.mxu0 %v1142
    %1888 = vmatpush1.bf16.msra.mxu0 %v1141
    %1889 = vmatprep.subr.bf16.mxu0 %v1150
    %1890 = vmatpush1.bf16.msra.mxu0 %v1149
    %1891 = vmatprep.subr.bf16.mxu0 %v1158
    %1892 = vmatpush1.bf16.msra.mxu0 %v1157
    %1893 = vmatprep.subr.bf16.mxu0 %v1166
    %1894 = vmatpush1.bf16.msra.mxu0 %v1165
    %1895 = vmatprep.subr.bf16.mxu0 %v1174
    %1896 = vmatpush1.bf16.msra.mxu0 %v1173
    %1897 = vmatprep.subr.bf16.mxu0 %v1182
    %1898 = vmatpush1.bf16.msra.mxu0 %v1181
    %1899 = vmatprep.subr.bf16.mxu0 %v1190
    %1900 = vmatpush1.bf16.msra.mxu0 %v1189
    %1901 = vmatprep.subr.bf16.mxu0 %v1198
    %1902 = vmatpush1.bf16.msra.mxu0 %v1197
    %1903 = vmatprep.subr.bf16.mxu0 %v1206
    %1904 = vmatpush1.bf16.msra.mxu0 %v1205
    %1905 = vmatprep.subr.bf16.mxu0 %v1214
    %1906 = vmatpush1.bf16.msra.mxu0 %v1213
    %1907 = vmatprep.subr.bf16.mxu0 %v1222
    %1908 = vmatpush1.bf16.msra.mxu0 %v1221
    %1909 = vmatprep.subr.bf16.mxu0 %v1230
    %1910 = vmatpush1.bf16.msra.mxu0 %v1229
    %1911 = vmatprep.subr.bf16.mxu0 %v1238
    %1912 = vmatpush1.bf16.msra.mxu0 %v1237
    %1913 = vmatprep.subr.bf16.mxu0 %v1246
    %1914 = vmatpush1.bf16.msra.mxu0 %v1245
    %1915 = vmatprep.subr.bf16.mxu0 %v1254
    %1916 = vmatpush1.bf16.msra.mxu0 %v1253
    %1917 = vmatprep.mubr.bf16.mxu0 %v58
    %1918 = vmatmul.mubr.bf16.gmra.mrb[0].mxu0 %v57
    %v1919 = vpop.f32.mrb[0].mxu0
    %v1920 = vadd.f32 %v346, %v1919
    %v1921 = vpop.f32.mrb[0].mxu0
    %v1922 = vadd.f32 %v350, %v1921
    %v1923 = vpop.f32.mrb[0].mxu0
    %v1924 = vpop.f32.mrb[0].mxu0
    %1925 = vdwg.mxu0
    %1926 = vmatprep.subr.bf16.mxu0 %v1262
    %1927 = vmatpush1.bf16.msra.mxu0 %v1261
    %1928 = vmatprep.subr.bf16.mxu0 %v1270
    %1929 = vmatpush1.bf16.msra.mxu0 %v1269
    %1930 = vmatprep.subr.bf16.mxu0 %v1278
    %1931 = vmatpush1.bf16.msra.mxu0 %v1277
    %1932 = vmatprep.subr.bf16.mxu0 %v1286
    %1933 = vmatpush1.bf16.msra.mxu0 %v1285
    %1934 = vmatprep.subr.bf16.mxu0 %v1294
    %1935 = vmatpush1.bf16.msra.mxu0 %v1293
    %1936 = vmatprep.subr.bf16.mxu0 %v1302
    %1937 = vmatpush1.bf16.msra.mxu0 %v1301
    %1938 = vmatprep.subr.bf16.mxu0 %v1310
    %1939 = vmatpush1.bf16.msra.mxu0 %v1309
    %1940 = vmatprep.subr.bf16.mxu0 %v1318
    %1941 = vmatpush1.bf16.msra.mxu0 %v1317
    %1942 = vmatprep.subr.bf16.mxu0 %v1326
    %1943 = vmatpush1.bf16.msra.mxu0 %v1325
    %1944 = vmatprep.subr.bf16.mxu0 %v1334
    %1945 = vmatpush1.bf16.msra.mxu0 %v1333
    %1946 = vmatprep.subr.bf16.mxu0 %v1342
    %1947 = vmatpush1.bf16.msra.mxu0 %v1341
    %1948 = vmatprep.subr.bf16.mxu0 %v1350
    %1949 = vmatpush1.bf16.msra.mxu0 %v1349
    %1950 = vmatprep.subr.bf16.mxu0 %v1358
    %1951 = vmatpush1.bf16.msra.mxu0 %v1357
    %1952 = vmatprep.subr.bf16.mxu0 %v1366
    %1953 = vmatpush1.bf16.msra.mxu0 %v1365
    %1954 = vmatprep.subr.bf16.mxu0 %v1374
    %1955 = vmatpush1.bf16.msra.mxu0 %v1373
    %1956 = vmatprep.subr.bf16.mxu0 %v1382
    %1957 = vmatpush1.bf16.msra.mxu0 %v1381
    %1958 = vmatprep.mubr.bf16.mxu0 %v60
    %1959 = vmatmul.mubr.bf16.gmra.mrb[0].mxu0 %v59
    %v1960 = vpop.f32.mrb[0].mxu0
    %v1961 = vadd.f32 %v1920, %v1960
    %v1962 = vpop.f32.mrb[0].mxu0
    %v1963 = vadd.f32 %v1922, %v1962
    %v1964 = vpop.f32.mrb[0].mxu0
    %v1965 = vpop.f32.mrb[0].mxu0
    %1966 = vdwg.mxu0
    %v1975 = vcombine.low %v1715, %v1717
    %v1976 = vcombine.low %v1797, %v1799
    %v1977 = vcombine.low %v1879, %v1881
    %v1978 = vcombine.low %v1961, %v1963
    %1983 = vst [vmem:[#allocation2] sm:$0xff] %v1975
    %1984 = vst [vmem:[#allocation2 + $0x8] sm:$0xff] %v1976
    %1985 = vst [vmem:[#allocation2 + $0x10] sm:$0xff] %v1977
    %1986 = vst [vmem:[#allocation2 + $0x18] sm:$0xff] %v1978
    %v1987 = vld [vmem:[%s2] sm:$0xff]
    %v1988 = vld [vmem:[%s2 + $0x8] sm:$0xff]
    %v1989 = vld [vmem:[%s2 + $0x10] sm:$0xff]
    %v1990 = vld [vmem:[%s2 + $0x18] sm:$0xff]
    %v1991 = vld [vmem:[%s2 + $0x20] sm:$0xff]
    %v1992 = vld [vmem:[%s2 + $0x28] sm:$0xff]
    %v1993 = vld [vmem:[%s2 + $0x30] sm:$0xff]
    %v1994 = vld [vmem:[%s2 + $0x38] sm:$0xff]
    %v1995 = vld [vmem:[%s2 + $0x40] sm:$0xff]
    %v1996 = vld [vmem:[%s2 + $0x48] sm:$0xff]
    %v1997 = vld [vmem:[%s2 + $0x50] sm:$0xff]
    %v1998 = vld [vmem:[%s2 + $0x58] sm:$0xff]
    %v1999 = vld [vmem:[%s2 + $0x60] sm:$0xff]
    %v2000 = vld [vmem:[%s2 + $0x68] sm:$0xff]
    %v2001 = vld [vmem:[%s2 + $0x70] sm:$0xff]
    %v2002 = vld [vmem:[%s2 + $0x78] sm:$0xff]
    %v2003 = vld [vmem:[%s2 + $0x80] sm:$0xff]
    %v2004 = vld [vmem:[%s2 + $0x88] sm:$0xff]
    %v2005 = vld [vmem:[%s2 + $0x90] sm:$0xff]
    %v2006 = vld [vmem:[%s2 + $0x98] sm:$0xff]
    %v2007 = vld [vmem:[%s2 + $0xa0] sm:$0xff]
    %v2008 = vld [vmem:[%s2 + $0xa8] sm:$0xff]
    %v2009 = vld [vmem:[%s2 + $0xb0] sm:$0xff]
    %v2010 = vld [vmem:[%s2 + $0xb8] sm:$0xff]
    %v2011 = vld [vmem:[%s2 + $0xc0] sm:$0xff]
    %v2012 = vld [vmem:[%s2 + $0xc8] sm:$0xff]
    %v2013 = vld [vmem:[%s2 + $0xd0] sm:$0xff]
    %v2014 = vld [vmem:[%s2 + $0xd8] sm:$0xff]
    %v2015 = vld [vmem:[%s2 + $0xe0] sm:$0xff]
    %v2016 = vld [vmem:[%s2 + $0xe8] sm:$0xff]
    %v2017 = vld [vmem:[%s2 + $0xf0] sm:$0xff]
    %v2018 = vld [vmem:[%s2 + $0xf8] sm:$0xff]
    %v2019 = vld [vmem:[%s2 + $0x100] sm:$0xff]
    %v2020 = vld [vmem:[%s2 + $0x108] sm:$0xff]
    %v2021 = vld [vmem:[%s2 + $0x110] sm:$0xff]
    %v2022 = vld [vmem:[%s2 + $0x118] sm:$0xff]
    %v2023 = vld [vmem:[%s2 + $0x120] sm:$0xff]
    %v2024 = vld [vmem:[%s2 + $0x128] sm:$0xff]
    %v2025 = vld [vmem:[%s2 + $0x130] sm:$0xff]
    %v2026 = vld [vmem:[%s2 + $0x138] sm:$0xff]
    %v2027 = vld [vmem:[%s2 + $0x140] sm:$0xff]
    %v2028 = vld [vmem:[%s2 + $0x148] sm:$0xff]
    %v2029 = vld [vmem:[%s2 + $0x150] sm:$0xff]
    %v2030 = vld [vmem:[%s2 + $0x158] sm:$0xff]
    %v2031 = vld [vmem:[%s2 + $0x160] sm:$0xff]
    %v2032 = vld [vmem:[%s2 + $0x168] sm:$0xff]
    %v2033 = vld [vmem:[%s2 + $0x170] sm:$0xff]
    %v2034 = vld [vmem:[%s2 + $0x178] sm:$0xff]
    %v2035 = vld [vmem:[%s2 + $0x180] sm:$0xff]
    %v2036 = vld [vmem:[%s2 + $0x188] sm:$0xff]
    %v2037 = vld [vmem:[%s2 + $0x190] sm:$0xff]
    %v2038 = vld [vmem:[%s2 + $0x198] sm:$0xff]
    %v2039 = vld [vmem:[%s2 + $0x1a0] sm:$0xff]
    %v2040 = vld [vmem:[%s2 + $0x1a8] sm:$0xff]
    %v2041 = vld [vmem:[%s2 + $0x1b0] sm:$0xff]
    %v2042 = vld [vmem:[%s2 + $0x1b8] sm:$0xff]
    %v2043 = vld [vmem:[%s2 + $0x1c0] sm:$0xff]
    %v2044 = vld [vmem:[%s2 + $0x1c8] sm:$0xff]
    %v2045 = vld [vmem:[%s2 + $0x1d0] sm:$0xff]
    %v2046 = vld [vmem:[%s2 + $0x1d8] sm:$0xff]
    %v2047 = vld [vmem:[%s2 + $0x1e0] sm:$0xff]
    %v2048 = vld [vmem:[%s2 + $0x1e8] sm:$0xff]
    %v2049 = vld [vmem:[%s2 + $0x1f0] sm:$0xff]
    %v2050 = vld [vmem:[%s2 + $0x1f8] sm:$0xff]
    %v2051 = vld [vmem:[%s2 + $0x200] sm:$0xff]
    %v2052 = vld [vmem:[%s2 + $0x208] sm:$0xff]
    %v2053 = vld [vmem:[%s2 + $0x210] sm:$0xff]
    %v2054 = vld [vmem:[%s2 + $0x218] sm:$0xff]
    %v2055 = vld [vmem:[%s2 + $0x220] sm:$0xff]
    %v2056 = vld [vmem:[%s2 + $0x228] sm:$0xff]
    %v2057 = vld [vmem:[%s2 + $0x230] sm:$0xff]
    %v2058 = vld [vmem:[%s2 + $0x238] sm:$0xff]
    %v2059 = vld [vmem:[%s2 + $0x240] sm:$0xff]
    %v2060 = vld [vmem:[%s2 + $0x248] sm:$0xff]
    %v2061 = vld [vmem:[%s2 + $0x250] sm:$0xff]
    %v2062 = vld [vmem:[%s2 + $0x258] sm:$0xff]
    %v2063 = vld [vmem:[%s2 + $0x260] sm:$0xff]
    %v2064 = vld [vmem:[%s2 + $0x268] sm:$0xff]
    %v2065 = vld [vmem:[%s2 + $0x270] sm:$0xff]
    %v2066 = vld [vmem:[%s2 + $0x278] sm:$0xff]
    %v2067 = vld [vmem:[%s2 + $0x280] sm:$0xff]
    %v2068 = vld [vmem:[%s2 + $0x288] sm:$0xff]
    %v2069 = vld [vmem:[%s2 + $0x290] sm:$0xff]
    %v2070 = vld [vmem:[%s2 + $0x298] sm:$0xff]
    %v2071 = vld [vmem:[%s2 + $0x2a0] sm:$0xff]
    %v2072 = vld [vmem:[%s2 + $0x2a8] sm:$0xff]
    %v2073 = vld [vmem:[%s2 + $0x2b0] sm:$0xff]
    %v2074 = vld [vmem:[%s2 + $0x2b8] sm:$0xff]
    %v2075 = vld [vmem:[%s2 + $0x2c0] sm:$0xff]
    %v2076 = vld [vmem:[%s2 + $0x2c8] sm:$0xff]
    %v2077 = vld [vmem:[%s2 + $0x2d0] sm:$0xff]
    %v2078 = vld [vmem:[%s2 + $0x2d8] sm:$0xff]
    %v2079 = vld [vmem:[%s2 + $0x2e0] sm:$0xff]
    %v2080 = vld [vmem:[%s2 + $0x2e8] sm:$0xff]
    %v2081 = vld [vmem:[%s2 + $0x2f0] sm:$0xff]
    %v2082 = vld [vmem:[%s2 + $0x2f8] sm:$0xff]
    %v2083 = vld [vmem:[%s2 + $0x300] sm:$0xff]
    %v2084 = vld [vmem:[%s2 + $0x308] sm:$0xff]
    %v2085 = vld [vmem:[%s2 + $0x310] sm:$0xff]
    %v2086 = vld [vmem:[%s2 + $0x318] sm:$0xff]
    %v2087 = vld [vmem:[%s2 + $0x320] sm:$0xff]
    %v2088 = vld [vmem:[%s2 + $0x328] sm:$0xff]
    %v2089 = vld [vmem:[%s2 + $0x330] sm:$0xff]
    %v2090 = vld [vmem:[%s2 + $0x338] sm:$0xff]
    %v2091 = vld [vmem:[%s2 + $0x340] sm:$0xff]
    %v2092 = vld [vmem:[%s2 + $0x348] sm:$0xff]
    %v2093 = vld [vmem:[%s2 + $0x350] sm:$0xff]
    %v2094 = vld [vmem:[%s2 + $0x358] sm:$0xff]
    %v2095 = vld [vmem:[%s2 + $0x360] sm:$0xff]
    %v2096 = vld [vmem:[%s2 + $0x368] sm:$0xff]
    %v2097 = vld [vmem:[%s2 + $0x370] sm:$0xff]
    %v2098 = vld [vmem:[%s2 + $0x378] sm:$0xff]
    %v2099 = vld [vmem:[%s2 + $0x380] sm:$0xff]
    %v2100 = vld [vmem:[%s2 + $0x388] sm:$0xff]
    %v2101 = vld [vmem:[%s2 + $0x390] sm:$0xff]
    %v2102 = vld [vmem:[%s2 + $0x398] sm:$0xff]
    %v2103 = vld [vmem:[%s2 + $0x3a0] sm:$0xff]
    %v2104 = vld [vmem:[%s2 + $0x3a8] sm:$0xff]
    %v2105 = vld [vmem:[%s2 + $0x3b0] sm:$0xff]
    %v2106 = vld [vmem:[%s2 + $0x3b8] sm:$0xff]
    %v2107 = vld [vmem:[%s2 + $0x3c0] sm:$0xff]
    %v2108 = vld [vmem:[%s2 + $0x3c8] sm:$0xff]
    %v2109 = vld [vmem:[%s2 + $0x3d0] sm:$0xff]
    %v2110 = vld [vmem:[%s2 + $0x3d8] sm:$0xff]
    %v2111 = vld [vmem:[%s2 + $0x3e0] sm:$0xff]
    %v2112 = vld [vmem:[%s2 + $0x3e8] sm:$0xff]
    %v2113 = vld [vmem:[%s2 + $0x3f0] sm:$0xff]
    %v2114 = vld [vmem:[%s2 + $0x3f8] sm:$0xff]
    %v2115 = vld [vmem:[%s2 + $0x400] sm:$0xff]
    %v2116 = vld [vmem:[%s2 + $0x408] sm:$0xff]
    %v2117 = vld [vmem:[%s2 + $0x410] sm:$0xff]
    %v2118 = vld [vmem:[%s2 + $0x418] sm:$0xff]
    %v2119 = vld [vmem:[%s2 + $0x420] sm:$0xff]
    %v2120 = vld [vmem:[%s2 + $0x428] sm:$0xff]
    %v2121 = vld [vmem:[%s2 + $0x430] sm:$0xff]
    %v2122 = vld [vmem:[%s2 + $0x438] sm:$0xff]
    %v2123 = vld [vmem:[%s2 + $0x440] sm:$0xff]
    %v2124 = vld [vmem:[%s2 + $0x448] sm:$0xff]
    %v2125 = vld [vmem:[%s2 + $0x450] sm:$0xff]
    %v2126 = vld [vmem:[%s2 + $0x458] sm:$0xff]
    %v2127 = vld [vmem:[%s2 + $0x460] sm:$0xff]
    %v2128 = vld [vmem:[%s2 + $0x468] sm:$0xff]
    %v2129 = vld [vmem:[%s2 + $0x470] sm:$0xff]
    %v2130 = vld [vmem:[%s2 + $0x478] sm:$0xff]
    %v2131 = vld [vmem:[%s2 + $0x480] sm:$0xff]
    %v2132 = vld [vmem:[%s2 + $0x488] sm:$0xff]
    %v2133 = vld [vmem:[%s2 + $0x490] sm:$0xff]
    %v2134 = vld [vmem:[%s2 + $0x498] sm:$0xff]
    %v2135 = vld [vmem:[%s2 + $0x4a0] sm:$0xff]
    %v2136 = vld [vmem:[%s2 + $0x4a8] sm:$0xff]
    %v2137 = vld [vmem:[%s2 + $0x4b0] sm:$0xff]
    %v2138 = vld [vmem:[%s2 + $0x4b8] sm:$0xff]
    %v2139 = vld [vmem:[%s2 + $0x4c0] sm:$0xff]
    %v2140 = vld [vmem:[%s2 + $0x4c8] sm:$0xff]
    %v2141 = vld [vmem:[%s2 + $0x4d0] sm:$0xff]
    %v2142 = vld [vmem:[%s2 + $0x4d8] sm:$0xff]
    %v2143 = vld [vmem:[%s2 + $0x4e0] sm:$0xff]
    %v2144 = vld [vmem:[%s2 + $0x4e8] sm:$0xff]
    %v2145 = vld [vmem:[%s2 + $0x4f0] sm:$0xff]
    %v2146 = vld [vmem:[%s2 + $0x4f8] sm:$0xff]
    %v2147 = vld [vmem:[%s2 + $0x500] sm:$0xff]
    %v2148 = vld [vmem:[%s2 + $0x508] sm:$0xff]
    %v2149 = vld [vmem:[%s2 + $0x510] sm:$0xff]
    %v2150 = vld [vmem:[%s2 + $0x518] sm:$0xff]
    %v2151 = vld [vmem:[%s2 + $0x520] sm:$0xff]
    %v2152 = vld [vmem:[%s2 + $0x528] sm:$0xff]
    %v2153 = vld [vmem:[%s2 + $0x530] sm:$0xff]
    %v2154 = vld [vmem:[%s2 + $0x538] sm:$0xff]
    %v2155 = vld [vmem:[%s2 + $0x540] sm:$0xff]
    %v2156 = vld [vmem:[%s2 + $0x548] sm:$0xff]
    %v2157 = vld [vmem:[%s2 + $0x550] sm:$0xff]
    %v2158 = vld [vmem:[%s2 + $0x558] sm:$0xff]
    %v2159 = vld [vmem:[%s2 + $0x560] sm:$0xff]
    %v2160 = vld [vmem:[%s2 + $0x568] sm:$0xff]
    %v2161 = vld [vmem:[%s2 + $0x570] sm:$0xff]
    %v2162 = vld [vmem:[%s2 + $0x578] sm:$0xff]
    %v2163 = vld [vmem:[%s2 + $0x580] sm:$0xff]
    %v2164 = vld [vmem:[%s2 + $0x588] sm:$0xff]
    %v2165 = vld [vmem:[%s2 + $0x590] sm:$0xff]
    %v2166 = vld [vmem:[%s2 + $0x598] sm:$0xff]
    %v2167 = vld [vmem:[%s2 + $0x5a0] sm:$0xff]
    %v2168 = vld [vmem:[%s2 + $0x5a8] sm:$0xff]
    %v2169 = vld [vmem:[%s2 + $0x5b0] sm:$0xff]
    %v2170 = vld [vmem:[%s2 + $0x5b8] sm:$0xff]
    %v2171 = vld [vmem:[%s2 + $0x5c0] sm:$0xff]
    %v2172 = vld [vmem:[%s2 + $0x5c8] sm:$0xff]
    %v2173 = vld [vmem:[%s2 + $0x5d0] sm:$0xff]
    %v2174 = vld [vmem:[%s2 + $0x5d8] sm:$0xff]
    %v2175 = vld [vmem:[%s2 + $0x5e0] sm:$0xff]
    %v2176 = vld [vmem:[%s2 + $0x5e8] sm:$0xff]
    %v2177 = vld [vmem:[%s2 + $0x5f0] sm:$0xff]
    %v2178 = vld [vmem:[%s2 + $0x5f8] sm:$0xff]
    %v2179 = vld [vmem:[%s2 + $0x600] sm:$0xff]
    %v2180 = vld [vmem:[%s2 + $0x608] sm:$0xff]
    %v2181 = vld [vmem:[%s2 + $0x610] sm:$0xff]
    %v2182 = vld [vmem:[%s2 + $0x618] sm:$0xff]
    %v2183 = vld [vmem:[%s2 + $0x620] sm:$0xff]
    %v2184 = vld [vmem:[%s2 + $0x628] sm:$0xff]
    %v2185 = vld [vmem:[%s2 + $0x630] sm:$0xff]
    %v2186 = vld [vmem:[%s2 + $0x638] sm:$0xff]
    %v2187 = vld [vmem:[%s2 + $0x640] sm:$0xff]
    %v2188 = vld [vmem:[%s2 + $0x648] sm:$0xff]
    %v2189 = vld [vmem:[%s2 + $0x650] sm:$0xff]
    %v2190 = vld [vmem:[%s2 + $0x658] sm:$0xff]
    %v2191 = vld [vmem:[%s2 + $0x660] sm:$0xff]
    %v2192 = vld [vmem:[%s2 + $0x668] sm:$0xff]
    %v2193 = vld [vmem:[%s2 + $0x670] sm:$0xff]
    %v2194 = vld [vmem:[%s2 + $0x678] sm:$0xff]
    %v2195 = vld [vmem:[%s2 + $0x680] sm:$0xff]
    %v2196 = vld [vmem:[%s2 + $0x688] sm:$0xff]
    %v2197 = vld [vmem:[%s2 + $0x690] sm:$0xff]
    %v2198 = vld [vmem:[%s2 + $0x698] sm:$0xff]
    %v2199 = vld [vmem:[%s2 + $0x6a0] sm:$0xff]
    %v2200 = vld [vmem:[%s2 + $0x6a8] sm:$0xff]
    %v2201 = vld [vmem:[%s2 + $0x6b0] sm:$0xff]
    %v2202 = vld [vmem:[%s2 + $0x6b8] sm:$0xff]
    %v2203 = vld [vmem:[%s2 + $0x6c0] sm:$0xff]
    %v2204 = vld [vmem:[%s2 + $0x6c8] sm:$0xff]
    %v2205 = vld [vmem:[%s2 + $0x6d0] sm:$0xff]
    %v2206 = vld [vmem:[%s2 + $0x6d8] sm:$0xff]
    %v2207 = vld [vmem:[%s2 + $0x6e0] sm:$0xff]
    %v2208 = vld [vmem:[%s2 + $0x6e8] sm:$0xff]
    %v2209 = vld [vmem:[%s2 + $0x6f0] sm:$0xff]
    %v2210 = vld [vmem:[%s2 + $0x6f8] sm:$0xff]
    %v2211 = vld [vmem:[%s2 + $0x700] sm:$0xff]
    %v2212 = vld [vmem:[%s2 + $0x708] sm:$0xff]
    %v2213 = vld [vmem:[%s2 + $0x710] sm:$0xff]
    %v2214 = vld [vmem:[%s2 + $0x718] sm:$0xff]
    %v2215 = vld [vmem:[%s2 + $0x720] sm:$0xff]
    %v2216 = vld [vmem:[%s2 + $0x728] sm:$0xff]
    %v2217 = vld [vmem:[%s2 + $0x730] sm:$0xff]
    %v2218 = vld [vmem:[%s2 + $0x738] sm:$0xff]
    %v2219 = vld [vmem:[%s2 + $0x740] sm:$0xff]
    %v2220 = vld [vmem:[%s2 + $0x748] sm:$0xff]
    %v2221 = vld [vmem:[%s2 + $0x750] sm:$0xff]
    %v2222 = vld [vmem:[%s2 + $0x758] sm:$0xff]
    %v2223 = vld [vmem:[%s2 + $0x760] sm:$0xff]
    %v2224 = vld [vmem:[%s2 + $0x768] sm:$0xff]
    %v2225 = vld [vmem:[%s2 + $0x770] sm:$0xff]
    %v2226 = vld [vmem:[%s2 + $0x778] sm:$0xff]
    %v2227 = vld [vmem:[%s2 + $0x780] sm:$0xff]
    %v2228 = vld [vmem:[%s2 + $0x788] sm:$0xff]
    %v2229 = vld [vmem:[%s2 + $0x790] sm:$0xff]
    %v2230 = vld [vmem:[%s2 + $0x798] sm:$0xff]
    %v2231 = vld [vmem:[%s2 + $0x7a0] sm:$0xff]
    %v2232 = vld [vmem:[%s2 + $0x7a8] sm:$0xff]
    %v2233 = vld [vmem:[%s2 + $0x7b0] sm:$0xff]
    %v2234 = vld [vmem:[%s2 + $0x7b8] sm:$0xff]
    %v2235 = vld [vmem:[%s2 + $0x7c0] sm:$0xff]
    %v2236 = vld [vmem:[%s2 + $0x7c8] sm:$0xff]
    %v2237 = vld [vmem:[%s2 + $0x7d0] sm:$0xff]
    %v2238 = vld [vmem:[%s2 + $0x7d8] sm:$0xff]
    %v2239 = vld [vmem:[%s2 + $0x7e0] sm:$0xff]
    %v2240 = vld [vmem:[%s2 + $0x7e8] sm:$0xff]
    %v2241 = vld [vmem:[%s2 + $0x7f0] sm:$0xff]
    %v2242 = vld [vmem:[%s2 + $0x7f8] sm:$0xff]
    %v2243 = vld [vmem:[%s4] sm:$0xff]
    %v2245 = vlaneseq
    %v2246 = vshrl.u32 %v2245, 7
    %v2247 = vsub.s32 0, %v2246
    %v2248 = vrot.slane %v2243, %v2247
    %v2249 = vlaneseq
    %v2250 = vshrl.u32 %v2249, 7
    %v2251 = vsub.s32 1, %v2250
    %v2252 = vrot.slane %v2243, %v2251
    %v2253 = vlaneseq
    %v2254 = vshrl.u32 %v2253, 7
    %v2255 = vsub.s32 2, %v2254
    %v2256 = vrot.slane %v2243, %v2255
    %v2257 = vlaneseq
    %v2258 = vshrl.u32 %v2257, 7
    %v2259 = vsub.s32 3, %v2258
    %v2260 = vrot.slane %v2243, %v2259
    %v2261 = vlaneseq
    %v2262 = vshrl.u32 %v2261, 7
    %v2263 = vsub.s32 4, %v2262
    %v2264 = vrot.slane %v2243, %v2263
    %v2265 = vlaneseq
    %v2266 = vshrl.u32 %v2265, 7
    %v2267 = vsub.s32 5, %v2266
    %v2268 = vrot.slane %v2243, %v2267
    %v2269 = vlaneseq
    %v2270 = vshrl.u32 %v2269, 7
    %v2271 = vsub.s32 6, %v2270
    %v2272 = vrot.slane %v2243, %v2271
    %v2273 = vlaneseq
    %v2274 = vshrl.u32 %v2273, 7
    %v2275 = vsub.s32 7, %v2274
    %v2276 = vrot.slane %v2243, %v2275
    %v2541 = vunpack.c.l.b16 %v1987
    %v2542 = vunpack.c.h.b16 %v1987
    %v2543 = vunpack.c.l.b16 %v1988
    %v2544 = vunpack.c.h.b16 %v1988
    %v2545 = vunpack.c.l.b16 %v1989
    %v2546 = vunpack.c.h.b16 %v1989
    %v2547 = vunpack.c.l.b16 %v1990
    %v2548 = vunpack.c.h.b16 %v1990
    %v2549 = vunpack.c.l.b16 %v1991
    %v2550 = vunpack.c.h.b16 %v1991
    %v2551 = vunpack.c.l.b16 %v1992
    %v2552 = vunpack.c.h.b16 %v1992
    %v2553 = vunpack.c.l.b16 %v1993
    %v2554 = vunpack.c.h.b16 %v1993
    %v2555 = vunpack.c.l.b16 %v1994
    %v2556 = vunpack.c.h.b16 %v1994
    %v2557 = vunpack.c.l.b16 %v1995
    %v2558 = vunpack.c.h.b16 %v1995
    %v2559 = vunpack.c.l.b16 %v1996
    %v2560 = vunpack.c.h.b16 %v1996
    %v2561 = vunpack.c.l.b16 %v1997
    %v2562 = vunpack.c.h.b16 %v1997
    %v2563 = vunpack.c.l.b16 %v1998
    %v2564 = vunpack.c.h.b16 %v1998
    %v2565 = vunpack.c.l.b16 %v1999
    %v2566 = vunpack.c.h.b16 %v1999
    %v2567 = vunpack.c.l.b16 %v2000
    %v2568 = vunpack.c.h.b16 %v2000
    %v2569 = vunpack.c.l.b16 %v2001
    %v2570 = vunpack.c.h.b16 %v2001
    %v2571 = vunpack.c.l.b16 %v2002
    %v2572 = vunpack.c.h.b16 %v2002
    %v2573 = vunpack.c.l.b16 %v2003
    %v2574 = vunpack.c.h.b16 %v2003
    %v2575 = vunpack.c.l.b16 %v2004
    %v2576 = vunpack.c.h.b16 %v2004
    %v2577 = vunpack.c.l.b16 %v2005
    %v2578 = vunpack.c.h.b16 %v2005
    %v2579 = vunpack.c.l.b16 %v2006
    %v2580 = vunpack.c.h.b16 %v2006
    %v2581 = vunpack.c.l.b16 %v2007
    %v2582 = vunpack.c.h.b16 %v2007
    %v2583 = vunpack.c.l.b16 %v2008
    %v2584 = vunpack.c.h.b16 %v2008
    %v2585 = vunpack.c.l.b16 %v2009
    %v2586 = vunpack.c.h.b16 %v2009
    %v2587 = vunpack.c.l.b16 %v2010
    %v2588 = vunpack.c.h.b16 %v2010
    %v2589 = vunpack.c.l.b16 %v2011
    %v2590 = vunpack.c.h.b16 %v2011
    %v2591 = vunpack.c.l.b16 %v2012
    %v2592 = vunpack.c.h.b16 %v2012
    %v2593 = vunpack.c.l.b16 %v2013
    %v2594 = vunpack.c.h.b16 %v2013
    %v2595 = vunpack.c.l.b16 %v2014
    %v2596 = vunpack.c.h.b16 %v2014
    %v2597 = vunpack.c.l.b16 %v2015
    %v2598 = vunpack.c.h.b16 %v2015
    %v2599 = vunpack.c.l.b16 %v2016
    %v2600 = vunpack.c.h.b16 %v2016
    %v2601 = vunpack.c.l.b16 %v2017
    %v2602 = vunpack.c.h.b16 %v2017
    %v2603 = vunpack.c.l.b16 %v2018
    %v2604 = vunpack.c.h.b16 %v2018
    %v2605 = vunpack.c.l.b16 %v2019
    %v2606 = vunpack.c.h.b16 %v2019
    %v2607 = vunpack.c.l.b16 %v2020
    %v2608 = vunpack.c.h.b16 %v2020
    %v2609 = vunpack.c.l.b16 %v2021
    %v2610 = vunpack.c.h.b16 %v2021
    %v2611 = vunpack.c.l.b16 %v2022
    %v2612 = vunpack.c.h.b16 %v2022
    %v2613 = vunpack.c.l.b16 %v2023
    %v2614 = vunpack.c.h.b16 %v2023
    %v2615 = vunpack.c.l.b16 %v2024
    %v2616 = vunpack.c.h.b16 %v2024
    %v2617 = vunpack.c.l.b16 %v2025
    %v2618 = vunpack.c.h.b16 %v2025
    %v2619 = vunpack.c.l.b16 %v2026
    %v2620 = vunpack.c.h.b16 %v2026
    %v2621 = vunpack.c.l.b16 %v2027
    %v2622 = vunpack.c.h.b16 %v2027
    %v2623 = vunpack.c.l.b16 %v2028
    %v2624 = vunpack.c.h.b16 %v2028
    %v2625 = vunpack.c.l.b16 %v2029
    %v2626 = vunpack.c.h.b16 %v2029
    %v2627 = vunpack.c.l.b16 %v2030
    %v2628 = vunpack.c.h.b16 %v2030
    %v2629 = vunpack.c.l.b16 %v2031
    %v2630 = vunpack.c.h.b16 %v2031
    %v2631 = vunpack.c.l.b16 %v2032
    %v2632 = vunpack.c.h.b16 %v2032
    %v2633 = vunpack.c.l.b16 %v2033
    %v2634 = vunpack.c.h.b16 %v2033
    %v2635 = vunpack.c.l.b16 %v2034
    %v2636 = vunpack.c.h.b16 %v2034
    %v2637 = vunpack.c.l.b16 %v2035
    %v2638 = vunpack.c.h.b16 %v2035
    %v2639 = vunpack.c.l.b16 %v2036
    %v2640 = vunpack.c.h.b16 %v2036
    %v2641 = vunpack.c.l.b16 %v2037
    %v2642 = vunpack.c.h.b16 %v2037
    %v2643 = vunpack.c.l.b16 %v2038
    %v2644 = vunpack.c.h.b16 %v2038
    %v2645 = vunpack.c.l.b16 %v2039
    %v2646 = vunpack.c.h.b16 %v2039
    %v2647 = vunpack.c.l.b16 %v2040
    %v2648 = vunpack.c.h.b16 %v2040
    %v2649 = vunpack.c.l.b16 %v2041
    %v2650 = vunpack.c.h.b16 %v2041
    %v2651 = vunpack.c.l.b16 %v2042
    %v2652 = vunpack.c.h.b16 %v2042
    %v2653 = vunpack.c.l.b16 %v2043
    %v2654 = vunpack.c.h.b16 %v2043
    %v2655 = vunpack.c.l.b16 %v2044
    %v2656 = vunpack.c.h.b16 %v2044
    %v2657 = vunpack.c.l.b16 %v2045
    %v2658 = vunpack.c.h.b16 %v2045
    %v2659 = vunpack.c.l.b16 %v2046
    %v2660 = vunpack.c.h.b16 %v2046
    %v2661 = vunpack.c.l.b16 %v2047
    %v2662 = vunpack.c.h.b16 %v2047
    %v2663 = vunpack.c.l.b16 %v2048
    %v2664 = vunpack.c.h.b16 %v2048
    %v2665 = vunpack.c.l.b16 %v2049
    %v2666 = vunpack.c.h.b16 %v2049
    %v2667 = vunpack.c.l.b16 %v2050
    %v2668 = vunpack.c.h.b16 %v2050
    %v2669 = vunpack.c.l.b16 %v2051
    %v2670 = vunpack.c.h.b16 %v2051
    %v2671 = vunpack.c.l.b16 %v2052
    %v2672 = vunpack.c.h.b16 %v2052
    %v2673 = vunpack.c.l.b16 %v2053
    %v2674 = vunpack.c.h.b16 %v2053
    %v2675 = vunpack.c.l.b16 %v2054
    %v2676 = vunpack.c.h.b16 %v2054
    %v2677 = vunpack.c.l.b16 %v2055
    %v2678 = vunpack.c.h.b16 %v2055
    %v2679 = vunpack.c.l.b16 %v2056
    %v2680 = vunpack.c.h.b16 %v2056
    %v2681 = vunpack.c.l.b16 %v2057
    %v2682 = vunpack.c.h.b16 %v2057
    %v2683 = vunpack.c.l.b16 %v2058
    %v2684 = vunpack.c.h.b16 %v2058
    %v2685 = vunpack.c.l.b16 %v2059
    %v2686 = vunpack.c.h.b16 %v2059
    %v2687 = vunpack.c.l.b16 %v2060
    %v2688 = vunpack.c.h.b16 %v2060
    %v2689 = vunpack.c.l.b16 %v2061
    %v2690 = vunpack.c.h.b16 %v2061
    %v2691 = vunpack.c.l.b16 %v2062
    %v2692 = vunpack.c.h.b16 %v2062
    %v2693 = vunpack.c.l.b16 %v2063
    %v2694 = vunpack.c.h.b16 %v2063
    %v2695 = vunpack.c.l.b16 %v2064
    %v2696 = vunpack.c.h.b16 %v2064
    %v2697 = vunpack.c.l.b16 %v2065
    %v2698 = vunpack.c.h.b16 %v2065
    %v2699 = vunpack.c.l.b16 %v2066
    %v2700 = vunpack.c.h.b16 %v2066
    %v2701 = vunpack.c.l.b16 %v2067
    %v2702 = vunpack.c.h.b16 %v2067
    %v2703 = vunpack.c.l.b16 %v2068
    %v2704 = vunpack.c.h.b16 %v2068
    %v2705 = vunpack.c.l.b16 %v2069
    %v2706 = vunpack.c.h.b16 %v2069
    %v2707 = vunpack.c.l.b16 %v2070
    %v2708 = vunpack.c.h.b16 %v2070
    %v2709 = vunpack.c.l.b16 %v2071
    %v2710 = vunpack.c.h.b16 %v2071
    %v2711 = vunpack.c.l.b16 %v2072
    %v2712 = vunpack.c.h.b16 %v2072
    %v2713 = vunpack.c.l.b16 %v2073
    %v2714 = vunpack.c.h.b16 %v2073
    %v2715 = vunpack.c.l.b16 %v2074
    %v2716 = vunpack.c.h.b16 %v2074
    %v2717 = vunpack.c.l.b16 %v2075
    %v2718 = vunpack.c.h.b16 %v2075
    %v2719 = vunpack.c.l.b16 %v2076
    %v2720 = vunpack.c.h.b16 %v2076
    %v2721 = vunpack.c.l.b16 %v2077
    %v2722 = vunpack.c.h.b16 %v2077
    %v2723 = vunpack.c.l.b16 %v2078
    %v2724 = vunpack.c.h.b16 %v2078
    %v2725 = vunpack.c.l.b16 %v2079
    %v2726 = vunpack.c.h.b16 %v2079
    %v2727 = vunpack.c.l.b16 %v2080
    %v2728 = vunpack.c.h.b16 %v2080
    %v2729 = vunpack.c.l.b16 %v2081
    %v2730 = vunpack.c.h.b16 %v2081
    %v2731 = vunpack.c.l.b16 %v2082
    %v2732 = vunpack.c.h.b16 %v2082
    %v2733 = vunpack.c.l.b16 %v2083
    %v2734 = vunpack.c.h.b16 %v2083
    %v2735 = vunpack.c.l.b16 %v2084
    %v2736 = vunpack.c.h.b16 %v2084
    %v2737 = vunpack.c.l.b16 %v2085
    %v2738 = vunpack.c.h.b16 %v2085
    %v2739 = vunpack.c.l.b16 %v2086
    %v2740 = vunpack.c.h.b16 %v2086
    %v2741 = vunpack.c.l.b16 %v2087
    %v2742 = vunpack.c.h.b16 %v2087
    %v2743 = vunpack.c.l.b16 %v2088
    %v2744 = vunpack.c.h.b16 %v2088
    %v2745 = vunpack.c.l.b16 %v2089
    %v2746 = vunpack.c.h.b16 %v2089
    %v2747 = vunpack.c.l.b16 %v2090
    %v2748 = vunpack.c.h.b16 %v2090
    %v2749 = vunpack.c.l.b16 %v2091
    %v2750 = vunpack.c.h.b16 %v2091
    %v2751 = vunpack.c.l.b16 %v2092
    %v2752 = vunpack.c.h.b16 %v2092
    %v2753 = vunpack.c.l.b16 %v2093
    %v2754 = vunpack.c.h.b16 %v2093
    %v2755 = vunpack.c.l.b16 %v2094
    %v2756 = vunpack.c.h.b16 %v2094
    %v2757 = vunpack.c.l.b16 %v2095
    %v2758 = vunpack.c.h.b16 %v2095
    %v2759 = vunpack.c.l.b16 %v2096
    %v2760 = vunpack.c.h.b16 %v2096
    %v2761 = vunpack.c.l.b16 %v2097
    %v2762 = vunpack.c.h.b16 %v2097
    %v2763 = vunpack.c.l.b16 %v2098
    %v2764 = vunpack.c.h.b16 %v2098
    %v2765 = vunpack.c.l.b16 %v2099
    %v2766 = vunpack.c.h.b16 %v2099
    %v2767 = vunpack.c.l.b16 %v2100
    %v2768 = vunpack.c.h.b16 %v2100
    %v2769 = vunpack.c.l.b16 %v2101
    %v2770 = vunpack.c.h.b16 %v2101
    %v2771 = vunpack.c.l.b16 %v2102
    %v2772 = vunpack.c.h.b16 %v2102
    %v2773 = vunpack.c.l.b16 %v2103
    %v2774 = vunpack.c.h.b16 %v2103
    %v2775 = vunpack.c.l.b16 %v2104
    %v2776 = vunpack.c.h.b16 %v2104
    %v2777 = vunpack.c.l.b16 %v2105
    %v2778 = vunpack.c.h.b16 %v2105
    %v2779 = vunpack.c.l.b16 %v2106
    %v2780 = vunpack.c.h.b16 %v2106
    %v2781 = vunpack.c.l.b16 %v2107
    %v2782 = vunpack.c.h.b16 %v2107
    %v2783 = vunpack.c.l.b16 %v2108
    %v2784 = vunpack.c.h.b16 %v2108
    %v2785 = vunpack.c.l.b16 %v2109
    %v2786 = vunpack.c.h.b16 %v2109
    %v2787 = vunpack.c.l.b16 %v2110
    %v2788 = vunpack.c.h.b16 %v2110
    %v2789 = vunpack.c.l.b16 %v2111
    %v2790 = vunpack.c.h.b16 %v2111
    %v2791 = vunpack.c.l.b16 %v2112
    %v2792 = vunpack.c.h.b16 %v2112
    %v2793 = vunpack.c.l.b16 %v2113
    %v2794 = vunpack.c.h.b16 %v2113
    %v2795 = vunpack.c.l.b16 %v2114
    %v2796 = vunpack.c.h.b16 %v2114
    %v2797 = vunpack.c.l.b16 %v2115
    %v2798 = vunpack.c.h.b16 %v2115
    %v2799 = vunpack.c.l.b16 %v2116
    %v2800 = vunpack.c.h.b16 %v2116
    %v2801 = vunpack.c.l.b16 %v2117
    %v2802 = vunpack.c.h.b16 %v2117
    %v2803 = vunpack.c.l.b16 %v2118
    %v2804 = vunpack.c.h.b16 %v2118
    %v2805 = vunpack.c.l.b16 %v2119
    %v2806 = vunpack.c.h.b16 %v2119
    %v2807 = vunpack.c.l.b16 %v2120
    %v2808 = vunpack.c.h.b16 %v2120
    %v2809 = vunpack.c.l.b16 %v2121
    %v2810 = vunpack.c.h.b16 %v2121
    %v2811 = vunpack.c.l.b16 %v2122
    %v2812 = vunpack.c.h.b16 %v2122
    %v2813 = vunpack.c.l.b16 %v2123
    %v2814 = vunpack.c.h.b16 %v2123
    %v2815 = vunpack.c.l.b16 %v2124
    %v2816 = vunpack.c.h.b16 %v2124
    %v2817 = vunpack.c.l.b16 %v2125
    %v2818 = vunpack.c.h.b16 %v2125
    %v2819 = vunpack.c.l.b16 %v2126
    %v2820 = vunpack.c.h.b16 %v2126
    %v2821 = vunpack.c.l.b16 %v2127
    %v2822 = vunpack.c.h.b16 %v2127
    %v2823 = vunpack.c.l.b16 %v2128
    %v2824 = vunpack.c.h.b16 %v2128
    %v2825 = vunpack.c.l.b16 %v2129
    %v2826 = vunpack.c.h.b16 %v2129
    %v2827 = vunpack.c.l.b16 %v2130
    %v2828 = vunpack.c.h.b16 %v2130
    %v2829 = vunpack.c.l.b16 %v2131
    %v2830 = vunpack.c.h.b16 %v2131
    %v2831 = vunpack.c.l.b16 %v2132
    %v2832 = vunpack.c.h.b16 %v2132
    %v2833 = vunpack.c.l.b16 %v2133
    %v2834 = vunpack.c.h.b16 %v2133
    %v2835 = vunpack.c.l.b16 %v2134
    %v2836 = vunpack.c.h.b16 %v2134
    %v2837 = vunpack.c.l.b16 %v2135
    %v2838 = vunpack.c.h.b16 %v2135
    %v2839 = vunpack.c.l.b16 %v2136
    %v2840 = vunpack.c.h.b16 %v2136
    %v2841 = vunpack.c.l.b16 %v2137
    %v2842 = vunpack.c.h.b16 %v2137
    %v2843 = vunpack.c.l.b16 %v2138
    %v2844 = vunpack.c.h.b16 %v2138
    %v2845 = vunpack.c.l.b16 %v2139
    %v2846 = vunpack.c.h.b16 %v2139
    %v2847 = vunpack.c.l.b16 %v2140
    %v2848 = vunpack.c.h.b16 %v2140
    %v2849 = vunpack.c.l.b16 %v2141
    %v2850 = vunpack.c.h.b16 %v2141
    %v2851 = vunpack.c.l.b16 %v2142
    %v2852 = vunpack.c.h.b16 %v2142
    %v2853 = vunpack.c.l.b16 %v2143
    %v2854 = vunpack.c.h.b16 %v2143
    %v2855 = vunpack.c.l.b16 %v2144
    %v2856 = vunpack.c.h.b16 %v2144
    %v2857 = vunpack.c.l.b16 %v2145
    %v2858 = vunpack.c.h.b16 %v2145
    %v2859 = vunpack.c.l.b16 %v2146
    %v2860 = vunpack.c.h.b16 %v2146
    %v2861 = vunpack.c.l.b16 %v2147
    %v2862 = vunpack.c.h.b16 %v2147
    %v2863 = vunpack.c.l.b16 %v2148
    %v2864 = vunpack.c.h.b16 %v2148
    %v2865 = vunpack.c.l.b16 %v2149
    %v2866 = vunpack.c.h.b16 %v2149
    %v2867 = vunpack.c.l.b16 %v2150
    %v2868 = vunpack.c.h.b16 %v2150
    %v2869 = vunpack.c.l.b16 %v2151
    %v2870 = vunpack.c.h.b16 %v2151
    %v2871 = vunpack.c.l.b16 %v2152
    %v2872 = vunpack.c.h.b16 %v2152
    %v2873 = vunpack.c.l.b16 %v2153
    %v2874 = vunpack.c.h.b16 %v2153
    %v2875 = vunpack.c.l.b16 %v2154
    %v2876 = vunpack.c.h.b16 %v2154
    %v2877 = vunpack.c.l.b16 %v2155
    %v2878 = vunpack.c.h.b16 %v2155
    %v2879 = vunpack.c.l.b16 %v2156
    %v2880 = vunpack.c.h.b16 %v2156
    %v2881 = vunpack.c.l.b16 %v2157
    %v2882 = vunpack.c.h.b16 %v2157
    %v2883 = vunpack.c.l.b16 %v2158
    %v2884 = vunpack.c.h.b16 %v2158
    %v2885 = vunpack.c.l.b16 %v2159
    %v2886 = vunpack.c.h.b16 %v2159
    %v2887 = vunpack.c.l.b16 %v2160
    %v2888 = vunpack.c.h.b16 %v2160
    %v2889 = vunpack.c.l.b16 %v2161
    %v2890 = vunpack.c.h.b16 %v2161
    %v2891 = vunpack.c.l.b16 %v2162
    %v2892 = vunpack.c.h.b16 %v2162
    %v2893 = vunpack.c.l.b16 %v2163
    %v2894 = vunpack.c.h.b16 %v2163
    %v2895 = vunpack.c.l.b16 %v2164
    %v2896 = vunpack.c.h.b16 %v2164
    %v2897 = vunpack.c.l.b16 %v2165
    %v2898 = vunpack.c.h.b16 %v2165
    %v2899 = vunpack.c.l.b16 %v2166
    %v2900 = vunpack.c.h.b16 %v2166
    %v2901 = vunpack.c.l.b16 %v2167
    %v2902 = vunpack.c.h.b16 %v2167
    %v2903 = vunpack.c.l.b16 %v2168
    %v2904 = vunpack.c.h.b16 %v2168
    %v2905 = vunpack.c.l.b16 %v2169
    %v2906 = vunpack.c.h.b16 %v2169
    %v2907 = vunpack.c.l.b16 %v2170
    %v2908 = vunpack.c.h.b16 %v2170
    %v2909 = vunpack.c.l.b16 %v2171
    %v2910 = vunpack.c.h.b16 %v2171
    %v2911 = vunpack.c.l.b16 %v2172
    %v2912 = vunpack.c.h.b16 %v2172
    %v2913 = vunpack.c.l.b16 %v2173
    %v2914 = vunpack.c.h.b16 %v2173
    %v2915 = vunpack.c.l.b16 %v2174
    %v2916 = vunpack.c.h.b16 %v2174
    %v2917 = vunpack.c.l.b16 %v2175
    %v2918 = vunpack.c.h.b16 %v2175
    %v2919 = vunpack.c.l.b16 %v2176
    %v2920 = vunpack.c.h.b16 %v2176
    %v2921 = vunpack.c.l.b16 %v2177
    %v2922 = vunpack.c.h.b16 %v2177
    %v2923 = vunpack.c.l.b16 %v2178
    %v2924 = vunpack.c.h.b16 %v2178
    %v2925 = vunpack.c.l.b16 %v2179
    %v2926 = vunpack.c.h.b16 %v2179
    %v2927 = vunpack.c.l.b16 %v2180
    %v2928 = vunpack.c.h.b16 %v2180
    %v2929 = vunpack.c.l.b16 %v2181
    %v2930 = vunpack.c.h.b16 %v2181
    %v2931 = vunpack.c.l.b16 %v2182
    %v2932 = vunpack.c.h.b16 %v2182
    %v2933 = vunpack.c.l.b16 %v2183
    %v2934 = vunpack.c.h.b16 %v2183
    %v2935 = vunpack.c.l.b16 %v2184
    %v2936 = vunpack.c.h.b16 %v2184
    %v2937 = vunpack.c.l.b16 %v2185
    %v2938 = vunpack.c.h.b16 %v2185
    %v2939 = vunpack.c.l.b16 %v2186
    %v2940 = vunpack.c.h.b16 %v2186
    %v2941 = vunpack.c.l.b16 %v2187
    %v2942 = vunpack.c.h.b16 %v2187
    %v2943 = vunpack.c.l.b16 %v2188
    %v2944 = vunpack.c.h.b16 %v2188
    %v2945 = vunpack.c.l.b16 %v2189
    %v2946 = vunpack.c.h.b16 %v2189
    %v2947 = vunpack.c.l.b16 %v2190
    %v2948 = vunpack.c.h.b16 %v2190
    %v2949 = vunpack.c.l.b16 %v2191
    %v2950 = vunpack.c.h.b16 %v2191
    %v2951 = vunpack.c.l.b16 %v2192
    %v2952 = vunpack.c.h.b16 %v2192
    %v2953 = vunpack.c.l.b16 %v2193
    %v2954 = vunpack.c.h.b16 %v2193
    %v2955 = vunpack.c.l.b16 %v2194
    %v2956 = vunpack.c.h.b16 %v2194
    %v2957 = vunpack.c.l.b16 %v2195
    %v2958 = vunpack.c.h.b16 %v2195
    %v2959 = vunpack.c.l.b16 %v2196
    %v2960 = vunpack.c.h.b16 %v2196
    %v2961 = vunpack.c.l.b16 %v2197
    %v2962 = vunpack.c.h.b16 %v2197
    %v2963 = vunpack.c.l.b16 %v2198
    %v2964 = vunpack.c.h.b16 %v2198
    %v2965 = vunpack.c.l.b16 %v2199
    %v2966 = vunpack.c.h.b16 %v2199
    %v2967 = vunpack.c.l.b16 %v2200
    %v2968 = vunpack.c.h.b16 %v2200
    %v2969 = vunpack.c.l.b16 %v2201
    %v2970 = vunpack.c.h.b16 %v2201
    %v2971 = vunpack.c.l.b16 %v2202
    %v2972 = vunpack.c.h.b16 %v2202
    %v2973 = vunpack.c.l.b16 %v2203
    %v2974 = vunpack.c.h.b16 %v2203
    %v2975 = vunpack.c.l.b16 %v2204
    %v2976 = vunpack.c.h.b16 %v2204
    %v2977 = vunpack.c.l.b16 %v2205
    %v2978 = vunpack.c.h.b16 %v2205
    %v2979 = vunpack.c.l.b16 %v2206
    %v2980 = vunpack.c.h.b16 %v2206
    %v2981 = vunpack.c.l.b16 %v2207
    %v2982 = vunpack.c.h.b16 %v2207
    %v2983 = vunpack.c.l.b16 %v2208
    %v2984 = vunpack.c.h.b16 %v2208
    %v2985 = vunpack.c.l.b16 %v2209
    %v2986 = vunpack.c.h.b16 %v2209
    %v2987 = vunpack.c.l.b16 %v2210
    %v2988 = vunpack.c.h.b16 %v2210
    %v2989 = vunpack.c.l.b16 %v2211
    %v2990 = vunpack.c.h.b16 %v2211
    %v2991 = vunpack.c.l.b16 %v2212
    %v2992 = vunpack.c.h.b16 %v2212
    %v2993 = vunpack.c.l.b16 %v2213
    %v2994 = vunpack.c.h.b16 %v2213
    %v2995 = vunpack.c.l.b16 %v2214
    %v2996 = vunpack.c.h.b16 %v2214
    %v2997 = vunpack.c.l.b16 %v2215
    %v2998 = vunpack.c.h.b16 %v2215
    %v2999 = vunpack.c.l.b16 %v2216
    %v3000 = vunpack.c.h.b16 %v2216
    %v3001 = vunpack.c.l.b16 %v2217
    %v3002 = vunpack.c.h.b16 %v2217
    %v3003 = vunpack.c.l.b16 %v2218
    %v3004 = vunpack.c.h.b16 %v2218
    %v3005 = vunpack.c.l.b16 %v2219
    %v3006 = vunpack.c.h.b16 %v2219
    %v3007 = vunpack.c.l.b16 %v2220
    %v3008 = vunpack.c.h.b16 %v2220
    %v3009 = vunpack.c.l.b16 %v2221
    %v3010 = vunpack.c.h.b16 %v2221
    %v3011 = vunpack.c.l.b16 %v2222
    %v3012 = vunpack.c.h.b16 %v2222
    %v3013 = vunpack.c.l.b16 %v2223
    %v3014 = vunpack.c.h.b16 %v2223
    %v3015 = vunpack.c.l.b16 %v2224
    %v3016 = vunpack.c.h.b16 %v2224
    %v3017 = vunpack.c.l.b16 %v2225
    %v3018 = vunpack.c.h.b16 %v2225
    %v3019 = vunpack.c.l.b16 %v2226
    %v3020 = vunpack.c.h.b16 %v2226
    %v3021 = vunpack.c.l.b16 %v2227
    %v3022 = vunpack.c.h.b16 %v2227
    %v3023 = vunpack.c.l.b16 %v2228
    %v3024 = vunpack.c.h.b16 %v2228
    %v3025 = vunpack.c.l.b16 %v2229
    %v3026 = vunpack.c.h.b16 %v2229
    %v3027 = vunpack.c.l.b16 %v2230
    %v3028 = vunpack.c.h.b16 %v2230
    %v3029 = vunpack.c.l.b16 %v2231
    %v3030 = vunpack.c.h.b16 %v2231
    %v3031 = vunpack.c.l.b16 %v2232
    %v3032 = vunpack.c.h.b16 %v2232
    %v3033 = vunpack.c.l.b16 %v2233
    %v3034 = vunpack.c.h.b16 %v2233
    %v3035 = vunpack.c.l.b16 %v2234
    %v3036 = vunpack.c.h.b16 %v2234
    %v3037 = vunpack.c.l.b16 %v2235
    %v3038 = vunpack.c.h.b16 %v2235
    %v3039 = vunpack.c.l.b16 %v2236
    %v3040 = vunpack.c.h.b16 %v2236
    %v3041 = vunpack.c.l.b16 %v2237
    %v3042 = vunpack.c.h.b16 %v2237
    %v3043 = vunpack.c.l.b16 %v2238
    %v3044 = vunpack.c.h.b16 %v2238
    %v3045 = vunpack.c.l.b16 %v2239
    %v3046 = vunpack.c.h.b16 %v2239
    %v3047 = vunpack.c.l.b16 %v2240
    %v3048 = vunpack.c.h.b16 %v2240
    %v3049 = vunpack.c.l.b16 %v2241
    %v3050 = vunpack.c.h.b16 %v2241
    %v3051 = vunpack.c.l.b16 %v2242
    %v3052 = vunpack.c.h.b16 %v2242
    %v3053 = vpack.c.b16 %v2549, %v2541
    %v3054 = vpack.c.b16 %v2550, %v2542
    %v3055 = vpack.c.b16 %v2551, %v2543
    %v3056 = vpack.c.b16 %v2552, %v2544
    %v3057 = vpack.c.b16 %v2553, %v2545
    %v3058 = vpack.c.b16 %v2554, %v2546
    %v3059 = vpack.c.b16 %v2555, %v2547
    %v3060 = vpack.c.b16 %v2556, %v2548
    %v3061 = vpack.c.b16 %v2565, %v2557
    %v3062 = vpack.c.b16 %v2566, %v2558
    %v3063 = vpack.c.b16 %v2567, %v2559
    %v3064 = vpack.c.b16 %v2568, %v2560
    %v3065 = vpack.c.b16 %v2569, %v2561
    %v3066 = vpack.c.b16 %v2570, %v2562
    %v3067 = vpack.c.b16 %v2571, %v2563
    %v3068 = vpack.c.b16 %v2572, %v2564
    %v3069 = vpack.c.b16 %v2581, %v2573
    %v3070 = vpack.c.b16 %v2582, %v2574
    %v3071 = vpack.c.b16 %v2583, %v2575
    %v3072 = vpack.c.b16 %v2584, %v2576
    %v3073 = vpack.c.b16 %v2585, %v2577
    %v3074 = vpack.c.b16 %v2586, %v2578
    %v3075 = vpack.c.b16 %v2587, %v2579
    %v3076 = vpack.c.b16 %v2588, %v2580
    %v3077 = vpack.c.b16 %v2597, %v2589
    %v3078 = vpack.c.b16 %v2598, %v2590
    %v3079 = vpack.c.b16 %v2599, %v2591
    %v3080 = vpack.c.b16 %v2600, %v2592
    %v3081 = vpack.c.b16 %v2601, %v2593
    %v3082 = vpack.c.b16 %v2602, %v2594
    %v3083 = vpack.c.b16 %v2603, %v2595
    %v3084 = vpack.c.b16 %v2604, %v2596
    %v3085 = vpack.c.b16 %v2613, %v2605
    %v3086 = vpack.c.b16 %v2614, %v2606
    %v3087 = vpack.c.b16 %v2615, %v2607
    %v3088 = vpack.c.b16 %v2616, %v2608
    %v3089 = vpack.c.b16 %v2617, %v2609
    %v3090 = vpack.c.b16 %v2618, %v2610
    %v3091 = vpack.c.b16 %v2619, %v2611
    %v3092 = vpack.c.b16 %v2620, %v2612
    %v3093 = vpack.c.b16 %v2629, %v2621
    %v3094 = vpack.c.b16 %v2630, %v2622
    %v3095 = vpack.c.b16 %v2631, %v2623
    %v3096 = vpack.c.b16 %v2632, %v2624
    %v3097 = vpack.c.b16 %v2633, %v2625
    %v3098 = vpack.c.b16 %v2634, %v2626
    %v3099 = vpack.c.b16 %v2635, %v2627
    %v3100 = vpack.c.b16 %v2636, %v2628
    %v3101 = vpack.c.b16 %v2645, %v2637
    %v3102 = vpack.c.b16 %v2646, %v2638
    %v3103 = vpack.c.b16 %v2647, %v2639
    %v3104 = vpack.c.b16 %v2648, %v2640
    %v3105 = vpack.c.b16 %v2649, %v2641
    %v3106 = vpack.c.b16 %v2650, %v2642
    %v3107 = vpack.c.b16 %v2651, %v2643
    %v3108 = vpack.c.b16 %v2652, %v2644
    %v3109 = vpack.c.b16 %v2661, %v2653
    %v3110 = vpack.c.b16 %v2662, %v2654
    %v3111 = vpack.c.b16 %v2663, %v2655
    %v3112 = vpack.c.b16 %v2664, %v2656
    %v3113 = vpack.c.b16 %v2665, %v2657
    %v3114 = vpack.c.b16 %v2666, %v2658
    %v3115 = vpack.c.b16 %v2667, %v2659
    %v3116 = vpack.c.b16 %v2668, %v2660
    %v3117 = vpack.c.b16 %v2677, %v2669
    %v3118 = vpack.c.b16 %v2678, %v2670
    %v3119 = vpack.c.b16 %v2679, %v2671
    %v3120 = vpack.c.b16 %v2680, %v2672
    %v3121 = vpack.c.b16 %v2681, %v2673
    %v3122 = vpack.c.b16 %v2682, %v2674
    %v3123 = vpack.c.b16 %v2683, %v2675
    %v3124 = vpack.c.b16 %v2684, %v2676
    %v3125 = vpack.c.b16 %v2693, %v2685
    %v3126 = vpack.c.b16 %v2694, %v2686
    %v3127 = vpack.c.b16 %v2695, %v2687
    %v3128 = vpack.c.b16 %v2696, %v2688
    %v3129 = vpack.c.b16 %v2697, %v2689
    %v3130 = vpack.c.b16 %v2698, %v2690
    %v3131 = vpack.c.b16 %v2699, %v2691
    %v3132 = vpack.c.b16 %v2700, %v2692
    %v3133 = vpack.c.b16 %v2709, %v2701
    %v3134 = vpack.c.b16 %v2710, %v2702
    %v3135 = vpack.c.b16 %v2711, %v2703
    %v3136 = vpack.c.b16 %v2712, %v2704
    %v3137 = vpack.c.b16 %v2713, %v2705
    %v3138 = vpack.c.b16 %v2714, %v2706
    %v3139 = vpack.c.b16 %v2715, %v2707
    %v3140 = vpack.c.b16 %v2716, %v2708
    %v3141 = vpack.c.b16 %v2725, %v2717
    %v3142 = vpack.c.b16 %v2726, %v2718
    %v3143 = vpack.c.b16 %v2727, %v2719
    %v3144 = vpack.c.b16 %v2728, %v2720
    %v3145 = vpack.c.b16 %v2729, %v2721
    %v3146 = vpack.c.b16 %v2730, %v2722
    %v3147 = vpack.c.b16 %v2731, %v2723
    %v3148 = vpack.c.b16 %v2732, %v2724
    %v3149 = vpack.c.b16 %v2741, %v2733
    %v3150 = vpack.c.b16 %v2742, %v2734
    %v3151 = vpack.c.b16 %v2743, %v2735
    %v3152 = vpack.c.b16 %v2744, %v2736
    %v3153 = vpack.c.b16 %v2745, %v2737
    %v3154 = vpack.c.b16 %v2746, %v2738
    %v3155 = vpack.c.b16 %v2747, %v2739
    %v3156 = vpack.c.b16 %v2748, %v2740
    %v3157 = vpack.c.b16 %v2757, %v2749
    %v3158 = vpack.c.b16 %v2758, %v2750
    %v3159 = vpack.c.b16 %v2759, %v2751
    %v3160 = vpack.c.b16 %v2760, %v2752
    %v3161 = vpack.c.b16 %v2761, %v2753
    %v3162 = vpack.c.b16 %v2762, %v2754
    %v3163 = vpack.c.b16 %v2763, %v2755
    %v3164 = vpack.c.b16 %v2764, %v2756
    %v3165 = vpack.c.b16 %v2773, %v2765
    %v3166 = vpack.c.b16 %v2774, %v2766
    %v3167 = vpack.c.b16 %v2775, %v2767
    %v3168 = vpack.c.b16 %v2776, %v2768
    %v3169 = vpack.c.b16 %v2777, %v2769
    %v3170 = vpack.c.b16 %v2778, %v2770
    %v3171 = vpack.c.b16 %v2779, %v2771
    %v3172 = vpack.c.b16 %v2780, %v2772
    %v3173 = vpack.c.b16 %v2789, %v2781
    %v3174 = vpack.c.b16 %v2790, %v2782
    %v3175 = vpack.c.b16 %v2791, %v2783
    %v3176 = vpack.c.b16 %v2792, %v2784
    %v3177 = vpack.c.b16 %v2793, %v2785
    %v3178 = vpack.c.b16 %v2794, %v2786
    %v3179 = vpack.c.b16 %v2795, %v2787
    %v3180 = vpack.c.b16 %v2796, %v2788
    %v3181 = vpack.c.b16 %v2805, %v2797
    %v3182 = vpack.c.b16 %v2806, %v2798
    %v3183 = vpack.c.b16 %v2807, %v2799
    %v3184 = vpack.c.b16 %v2808, %v2800
    %v3185 = vpack.c.b16 %v2809, %v2801
    %v3186 = vpack.c.b16 %v2810, %v2802
    %v3187 = vpack.c.b16 %v2811, %v2803
    %v3188 = vpack.c.b16 %v2812, %v2804
    %v3189 = vpack.c.b16 %v2821, %v2813
    %v3190 = vpack.c.b16 %v2822, %v2814
    %v3191 = vpack.c.b16 %v2823, %v2815
    %v3192 = vpack.c.b16 %v2824, %v2816
    %v3193 = vpack.c.b16 %v2825, %v2817
    %v3194 = vpack.c.b16 %v2826, %v2818
    %v3195 = vpack.c.b16 %v2827, %v2819
    %v3196 = vpack.c.b16 %v2828, %v2820
    %v3197 = vpack.c.b16 %v2837, %v2829
    %v3198 = vpack.c.b16 %v2838, %v2830
    %v3199 = vpack.c.b16 %v2839, %v2831
    %v3200 = vpack.c.b16 %v2840, %v2832
    %v3201 = vpack.c.b16 %v2841, %v2833
    %v3202 = vpack.c.b16 %v2842, %v2834
    %v3203 = vpack.c.b16 %v2843, %v2835
    %v3204 = vpack.c.b16 %v2844, %v2836
    %v3205 = vpack.c.b16 %v2853, %v2845
    %v3206 = vpack.c.b16 %v2854, %v2846
    %v3207 = vpack.c.b16 %v2855, %v2847
    %v3208 = vpack.c.b16 %v2856, %v2848
    %v3209 = vpack.c.b16 %v2857, %v2849
    %v3210 = vpack.c.b16 %v2858, %v2850
    %v3211 = vpack.c.b16 %v2859, %v2851
    %v3212 = vpack.c.b16 %v2860, %v2852
    %v3213 = vpack.c.b16 %v2869, %v2861
    %v3214 = vpack.c.b16 %v2870, %v2862
    %v3215 = vpack.c.b16 %v2871, %v2863
    %v3216 = vpack.c.b16 %v2872, %v2864
    %v3217 = vpack.c.b16 %v2873, %v2865
    %v3218 = vpack.c.b16 %v2874, %v2866
    %v3219 = vpack.c.b16 %v2875, %v2867
    %v3220 = vpack.c.b16 %v2876, %v2868
    %v3221 = vpack.c.b16 %v2885, %v2877
    %v3222 = vpack.c.b16 %v2886, %v2878
    %v3223 = vpack.c.b16 %v2887, %v2879
    %v3224 = vpack.c.b16 %v2888, %v2880
    %v3225 = vpack.c.b16 %v2889, %v2881
    %v3226 = vpack.c.b16 %v2890, %v2882
    %v3227 = vpack.c.b16 %v2891, %v2883
    %v3228 = vpack.c.b16 %v2892, %v2884
    %v3229 = vpack.c.b16 %v2901, %v2893
    %v3230 = vpack.c.b16 %v2902, %v2894
    %v3231 = vpack.c.b16 %v2903, %v2895
    %v3232 = vpack.c.b16 %v2904, %v2896
    %v3233 = vpack.c.b16 %v2905, %v2897
    %v3234 = vpack.c.b16 %v2906, %v2898
    %v3235 = vpack.c.b16 %v2907, %v2899
    %v3236 = vpack.c.b16 %v2908, %v2900
    %v3237 = vpack.c.b16 %v2917, %v2909
    %v3238 = vpack.c.b16 %v2918, %v2910
    %v3239 = vpack.c.b16 %v2919, %v2911
    %v3240 = vpack.c.b16 %v2920, %v2912
    %v3241 = vpack.c.b16 %v2921, %v2913
    %v3242 = vpack.c.b16 %v2922, %v2914
    %v3243 = vpack.c.b16 %v2923, %v2915
    %v3244 = vpack.c.b16 %v2924, %v2916
    %v3245 = vpack.c.b16 %v2933, %v2925
    %v3246 = vpack.c.b16 %v2934, %v2926
    %v3247 = vpack.c.b16 %v2935, %v2927
    %v3248 = vpack.c.b16 %v2936, %v2928
    %v3249 = vpack.c.b16 %v2937, %v2929
    %v3250 = vpack.c.b16 %v2938, %v2930
    %v3251 = vpack.c.b16 %v2939, %v2931
    %v3252 = vpack.c.b16 %v2940, %v2932
    %v3253 = vpack.c.b16 %v2949, %v2941
    %v3254 = vpack.c.b16 %v2950, %v2942
    %v3255 = vpack.c.b16 %v2951, %v2943
    %v3256 = vpack.c.b16 %v2952, %v2944
    %v3257 = vpack.c.b16 %v2953, %v2945
    %v3258 = vpack.c.b16 %v2954, %v2946
    %v3259 = vpack.c.b16 %v2955, %v2947
    %v3260 = vpack.c.b16 %v2956, %v2948
    %v3261 = vpack.c.b16 %v2965, %v2957
    %v3262 = vpack.c.b16 %v2966, %v2958
    %v3263 = vpack.c.b16 %v2967, %v2959
    %v3264 = vpack.c.b16 %v2968, %v2960
    %v3265 = vpack.c.b16 %v2969, %v2961
    %v3266 = vpack.c.b16 %v2970, %v2962
    %v3267 = vpack.c.b16 %v2971, %v2963
    %v3268 = vpack.c.b16 %v2972, %v2964
    %v3269 = vpack.c.b16 %v2981, %v2973
    %v3270 = vpack.c.b16 %v2982, %v2974
    %v3271 = vpack.c.b16 %v2983, %v2975
    %v3272 = vpack.c.b16 %v2984, %v2976
    %v3273 = vpack.c.b16 %v2985, %v2977
    %v3274 = vpack.c.b16 %v2986, %v2978
    %v3275 = vpack.c.b16 %v2987, %v2979
    %v3276 = vpack.c.b16 %v2988, %v2980
    %v3277 = vpack.c.b16 %v2997, %v2989
    %v3278 = vpack.c.b16 %v2998, %v2990
    %v3279 = vpack.c.b16 %v2999, %v2991
    %v3280 = vpack.c.b16 %v3000, %v2992
    %v3281 = vpack.c.b16 %v3001, %v2993
    %v3282 = vpack.c.b16 %v3002, %v2994
    %v3283 = vpack.c.b16 %v3003, %v2995
    %v3284 = vpack.c.b16 %v3004, %v2996
    %v3285 = vpack.c.b16 %v3013, %v3005
    %v3286 = vpack.c.b16 %v3014, %v3006
    %v3287 = vpack.c.b16 %v3015, %v3007
    %v3288 = vpack.c.b16 %v3016, %v3008
    %v3289 = vpack.c.b16 %v3017, %v3009
    %v3290 = vpack.c.b16 %v3018, %v3010
    %v3291 = vpack.c.b16 %v3019, %v3011
    %v3292 = vpack.c.b16 %v3020, %v3012
    %v3293 = vpack.c.b16 %v3029, %v3021
    %v3294 = vpack.c.b16 %v3030, %v3022
    %v3295 = vpack.c.b16 %v3031, %v3023
    %v3296 = vpack.c.b16 %v3032, %v3024
    %v3297 = vpack.c.b16 %v3033, %v3025
    %v3298 = vpack.c.b16 %v3034, %v3026
    %v3299 = vpack.c.b16 %v3035, %v3027
    %v3300 = vpack.c.b16 %v3036, %v3028
    %v3301 = vpack.c.b16 %v3045, %v3037
    %v3302 = vpack.c.b16 %v3046, %v3038
    %v3303 = vpack.c.b16 %v3047, %v3039
    %v3304 = vpack.c.b16 %v3048, %v3040
    %v3305 = vpack.c.b16 %v3049, %v3041
    %v3306 = vpack.c.b16 %v3050, %v3042
    %v3307 = vpack.c.b16 %v3051, %v3043
    %v3308 = vpack.c.b16 %v3052, %v3044
    %3565 = vmatprep.subr.bf16.mxu0 %v3054
    %3566 = vmatpush1.bf16.msra.mxu0 %v3053
    %3567 = vmatprep.subr.bf16.mxu0 %v3062
    %3568 = vmatpush1.bf16.msra.mxu0 %v3061
    %3569 = vmatprep.subr.bf16.mxu0 %v3070
    %3570 = vmatpush1.bf16.msra.mxu0 %v3069
    %3571 = vmatprep.subr.bf16.mxu0 %v3078
    %3572 = vmatpush1.bf16.msra.mxu0 %v3077
    %3573 = vmatprep.subr.bf16.mxu0 %v3086
    %3574 = vmatpush1.bf16.msra.mxu0 %v3085
    %3575 = vmatprep.subr.bf16.mxu0 %v3094
    %3576 = vmatpush1.bf16.msra.mxu0 %v3093
    %3577 = vmatprep.subr.bf16.mxu0 %v3102
    %3578 = vmatpush1.bf16.msra.mxu0 %v3101
    %3579 = vmatprep.subr.bf16.mxu0 %v3110
    %3580 = vmatpush1.bf16.msra.mxu0 %v3109
    %3581 = vmatprep.subr.bf16.mxu0 %v3118
    %3582 = vmatpush1.bf16.msra.mxu0 %v3117
    %3583 = vmatprep.subr.bf16.mxu0 %v3126
    %3584 = vmatpush1.bf16.msra.mxu0 %v3125
    %3585 = vmatprep.subr.bf16.mxu0 %v3134
    %3586 = vmatpush1.bf16.msra.mxu0 %v3133
    %3587 = vmatprep.subr.bf16.mxu0 %v3142
    %3588 = vmatpush1.bf16.msra.mxu0 %v3141
    %3589 = vmatprep.subr.bf16.mxu0 %v3150
    %3590 = vmatpush1.bf16.msra.mxu0 %v3149
    %3591 = vmatprep.subr.bf16.mxu0 %v3158
    %3592 = vmatpush1.bf16.msra.mxu0 %v3157
    %3593 = vmatprep.subr.bf16.mxu0 %v3166
    %3594 = vmatpush1.bf16.msra.mxu0 %v3165
    %3595 = vmatprep.subr.bf16.mxu0 %v3174
    %3596 = vmatpush1.bf16.msra.mxu0 %v3173
    %3597 = vmatprep.mubr.bf16.mxu0 %v58
    %3598 = vmatmul.mubr.bf16.gmra.mrb[0].mxu0 %v57
    %v3599 = vpop.f32.mrb[0].mxu0
    %v3600 = vadd.f32 %v2248, %v3599
    %v3601 = vpop.f32.mrb[0].mxu0
    %v3602 = vadd.f32 %v2252, %v3601
    %v3603 = vpop.f32.mrb[0].mxu0
    %v3604 = vpop.f32.mrb[0].mxu0
    %3605 = vdwg.mxu0
    %3606 = vmatprep.subr.bf16.mxu0 %v3182
    %3607 = vmatpush1.bf16.msra.mxu0 %v3181
    %3608 = vmatprep.subr.bf16.mxu0 %v3190
    %3609 = vmatpush1.bf16.msra.mxu0 %v3189
    %3610 = vmatprep.subr.bf16.mxu0 %v3198
    %3611 = vmatpush1.bf16.msra.mxu0 %v3197
    %3612 = vmatprep.subr.bf16.mxu0 %v3206
    %3613 = vmatpush1.bf16.msra.mxu0 %v3205
    %3614 = vmatprep.subr.bf16.mxu0 %v3214
    %3615 = vmatpush1.bf16.msra.mxu0 %v3213
    %3616 = vmatprep.subr.bf16.mxu0 %v3222
    %3617 = vmatpush1.bf16.msra.mxu0 %v3221
    %3618 = vmatprep.subr.bf16.mxu0 %v3230
    %3619 = vmatpush1.bf16.msra.mxu0 %v3229
    %3620 = vmatprep.subr.bf16.mxu0 %v3238
    %3621 = vmatpush1.bf16.msra.mxu0 %v3237
    %3622 = vmatprep.subr.bf16.mxu0 %v3246
    %3623 = vmatpush1.bf16.msra.mxu0 %v3245
    %3624 = vmatprep.subr.bf16.mxu0 %v3254
    %3625 = vmatpush1.bf16.msra.mxu0 %v3253
    %3626 = vmatprep.subr.bf16.mxu0 %v3262
    %3627 = vmatpush1.bf16.msra.mxu0 %v3261
    %3628 = vmatprep.subr.bf16.mxu0 %v3270
    %3629 = vmatpush1.bf16.msra.mxu0 %v3269
    %3630 = vmatprep.subr.bf16.mxu0 %v3278
    %3631 = vmatpush1.bf16.msra.mxu0 %v3277
    %3632 = vmatprep.subr.bf16.mxu0 %v3286
    %3633 = vmatpush1.bf16.msra.mxu0 %v3285
    %3634 = vmatprep.subr.bf16.mxu0 %v3294
    %3635 = vmatpush1.bf16.msra.mxu0 %v3293
    %3636 = vmatprep.subr.bf16.mxu0 %v3302
    %3637 = vmatpush1.bf16.msra.mxu0 %v3301
    %3638 = vmatprep.mubr.bf16.mxu0 %v60
    %3639 = vmatmul.mubr.bf16.gmra.mrb[0].mxu0 %v59
    %v3640 = vpop.f32.mrb[0].mxu0
    %v3641 = vadd.f32 %v3600, %v3640
    %v3642 = vpop.f32.mrb[0].mxu0
    %v3643 = vadd.f32 %v3602, %v3642
    %v3644 = vpop.f32.mrb[0].mxu0
    %v3645 = vpop.f32.mrb[0].mxu0
    %3646 = vdwg.mxu0
    %3647 = vmatprep.subr.bf16.mxu0 %v3056
    %3648 = vmatpush1.bf16.msra.mxu0 %v3055
    %3649 = vmatprep.subr.bf16.mxu0 %v3064
    %3650 = vmatpush1.bf16.msra.mxu0 %v3063
    %3651 = vmatprep.subr.bf16.mxu0 %v3072
    %3652 = vmatpush1.bf16.msra.mxu0 %v3071
    %3653 = vmatprep.subr.bf16.mxu0 %v3080
    %3654 = vmatpush1.bf16.msra.mxu0 %v3079
    %3655 = vmatprep.subr.bf16.mxu0 %v3088
    %3656 = vmatpush1.bf16.msra.mxu0 %v3087
    %3657 = vmatprep.subr.bf16.mxu0 %v3096
    %3658 = vmatpush1.bf16.msra.mxu0 %v3095
    %3659 = vmatprep.subr.bf16.mxu0 %v3104
    %3660 = vmatpush1.bf16.msra.mxu0 %v3103
    %3661 = vmatprep.subr.bf16.mxu0 %v3112
    %3662 = vmatpush1.bf16.msra.mxu0 %v3111
    %3663 = vmatprep.subr.bf16.mxu0 %v3120
    %3664 = vmatpush1.bf16.msra.mxu0 %v3119
    %3665 = vmatprep.subr.bf16.mxu0 %v3128
    %3666 = vmatpush1.bf16.msra.mxu0 %v3127
    %3667 = vmatprep.subr.bf16.mxu0 %v3136
    %3668 = vmatpush1.bf16.msra.mxu0 %v3135
    %3669 = vmatprep.subr.bf16.mxu0 %v3144
    %3670 = vmatpush1.bf16.msra.mxu0 %v3143
    %3671 = vmatprep.subr.bf16.mxu0 %v3152
    %3672 = vmatpush1.bf16.msra.mxu0 %v3151
    %3673 = vmatprep.subr.bf16.mxu0 %v3160
    %3674 = vmatpush1.bf16.msra.mxu0 %v3159
    %3675 = vmatprep.subr.bf16.mxu0 %v3168
    %3676 = vmatpush1.bf16.msra.mxu0 %v3167
    %3677 = vmatprep.subr.bf16.mxu0 %v3176
    %3678 = vmatpush1.bf16.msra.mxu0 %v3175
    %3679 = vmatprep.mubr.bf16.mxu0 %v58
    %3680 = vmatmul.mubr.bf16.gmra.mrb[0].mxu0 %v57
    %v3681 = vpop.f32.mrb[0].mxu0
    %v3682 = vadd.f32 %v2256, %v3681
    %v3683 = vpop.f32.mrb[0].mxu0
    %v3684 = vadd.f32 %v2260, %v3683
    %v3685 = vpop.f32.mrb[0].mxu0
    %v3686 = vpop.f32.mrb[0].mxu0
    %3687 = vdwg.mxu0
    %3688 = vmatprep.subr.bf16.mxu0 %v3184
    %3689 = vmatpush1.bf16.msra.mxu0 %v3183
    %3690 = vmatprep.subr.bf16.mxu0 %v3192
    %3691 = vmatpush1.bf16.msra.mxu0 %v3191
    %3692 = vmatprep.subr.bf16.mxu0 %v3200
    %3693 = vmatpush1.bf16.msra.mxu0 %v3199
    %3694 = vmatprep.subr.bf16.mxu0 %v3208
    %3695 = vmatpush1.bf16.msra.mxu0 %v3207
    %3696 = vmatprep.subr.bf16.mxu0 %v3216
    %3697 = vmatpush1.bf16.msra.mxu0 %v3215
    %3698 = vmatprep.subr.bf16.mxu0 %v3224
    %3699 = vmatpush1.bf16.msra.mxu0 %v3223
    %3700 = vmatprep.subr.bf16.mxu0 %v3232
    %3701 = vmatpush1.bf16.msra.mxu0 %v3231
    %3702 = vmatprep.subr.bf16.mxu0 %v3240
    %3703 = vmatpush1.bf16.msra.mxu0 %v3239
    %3704 = vmatprep.subr.bf16.mxu0 %v3248
    %3705 = vmatpush1.bf16.msra.mxu0 %v3247
    %3706 = vmatprep.subr.bf16.mxu0 %v3256
    %3707 = vmatpush1.bf16.msra.mxu0 %v3255
    %3708 = vmatprep.subr.bf16.mxu0 %v3264
    %3709 = vmatpush1.bf16.msra.mxu0 %v3263
    %3710 = vmatprep.subr.bf16.mxu0 %v3272
    %3711 = vmatpush1.bf16.msra.mxu0 %v3271
    %3712 = vmatprep.subr.bf16.mxu0 %v3280
    %3713 = vmatpush1.bf16.msra.mxu0 %v3279
    %3714 = vmatprep.subr.bf16.mxu0 %v3288
    %3715 = vmatpush1.bf16.msra.mxu0 %v3287
    %3716 = vmatprep.subr.bf16.mxu0 %v3296
    %3717 = vmatpush1.bf16.msra.mxu0 %v3295
    %3718 = vmatprep.subr.bf16.mxu0 %v3304
    %3719 = vmatpush1.bf16.msra.mxu0 %v3303
    %3720 = vmatprep.mubr.bf16.mxu0 %v60
    %3721 = vmatmul.mubr.bf16.gmra.mrb[0].mxu0 %v59
    %v3722 = vpop.f32.mrb[0].mxu0
    %v3723 = vadd.f32 %v3682, %v3722
    %v3724 = vpop.f32.mrb[0].mxu0
    %v3725 = vadd.f32 %v3684, %v3724
    %v3726 = vpop.f32.mrb[0].mxu0
    %v3727 = vpop.f32.mrb[0].mxu0
    %3728 = vdwg.mxu0
    %3729 = vmatprep.subr.bf16.mxu0 %v3058
    %3730 = vmatpush1.bf16.msra.mxu0 %v3057
    %3731 = vmatprep.subr.bf16.mxu0 %v3066
    %3732 = vmatpush1.bf16.msra.mxu0 %v3065
    %3733 = vmatprep.subr.bf16.mxu0 %v3074
    %3734 = vmatpush1.bf16.msra.mxu0 %v3073
    %3735 = vmatprep.subr.bf16.mxu0 %v3082
    %3736 = vmatpush1.bf16.msra.mxu0 %v3081
    %3737 = vmatprep.subr.bf16.mxu0 %v3090
    %3738 = vmatpush1.bf16.msra.mxu0 %v3089
    %3739 = vmatprep.subr.bf16.mxu0 %v3098
    %3740 = vmatpush1.bf16.msra.mxu0 %v3097
    %3741 = vmatprep.subr.bf16.mxu0 %v3106
    %3742 = vmatpush1.bf16.msra.mxu0 %v3105
    %3743 = vmatprep.subr.bf16.mxu0 %v3114
    %3744 = vmatpush1.bf16.msra.mxu0 %v3113
    %3745 = vmatprep.subr.bf16.mxu0 %v3122
    %3746 = vmatpush1.bf16.msra.mxu0 %v3121
    %3747 = vmatprep.subr.bf16.mxu0 %v3130
    %3748 = vmatpush1.bf16.msra.mxu0 %v3129
    %3749 = vmatprep.subr.bf16.mxu0 %v3138
    %3750 = vmatpush1.bf16.msra.mxu0 %v3137
    %3751 = vmatprep.subr.bf16.mxu0 %v3146
    %3752 = vmatpush1.bf16.msra.mxu0 %v3145
    %3753 = vmatprep.subr.bf16.mxu0 %v3154
    %3754 = vmatpush1.bf16.msra.mxu0 %v3153
    %3755 = vmatprep.subr.bf16.mxu0 %v3162
    %3756 = vmatpush1.bf16.msra.mxu0 %v3161
    %3757 = vmatprep.subr.bf16.mxu0 %v3170
    %3758 = vmatpush1.bf16.msra.mxu0 %v3169
    %3759 = vmatprep.subr.bf16.mxu0 %v3178
    %3760 = vmatpush1.bf16.msra.mxu0 %v3177
    %3761 = vmatprep.mubr.bf16.mxu0 %v58
    %3762 = vmatmul.mubr.bf16.gmra.mrb[0].mxu0 %v57
    %v3763 = vpop.f32.mrb[0].mxu0
    %v3764 = vadd.f32 %v2264, %v3763
    %v3765 = vpop.f32.mrb[0].mxu0
    %v3766 = vadd.f32 %v2268, %v3765
    %v3767 = vpop.f32.mrb[0].mxu0
    %v3768 = vpop.f32.mrb[0].mxu0
    %3769 = vdwg.mxu0
    %3770 = vmatprep.subr.bf16.mxu0 %v3186
    %3771 = vmatpush1.bf16.msra.mxu0 %v3185
    %3772 = vmatprep.subr.bf16.mxu0 %v3194
    %3773 = vmatpush1.bf16.msra.mxu0 %v3193
    %3774 = vmatprep.subr.bf16.mxu0 %v3202
    %3775 = vmatpush1.bf16.msra.mxu0 %v3201
    %3776 = vmatprep.subr.bf16.mxu0 %v3210
    %3777 = vmatpush1.bf16.msra.mxu0 %v3209
    %3778 = vmatprep.subr.bf16.mxu0 %v3218
    %3779 = vmatpush1.bf16.msra.mxu0 %v3217
    %3780 = vmatprep.subr.bf16.mxu0 %v3226
    %3781 = vmatpush1.bf16.msra.mxu0 %v3225
    %3782 = vmatprep.subr.bf16.mxu0 %v3234
    %3783 = vmatpush1.bf16.msra.mxu0 %v3233
    %3784 = vmatprep.subr.bf16.mxu0 %v3242
    %3785 = vmatpush1.bf16.msra.mxu0 %v3241
    %3786 = vmatprep.subr.bf16.mxu0 %v3250
    %3787 = vmatpush1.bf16.msra.mxu0 %v3249
    %3788 = vmatprep.subr.bf16.mxu0 %v3258
    %3789 = vmatpush1.bf16.msra.mxu0 %v3257
    %3790 = vmatprep.subr.bf16.mxu0 %v3266
    %3791 = vmatpush1.bf16.msra.mxu0 %v3265
    %3792 = vmatprep.subr.bf16.mxu0 %v3274
    %3793 = vmatpush1.bf16.msra.mxu0 %v3273
    %3794 = vmatprep.subr.bf16.mxu0 %v3282
    %3795 = vmatpush1.bf16.msra.mxu0 %v3281
    %3796 = vmatprep.subr.bf16.mxu0 %v3290
    %3797 = vmatpush1.bf16.msra.mxu0 %v3289
    %3798 = vmatprep.subr.bf16.mxu0 %v3298
    %3799 = vmatpush1.bf16.msra.mxu0 %v3297
    %3800 = vmatprep.subr.bf16.mxu0 %v3306
    %3801 = vmatpush1.bf16.msra.mxu0 %v3305
    %3802 = vmatprep.mubr.bf16.mxu0 %v60
    %3803 = vmatmul.mubr.bf16.gmra.mrb[0].mxu0 %v59
    %v3804 = vpop.f32.mrb[0].mxu0
    %v3805 = vadd.f32 %v3764, %v3804
    %v3806 = vpop.f32.mrb[0].mxu0
    %v3807 = vadd.f32 %v3766, %v3806
    %v3808 = vpop.f32.mrb[0].mxu0
    %v3809 = vpop.f32.mrb[0].mxu0
    %3810 = vdwg.mxu0
    %3811 = vmatprep.subr.bf16.mxu0 %v3060
    %3812 = vmatpush1.bf16.msra.mxu0 %v3059
    %3813 = vmatprep.subr.bf16.mxu0 %v3068
    %3814 = vmatpush1.bf16.msra.mxu0 %v3067
    %3815 = vmatprep.subr.bf16.mxu0 %v3076
    %3816 = vmatpush1.bf16.msra.mxu0 %v3075
    %3817 = vmatprep.subr.bf16.mxu0 %v3084
    %3818 = vmatpush1.bf16.msra.mxu0 %v3083
    %3819 = vmatprep.subr.bf16.mxu0 %v3092
    %3820 = vmatpush1.bf16.msra.mxu0 %v3091
    %3821 = vmatprep.subr.bf16.mxu0 %v3100
    %3822 = vmatpush1.bf16.msra.mxu0 %v3099
    %3823 = vmatprep.subr.bf16.mxu0 %v3108
    %3824 = vmatpush1.bf16.msra.mxu0 %v3107
    %3825 = vmatprep.subr.bf16.mxu0 %v3116
    %3826 = vmatpush1.bf16.msra.mxu0 %v3115
    %3827 = vmatprep.subr.bf16.mxu0 %v3124
    %3828 = vmatpush1.bf16.msra.mxu0 %v3123
    %3829 = vmatprep.subr.bf16.mxu0 %v3132
    %3830 = vmatpush1.bf16.msra.mxu0 %v3131
    %3831 = vmatprep.subr.bf16.mxu0 %v3140
    %3832 = vmatpush1.bf16.msra.mxu0 %v3139
    %3833 = vmatprep.subr.bf16.mxu0 %v3148
    %3834 = vmatpush1.bf16.msra.mxu0 %v3147
    %3835 = vmatprep.subr.bf16.mxu0 %v3156
    %3836 = vmatpush1.bf16.msra.mxu0 %v3155
    %3837 = vmatprep.subr.bf16.mxu0 %v3164
    %3838 = vmatpush1.bf16.msra.mxu0 %v3163
    %3839 = vmatprep.subr.bf16.mxu0 %v3172
    %3840 = vmatpush1.bf16.msra.mxu0 %v3171
    %3841 = vmatprep.subr.bf16.mxu0 %v3180
    %3842 = vmatpush1.bf16.msra.mxu0 %v3179
    %3843 = vmatprep.mubr.bf16.mxu0 %v58
    %3844 = vmatmul.mubr.bf16.gmra.mrb[0].mxu0 %v57
    %v3845 = vpop.f32.mrb[0].mxu0
    %v3846 = vadd.f32 %v2272, %v3845
    %v3847 = vpop.f32.mrb[0].mxu0
    %v3848 = vadd.f32 %v2276, %v3847
    %v3849 = vpop.f32.mrb[0].mxu0
    %v3850 = vpop.f32.mrb[0].mxu0
    %3851 = vdwg.mxu0
    %3852 = vmatprep.subr.bf16.mxu0 %v3188
    %3853 = vmatpush1.bf16.msra.mxu0 %v3187
    %3854 = vmatprep.subr.bf16.mxu0 %v3196
    %3855 = vmatpush1.bf16.msra.mxu0 %v3195
    %3856 = vmatprep.subr.bf16.mxu0 %v3204
    %3857 = vmatpush1.bf16.msra.mxu0 %v3203
    %3858 = vmatprep.subr.bf16.mxu0 %v3212
    %3859 = vmatpush1.bf16.msra.mxu0 %v3211
    %3860 = vmatprep.subr.bf16.mxu0 %v3220
    %3861 = vmatpush1.bf16.msra.mxu0 %v3219
    %3862 = vmatprep.subr.bf16.mxu0 %v3228
    %3863 = vmatpush1.bf16.msra.mxu0 %v3227
    %3864 = vmatprep.subr.bf16.mxu0 %v3236
    %3865 = vmatpush1.bf16.msra.mxu0 %v3235
    %3866 = vmatprep.subr.bf16.mxu0 %v3244
    %3867 = vmatpush1.bf16.msra.mxu0 %v3243
    %3868 = vmatprep.subr.bf16.mxu0 %v3252
    %3869 = vmatpush1.bf16.msra.mxu0 %v3251
    %3870 = vmatprep.subr.bf16.mxu0 %v3260
    %3871 = vmatpush1.bf16.msra.mxu0 %v3259
    %3872 = vmatprep.subr.bf16.mxu0 %v3268
    %3873 = vmatpush1.bf16.msra.mxu0 %v3267
    %3874 = vmatprep.subr.bf16.mxu0 %v3276
    %3875 = vmatpush1.bf16.msra.mxu0 %v3275
    %3876 = vmatprep.subr.bf16.mxu0 %v3284
    %3877 = vmatpush1.bf16.msra.mxu0 %v3283
    %3878 = vmatprep.subr.bf16.mxu0 %v3292
    %3879 = vmatpush1.bf16.msra.mxu0 %v3291
    %3880 = vmatprep.subr.bf16.mxu0 %v3300
    %3881 = vmatpush1.bf16.msra.mxu0 %v3299
    %3882 = vmatprep.subr.bf16.mxu0 %v3308
    %3883 = vmatpush1.bf16.msra.mxu0 %v3307
    %3884 = vmatprep.mubr.bf16.mxu0 %v60
    %3885 = vmatmul.mubr.bf16.gmra.mrb[0].mxu0 %v59
    %v3886 = vpop.f32.mrb[0].mxu0
    %v3887 = vadd.f32 %v3846, %v3886
    %v3888 = vpop.f32.mrb[0].mxu0
    %v3889 = vadd.f32 %v3848, %v3888
    %v3890 = vpop.f32.mrb[0].mxu0
    %v3891 = vpop.f32.mrb[0].mxu0
    %3892 = vdwg.mxu0
    %v3901 = vcombine.low %v3641, %v3643
    %v3902 = vcombine.low %v3723, %v3725
    %v3903 = vcombine.low %v3805, %v3807
    %v3904 = vcombine.low %v3887, %v3889
    %3909 = vst [vmem:[#allocation3] sm:$0xff] %v3901
    %3910 = vst [vmem:[#allocation3 + $0x8] sm:$0xff] %v3902
    %3911 = vst [vmem:[#allocation3 + $0x10] sm:$0xff] %v3903
    %3912 = vst [vmem:[#allocation3 + $0x18] sm:$0xff] %v3904
    %v3913 = vlaneseq
    %vm3914 = vcmp.ge.s32.totalorder %v3913, 0
    %vm3915 = vcmp.lt.s32.totalorder %v3913, 256
    %vm3916 = vmand %vm3914, %vm3915
    %3917 = vst.msk [vmem:[#allocation4] sm:$0x3] %vm3916, 0.0
    %3918 = vst.msk [vmem:[#allocation5] sm:$0x3] %vm3916, 0.0
    %3919 = vst.msk [vmem:[#allocation6] sm:$0x3] %vm3916, 0.0
    %3920 = vst.msk [vmem:[#allocation7] sm:$0x3] %vm3916, 0.0
    loop: start=0, step=1, limit=4
    $region42: #{_run_model.3} parent=1 // loop_pre_header
      _
    $region43: #{_run_model.3} parent=1 // loop_header
      %s3922 = sphi 0, %s3926
      %p3923 = scmp.ge.s32.totalorder %s3922, 4
    $region44: #{_run_model.3} parent=1 // loop_header_branch
      %3925 = sbr.rel (%p3923) target = $region48
    $region45: #{_run_model.3} parent=1 // loop_body
      %s3927 = sshra.s32 %s3922, 2
      %s3928 = sand.u32 %s3922, 3
      %s3929 = sshra.s32 %s3922, 2
      %s3930 = sand.u32 %s3922, 3
      %s3931 = smul.u32 %s3927, 8
      %s3932 = smul.u32 %s3931, 4
      %s3933 = sadd.s32 %s3932, %s3930
      %s3934 = scalar_lea.vmem [#allocation2], %s3933
      %v3935 = vld [vmem:[%s3934] ss:$4 sm:$0xff]
      %v3936 = vld [vmem:[#allocation4] sm:$0x3]
      %v3938 = vlaneseq
      %v3939 = vshrl.u32 %v3938, 7
      %v3940 = vsub.s32 0, %v3939
      %v3941 = vrot.slane %v3936, %v3940
      %v3942 = vlaneseq
      %v3943 = vshrl.u32 %v3942, 7
      %v3944 = vsub.s32 1, %v3943
      %v3945 = vrot.slane %v3936, %v3944
      %v3948 = vpack.c.bf16 %v3941, %v3941
      %v3949 = vpack.c.bf16 %v3945, %v3945
      %v3950 = vld [vmem:[%s5] sm:$0xff]
      %v3951 = vld [vmem:[%s5 + $0x8] sm:$0xff]
      %v3952 = vld [vmem:[%s5 + $0x10] sm:$0xff]
      %v3953 = vld [vmem:[%s5 + $0x18] sm:$0xff]
      %v3954 = vld [vmem:[%s5 + $0x20] sm:$0xff]
      %v3955 = vld [vmem:[%s5 + $0x28] sm:$0xff]
      %v3956 = vld [vmem:[%s5 + $0x30] sm:$0xff]
      %v3957 = vld [vmem:[%s5 + $0x38] sm:$0xff]
      %v3958 = vld [vmem:[%s5 + $0x40] sm:$0xff]
      %v3959 = vld [vmem:[%s5 + $0x48] sm:$0xff]
      %v3960 = vld [vmem:[%s5 + $0x50] sm:$0xff]
      %v3961 = vld [vmem:[%s5 + $0x58] sm:$0xff]
      %v3962 = vld [vmem:[%s5 + $0x60] sm:$0xff]
      %v3963 = vld [vmem:[%s5 + $0x68] sm:$0xff]
      %v3964 = vld [vmem:[%s5 + $0x70] sm:$0xff]
      %v3965 = vld [vmem:[%s5 + $0x78] sm:$0xff]
      %v3966 = vld [vmem:[%s5 + $0x80] sm:$0xff]
      %v3967 = vld [vmem:[%s5 + $0x88] sm:$0xff]
      %v3968 = vld [vmem:[%s5 + $0x90] sm:$0xff]
      %v3969 = vld [vmem:[%s5 + $0x98] sm:$0xff]
      %v3970 = vld [vmem:[%s5 + $0xa0] sm:$0xff]
      %v3971 = vld [vmem:[%s5 + $0xa8] sm:$0xff]
      %v3972 = vld [vmem:[%s5 + $0xb0] sm:$0xff]
      %v3973 = vld [vmem:[%s5 + $0xb8] sm:$0xff]
      %v3974 = vld [vmem:[%s5 + $0xc0] sm:$0xff]
      %v3975 = vld [vmem:[%s5 + $0xc8] sm:$0xff]
      %v3976 = vld [vmem:[%s5 + $0xd0] sm:$0xff]
      %v3977 = vld [vmem:[%s5 + $0xd8] sm:$0xff]
      %v3978 = vld [vmem:[%s5 + $0xe0] sm:$0xff]
      %v3979 = vld [vmem:[%s5 + $0xe8] sm:$0xff]
      %v3980 = vld [vmem:[%s5 + $0xf0] sm:$0xff]
      %v3981 = vld [vmem:[%s5 + $0xf8] sm:$0xff]
      %v3982 = vld [vmem:[%s5 + $0x100] sm:$0xff]
      %v3983 = vld [vmem:[%s5 + $0x108] sm:$0xff]
      %v3984 = vld [vmem:[%s5 + $0x110] sm:$0xff]
      %v3985 = vld [vmem:[%s5 + $0x118] sm:$0xff]
      %v3986 = vld [vmem:[%s5 + $0x120] sm:$0xff]
      %v3987 = vld [vmem:[%s5 + $0x128] sm:$0xff]
      %v3988 = vld [vmem:[%s5 + $0x130] sm:$0xff]
      %v3989 = vld [vmem:[%s5 + $0x138] sm:$0xff]
      %v3990 = vld [vmem:[%s5 + $0x140] sm:$0xff]
      %v3991 = vld [vmem:[%s5 + $0x148] sm:$0xff]
      %v3992 = vld [vmem:[%s5 + $0x150] sm:$0xff]
      %v3993 = vld [vmem:[%s5 + $0x158] sm:$0xff]
      %v3994 = vld [vmem:[%s5 + $0x160] sm:$0xff]
      %v3995 = vld [vmem:[%s5 + $0x168] sm:$0xff]
      %v3996 = vld [vmem:[%s5 + $0x170] sm:$0xff]
      %v3997 = vld [vmem:[%s5 + $0x178] sm:$0xff]
      %v3998 = vld [vmem:[%s5 + $0x180] sm:$0xff]
      %v3999 = vld [vmem:[%s5 + $0x188] sm:$0xff]
      %v4000 = vld [vmem:[%s5 + $0x190] sm:$0xff]
      %v4001 = vld [vmem:[%s5 + $0x198] sm:$0xff]
      %v4002 = vld [vmem:[%s5 + $0x1a0] sm:$0xff]
      %v4003 = vld [vmem:[%s5 + $0x1a8] sm:$0xff]
      %v4004 = vld [vmem:[%s5 + $0x1b0] sm:$0xff]
      %v4005 = vld [vmem:[%s5 + $0x1b8] sm:$0xff]
      %v4006 = vld [vmem:[%s5 + $0x1c0] sm:$0xff]
      %v4007 = vld [vmem:[%s5 + $0x1c8] sm:$0xff]
      %v4008 = vld [vmem:[%s5 + $0x1d0] sm:$0xff]
      %v4009 = vld [vmem:[%s5 + $0x1d8] sm:$0xff]
      %v4010 = vld [vmem:[%s5 + $0x1e0] sm:$0xff]
      %v4011 = vld [vmem:[%s5 + $0x1e8] sm:$0xff]
      %v4012 = vld [vmem:[%s5 + $0x1f0] sm:$0xff]
      %v4013 = vld [vmem:[%s5 + $0x1f8] sm:$0xff]
      %v4014 = vld [vmem:[%s5 + $0x200] sm:$0xff]
      %v4015 = vld [vmem:[%s5 + $0x208] sm:$0xff]
      %v4016 = vld [vmem:[%s5 + $0x210] sm:$0xff]
      %v4017 = vld [vmem:[%s5 + $0x218] sm:$0xff]
      %v4018 = vld [vmem:[%s5 + $0x220] sm:$0xff]
      %v4019 = vld [vmem:[%s5 + $0x228] sm:$0xff]
      %v4020 = vld [vmem:[%s5 + $0x230] sm:$0xff]
      %v4021 = vld [vmem:[%s5 + $0x238] sm:$0xff]
      %v4022 = vld [vmem:[%s5 + $0x240] sm:$0xff]
      %v4023 = vld [vmem:[%s5 + $0x248] sm:$0xff]
      %v4024 = vld [vmem:[%s5 + $0x250] sm:$0xff]
      %v4025 = vld [vmem:[%s5 + $0x258] sm:$0xff]
      %v4026 = vld [vmem:[%s5 + $0x260] sm:$0xff]
      %v4027 = vld [vmem:[%s5 + $0x268] sm:$0xff]
      %v4028 = vld [vmem:[%s5 + $0x270] sm:$0xff]
      %v4029 = vld [vmem:[%s5 + $0x278] sm:$0xff]
      %v4030 = vld [vmem:[%s5 + $0x280] sm:$0xff]
      %v4031 = vld [vmem:[%s5 + $0x288] sm:$0xff]
      %v4032 = vld [vmem:[%s5 + $0x290] sm:$0xff]
      %v4033 = vld [vmem:[%s5 + $0x298] sm:$0xff]
      %v4034 = vld [vmem:[%s5 + $0x2a0] sm:$0xff]
      %v4035 = vld [vmem:[%s5 + $0x2a8] sm:$0xff]
      %v4036 = vld [vmem:[%s5 + $0x2b0] sm:$0xff]
      %v4037 = vld [vmem:[%s5 + $0x2b8] sm:$0xff]
      %v4038 = vld [vmem:[%s5 + $0x2c0] sm:$0xff]
      %v4039 = vld [vmem:[%s5 + $0x2c8] sm:$0xff]
      %v4040 = vld [vmem:[%s5 + $0x2d0] sm:$0xff]
      %v4041 = vld [vmem:[%s5 + $0x2d8] sm:$0xff]
      %v4042 = vld [vmem:[%s5 + $0x2e0] sm:$0xff]
      %v4043 = vld [vmem:[%s5 + $0x2e8] sm:$0xff]
      %v4044 = vld [vmem:[%s5 + $0x2f0] sm:$0xff]
      %v4045 = vld [vmem:[%s5 + $0x2f8] sm:$0xff]
      %v4046 = vld [vmem:[%s5 + $0x300] sm:$0xff]
      %v4047 = vld [vmem:[%s5 + $0x308] sm:$0xff]
      %v4048 = vld [vmem:[%s5 + $0x310] sm:$0xff]
      %v4049 = vld [vmem:[%s5 + $0x318] sm:$0xff]
      %v4050 = vld [vmem:[%s5 + $0x320] sm:$0xff]
      %v4051 = vld [vmem:[%s5 + $0x328] sm:$0xff]
      %v4052 = vld [vmem:[%s5 + $0x330] sm:$0xff]
      %v4053 = vld [vmem:[%s5 + $0x338] sm:$0xff]
      %v4054 = vld [vmem:[%s5 + $0x340] sm:$0xff]
      %v4055 = vld [vmem:[%s5 + $0x348] sm:$0xff]
      %v4056 = vld [vmem:[%s5 + $0x350] sm:$0xff]
      %v4057 = vld [vmem:[%s5 + $0x358] sm:$0xff]
      %v4058 = vld [vmem:[%s5 + $0x360] sm:$0xff]
      %v4059 = vld [vmem:[%s5 + $0x368] sm:$0xff]
      %v4060 = vld [vmem:[%s5 + $0x370] sm:$0xff]
      %v4061 = vld [vmem:[%s5 + $0x378] sm:$0xff]
      %v4062 = vld [vmem:[%s5 + $0x380] sm:$0xff]
      %v4063 = vld [vmem:[%s5 + $0x388] sm:$0xff]
      %v4064 = vld [vmem:[%s5 + $0x390] sm:$0xff]
      %v4065 = vld [vmem:[%s5 + $0x398] sm:$0xff]
      %v4066 = vld [vmem:[%s5 + $0x3a0] sm:$0xff]
      %v4067 = vld [vmem:[%s5 + $0x3a8] sm:$0xff]
      %v4068 = vld [vmem:[%s5 + $0x3b0] sm:$0xff]
      %v4069 = vld [vmem:[%s5 + $0x3b8] sm:$0xff]
      %v4070 = vld [vmem:[%s5 + $0x3c0] sm:$0xff]
      %v4071 = vld [vmem:[%s5 + $0x3c8] sm:$0xff]
      %v4072 = vld [vmem:[%s5 + $0x3d0] sm:$0xff]
      %v4073 = vld [vmem:[%s5 + $0x3d8] sm:$0xff]
      %v4074 = vld [vmem:[%s5 + $0x3e0] sm:$0xff]
      %v4075 = vld [vmem:[%s5 + $0x3e8] sm:$0xff]
      %v4076 = vld [vmem:[%s5 + $0x3f0] sm:$0xff]
      %v4077 = vld [vmem:[%s5 + $0x3f8] sm:$0xff]
      %v4206 = vunpack.c.l.b16 %v3950
      %v4207 = vunpack.c.h.b16 %v3950
      %v4208 = vunpack.c.l.b16 %v3951
      %v4209 = vunpack.c.h.b16 %v3951
      %v4210 = vunpack.c.l.b16 %v3952
      %v4211 = vunpack.c.h.b16 %v3952
      %v4212 = vunpack.c.l.b16 %v3953
      %v4213 = vunpack.c.h.b16 %v3953
      %v4214 = vunpack.c.l.b16 %v3954
      %v4215 = vunpack.c.h.b16 %v3954
      %v4216 = vunpack.c.l.b16 %v3955
      %v4217 = vunpack.c.h.b16 %v3955
      %v4218 = vunpack.c.l.b16 %v3956
      %v4219 = vunpack.c.h.b16 %v3956
      %v4220 = vunpack.c.l.b16 %v3957
      %v4221 = vunpack.c.h.b16 %v3957
      %v4222 = vunpack.c.l.b16 %v3958
      %v4223 = vunpack.c.h.b16 %v3958
      %v4224 = vunpack.c.l.b16 %v3959
      %v4225 = vunpack.c.h.b16 %v3959
      %v4226 = vunpack.c.l.b16 %v3960
      %v4227 = vunpack.c.h.b16 %v3960
      %v4228 = vunpack.c.l.b16 %v3961
      %v4229 = vunpack.c.h.b16 %v3961
      %v4230 = vunpack.c.l.b16 %v3962
      %v4231 = vunpack.c.h.b16 %v3962
      %v4232 = vunpack.c.l.b16 %v3963
      %v4233 = vunpack.c.h.b16 %v3963
      %v4234 = vunpack.c.l.b16 %v3964
      %v4235 = vunpack.c.h.b16 %v3964
      %v4236 = vunpack.c.l.b16 %v3965
      %v4237 = vunpack.c.h.b16 %v3965
      %v4238 = vunpack.c.l.b16 %v3966
      %v4239 = vunpack.c.h.b16 %v3966
      %v4240 = vunpack.c.l.b16 %v3967
      %v4241 = vunpack.c.h.b16 %v3967
      %v4242 = vunpack.c.l.b16 %v3968
      %v4243 = vunpack.c.h.b16 %v3968
      %v4244 = vunpack.c.l.b16 %v3969
      %v4245 = vunpack.c.h.b16 %v3969
      %v4246 = vunpack.c.l.b16 %v3970
      %v4247 = vunpack.c.h.b16 %v3970
      %v4248 = vunpack.c.l.b16 %v3971
      %v4249 = vunpack.c.h.b16 %v3971
      %v4250 = vunpack.c.l.b16 %v3972
      %v4251 = vunpack.c.h.b16 %v3972
      %v4252 = vunpack.c.l.b16 %v3973
      %v4253 = vunpack.c.h.b16 %v3973
      %v4254 = vunpack.c.l.b16 %v3974
      %v4255 = vunpack.c.h.b16 %v3974
      %v4256 = vunpack.c.l.b16 %v3975
      %v4257 = vunpack.c.h.b16 %v3975
      %v4258 = vunpack.c.l.b16 %v3976
      %v4259 = vunpack.c.h.b16 %v3976
      %v4260 = vunpack.c.l.b16 %v3977
      %v4261 = vunpack.c.h.b16 %v3977
      %v4262 = vunpack.c.l.b16 %v3978
      %v4263 = vunpack.c.h.b16 %v3978
      %v4264 = vunpack.c.l.b16 %v3979
      %v4265 = vunpack.c.h.b16 %v3979
      %v4266 = vunpack.c.l.b16 %v3980
      %v4267 = vunpack.c.h.b16 %v3980
      %v4268 = vunpack.c.l.b16 %v3981
      %v4269 = vunpack.c.h.b16 %v3981
      %v4270 = vunpack.c.l.b16 %v3982
      %v4271 = vunpack.c.h.b16 %v3982
      %v4272 = vunpack.c.l.b16 %v3983
      %v4273 = vunpack.c.h.b16 %v3983
      %v4274 = vunpack.c.l.b16 %v3984
      %v4275 = vunpack.c.h.b16 %v3984
      %v4276 = vunpack.c.l.b16 %v3985
      %v4277 = vunpack.c.h.b16 %v3985
      %v4278 = vunpack.c.l.b16 %v3986
      %v4279 = vunpack.c.h.b16 %v3986
      %v4280 = vunpack.c.l.b16 %v3987
      %v4281 = vunpack.c.h.b16 %v3987
      %v4282 = vunpack.c.l.b16 %v3988
      %v4283 = vunpack.c.h.b16 %v3988
      %v4284 = vunpack.c.l.b16 %v3989
      %v4285 = vunpack.c.h.b16 %v3989
      %v4286 = vunpack.c.l.b16 %v3990
      %v4287 = vunpack.c.h.b16 %v3990
      %v4288 = vunpack.c.l.b16 %v3991
      %v4289 = vunpack.c.h.b16 %v3991
      %v4290 = vunpack.c.l.b16 %v3992
      %v4291 = vunpack.c.h.b16 %v3992
      %v4292 = vunpack.c.l.b16 %v3993
      %v4293 = vunpack.c.h.b16 %v3993
      %v4294 = vunpack.c.l.b16 %v3994
      %v4295 = vunpack.c.h.b16 %v3994
      %v4296 = vunpack.c.l.b16 %v3995
      %v4297 = vunpack.c.h.b16 %v3995
      %v4298 = vunpack.c.l.b16 %v3996
      %v4299 = vunpack.c.h.b16 %v3996
      %v4300 = vunpack.c.l.b16 %v3997
      %v4301 = vunpack.c.h.b16 %v3997
      %v4302 = vunpack.c.l.b16 %v3998
      %v4303 = vunpack.c.h.b16 %v3998
      %v4304 = vunpack.c.l.b16 %v3999
      %v4305 = vunpack.c.h.b16 %v3999
      %v4306 = vunpack.c.l.b16 %v4000
      %v4307 = vunpack.c.h.b16 %v4000
      %v4308 = vunpack.c.l.b16 %v4001
      %v4309 = vunpack.c.h.b16 %v4001
      %v4310 = vunpack.c.l.b16 %v4002
      %v4311 = vunpack.c.h.b16 %v4002
      %v4312 = vunpack.c.l.b16 %v4003
      %v4313 = vunpack.c.h.b16 %v4003
      %v4314 = vunpack.c.l.b16 %v4004
      %v4315 = vunpack.c.h.b16 %v4004
      %v4316 = vunpack.c.l.b16 %v4005
      %v4317 = vunpack.c.h.b16 %v4005
      %v4318 = vunpack.c.l.b16 %v4006
      %v4319 = vunpack.c.h.b16 %v4006
      %v4320 = vunpack.c.l.b16 %v4007
      %v4321 = vunpack.c.h.b16 %v4007
      %v4322 = vunpack.c.l.b16 %v4008
      %v4323 = vunpack.c.h.b16 %v4008
      %v4324 = vunpack.c.l.b16 %v4009
      %v4325 = vunpack.c.h.b16 %v4009
      %v4326 = vunpack.c.l.b16 %v4010
      %v4327 = vunpack.c.h.b16 %v4010
      %v4328 = vunpack.c.l.b16 %v4011
      %v4329 = vunpack.c.h.b16 %v4011
      %v4330 = vunpack.c.l.b16 %v4012
      %v4331 = vunpack.c.h.b16 %v4012
      %v4332 = vunpack.c.l.b16 %v4013
      %v4333 = vunpack.c.h.b16 %v4013
      %v4334 = vunpack.c.l.b16 %v4014
      %v4335 = vunpack.c.h.b16 %v4014
      %v4336 = vunpack.c.l.b16 %v4015
      %v4337 = vunpack.c.h.b16 %v4015
      %v4338 = vunpack.c.l.b16 %v4016
      %v4339 = vunpack.c.h.b16 %v4016
      %v4340 = vunpack.c.l.b16 %v4017
      %v4341 = vunpack.c.h.b16 %v4017
      %v4342 = vunpack.c.l.b16 %v4018
      %v4343 = vunpack.c.h.b16 %v4018
      %v4344 = vunpack.c.l.b16 %v4019
      %v4345 = vunpack.c.h.b16 %v4019
      %v4346 = vunpack.c.l.b16 %v4020
      %v4347 = vunpack.c.h.b16 %v4020
      %v4348 = vunpack.c.l.b16 %v4021
      %v4349 = vunpack.c.h.b16 %v4021
      %v4350 = vunpack.c.l.b16 %v4022
      %v4351 = vunpack.c.h.b16 %v4022
      %v4352 = vunpack.c.l.b16 %v4023
      %v4353 = vunpack.c.h.b16 %v4023
      %v4354 = vunpack.c.l.b16 %v4024
      %v4355 = vunpack.c.h.b16 %v4024
      %v4356 = vunpack.c.l.b16 %v4025
      %v4357 = vunpack.c.h.b16 %v4025
      %v4358 = vunpack.c.l.b16 %v4026
      %v4359 = vunpack.c.h.b16 %v4026
      %v4360 = vunpack.c.l.b16 %v4027
      %v4361 = vunpack.c.h.b16 %v4027
      %v4362 = vunpack.c.l.b16 %v4028
      %v4363 = vunpack.c.h.b16 %v4028
      %v4364 = vunpack.c.l.b16 %v4029
      %v4365 = vunpack.c.h.b16 %v4029
      %v4366 = vunpack.c.l.b16 %v4030
      %v4367 = vunpack.c.h.b16 %v4030
      %v4368 = vunpack.c.l.b16 %v4031
      %v4369 = vunpack.c.h.b16 %v4031
      %v4370 = vunpack.c.l.b16 %v4032
      %v4371 = vunpack.c.h.b16 %v4032
      %v4372 = vunpack.c.l.b16 %v4033
      %v4373 = vunpack.c.h.b16 %v4033
      %v4374 = vunpack.c.l.b16 %v4034
      %v4375 = vunpack.c.h.b16 %v4034
      %v4376 = vunpack.c.l.b16 %v4035
      %v4377 = vunpack.c.h.b16 %v4035
      %v4378 = vunpack.c.l.b16 %v4036
      %v4379 = vunpack.c.h.b16 %v4036
      %v4380 = vunpack.c.l.b16 %v4037
      %v4381 = vunpack.c.h.b16 %v4037
      %v4382 = vunpack.c.l.b16 %v4038
      %v4383 = vunpack.c.h.b16 %v4038
      %v4384 = vunpack.c.l.b16 %v4039
      %v4385 = vunpack.c.h.b16 %v4039
      %v4386 = vunpack.c.l.b16 %v4040
      %v4387 = vunpack.c.h.b16 %v4040
      %v4388 = vunpack.c.l.b16 %v4041
      %v4389 = vunpack.c.h.b16 %v4041
      %v4390 = vunpack.c.l.b16 %v4042
      %v4391 = vunpack.c.h.b16 %v4042
      %v4392 = vunpack.c.l.b16 %v4043
      %v4393 = vunpack.c.h.b16 %v4043
      %v4394 = vunpack.c.l.b16 %v4044
      %v4395 = vunpack.c.h.b16 %v4044
      %v4396 = vunpack.c.l.b16 %v4045
      %v4397 = vunpack.c.h.b16 %v4045
      %v4398 = vunpack.c.l.b16 %v4046
      %v4399 = vunpack.c.h.b16 %v4046
      %v4400 = vunpack.c.l.b16 %v4047
      %v4401 = vunpack.c.h.b16 %v4047
      %v4402 = vunpack.c.l.b16 %v4048
      %v4403 = vunpack.c.h.b16 %v4048
      %v4404 = vunpack.c.l.b16 %v4049
      %v4405 = vunpack.c.h.b16 %v4049
      %v4406 = vunpack.c.l.b16 %v4050
      %v4407 = vunpack.c.h.b16 %v4050
      %v4408 = vunpack.c.l.b16 %v4051
      %v4409 = vunpack.c.h.b16 %v4051
      %v4410 = vunpack.c.l.b16 %v4052
      %v4411 = vunpack.c.h.b16 %v4052
      %v4412 = vunpack.c.l.b16 %v4053
      %v4413 = vunpack.c.h.b16 %v4053
      %v4414 = vunpack.c.l.b16 %v4054
      %v4415 = vunpack.c.h.b16 %v4054
      %v4416 = vunpack.c.l.b16 %v4055
      %v4417 = vunpack.c.h.b16 %v4055
      %v4418 = vunpack.c.l.b16 %v4056
      %v4419 = vunpack.c.h.b16 %v4056
      %v4420 = vunpack.c.l.b16 %v4057
      %v4421 = vunpack.c.h.b16 %v4057
      %v4422 = vunpack.c.l.b16 %v4058
      %v4423 = vunpack.c.h.b16 %v4058
      %v4424 = vunpack.c.l.b16 %v4059
      %v4425 = vunpack.c.h.b16 %v4059
      %v4426 = vunpack.c.l.b16 %v4060
      %v4427 = vunpack.c.h.b16 %v4060
      %v4428 = vunpack.c.l.b16 %v4061
      %v4429 = vunpack.c.h.b16 %v4061
      %v4430 = vunpack.c.l.b16 %v4062
      %v4431 = vunpack.c.h.b16 %v4062
      %v4432 = vunpack.c.l.b16 %v4063
      %v4433 = vunpack.c.h.b16 %v4063
      %v4434 = vunpack.c.l.b16 %v4064
      %v4435 = vunpack.c.h.b16 %v4064
      %v4436 = vunpack.c.l.b16 %v4065
      %v4437 = vunpack.c.h.b16 %v4065
      %v4438 = vunpack.c.l.b16 %v4066
      %v4439 = vunpack.c.h.b16 %v4066
      %v4440 = vunpack.c.l.b16 %v4067
      %v4441 = vunpack.c.h.b16 %v4067
      %v4442 = vunpack.c.l.b16 %v4068
      %v4443 = vunpack.c.h.b16 %v4068
      %v4444 = vunpack.c.l.b16 %v4069
      %v4445 = vunpack.c.h.b16 %v4069
      %v4446 = vunpack.c.l.b16 %v4070
      %v4447 = vunpack.c.h.b16 %v4070
      %v4448 = vunpack.c.l.b16 %v4071
      %v4449 = vunpack.c.h.b16 %v4071
      %v4450 = vunpack.c.l.b16 %v4072
      %v4451 = vunpack.c.h.b16 %v4072
      %v4452 = vunpack.c.l.b16 %v4073
      %v4453 = vunpack.c.h.b16 %v4073
      %v4454 = vunpack.c.l.b16 %v4074
      %v4455 = vunpack.c.h.b16 %v4074
      %v4456 = vunpack.c.l.b16 %v4075
      %v4457 = vunpack.c.h.b16 %v4075
      %v4458 = vunpack.c.l.b16 %v4076
      %v4459 = vunpack.c.h.b16 %v4076
      %v4460 = vunpack.c.l.b16 %v4077
      %v4461 = vunpack.c.h.b16 %v4077
      %v4462 = vpack.c.b16 %v4214, %v4206
      %v4463 = vpack.c.b16 %v4215, %v4207
      %v4464 = vpack.c.b16 %v4216, %v4208
      %v4465 = vpack.c.b16 %v4217, %v4209
      %v4466 = vpack.c.b16 %v4218, %v4210
      %v4467 = vpack.c.b16 %v4219, %v4211
      %v4468 = vpack.c.b16 %v4220, %v4212
      %v4469 = vpack.c.b16 %v4221, %v4213
      %v4470 = vpack.c.b16 %v4230, %v4222
      %v4471 = vpack.c.b16 %v4231, %v4223
      %v4472 = vpack.c.b16 %v4232, %v4224
      %v4473 = vpack.c.b16 %v4233, %v4225
      %v4474 = vpack.c.b16 %v4234, %v4226
      %v4475 = vpack.c.b16 %v4235, %v4227
      %v4476 = vpack.c.b16 %v4236, %v4228
      %v4477 = vpack.c.b16 %v4237, %v4229
      %v4478 = vpack.c.b16 %v4246, %v4238
      %v4479 = vpack.c.b16 %v4247, %v4239
      %v4480 = vpack.c.b16 %v4248, %v4240
      %v4481 = vpack.c.b16 %v4249, %v4241
      %v4482 = vpack.c.b16 %v4250, %v4242
      %v4483 = vpack.c.b16 %v4251, %v4243
      %v4484 = vpack.c.b16 %v4252, %v4244
      %v4485 = vpack.c.b16 %v4253, %v4245
      %v4486 = vpack.c.b16 %v4262, %v4254
      %v4487 = vpack.c.b16 %v4263, %v4255
      %v4488 = vpack.c.b16 %v4264, %v4256
      %v4489 = vpack.c.b16 %v4265, %v4257
      %v4490 = vpack.c.b16 %v4266, %v4258
      %v4491 = vpack.c.b16 %v4267, %v4259
      %v4492 = vpack.c.b16 %v4268, %v4260
      %v4493 = vpack.c.b16 %v4269, %v4261
      %v4494 = vpack.c.b16 %v4278, %v4270
      %v4495 = vpack.c.b16 %v4279, %v4271
      %v4496 = vpack.c.b16 %v4280, %v4272
      %v4497 = vpack.c.b16 %v4281, %v4273
      %v4498 = vpack.c.b16 %v4282, %v4274
      %v4499 = vpack.c.b16 %v4283, %v4275
      %v4500 = vpack.c.b16 %v4284, %v4276
      %v4501 = vpack.c.b16 %v4285, %v4277
      %v4502 = vpack.c.b16 %v4294, %v4286
      %v4503 = vpack.c.b16 %v4295, %v4287
      %v4504 = vpack.c.b16 %v4296, %v4288
      %v4505 = vpack.c.b16 %v4297, %v4289
      %v4506 = vpack.c.b16 %v4298, %v4290
      %v4507 = vpack.c.b16 %v4299, %v4291
      %v4508 = vpack.c.b16 %v4300, %v4292
      %v4509 = vpack.c.b16 %v4301, %v4293
      %v4510 = vpack.c.b16 %v4310, %v4302
      %v4511 = vpack.c.b16 %v4311, %v4303
      %v4512 = vpack.c.b16 %v4312, %v4304
      %v4513 = vpack.c.b16 %v4313, %v4305
      %v4514 = vpack.c.b16 %v4314, %v4306
      %v4515 = vpack.c.b16 %v4315, %v4307
      %v4516 = vpack.c.b16 %v4316, %v4308
      %v4517 = vpack.c.b16 %v4317, %v4309
      %v4518 = vpack.c.b16 %v4326, %v4318
      %v4519 = vpack.c.b16 %v4327, %v4319
      %v4520 = vpack.c.b16 %v4328, %v4320
      %v4521 = vpack.c.b16 %v4329, %v4321
      %v4522 = vpack.c.b16 %v4330, %v4322
      %v4523 = vpack.c.b16 %v4331, %v4323
      %v4524 = vpack.c.b16 %v4332, %v4324
      %v4525 = vpack.c.b16 %v4333, %v4325
      %v4526 = vpack.c.b16 %v4342, %v4334
      %v4527 = vpack.c.b16 %v4343, %v4335
      %v4528 = vpack.c.b16 %v4344, %v4336
      %v4529 = vpack.c.b16 %v4345, %v4337
      %v4530 = vpack.c.b16 %v4346, %v4338
      %v4531 = vpack.c.b16 %v4347, %v4339
      %v4532 = vpack.c.b16 %v4348, %v4340
      %v4533 = vpack.c.b16 %v4349, %v4341
      %v4534 = vpack.c.b16 %v4358, %v4350
      %v4535 = vpack.c.b16 %v4359, %v4351
      %v4536 = vpack.c.b16 %v4360, %v4352
      %v4537 = vpack.c.b16 %v4361, %v4353
      %v4538 = vpack.c.b16 %v4362, %v4354
      %v4539 = vpack.c.b16 %v4363, %v4355
      %v4540 = vpack.c.b16 %v4364, %v4356
      %v4541 = vpack.c.b16 %v4365, %v4357
      %v4542 = vpack.c.b16 %v4374, %v4366
      %v4543 = vpack.c.b16 %v4375, %v4367
      %v4544 = vpack.c.b16 %v4376, %v4368
      %v4545 = vpack.c.b16 %v4377, %v4369
      %v4546 = vpack.c.b16 %v4378, %v4370
      %v4547 = vpack.c.b16 %v4379, %v4371
      %v4548 = vpack.c.b16 %v4380, %v4372
      %v4549 = vpack.c.b16 %v4381, %v4373
      %v4550 = vpack.c.b16 %v4390, %v4382
      %v4551 = vpack.c.b16 %v4391, %v4383
      %v4552 = vpack.c.b16 %v4392, %v4384
      %v4553 = vpack.c.b16 %v4393, %v4385
      %v4554 = vpack.c.b16 %v4394, %v4386
      %v4555 = vpack.c.b16 %v4395, %v4387
      %v4556 = vpack.c.b16 %v4396, %v4388
      %v4557 = vpack.c.b16 %v4397, %v4389
      %v4558 = vpack.c.b16 %v4406, %v4398
      %v4559 = vpack.c.b16 %v4407, %v4399
      %v4560 = vpack.c.b16 %v4408, %v4400
      %v4561 = vpack.c.b16 %v4409, %v4401
      %v4562 = vpack.c.b16 %v4410, %v4402
      %v4563 = vpack.c.b16 %v4411, %v4403
      %v4564 = vpack.c.b16 %v4412, %v4404
      %v4565 = vpack.c.b16 %v4413, %v4405
      %v4566 = vpack.c.b16 %v4422, %v4414
      %v4567 = vpack.c.b16 %v4423, %v4415
      %v4568 = vpack.c.b16 %v4424, %v4416
      %v4569 = vpack.c.b16 %v4425, %v4417
      %v4570 = vpack.c.b16 %v4426, %v4418
      %v4571 = vpack.c.b16 %v4427, %v4419
      %v4572 = vpack.c.b16 %v4428, %v4420
      %v4573 = vpack.c.b16 %v4429, %v4421
      %v4574 = vpack.c.b16 %v4438, %v4430
      %v4575 = vpack.c.b16 %v4439, %v4431
      %v4576 = vpack.c.b16 %v4440, %v4432
      %v4577 = vpack.c.b16 %v4441, %v4433
      %v4578 = vpack.c.b16 %v4442, %v4434
      %v4579 = vpack.c.b16 %v4443, %v4435
      %v4580 = vpack.c.b16 %v4444, %v4436
      %v4581 = vpack.c.b16 %v4445, %v4437
      %v4582 = vpack.c.b16 %v4454, %v4446
      %v4583 = vpack.c.b16 %v4455, %v4447
      %v4584 = vpack.c.b16 %v4456, %v4448
      %v4585 = vpack.c.b16 %v4457, %v4449
      %v4586 = vpack.c.b16 %v4458, %v4450
      %v4587 = vpack.c.b16 %v4459, %v4451
      %v4588 = vpack.c.b16 %v4460, %v4452
      %v4589 = vpack.c.b16 %v4461, %v4453
      %4718 = vmatprep.subr.bf16.mxu0 %v4463
      %4719 = vmatpush1.bf16.msra.mxu0 %v4462
      %4720 = vmatprep.subr.bf16.mxu0 %v4471
      %4721 = vmatpush1.bf16.msra.mxu0 %v4470
      %4722 = vmatprep.subr.bf16.mxu0 %v4479
      %4723 = vmatpush1.bf16.msra.mxu0 %v4478
      %4724 = vmatprep.subr.bf16.mxu0 %v4487
      %4725 = vmatpush1.bf16.msra.mxu0 %v4486
      %4726 = vmatprep.subr.bf16.mxu0 %v4495
      %4727 = vmatpush1.bf16.msra.mxu0 %v4494
      %4728 = vmatprep.subr.bf16.mxu0 %v4503
      %4729 = vmatpush1.bf16.msra.mxu0 %v4502
      %4730 = vmatprep.subr.bf16.mxu0 %v4511
      %4731 = vmatpush1.bf16.msra.mxu0 %v4510
      %4732 = vmatprep.subr.bf16.mxu0 %v4519
      %4733 = vmatpush1.bf16.msra.mxu0 %v4518
      %4734 = vmatprep.subr.bf16.mxu0 %v4527
      %4735 = vmatpush1.bf16.msra.mxu0 %v4526
      %4736 = vmatprep.subr.bf16.mxu0 %v4535
      %4737 = vmatpush1.bf16.msra.mxu0 %v4534
      %4738 = vmatprep.subr.bf16.mxu0 %v4543
      %4739 = vmatpush1.bf16.msra.mxu0 %v4542
      %4740 = vmatprep.subr.bf16.mxu0 %v4551
      %4741 = vmatpush1.bf16.msra.mxu0 %v4550
      %4742 = vmatprep.subr.bf16.mxu0 %v4559
      %4743 = vmatpush1.bf16.msra.mxu0 %v4558
      %4744 = vmatprep.subr.bf16.mxu0 %v4567
      %4745 = vmatpush1.bf16.msra.mxu0 %v4566
      %4746 = vmatprep.subr.bf16.mxu0 %v4575
      %4747 = vmatpush1.bf16.msra.mxu0 %v4574
      %4748 = vmatprep.subr.bf16.mxu0 %v4583
      %4749 = vmatpush1.bf16.msra.mxu0 %v4582
      %4750 = vmatprep.mubr.bf16.mxu0 %v3949
      %4751 = vmatmul.mubr.bf16.gmra.mrb[0].mxu0 %v3948
      %v4752 = vpop.f32.mrb[0].mxu0
      %v4753 = vadd.f32 0.0, %v4752
      %v4754 = vpop.f32.mrb[0].mxu0
      %v4755 = vadd.f32 0.0, %v4754
      %v4756 = vpop.f32.mrb[0].mxu0
      %v4757 = vpop.f32.mrb[0].mxu0
      %4758 = vdwg.mxu0
      %4759 = vmatprep.subr.bf16.mxu0 %v4465
      %4760 = vmatpush1.bf16.msra.mxu0 %v4464
      %4761 = vmatprep.subr.bf16.mxu0 %v4473
      %4762 = vmatpush1.bf16.msra.mxu0 %v4472
      %4763 = vmatprep.subr.bf16.mxu0 %v4481
      %4764 = vmatpush1.bf16.msra.mxu0 %v4480
      %4765 = vmatprep.subr.bf16.mxu0 %v4489
      %4766 = vmatpush1.bf16.msra.mxu0 %v4488
      %4767 = vmatprep.subr.bf16.mxu0 %v4497
      %4768 = vmatpush1.bf16.msra.mxu0 %v4496
      %4769 = vmatprep.subr.bf16.mxu0 %v4505
      %4770 = vmatpush1.bf16.msra.mxu0 %v4504
      %4771 = vmatprep.subr.bf16.mxu0 %v4513
      %4772 = vmatpush1.bf16.msra.mxu0 %v4512
      %4773 = vmatprep.subr.bf16.mxu0 %v4521
      %4774 = vmatpush1.bf16.msra.mxu0 %v4520
      %4775 = vmatprep.subr.bf16.mxu0 %v4529
      %4776 = vmatpush1.bf16.msra.mxu0 %v4528
      %4777 = vmatprep.subr.bf16.mxu0 %v4537
      %4778 = vmatpush1.bf16.msra.mxu0 %v4536
      %4779 = vmatprep.subr.bf16.mxu0 %v4545
      %4780 = vmatpush1.bf16.msra.mxu0 %v4544
      %4781 = vmatprep.subr.bf16.mxu0 %v4553
      %4782 = vmatpush1.bf16.msra.mxu0 %v4552
      %4783 = vmatprep.subr.bf16.mxu0 %v4561
      %4784 = vmatpush1.bf16.msra.mxu0 %v4560
      %4785 = vmatprep.subr.bf16.mxu0 %v4569
      %4786 = vmatpush1.bf16.msra.mxu0 %v4568
      %4787 = vmatprep.subr.bf16.mxu0 %v4577
      %4788 = vmatpush1.bf16.msra.mxu0 %v4576
      %4789 = vmatprep.subr.bf16.mxu0 %v4585
      %4790 = vmatpush1.bf16.msra.mxu0 %v4584
      %4791 = vmatprep.mubr.bf16.mxu0 %v3949
      %4792 = vmatmul.mubr.bf16.gmra.mrb[0].mxu0 %v3948
      %v4793 = vpop.f32.mrb[0].mxu0
      %v4794 = vadd.f32 0.0, %v4793
      %v4795 = vpop.f32.mrb[0].mxu0
      %v4796 = vadd.f32 0.0, %v4795
      %v4797 = vpop.f32.mrb[0].mxu0
      %v4798 = vpop.f32.mrb[0].mxu0
      %4799 = vdwg.mxu0
      %4800 = vmatprep.subr.bf16.mxu0 %v4467
      %4801 = vmatpush1.bf16.msra.mxu0 %v4466
      %4802 = vmatprep.subr.bf16.mxu0 %v4475
      %4803 = vmatpush1.bf16.msra.mxu0 %v4474
      %4804 = vmatprep.subr.bf16.mxu0 %v4483
      %4805 = vmatpush1.bf16.msra.mxu0 %v4482
      %4806 = vmatprep.subr.bf16.mxu0 %v4491
      %4807 = vmatpush1.bf16.msra.mxu0 %v4490
      %4808 = vmatprep.subr.bf16.mxu0 %v4499
      %4809 = vmatpush1.bf16.msra.mxu0 %v4498
      %4810 = vmatprep.subr.bf16.mxu0 %v4507
      %4811 = vmatpush1.bf16.msra.mxu0 %v4506
      %4812 = vmatprep.subr.bf16.mxu0 %v4515
      %4813 = vmatpush1.bf16.msra.mxu0 %v4514
      %4814 = vmatprep.subr.bf16.mxu0 %v4523
      %4815 = vmatpush1.bf16.msra.mxu0 %v4522
      %4816 = vmatprep.subr.bf16.mxu0 %v4531
      %4817 = vmatpush1.bf16.msra.mxu0 %v4530
      %4818 = vmatprep.subr.bf16.mxu0 %v4539
      %4819 = vmatpush1.bf16.msra.mxu0 %v4538
      %4820 = vmatprep.subr.bf16.mxu0 %v4547
      %4821 = vmatpush1.bf16.msra.mxu0 %v4546
      %4822 = vmatprep.subr.bf16.mxu0 %v4555
      %4823 = vmatpush1.bf16.msra.mxu0 %v4554
      %4824 = vmatprep.subr.bf16.mxu0 %v4563
      %4825 = vmatpush1.bf16.msra.mxu0 %v4562
      %4826 = vmatprep.subr.bf16.mxu0 %v4571
      %4827 = vmatpush1.bf16.msra.mxu0 %v4570
      %4828 = vmatprep.subr.bf16.mxu0 %v4579
      %4829 = vmatpush1.bf16.msra.mxu0 %v4578
      %4830 = vmatprep.subr.bf16.mxu0 %v4587
      %4831 = vmatpush1.bf16.msra.mxu0 %v4586
      %4832 = vmatprep.mubr.bf16.mxu0 %v3949
      %4833 = vmatmul.mubr.bf16.gmra.mrb[0].mxu0 %v3948
      %v4834 = vpop.f32.mrb[0].mxu0
      %v4835 = vadd.f32 0.0, %v4834
      %v4836 = vpop.f32.mrb[0].mxu0
      %v4837 = vadd.f32 0.0, %v4836
      %v4838 = vpop.f32.mrb[0].mxu0
      %v4839 = vpop.f32.mrb[0].mxu0
      %4840 = vdwg.mxu0
      %4841 = vmatprep.subr.bf16.mxu0 %v4469
      %4842 = vmatpush1.bf16.msra.mxu0 %v4468
      %4843 = vmatprep.subr.bf16.mxu0 %v4477
      %4844 = vmatpush1.bf16.msra.mxu0 %v4476
      %4845 = vmatprep.subr.bf16.mxu0 %v4485
      %4846 = vmatpush1.bf16.msra.mxu0 %v4484
      %4847 = vmatprep.subr.bf16.mxu0 %v4493
      %4848 = vmatpush1.bf16.msra.mxu0 %v4492
      %4849 = vmatprep.subr.bf16.mxu0 %v4501
      %4850 = vmatpush1.bf16.msra.mxu0 %v4500
      %4851 = vmatprep.subr.bf16.mxu0 %v4509
      %4852 = vmatpush1.bf16.msra.mxu0 %v4508
      %4853 = vmatprep.subr.bf16.mxu0 %v4517
      %4854 = vmatpush1.bf16.msra.mxu0 %v4516
      %4855 = vmatprep.subr.bf16.mxu0 %v4525
      %4856 = vmatpush1.bf16.msra.mxu0 %v4524
      %4857 = vmatprep.subr.bf16.mxu0 %v4533
      %4858 = vmatpush1.bf16.msra.mxu0 %v4532
      %4859 = vmatprep.subr.bf16.mxu0 %v4541
      %4860 = vmatpush1.bf16.msra.mxu0 %v4540
      %4861 = vmatprep.subr.bf16.mxu0 %v4549
      %4862 = vmatpush1.bf16.msra.mxu0 %v4548
      %4863 = vmatprep.subr.bf16.mxu0 %v4557
      %4864 = vmatpush1.bf16.msra.mxu0 %v4556
      %4865 = vmatprep.subr.bf16.mxu0 %v4565
      %4866 = vmatpush1.bf16.msra.mxu0 %v4564
      %4867 = vmatprep.subr.bf16.mxu0 %v4573
      %4868 = vmatpush1.bf16.msra.mxu0 %v4572
      %4869 = vmatprep.subr.bf16.mxu0 %v4581
      %4870 = vmatpush1.bf16.msra.mxu0 %v4580
      %4871 = vmatprep.subr.bf16.mxu0 %v4589
      %4872 = vmatpush1.bf16.msra.mxu0 %v4588
      %4873 = vmatprep.mubr.bf16.mxu0 %v3949
      %4874 = vmatmul.mubr.bf16.gmra.mrb[0].mxu0 %v3948
      %v4875 = vpop.f32.mrb[0].mxu0
      %v4876 = vadd.f32 0.0, %v4875
      %v4877 = vpop.f32.mrb[0].mxu0
      %v4878 = vadd.f32 0.0, %v4877
      %v4879 = vpop.f32.mrb[0].mxu0
      %v4880 = vpop.f32.mrb[0].mxu0
      %4881 = vdwg.mxu0
      %v4890 = vcombine.low %v4753, %v4755
      %v4891 = vcombine.low %v4794, %v4796
      %v4892 = vcombine.low %v4835, %v4837
      %v4893 = vcombine.low %v4876, %v4878
      %v4895 = vunpack.c.l.s4 1966171168
      %v4896 = vunpack.c.0.s8 %v4895
      %v4897 = vlaneseq
      %v4898 = vshrl.u32 %v4897, 7
      %v4899 = vsub.s32 %v4896, %v4898
      %v4900 = vrot.slane %v4890, %v4899
      %v4902 = vunpack.c.l.s4 1966171168
      %v4903 = vunpack.c.0.s8 %v4902
      %v4904 = vlaneseq
      %v4905 = vshrl.u32 %v4904, 7
      %v4906 = vsub.s32 %v4903, %v4905
      %v4907 = vrot.slane %v4891, %v4906
      %v4909 = vunpack.c.l.s4 1966171168
      %v4910 = vunpack.c.0.s8 %v4909
      %v4911 = vlaneseq
      %v4912 = vshrl.u32 %v4911, 7
      %v4913 = vsub.s32 %v4910, %v4912
      %v4914 = vrot.slane %v4892, %v4913
      %v4916 = vunpack.c.l.s4 1966171168
      %v4917 = vunpack.c.0.s8 %v4916
      %v4918 = vlaneseq
      %v4919 = vshrl.u32 %v4918, 7
      %v4920 = vsub.s32 %v4917, %v4919
      %v4921 = vrot.slane %v4893, %v4920
      %v4922 = vcombine.low %v4900, %v4907
      %v4923 = vcombine.low %v4914, %v4921
      %v4925 = vunpack.c.l.s4 1966171168
      %v4926 = vunpack.c.0.s8 %v4925
      %v4927 = vlaneseq
      %v4928 = vshrl.u32 %v4927, 7
      %v4929 = vsub.s32 %v4926, %v4928
      %v4930 = vrot.slane %v4922, %v4929
      %v4932 = vunpack.c.l.s4 1966171168
      %v4933 = vunpack.c.0.s8 %v4932
      %v4934 = vlaneseq
      %v4935 = vshrl.u32 %v4934, 7
      %v4936 = vsub.s32 %v4933, %v4935
      %v4937 = vrot.slane %v4923, %v4936
      %v4938 = vcombine.low %v4930, %v4937
      %v4940 = vadd.f32 %v3935, %v4938
      %s4941 = ssub.s32 3, %s3922
      %s4942 = sshra.s32 %s4941, 2
      %s4943 = sand.u32 %s4941, 3
      %s4944 = sshra.s32 %s4941, 2
      %s4945 = sand.u32 %s4941, 3
      %s4946 = smul.u32 %s4942, 8
      %s4947 = smul.u32 %s4946, 4
      %s4948 = sadd.s32 %s4947, %s4945
      %s4949 = scalar_lea.vmem [#allocation3], %s4948
      %v4950 = vld [vmem:[%s4949] ss:$4 sm:$0xff]
      %v4951 = vld [vmem:[#allocation6] sm:$0x3]
      %v4953 = vlaneseq
      %v4954 = vshrl.u32 %v4953, 7
      %v4955 = vsub.s32 0, %v4954
      %v4956 = vrot.slane %v4951, %v4955
      %v4957 = vlaneseq
      %v4958 = vshrl.u32 %v4957, 7
      %v4959 = vsub.s32 1, %v4958
      %v4960 = vrot.slane %v4951, %v4959
      %v4963 = vpack.c.bf16 %v4956, %v4956
      %v4964 = vpack.c.bf16 %v4960, %v4960
      %v4965 = vld [vmem:[#allocation8] sm:$0xff]
      %v4966 = vld [vmem:[#allocation8 + $0x8] sm:$0xff]
      %v4967 = vld [vmem:[#allocation8 + $0x10] sm:$0xff]
      %v4968 = vld [vmem:[#allocation8 + $0x18] sm:$0xff]
      %v4969 = vld [vmem:[#allocation8 + $0x20] sm:$0xff]
      %v4970 = vld [vmem:[#allocation8 + $0x28] sm:$0xff]
      %v4971 = vld [vmem:[#allocation8 + $0x30] sm:$0xff]
      %v4972 = vld [vmem:[#allocation8 + $0x38] sm:$0xff]
      %v4973 = vld [vmem:[#allocation8 + $0x40] sm:$0xff]
      %v4974 = vld [vmem:[#allocation8 + $0x48] sm:$0xff]
      %v4975 = vld [vmem:[#allocation8 + $0x50] sm:$0xff]
      %v4976 = vld [vmem:[#allocation8 + $0x58] sm:$0xff]
      %v4977 = vld [vmem:[#allocation8 + $0x60] sm:$0xff]
      %v4978 = vld [vmem:[#allocation8 + $0x68] sm:$0xff]
      %v4979 = vld [vmem:[#allocation8 + $0x70] sm:$0xff]
      %v4980 = vld [vmem:[#allocation8 + $0x78] sm:$0xff]
      %v4981 = vld [vmem:[#allocation8 + $0x80] sm:$0xff]
      %v4982 = vld [vmem:[#allocation8 + $0x88] sm:$0xff]
      %v4983 = vld [vmem:[#allocation8 + $0x90] sm:$0xff]
      %v4984 = vld [vmem:[#allocation8 + $0x98] sm:$0xff]
      %v4985 = vld [vmem:[#allocation8 + $0xa0] sm:$0xff]
      %v4986 = vld [vmem:[#allocation8 + $0xa8] sm:$0xff]
      %v4987 = vld [vmem:[#allocation8 + $0xb0] sm:$0xff]
      %v4988 = vld [vmem:[#allocation8 + $0xb8] sm:$0xff]
      %v4989 = vld [vmem:[#allocation8 + $0xc0] sm:$0xff]
      %v4990 = vld [vmem:[#allocation8 + $0xc8] sm:$0xff]
      %v4991 = vld [vmem:[#allocation8 + $0xd0] sm:$0xff]
      %v4992 = vld [vmem:[#allocation8 + $0xd8] sm:$0xff]
      %v4993 = vld [vmem:[#allocation8 + $0xe0] sm:$0xff]
      %v4994 = vld [vmem:[#allocation8 + $0xe8] sm:$0xff]
      %v4995 = vld [vmem:[#allocation8 + $0xf0] sm:$0xff]
      %v4996 = vld [vmem:[#allocation8 + $0xf8] sm:$0xff]
      %v4997 = vld [vmem:[#allocation8 + $0x100] sm:$0xff]
      %v4998 = vld [vmem:[#allocation8 + $0x108] sm:$0xff]
      %v4999 = vld [vmem:[#allocation8 + $0x110] sm:$0xff]
      %v5000 = vld [vmem:[#allocation8 + $0x118] sm:$0xff]
      %v5001 = vld [vmem:[#allocation8 + $0x120] sm:$0xff]
      %v5002 = vld [vmem:[#allocation8 + $0x128] sm:$0xff]
      %v5003 = vld [vmem:[#allocation8 + $0x130] sm:$0xff]
      %v5004 = vld [vmem:[#allocation8 + $0x138] sm:$0xff]
      %v5005 = vld [vmem:[#allocation8 + $0x140] sm:$0xff]
      %v5006 = vld [vmem:[#allocation8 + $0x148] sm:$0xff]
      %v5007 = vld [vmem:[#allocation8 + $0x150] sm:$0xff]
      %v5008 = vld [vmem:[#allocation8 + $0x158] sm:$0xff]
      %v5009 = vld [vmem:[#allocation8 + $0x160] sm:$0xff]
      %v5010 = vld [vmem:[#allocation8 + $0x168] sm:$0xff]
      %v5011 = vld [vmem:[#allocation8 + $0x170] sm:$0xff]
      %v5012 = vld [vmem:[#allocation8 + $0x178] sm:$0xff]
      %v5013 = vld [vmem:[#allocation8 + $0x180] sm:$0xff]
      %v5014 = vld [vmem:[#allocation8 + $0x188] sm:$0xff]
      %v5015 = vld [vmem:[#allocation8 + $0x190] sm:$0xff]
      %v5016 = vld [vmem:[#allocation8 + $0x198] sm:$0xff]
      %v5017 = vld [vmem:[#allocation8 + $0x1a0] sm:$0xff]
      %v5018 = vld [vmem:[#allocation8 + $0x1a8] sm:$0xff]
      %v5019 = vld [vmem:[#allocation8 + $0x1b0] sm:$0xff]
      %v5020 = vld [vmem:[#allocation8 + $0x1b8] sm:$0xff]
      %v5021 = vld [vmem:[#allocation8 + $0x1c0] sm:$0xff]
      %v5022 = vld [vmem:[#allocation8 + $0x1c8] sm:$0xff]
      %v5023 = vld [vmem:[#allocation8 + $0x1d0] sm:$0xff]
      %v5024 = vld [vmem:[#allocation8 + $0x1d8] sm:$0xff]
      %v5025 = vld [vmem:[#allocation8 + $0x1e0] sm:$0xff]
      %v5026 = vld [vmem:[#allocation8 + $0x1e8] sm:$0xff]
      %v5027 = vld [vmem:[#allocation8 + $0x1f0] sm:$0xff]
      %v5028 = vld [vmem:[#allocation8 + $0x1f8] sm:$0xff]
      %v5029 = vld [vmem:[#allocation8 + $0x200] sm:$0xff]
      %v5030 = vld [vmem:[#allocation8 + $0x208] sm:$0xff]
      %v5031 = vld [vmem:[#allocation8 + $0x210] sm:$0xff]
      %v5032 = vld [vmem:[#allocation8 + $0x218] sm:$0xff]
      %v5033 = vld [vmem:[#allocation8 + $0x220] sm:$0xff]
      %v5034 = vld [vmem:[#allocation8 + $0x228] sm:$0xff]
      %v5035 = vld [vmem:[#allocation8 + $0x230] sm:$0xff]
      %v5036 = vld [vmem:[#allocation8 + $0x238] sm:$0xff]
      %v5037 = vld [vmem:[#allocation8 + $0x240] sm:$0xff]
      %v5038 = vld [vmem:[#allocation8 + $0x248] sm:$0xff]
      %v5039 = vld [vmem:[#allocation8 + $0x250] sm:$0xff]
      %v5040 = vld [vmem:[#allocation8 + $0x258] sm:$0xff]
      %v5041 = vld [vmem:[#allocation8 + $0x260] sm:$0xff]
      %v5042 = vld [vmem:[#allocation8 + $0x268] sm:$0xff]
      %v5043 = vld [vmem:[#allocation8 + $0x270] sm:$0xff]
      %v5044 = vld [vmem:[#allocation8 + $0x278] sm:$0xff]
      %v5045 = vld [vmem:[#allocation8 + $0x280] sm:$0xff]
      %v5046 = vld [vmem:[#allocation8 + $0x288] sm:$0xff]
      %v5047 = vld [vmem:[#allocation8 + $0x290] sm:$0xff]
      %v5048 = vld [vmem:[#allocation8 + $0x298] sm:$0xff]
      %v5049 = vld [vmem:[#allocation8 + $0x2a0] sm:$0xff]
      %v5050 = vld [vmem:[#allocation8 + $0x2a8] sm:$0xff]
      %v5051 = vld [vmem:[#allocation8 + $0x2b0] sm:$0xff]
      %v5052 = vld [vmem:[#allocation8 + $0x2b8] sm:$0xff]
      %v5053 = vld [vmem:[#allocation8 + $0x2c0] sm:$0xff]
      %v5054 = vld [vmem:[#allocation8 + $0x2c8] sm:$0xff]
      %v5055 = vld [vmem:[#allocation8 + $0x2d0] sm:$0xff]
      %v5056 = vld [vmem:[#allocation8 + $0x2d8] sm:$0xff]
      %v5057 = vld [vmem:[#allocation8 + $0x2e0] sm:$0xff]
      %v5058 = vld [vmem:[#allocation8 + $0x2e8] sm:$0xff]
      %v5059 = vld [vmem:[#allocation8 + $0x2f0] sm:$0xff]
      %v5060 = vld [vmem:[#allocation8 + $0x2f8] sm:$0xff]
      %v5061 = vld [vmem:[#allocation8 + $0x300] sm:$0xff]
      %v5062 = vld [vmem:[#allocation8 + $0x308] sm:$0xff]
      %v5063 = vld [vmem:[#allocation8 + $0x310] sm:$0xff]
      %v5064 = vld [vmem:[#allocation8 + $0x318] sm:$0xff]
      %v5065 = vld [vmem:[#allocation8 + $0x320] sm:$0xff]
      %v5066 = vld [vmem:[#allocation8 + $0x328] sm:$0xff]
      %v5067 = vld [vmem:[#allocation8 + $0x330] sm:$0xff]
      %v5068 = vld [vmem:[#allocation8 + $0x338] sm:$0xff]
      %v5069 = vld [vmem:[#allocation8 + $0x340] sm:$0xff]
      %v5070 = vld [vmem:[#allocation8 + $0x348] sm:$0xff]
      %v5071 = vld [vmem:[#allocation8 + $0x350] sm:$0xff]
      %v5072 = vld [vmem:[#allocation8 + $0x358] sm:$0xff]
      %v5073 = vld [vmem:[#allocation8 + $0x360] sm:$0xff]
      %v5074 = vld [vmem:[#allocation8 + $0x368] sm:$0xff]
      %v5075 = vld [vmem:[#allocation8 + $0x370] sm:$0xff]
      %v5076 = vld [vmem:[#allocation8 + $0x378] sm:$0xff]
      %v5077 = vld [vmem:[#allocation8 + $0x380] sm:$0xff]
      %v5078 = vld [vmem:[#allocation8 + $0x388] sm:$0xff]
      %v5079 = vld [vmem:[#allocation8 + $0x390] sm:$0xff]
      %v5080 = vld [vmem:[#allocation8 + $0x398] sm:$0xff]
      %v5081 = vld [vmem:[#allocation8 + $0x3a0] sm:$0xff]
      %v5082 = vld [vmem:[#allocation8 + $0x3a8] sm:$0xff]
      %v5083 = vld [vmem:[#allocation8 + $0x3b0] sm:$0xff]
      %v5084 = vld [vmem:[#allocation8 + $0x3b8] sm:$0xff]
      %v5085 = vld [vmem:[#allocation8 + $0x3c0] sm:$0xff]
      %v5086 = vld [vmem:[#allocation8 + $0x3c8] sm:$0xff]
      %v5087 = vld [vmem:[#allocation8 + $0x3d0] sm:$0xff]
      %v5088 = vld [vmem:[#allocation8 + $0x3d8] sm:$0xff]
      %v5089 = vld [vmem:[#allocation8 + $0x3e0] sm:$0xff]
      %v5090 = vld [vmem:[#allocation8 + $0x3e8] sm:$0xff]
      %v5091 = vld [vmem:[#allocation8 + $0x3f0] sm:$0xff]
      %v5092 = vld [vmem:[#allocation8 + $0x3f8] sm:$0xff]
      %v5221 = vunpack.c.l.b16 %v4965
      %v5222 = vunpack.c.h.b16 %v4965
      %v5223 = vunpack.c.l.b16 %v4966
      %v5224 = vunpack.c.h.b16 %v4966
      %v5225 = vunpack.c.l.b16 %v4967
      %v5226 = vunpack.c.h.b16 %v4967
      %v5227 = vunpack.c.l.b16 %v4968
      %v5228 = vunpack.c.h.b16 %v4968
      %v5229 = vunpack.c.l.b16 %v4969
      %v5230 = vunpack.c.h.b16 %v4969
      %v5231 = vunpack.c.l.b16 %v4970
      %v5232 = vunpack.c.h.b16 %v4970
      %v5233 = vunpack.c.l.b16 %v4971
      %v5234 = vunpack.c.h.b16 %v4971
      %v5235 = vunpack.c.l.b16 %v4972
      %v5236 = vunpack.c.h.b16 %v4972
      %v5237 = vunpack.c.l.b16 %v4973
      %v5238 = vunpack.c.h.b16 %v4973
      %v5239 = vunpack.c.l.b16 %v4974
      %v5240 = vunpack.c.h.b16 %v4974
      %v5241 = vunpack.c.l.b16 %v4975
      %v5242 = vunpack.c.h.b16 %v4975
      %v5243 = vunpack.c.l.b16 %v4976
      %v5244 = vunpack.c.h.b16 %v4976
      %v5245 = vunpack.c.l.b16 %v4977
      %v5246 = vunpack.c.h.b16 %v4977
      %v5247 = vunpack.c.l.b16 %v4978
      %v5248 = vunpack.c.h.b16 %v4978
      %v5249 = vunpack.c.l.b16 %v4979
      %v5250 = vunpack.c.h.b16 %v4979
      %v5251 = vunpack.c.l.b16 %v4980
      %v5252 = vunpack.c.h.b16 %v4980
      %v5253 = vunpack.c.l.b16 %v4981
      %v5254 = vunpack.c.h.b16 %v4981
      %v5255 = vunpack.c.l.b16 %v4982
      %v5256 = vunpack.c.h.b16 %v4982
      %v5257 = vunpack.c.l.b16 %v4983
      %v5258 = vunpack.c.h.b16 %v4983
      %v5259 = vunpack.c.l.b16 %v4984
      %v5260 = vunpack.c.h.b16 %v4984
      %v5261 = vunpack.c.l.b16 %v4985
      %v5262 = vunpack.c.h.b16 %v4985
      %v5263 = vunpack.c.l.b16 %v4986
      %v5264 = vunpack.c.h.b16 %v4986
      %v5265 = vunpack.c.l.b16 %v4987
      %v5266 = vunpack.c.h.b16 %v4987
      %v5267 = vunpack.c.l.b16 %v4988
      %v5268 = vunpack.c.h.b16 %v4988
      %v5269 = vunpack.c.l.b16 %v4989
      %v5270 = vunpack.c.h.b16 %v4989
      %v5271 = vunpack.c.l.b16 %v4990
      %v5272 = vunpack.c.h.b16 %v4990
      %v5273 = vunpack.c.l.b16 %v4991
      %v5274 = vunpack.c.h.b16 %v4991
      %v5275 = vunpack.c.l.b16 %v4992
      %v5276 = vunpack.c.h.b16 %v4992
      %v5277 = vunpack.c.l.b16 %v4993
      %v5278 = vunpack.c.h.b16 %v4993
      %v5279 = vunpack.c.l.b16 %v4994
      %v5280 = vunpack.c.h.b16 %v4994
      %v5281 = vunpack.c.l.b16 %v4995
      %v5282 = vunpack.c.h.b16 %v4995
      %v5283 = vunpack.c.l.b16 %v4996
      %v5284 = vunpack.c.h.b16 %v4996
      %v5285 = vunpack.c.l.b16 %v4997
      %v5286 = vunpack.c.h.b16 %v4997
      %v5287 = vunpack.c.l.b16 %v4998
      %v5288 = vunpack.c.h.b16 %v4998
      %v5289 = vunpack.c.l.b16 %v4999
      %v5290 = vunpack.c.h.b16 %v4999
      %v5291 = vunpack.c.l.b16 %v5000
      %v5292 = vunpack.c.h.b16 %v5000
      %v5293 = vunpack.c.l.b16 %v5001
      %v5294 = vunpack.c.h.b16 %v5001
      %v5295 = vunpack.c.l.b16 %v5002
      %v5296 = vunpack.c.h.b16 %v5002
      %v5297 = vunpack.c.l.b16 %v5003
      %v5298 = vunpack.c.h.b16 %v5003
      %v5299 = vunpack.c.l.b16 %v5004
      %v5300 = vunpack.c.h.b16 %v5004
      %v5301 = vunpack.c.l.b16 %v5005
      %v5302 = vunpack.c.h.b16 %v5005
      %v5303 = vunpack.c.l.b16 %v5006
      %v5304 = vunpack.c.h.b16 %v5006
      %v5305 = vunpack.c.l.b16 %v5007
      %v5306 = vunpack.c.h.b16 %v5007
      %v5307 = vunpack.c.l.b16 %v5008
      %v5308 = vunpack.c.h.b16 %v5008
      %v5309 = vunpack.c.l.b16 %v5009
      %v5310 = vunpack.c.h.b16 %v5009
      %v5311 = vunpack.c.l.b16 %v5010
      %v5312 = vunpack.c.h.b16 %v5010
      %v5313 = vunpack.c.l.b16 %v5011
      %v5314 = vunpack.c.h.b16 %v5011
      %v5315 = vunpack.c.l.b16 %v5012
      %v5316 = vunpack.c.h.b16 %v5012
      %v5317 = vunpack.c.l.b16 %v5013
      %v5318 = vunpack.c.h.b16 %v5013
      %v5319 = vunpack.c.l.b16 %v5014
      %v5320 = vunpack.c.h.b16 %v5014
      %v5321 = vunpack.c.l.b16 %v5015
      %v5322 = vunpack.c.h.b16 %v5015
      %v5323 = vunpack.c.l.b16 %v5016
      %v5324 = vunpack.c.h.b16 %v5016
      %v5325 = vunpack.c.l.b16 %v5017
      %v5326 = vunpack.c.h.b16 %v5017
      %v5327 = vunpack.c.l.b16 %v5018
      %v5328 = vunpack.c.h.b16 %v5018
      %v5329 = vunpack.c.l.b16 %v5019
      %v5330 = vunpack.c.h.b16 %v5019
      %v5331 = vunpack.c.l.b16 %v5020
      %v5332 = vunpack.c.h.b16 %v5020
      %v5333 = vunpack.c.l.b16 %v5021
      %v5334 = vunpack.c.h.b16 %v5021
      %v5335 = vunpack.c.l.b16 %v5022
      %v5336 = vunpack.c.h.b16 %v5022
      %v5337 = vunpack.c.l.b16 %v5023
      %v5338 = vunpack.c.h.b16 %v5023
      %v5339 = vunpack.c.l.b16 %v5024
      %v5340 = vunpack.c.h.b16 %v5024
      %v5341 = vunpack.c.l.b16 %v5025
      %v5342 = vunpack.c.h.b16 %v5025
      %v5343 = vunpack.c.l.b16 %v5026
      %v5344 = vunpack.c.h.b16 %v5026
      %v5345 = vunpack.c.l.b16 %v5027
      %v5346 = vunpack.c.h.b16 %v5027
      %v5347 = vunpack.c.l.b16 %v5028
      %v5348 = vunpack.c.h.b16 %v5028
      %v5349 = vunpack.c.l.b16 %v5029
      %v5350 = vunpack.c.h.b16 %v5029
      %v5351 = vunpack.c.l.b16 %v5030
      %v5352 = vunpack.c.h.b16 %v5030
      %v5353 = vunpack.c.l.b16 %v5031
      %v5354 = vunpack.c.h.b16 %v5031
      %v5355 = vunpack.c.l.b16 %v5032
      %v5356 = vunpack.c.h.b16 %v5032
      %v5357 = vunpack.c.l.b16 %v5033
      %v5358 = vunpack.c.h.b16 %v5033
      %v5359 = vunpack.c.l.b16 %v5034
      %v5360 = vunpack.c.h.b16 %v5034
      %v5361 = vunpack.c.l.b16 %v5035
      %v5362 = vunpack.c.h.b16 %v5035
      %v5363 = vunpack.c.l.b16 %v5036
      %v5364 = vunpack.c.h.b16 %v5036
      %v5365 = vunpack.c.l.b16 %v5037
      %v5366 = vunpack.c.h.b16 %v5037
      %v5367 = vunpack.c.l.b16 %v5038
      %v5368 = vunpack.c.h.b16 %v5038
      %v5369 = vunpack.c.l.b16 %v5039
      %v5370 = vunpack.c.h.b16 %v5039
      %v5371 = vunpack.c.l.b16 %v5040
      %v5372 = vunpack.c.h.b16 %v5040
      %v5373 = vunpack.c.l.b16 %v5041
      %v5374 = vunpack.c.h.b16 %v5041
      %v5375 = vunpack.c.l.b16 %v5042
      %v5376 = vunpack.c.h.b16 %v5042
      %v5377 = vunpack.c.l.b16 %v5043
      %v5378 = vunpack.c.h.b16 %v5043
      %v5379 = vunpack.c.l.b16 %v5044
      %v5380 = vunpack.c.h.b16 %v5044
      %v5381 = vunpack.c.l.b16 %v5045
      %v5382 = vunpack.c.h.b16 %v5045
      %v5383 = vunpack.c.l.b16 %v5046
      %v5384 = vunpack.c.h.b16 %v5046
      %v5385 = vunpack.c.l.b16 %v5047
      %v5386 = vunpack.c.h.b16 %v5047
      %v5387 = vunpack.c.l.b16 %v5048
      %v5388 = vunpack.c.h.b16 %v5048
      %v5389 = vunpack.c.l.b16 %v5049
      %v5390 = vunpack.c.h.b16 %v5049
      %v5391 = vunpack.c.l.b16 %v5050
      %v5392 = vunpack.c.h.b16 %v5050
      %v5393 = vunpack.c.l.b16 %v5051
      %v5394 = vunpack.c.h.b16 %v5051
      %v5395 = vunpack.c.l.b16 %v5052
      %v5396 = vunpack.c.h.b16 %v5052
      %v5397 = vunpack.c.l.b16 %v5053
      %v5398 = vunpack.c.h.b16 %v5053
      %v5399 = vunpack.c.l.b16 %v5054
      %v5400 = vunpack.c.h.b16 %v5054
      %v5401 = vunpack.c.l.b16 %v5055
      %v5402 = vunpack.c.h.b16 %v5055
      %v5403 = vunpack.c.l.b16 %v5056
      %v5404 = vunpack.c.h.b16 %v5056
      %v5405 = vunpack.c.l.b16 %v5057
      %v5406 = vunpack.c.h.b16 %v5057
      %v5407 = vunpack.c.l.b16 %v5058
      %v5408 = vunpack.c.h.b16 %v5058
      %v5409 = vunpack.c.l.b16 %v5059
      %v5410 = vunpack.c.h.b16 %v5059
      %v5411 = vunpack.c.l.b16 %v5060
      %v5412 = vunpack.c.h.b16 %v5060
      %v5413 = vunpack.c.l.b16 %v5061
      %v5414 = vunpack.c.h.b16 %v5061
      %v5415 = vunpack.c.l.b16 %v5062
      %v5416 = vunpack.c.h.b16 %v5062
      %v5417 = vunpack.c.l.b16 %v5063
      %v5418 = vunpack.c.h.b16 %v5063
      %v5419 = vunpack.c.l.b16 %v5064
      %v5420 = vunpack.c.h.b16 %v5064
      %v5421 = vunpack.c.l.b16 %v5065
      %v5422 = vunpack.c.h.b16 %v5065
      %v5423 = vunpack.c.l.b16 %v5066
      %v5424 = vunpack.c.h.b16 %v5066
      %v5425 = vunpack.c.l.b16 %v5067
      %v5426 = vunpack.c.h.b16 %v5067
      %v5427 = vunpack.c.l.b16 %v5068
      %v5428 = vunpack.c.h.b16 %v5068
      %v5429 = vunpack.c.l.b16 %v5069
      %v5430 = vunpack.c.h.b16 %v5069
      %v5431 = vunpack.c.l.b16 %v5070
      %v5432 = vunpack.c.h.b16 %v5070
      %v5433 = vunpack.c.l.b16 %v5071
      %v5434 = vunpack.c.h.b16 %v5071
      %v5435 = vunpack.c.l.b16 %v5072
      %v5436 = vunpack.c.h.b16 %v5072
      %v5437 = vunpack.c.l.b16 %v5073
      %v5438 = vunpack.c.h.b16 %v5073
      %v5439 = vunpack.c.l.b16 %v5074
      %v5440 = vunpack.c.h.b16 %v5074
      %v5441 = vunpack.c.l.b16 %v5075
      %v5442 = vunpack.c.h.b16 %v5075
      %v5443 = vunpack.c.l.b16 %v5076
      %v5444 = vunpack.c.h.b16 %v5076
      %v5445 = vunpack.c.l.b16 %v5077
      %v5446 = vunpack.c.h.b16 %v5077
      %v5447 = vunpack.c.l.b16 %v5078
      %v5448 = vunpack.c.h.b16 %v5078
      %v5449 = vunpack.c.l.b16 %v5079
      %v5450 = vunpack.c.h.b16 %v5079
      %v5451 = vunpack.c.l.b16 %v5080
      %v5452 = vunpack.c.h.b16 %v5080
      %v5453 = vunpack.c.l.b16 %v5081
      %v5454 = vunpack.c.h.b16 %v5081
      %v5455 = vunpack.c.l.b16 %v5082
      %v5456 = vunpack.c.h.b16 %v5082
      %v5457 = vunpack.c.l.b16 %v5083
      %v5458 = vunpack.c.h.b16 %v5083
      %v5459 = vunpack.c.l.b16 %v5084
      %v5460 = vunpack.c.h.b16 %v5084
      %v5461 = vunpack.c.l.b16 %v5085
      %v5462 = vunpack.c.h.b16 %v5085
      %v5463 = vunpack.c.l.b16 %v5086
      %v5464 = vunpack.c.h.b16 %v5086
      %v5465 = vunpack.c.l.b16 %v5087
      %v5466 = vunpack.c.h.b16 %v5087
      %v5467 = vunpack.c.l.b16 %v5088
      %v5468 = vunpack.c.h.b16 %v5088
      %v5469 = vunpack.c.l.b16 %v5089
      %v5470 = vunpack.c.h.b16 %v5089
      %v5471 = vunpack.c.l.b16 %v5090
      %v5472 = vunpack.c.h.b16 %v5090
      %v5473 = vunpack.c.l.b16 %v5091
      %v5474 = vunpack.c.h.b16 %v5091
      %v5475 = vunpack.c.l.b16 %v5092
      %v5476 = vunpack.c.h.b16 %v5092
      %v5477 = vpack.c.b16 %v5229, %v5221
      %v5478 = vpack.c.b16 %v5230, %v5222
      %v5479 = vpack.c.b16 %v5231, %v5223
      %v5480 = vpack.c.b16 %v5232, %v5224
      %v5481 = vpack.c.b16 %v5233, %v5225
      %v5482 = vpack.c.b16 %v5234, %v5226
      %v5483 = vpack.c.b16 %v5235, %v5227
      %v5484 = vpack.c.b16 %v5236, %v5228
      %v5485 = vpack.c.b16 %v5245, %v5237
      %v5486 = vpack.c.b16 %v5246, %v5238
      %v5487 = vpack.c.b16 %v5247, %v5239
      %v5488 = vpack.c.b16 %v5248, %v5240
      %v5489 = vpack.c.b16 %v5249, %v5241
      %v5490 = vpack.c.b16 %v5250, %v5242
      %v5491 = vpack.c.b16 %v5251, %v5243
      %v5492 = vpack.c.b16 %v5252, %v5244
      %v5493 = vpack.c.b16 %v5261, %v5253
      %v5494 = vpack.c.b16 %v5262, %v5254
      %v5495 = vpack.c.b16 %v5263, %v5255
      %v5496 = vpack.c.b16 %v5264, %v5256
      %v5497 = vpack.c.b16 %v5265, %v5257
      %v5498 = vpack.c.b16 %v5266, %v5258
      %v5499 = vpack.c.b16 %v5267, %v5259
      %v5500 = vpack.c.b16 %v5268, %v5260
      %v5501 = vpack.c.b16 %v5277, %v5269
      %v5502 = vpack.c.b16 %v5278, %v5270
      %v5503 = vpack.c.b16 %v5279, %v5271
      %v5504 = vpack.c.b16 %v5280, %v5272
      %v5505 = vpack.c.b16 %v5281, %v5273
      %v5506 = vpack.c.b16 %v5282, %v5274
      %v5507 = vpack.c.b16 %v5283, %v5275
      %v5508 = vpack.c.b16 %v5284, %v5276
      %v5509 = vpack.c.b16 %v5293, %v5285
      %v5510 = vpack.c.b16 %v5294, %v5286
      %v5511 = vpack.c.b16 %v5295, %v5287
      %v5512 = vpack.c.b16 %v5296, %v5288
      %v5513 = vpack.c.b16 %v5297, %v5289
      %v5514 = vpack.c.b16 %v5298, %v5290
      %v5515 = vpack.c.b16 %v5299, %v5291
      %v5516 = vpack.c.b16 %v5300, %v5292
      %v5517 = vpack.c.b16 %v5309, %v5301
      %v5518 = vpack.c.b16 %v5310, %v5302
      %v5519 = vpack.c.b16 %v5311, %v5303
      %v5520 = vpack.c.b16 %v5312, %v5304
      %v5521 = vpack.c.b16 %v5313, %v5305
      %v5522 = vpack.c.b16 %v5314, %v5306
      %v5523 = vpack.c.b16 %v5315, %v5307
      %v5524 = vpack.c.b16 %v5316, %v5308
      %v5525 = vpack.c.b16 %v5325, %v5317
      %v5526 = vpack.c.b16 %v5326, %v5318
      %v5527 = vpack.c.b16 %v5327, %v5319
      %v5528 = vpack.c.b16 %v5328, %v5320
      %v5529 = vpack.c.b16 %v5329, %v5321
      %v5530 = vpack.c.b16 %v5330, %v5322
      %v5531 = vpack.c.b16 %v5331, %v5323
      %v5532 = vpack.c.b16 %v5332, %v5324
      %v5533 = vpack.c.b16 %v5341, %v5333
      %v5534 = vpack.c.b16 %v5342, %v5334
      %v5535 = vpack.c.b16 %v5343, %v5335
      %v5536 = vpack.c.b16 %v5344, %v5336
      %v5537 = vpack.c.b16 %v5345, %v5337
      %v5538 = vpack.c.b16 %v5346, %v5338
      %v5539 = vpack.c.b16 %v5347, %v5339
      %v5540 = vpack.c.b16 %v5348, %v5340
      %v5541 = vpack.c.b16 %v5357, %v5349
      %v5542 = vpack.c.b16 %v5358, %v5350
      %v5543 = vpack.c.b16 %v5359, %v5351
      %v5544 = vpack.c.b16 %v5360, %v5352
      %v5545 = vpack.c.b16 %v5361, %v5353
      %v5546 = vpack.c.b16 %v5362, %v5354
      %v5547 = vpack.c.b16 %v5363, %v5355
      %v5548 = vpack.c.b16 %v5364, %v5356
      %v5549 = vpack.c.b16 %v5373, %v5365
      %v5550 = vpack.c.b16 %v5374, %v5366
      %v5551 = vpack.c.b16 %v5375, %v5367
      %v5552 = vpack.c.b16 %v5376, %v5368
      %v5553 = vpack.c.b16 %v5377, %v5369
      %v5554 = vpack.c.b16 %v5378, %v5370
      %v5555 = vpack.c.b16 %v5379, %v5371
      %v5556 = vpack.c.b16 %v5380, %v5372
      %v5557 = vpack.c.b16 %v5389, %v5381
      %v5558 = vpack.c.b16 %v5390, %v5382
      %v5559 = vpack.c.b16 %v5391, %v5383
      %v5560 = vpack.c.b16 %v5392, %v5384
      %v5561 = vpack.c.b16 %v5393, %v5385
      %v5562 = vpack.c.b16 %v5394, %v5386
      %v5563 = vpack.c.b16 %v5395, %v5387
      %v5564 = vpack.c.b16 %v5396, %v5388
      %v5565 = vpack.c.b16 %v5405, %v5397
      %v5566 = vpack.c.b16 %v5406, %v5398
      %v5567 = vpack.c.b16 %v5407, %v5399
      %v5568 = vpack.c.b16 %v5408, %v5400
      %v5569 = vpack.c.b16 %v5409, %v5401
      %v5570 = vpack.c.b16 %v5410, %v5402
      %v5571 = vpack.c.b16 %v5411, %v5403
      %v5572 = vpack.c.b16 %v5412, %v5404
      %v5573 = vpack.c.b16 %v5421, %v5413
      %v5574 = vpack.c.b16 %v5422, %v5414
      %v5575 = vpack.c.b16 %v5423, %v5415
      %v5576 = vpack.c.b16 %v5424, %v5416
      %v5577 = vpack.c.b16 %v5425, %v5417
      %v5578 = vpack.c.b16 %v5426, %v5418
      %v5579 = vpack.c.b16 %v5427, %v5419
      %v5580 = vpack.c.b16 %v5428, %v5420
      %v5581 = vpack.c.b16 %v5437, %v5429
      %v5582 = vpack.c.b16 %v5438, %v5430
      %v5583 = vpack.c.b16 %v5439, %v5431
      %v5584 = vpack.c.b16 %v5440, %v5432
      %v5585 = vpack.c.b16 %v5441, %v5433
      %v5586 = vpack.c.b16 %v5442, %v5434
      %v5587 = vpack.c.b16 %v5443, %v5435
      %v5588 = vpack.c.b16 %v5444, %v5436
      %v5589 = vpack.c.b16 %v5453, %v5445
      %v5590 = vpack.c.b16 %v5454, %v5446
      %v5591 = vpack.c.b16 %v5455, %v5447
      %v5592 = vpack.c.b16 %v5456, %v5448
      %v5593 = vpack.c.b16 %v5457, %v5449
      %v5594 = vpack.c.b16 %v5458, %v5450
      %v5595 = vpack.c.b16 %v5459, %v5451
      %v5596 = vpack.c.b16 %v5460, %v5452
      %v5597 = vpack.c.b16 %v5469, %v5461
      %v5598 = vpack.c.b16 %v5470, %v5462
      %v5599 = vpack.c.b16 %v5471, %v5463
      %v5600 = vpack.c.b16 %v5472, %v5464
      %v5601 = vpack.c.b16 %v5473, %v5465
      %v5602 = vpack.c.b16 %v5474, %v5466
      %v5603 = vpack.c.b16 %v5475, %v5467
      %v5604 = vpack.c.b16 %v5476, %v5468
      %5733 = vmatprep.subr.bf16.mxu0 %v5478
      %5734 = vmatpush1.bf16.msra.mxu0 %v5477
      %5735 = vmatprep.subr.bf16.mxu0 %v5486
      %5736 = vmatpush1.bf16.msra.mxu0 %v5485
      %5737 = vmatprep.subr.bf16.mxu0 %v5494
      %5738 = vmatpush1.bf16.msra.mxu0 %v5493
      %5739 = vmatprep.subr.bf16.mxu0 %v5502
      %5740 = vmatpush1.bf16.msra.mxu0 %v5501
      %5741 = vmatprep.subr.bf16.mxu0 %v5510
      %5742 = vmatpush1.bf16.msra.mxu0 %v5509
      %5743 = vmatprep.subr.bf16.mxu0 %v5518
      %5744 = vmatpush1.bf16.msra.mxu0 %v5517
      %5745 = vmatprep.subr.bf16.mxu0 %v5526
      %5746 = vmatpush1.bf16.msra.mxu0 %v5525
      %5747 = vmatprep.subr.bf16.mxu0 %v5534
      %5748 = vmatpush1.bf16.msra.mxu0 %v5533
      %5749 = vmatprep.subr.bf16.mxu0 %v5542
      %5750 = vmatpush1.bf16.msra.mxu0 %v5541
      %5751 = vmatprep.subr.bf16.mxu0 %v5550
      %5752 = vmatpush1.bf16.msra.mxu0 %v5549
      %5753 = vmatprep.subr.bf16.mxu0 %v5558
      %5754 = vmatpush1.bf16.msra.mxu0 %v5557
      %5755 = vmatprep.subr.bf16.mxu0 %v5566
      %5756 = vmatpush1.bf16.msra.mxu0 %v5565
      %5757 = vmatprep.subr.bf16.mxu0 %v5574
      %5758 = vmatpush1.bf16.msra.mxu0 %v5573
      %5759 = vmatprep.subr.bf16.mxu0 %v5582
      %5760 = vmatpush1.bf16.msra.mxu0 %v5581
      %5761 = vmatprep.subr.bf16.mxu0 %v5590
      %5762 = vmatpush1.bf16.msra.mxu0 %v5589
      %5763 = vmatprep.subr.bf16.mxu0 %v5598
      %5764 = vmatpush1.bf16.msra.mxu0 %v5597
      %5765 = vmatprep.mubr.bf16.mxu0 %v4964
      %5766 = vmatmul.mubr.bf16.gmra.mrb[0].mxu0 %v4963
      %v5767 = vpop.f32.mrb[0].mxu0
      %v5768 = vadd.f32 0.0, %v5767
      %v5769 = vpop.f32.mrb[0].mxu0
      %v5770 = vadd.f32 0.0, %v5769
      %v5771 = vpop.f32.mrb[0].mxu0
      %v5772 = vpop.f32.mrb[0].mxu0
      %5773 = vdwg.mxu0
      %5774 = vmatprep.subr.bf16.mxu0 %v5480
      %5775 = vmatpush1.bf16.msra.mxu0 %v5479
      %5776 = vmatprep.subr.bf16.mxu0 %v5488
      %5777 = vmatpush1.bf16.msra.mxu0 %v5487
      %5778 = vmatprep.subr.bf16.mxu0 %v5496
      %5779 = vmatpush1.bf16.msra.mxu0 %v5495
      %5780 = vmatprep.subr.bf16.mxu0 %v5504
      %5781 = vmatpush1.bf16.msra.mxu0 %v5503
      %5782 = vmatprep.subr.bf16.mxu0 %v5512
      %5783 = vmatpush1.bf16.msra.mxu0 %v5511
      %5784 = vmatprep.subr.bf16.mxu0 %v5520
      %5785 = vmatpush1.bf16.msra.mxu0 %v5519
      %5786 = vmatprep.subr.bf16.mxu0 %v5528
      %5787 = vmatpush1.bf16.msra.mxu0 %v5527
      %5788 = vmatprep.subr.bf16.mxu0 %v5536
      %5789 = vmatpush1.bf16.msra.mxu0 %v5535
      %5790 = vmatprep.subr.bf16.mxu0 %v5544
      %5791 = vmatpush1.bf16.msra.mxu0 %v5543
      %5792 = vmatprep.subr.bf16.mxu0 %v5552
      %5793 = vmatpush1.bf16.msra.mxu0 %v5551
      %5794 = vmatprep.subr.bf16.mxu0 %v5560
      %5795 = vmatpush1.bf16.msra.mxu0 %v5559
      %5796 = vmatprep.subr.bf16.mxu0 %v5568
      %5797 = vmatpush1.bf16.msra.mxu0 %v5567
      %5798 = vmatprep.subr.bf16.mxu0 %v5576
      %5799 = vmatpush1.bf16.msra.mxu0 %v5575
      %5800 = vmatprep.subr.bf16.mxu0 %v5584
      %5801 = vmatpush1.bf16.msra.mxu0 %v5583
      %5802 = vmatprep.subr.bf16.mxu0 %v5592
      %5803 = vmatpush1.bf16.msra.mxu0 %v5591
      %5804 = vmatprep.subr.bf16.mxu0 %v5600
      %5805 = vmatpush1.bf16.msra.mxu0 %v5599
      %5806 = vmatprep.mubr.bf16.mxu0 %v4964
      %5807 = vmatmul.mubr.bf16.gmra.mrb[0].mxu0 %v4963
      %v5808 = vpop.f32.mrb[0].mxu0
      %v5809 = vadd.f32 0.0, %v5808
      %v5810 = vpop.f32.mrb[0].mxu0
      %v5811 = vadd.f32 0.0, %v5810
      %v5812 = vpop.f32.mrb[0].mxu0
      %v5813 = vpop.f32.mrb[0].mxu0
      %5814 = vdwg.mxu0
      %5815 = vmatprep.subr.bf16.mxu0 %v5482
      %5816 = vmatpush1.bf16.msra.mxu0 %v5481
      %5817 = vmatprep.subr.bf16.mxu0 %v5490
      %5818 = vmatpush1.bf16.msra.mxu0 %v5489
      %5819 = vmatprep.subr.bf16.mxu0 %v5498
      %5820 = vmatpush1.bf16.msra.mxu0 %v5497
      %5821 = vmatprep.subr.bf16.mxu0 %v5506
      %5822 = vmatpush1.bf16.msra.mxu0 %v5505
      %5823 = vmatprep.subr.bf16.mxu0 %v5514
      %5824 = vmatpush1.bf16.msra.mxu0 %v5513
      %5825 = vmatprep.subr.bf16.mxu0 %v5522
      %5826 = vmatpush1.bf16.msra.mxu0 %v5521
      %5827 = vmatprep.subr.bf16.mxu0 %v5530
      %5828 = vmatpush1.bf16.msra.mxu0 %v5529
      %5829 = vmatprep.subr.bf16.mxu0 %v5538
      %5830 = vmatpush1.bf16.msra.mxu0 %v5537
      %5831 = vmatprep.subr.bf16.mxu0 %v5546
      %5832 = vmatpush1.bf16.msra.mxu0 %v5545
      %5833 = vmatprep.subr.bf16.mxu0 %v5554
      %5834 = vmatpush1.bf16.msra.mxu0 %v5553
      %5835 = vmatprep.subr.bf16.mxu0 %v5562
      %5836 = vmatpush1.bf16.msra.mxu0 %v5561
      %5837 = vmatprep.subr.bf16.mxu0 %v5570
      %5838 = vmatpush1.bf16.msra.mxu0 %v5569
      %5839 = vmatprep.subr.bf16.mxu0 %v5578
      %5840 = vmatpush1.bf16.msra.mxu0 %v5577
      %5841 = vmatprep.subr.bf16.mxu0 %v5586
      %5842 = vmatpush1.bf16.msra.mxu0 %v5585
      %5843 = vmatprep.subr.bf16.mxu0 %v5594
      %5844 = vmatpush1.bf16.msra.mxu0 %v5593
      %5845 = vmatprep.subr.bf16.mxu0 %v5602
      %5846 = vmatpush1.bf16.msra.mxu0 %v5601
      %5847 = vmatprep.mubr.bf16.mxu0 %v4964
      %5848 = vmatmul.mubr.bf16.gmra.mrb[0].mxu0 %v4963
      %v5849 = vpop.f32.mrb[0].mxu0
      %v5850 = vadd.f32 0.0, %v5849
      %v5851 = vpop.f32.mrb[0].mxu0
      %v5852 = vadd.f32 0.0, %v5851
      %v5853 = vpop.f32.mrb[0].mxu0
      %v5854 = vpop.f32.mrb[0].mxu0
      %5855 = vdwg.mxu0
      %5856 = vmatprep.subr.bf16.mxu0 %v5484
      %5857 = vmatpush1.bf16.msra.mxu0 %v5483
      %5858 = vmatprep.subr.bf16.mxu0 %v5492
      %5859 = vmatpush1.bf16.msra.mxu0 %v5491
      %5860 = vmatprep.subr.bf16.mxu0 %v5500
      %5861 = vmatpush1.bf16.msra.mxu0 %v5499
      %5862 = vmatprep.subr.bf16.mxu0 %v5508
      %5863 = vmatpush1.bf16.msra.mxu0 %v5507
      %5864 = vmatprep.subr.bf16.mxu0 %v5516
      %5865 = vmatpush1.bf16.msra.mxu0 %v5515
      %5866 = vmatprep.subr.bf16.mxu0 %v5524
      %5867 = vmatpush1.bf16.msra.mxu0 %v5523
      %5868 = vmatprep.subr.bf16.mxu0 %v5532
      %5869 = vmatpush1.bf16.msra.mxu0 %v5531
      %5870 = vmatprep.subr.bf16.mxu0 %v5540
      %5871 = vmatpush1.bf16.msra.mxu0 %v5539
      %5872 = vmatprep.subr.bf16.mxu0 %v5548
      %5873 = vmatpush1.bf16.msra.mxu0 %v5547
      %5874 = vmatprep.subr.bf16.mxu0 %v5556
      %5875 = vmatpush1.bf16.msra.mxu0 %v5555
      %5876 = vmatprep.subr.bf16.mxu0 %v5564
      %5877 = vmatpush1.bf16.msra.mxu0 %v5563
      %5878 = vmatprep.subr.bf16.mxu0 %v5572
      %5879 = vmatpush1.bf16.msra.mxu0 %v5571
      %5880 = vmatprep.subr.bf16.mxu0 %v5580
      %5881 = vmatpush1.bf16.msra.mxu0 %v5579
      %5882 = vmatprep.subr.bf16.mxu0 %v5588
      %5883 = vmatpush1.bf16.msra.mxu0 %v5587
      %5884 = vmatprep.subr.bf16.mxu0 %v5596
      %5885 = vmatpush1.bf16.msra.mxu0 %v5595
      %5886 = vmatprep.subr.bf16.mxu0 %v5604
      %5887 = vmatpush1.bf16.msra.mxu0 %v5603
      %5888 = vmatprep.mubr.bf16.mxu0 %v4964
      %5889 = vmatmul.mubr.bf16.gmra.mrb[0].mxu0 %v4963
      %v5890 = vpop.f32.mrb[0].mxu0
      %v5891 = vadd.f32 0.0, %v5890
      %v5892 = vpop.f32.mrb[0].mxu0
      %v5893 = vadd.f32 0.0, %v5892
      %v5894 = vpop.f32.mrb[0].mxu0
      %v5895 = vpop.f32.mrb[0].mxu0
      %5896 = vdwg.mxu0
      %v5905 = vcombine.low %v5768, %v5770
      %v5906 = vcombine.low %v5809, %v5811
      %v5907 = vcombine.low %v5850, %v5852
      %v5908 = vcombine.low %v5891, %v5893
      %v5910 = vunpack.c.l.s4 1966171168
      %v5911 = vunpack.c.0.s8 %v5910
      %v5912 = vlaneseq
      %v5913 = vshrl.u32 %v5912, 7
      %v5914 = vsub.s32 %v5911, %v5913
      %v5915 = vrot.slane %v5905, %v5914
      %v5917 = vunpack.c.l.s4 1966171168
      %v5918 = vunpack.c.0.s8 %v5917
      %v5919 = vlaneseq
      %v5920 = vshrl.u32 %v5919, 7
      %v5921 = vsub.s32 %v5918, %v5920
      %v5922 = vrot.slane %v5906, %v5921
      %v5924 = vunpack.c.l.s4 1966171168
      %v5925 = vunpack.c.0.s8 %v5924
      %v5926 = vlaneseq
      %v5927 = vshrl.u32 %v5926, 7
      %v5928 = vsub.s32 %v5925, %v5927
      %v5929 = vrot.slane %v5907, %v5928
      %v5931 = vunpack.c.l.s4 1966171168
      %v5932 = vunpack.c.0.s8 %v5931
      %v5933 = vlaneseq
      %v5934 = vshrl.u32 %v5933, 7
      %v5935 = vsub.s32 %v5932, %v5934
      %v5936 = vrot.slane %v5908, %v5935
      %v5937 = vcombine.low %v5915, %v5922
      %v5938 = vcombine.low %v5929, %v5936
      %v5940 = vunpack.c.l.s4 1966171168
      %v5941 = vunpack.c.0.s8 %v5940
      %v5942 = vlaneseq
      %v5943 = vshrl.u32 %v5942, 7
      %v5944 = vsub.s32 %v5941, %v5943
      %v5945 = vrot.slane %v5937, %v5944
      %v5947 = vunpack.c.l.s4 1966171168
      %v5948 = vunpack.c.0.s8 %v5947
      %v5949 = vlaneseq
      %v5950 = vshrl.u32 %v5949, 7
      %v5951 = vsub.s32 %v5948, %v5950
      %v5952 = vrot.slane %v5938, %v5951
      %v5953 = vcombine.low %v5945, %v5952
      %v5955 = vadd.f32 %v4950, %v5953
      %v5956 = vld [vmem:[#allocation5] sm:$0x3]
      %v5957 = vxor.u32 %v4940, 2147483648
      %v5958 = vmul.f32 %v5957, 1.442695
      %v5959 = vpow.pop %v5958
      %v5960 = vadd.f32 %v5959, 1.0
      %v5961 = vrcp.pop %v5960
      %v5962 = vmul.f32 1.0, %v5961
      %v5964 = vrot.slane %v4940, 2
      %v5966 = vxor.u32 %v5964, 2147483648
      %v5967 = vmul.f32 %v5966, 1.442695
      %v5968 = vpow.pop %v5967
      %v5969 = vadd.f32 %v5968, 1.0
      %v5970 = vrcp.pop %v5969
      %v5971 = vmul.f32 1.0, %v5970
      %v5972 = vrot.slane %v4940, 4
      %v5974 = vtanh.pop %v5972
      %v5975 = vrot.slane %v4940, 6
      %v5977 = vxor.u32 %v5975, 2147483648
      %v5978 = vmul.f32 %v5977, 1.442695
      %v5979 = vpow.pop %v5978
      %v5980 = vadd.f32 %v5979, 1.0
      %v5981 = vrcp.pop %v5980
      %v5982 = vmul.f32 1.0, %v5981
      %v5983 = vmul.f32 %v5971, %v5956
      %v5984 = vmul.f32 %v5962, %v5974
      %v5985 = vadd.f32 %v5983, %v5984
      %v5986 = vtanh.pop %v5985
      %v5987 = vmul.f32 %v5982, %v5986
      %v5988 = vld [vmem:[#allocation7] sm:$0x3]
      %v5989 = vxor.u32 %v5955, 2147483648
      %v5990 = vmul.f32 %v5989, 1.442695
      %v5991 = vpow.pop %v5990
      %v5992 = vadd.f32 %v5991, 1.0
      %v5993 = vrcp.pop %v5992
      %v5994 = vmul.f32 1.0, %v5993
      %v5996 = vrot.slane %v5955, 2
      %v5998 = vxor.u32 %v5996, 2147483648
      %v5999 = vmul.f32 %v5998, 1.442695
      %v6000 = vpow.pop %v5999
      %v6001 = vadd.f32 %v6000, 1.0
      %v6002 = vrcp.pop %v6001
      %v6003 = vmul.f32 1.0, %v6002
      %v6004 = vrot.slane %v5955, 4
      %v6006 = vtanh.pop %v6004
      %v6007 = vrot.slane %v5955, 6
      %v6009 = vxor.u32 %v6007, 2147483648
      %v6010 = vmul.f32 %v6009, 1.442695
      %v6011 = vpow.pop %v6010
      %v6012 = vadd.f32 %v6011, 1.0
      %v6013 = vrcp.pop %v6012
      %v6014 = vmul.f32 1.0, %v6013
      %v6015 = vmul.f32 %v6003, %v5988
      %v6016 = vmul.f32 %v5994, %v6006
      %v6017 = vadd.f32 %v6015, %v6016
      %v6018 = vtanh.pop %v6017
      %v6019 = vmul.f32 %v6014, %v6018
      %6020 = vst.msk [vmem:[#allocation4] sm:$0x3] %vm3916, %v5987
      %6021 = vst.msk [vmem:[#allocation5] sm:$0x3] %vm3916, %v5985
      %6022 = vst.msk [vmem:[#allocation6] sm:$0x3] %vm3916, %v6019
      %6023 = vst.msk [vmem:[#allocation7] sm:$0x3] %vm3916, %v6017
      %s6024 = smul.u32 %s3927, 4
      %s6025 = smul.u32 %s6024, 4
      %s6026 = sadd.s32 %s6025, %s3930
      %s6027 = scalar_lea.vmem %s9, %s6026
      %6028 = vst.msk [vmem:[%s6027] ss:$4 sm:$0x3] %vm3916, %v5987
      %s6029 = smul.u32 %s4942, 4
      %s6030 = sadd.s32 %s6029, 2
      %s6031 = smul.u32 %s6030, 4
      %s6032 = sadd.s32 %s6031, %s4945
      %s6033 = scalar_lea.vmem %s9, %s6032
      %6034 = vst.msk [vmem:[%s6033] ss:$4 sm:$0x3] %vm3916, %v6019
    $region46: #{_run_model.3} parent=1 // loop_footer
      %s3926 = sadd.s32 1, %s3922
    $region47: #{_run_model.3} parent=1 // loop_footer_branch
      %3921 = sbr.rel target = $region43
    $region48: #{_run_model.3} parent=1 // loop_exit
      _
    %v6035 = vld [vmem:[%s9] sm:$0xff]
    %v6036 = vld [vmem:[%s9 + $0x8] sm:$0xff]
    %v6039 = vcombine.high %v6035, %v6035
    %v6040 = vcombine.high %v6036, %v6036
    %v6043 = vpack.c.bf16 %v6035, %v6035
    %v6044 = vpack.c.bf16 %v6039, %v6039
    %v6045 = vpack.c.bf16 %v6036, %v6036
    %v6046 = vpack.c.bf16 %v6040, %v6040
    %v6047 = vld [vmem:[%s7] sm:$0xf]
    %v6048 = vld [vmem:[%s7 + $0x4] sm:$0xf]
    %v6049 = vld [vmem:[%s7 + $0x8] sm:$0xf]
    %v6050 = vld [vmem:[%s7 + $0xc] sm:$0xf]
    %v6051 = vld [vmem:[%s7 + $0x10] sm:$0xf]
    %v6052 = vld [vmem:[%s7 + $0x14] sm:$0xf]
    %v6053 = vld [vmem:[%s7 + $0x18] sm:$0xf]
    %v6054 = vld [vmem:[%s7 + $0x1c] sm:$0xf]
    %v6055 = vld [vmem:[%s7 + $0x20] sm:$0xf]
    %v6056 = vld [vmem:[%s7 + $0x24] sm:$0xf]
    %v6057 = vld [vmem:[%s7 + $0x28] sm:$0xf]
    %v6058 = vld [vmem:[%s7 + $0x2c] sm:$0xf]
    %v6059 = vld [vmem:[%s7 + $0x30] sm:$0xf]
    %v6060 = vld [vmem:[%s7 + $0x34] sm:$0xf]
    %v6061 = vld [vmem:[%s7 + $0x38] sm:$0xf]
    %v6062 = vld [vmem:[%s7 + $0x3c] sm:$0xf]
    %v6063 = vld [vmem:[%s7 + $0x40] sm:$0xf]
    %v6064 = vld [vmem:[%s7 + $0x44] sm:$0xf]
    %v6065 = vld [vmem:[%s7 + $0x48] sm:$0xf]
    %v6066 = vld [vmem:[%s7 + $0x4c] sm:$0xf]
    %v6067 = vld [vmem:[%s7 + $0x50] sm:$0xf]
    %v6068 = vld [vmem:[%s7 + $0x54] sm:$0xf]
    %v6069 = vld [vmem:[%s7 + $0x58] sm:$0xf]
    %v6070 = vld [vmem:[%s7 + $0x5c] sm:$0xf]
    %v6071 = vld [vmem:[%s7 + $0x60] sm:$0xf]
    %v6072 = vld [vmem:[%s7 + $0x64] sm:$0xf]
    %v6073 = vld [vmem:[%s7 + $0x68] sm:$0xf]
    %v6074 = vld [vmem:[%s7 + $0x6c] sm:$0xf]
    %v6075 = vld [vmem:[%s7 + $0x70] sm:$0xf]
    %v6076 = vld [vmem:[%s7 + $0x74] sm:$0xf]
    %v6077 = vld [vmem:[%s7 + $0x78] sm:$0xf]
    %v6078 = vld [vmem:[%s7 + $0x7c] sm:$0xf]
    %v6079 = vld [vmem:[%s7 + $0x80] sm:$0xf]
    %v6080 = vld [vmem:[%s7 + $0x84] sm:$0xf]
    %v6081 = vld [vmem:[%s7 + $0x88] sm:$0xf]
    %v6082 = vld [vmem:[%s7 + $0x8c] sm:$0xf]
    %v6083 = vld [vmem:[%s7 + $0x90] sm:$0xf]
    %v6084 = vld [vmem:[%s7 + $0x94] sm:$0xf]
    %v6085 = vld [vmem:[%s7 + $0x98] sm:$0xf]
    %v6086 = vld [vmem:[%s7 + $0x9c] sm:$0xf]
    %v6087 = vld [vmem:[%s7 + $0xa0] sm:$0xf]
    %v6088 = vld [vmem:[%s7 + $0xa4] sm:$0xf]
    %v6089 = vld [vmem:[%s7 + $0xa8] sm:$0xf]
    %v6090 = vld [vmem:[%s7 + $0xac] sm:$0xf]
    %v6091 = vld [vmem:[%s7 + $0xb0] sm:$0xf]
    %v6092 = vld [vmem:[%s7 + $0xb4] sm:$0xf]
    %v6093 = vld [vmem:[%s7 + $0xb8] sm:$0xf]
    %v6094 = vld [vmem:[%s7 + $0xbc] sm:$0xf]
    %v6095 = vld [vmem:[%s7 + $0xc0] sm:$0xf]
    %v6096 = vld [vmem:[%s7 + $0xc4] sm:$0xf]
    %v6097 = vld [vmem:[%s7 + $0xc8] sm:$0xf]
    %v6098 = vld [vmem:[%s7 + $0xcc] sm:$0xf]
    %v6099 = vld [vmem:[%s7 + $0xd0] sm:$0xf]
    %v6100 = vld [vmem:[%s7 + $0xd4] sm:$0xf]
    %v6101 = vld [vmem:[%s7 + $0xd8] sm:$0xf]
    %v6102 = vld [vmem:[%s7 + $0xdc] sm:$0xf]
    %v6103 = vld [vmem:[%s7 + $0xe0] sm:$0xf]
    %v6104 = vld [vmem:[%s7 + $0xe4] sm:$0xf]
    %v6105 = vld [vmem:[%s7 + $0xe8] sm:$0xf]
    %v6106 = vld [vmem:[%s7 + $0xec] sm:$0xf]
    %v6107 = vld [vmem:[%s7 + $0xf0] sm:$0xf]
    %v6108 = vld [vmem:[%s7 + $0xf4] sm:$0xf]
    %v6109 = vld [vmem:[%s7 + $0xf8] sm:$0xf]
    %v6110 = vld [vmem:[%s7 + $0xfc] sm:$0xf]
    %v6111 = vld [vmem:[%s8] sm:$0x1]
    %v6113 = vlaneseq
    %v6114 = vshrl.u32 %v6113, 7
    %v6115 = vsub.s32 0, %v6114
    %v6116 = vrot.slane %v6111, %v6115
    %v6182 = vunpack.c.l.b16 %v6047
    %v6183 = vunpack.c.l.b16 %v6048
    %v6184 = vunpack.c.l.b16 %v6049
    %v6185 = vunpack.c.l.b16 %v6050
    %v6186 = vunpack.c.l.b16 %v6051
    %v6187 = vunpack.c.l.b16 %v6052
    %v6188 = vunpack.c.l.b16 %v6053
    %v6189 = vunpack.c.l.b16 %v6054
    %v6190 = vunpack.c.l.b16 %v6055
    %v6191 = vunpack.c.l.b16 %v6056
    %v6192 = vunpack.c.l.b16 %v6057
    %v6193 = vunpack.c.l.b16 %v6058
    %v6194 = vunpack.c.l.b16 %v6059
    %v6195 = vunpack.c.l.b16 %v6060
    %v6196 = vunpack.c.l.b16 %v6061
    %v6197 = vunpack.c.l.b16 %v6062
    %v6198 = vunpack.c.l.b16 %v6063
    %v6199 = vunpack.c.l.b16 %v6064
    %v6200 = vunpack.c.l.b16 %v6065
    %v6201 = vunpack.c.l.b16 %v6066
    %v6202 = vunpack.c.l.b16 %v6067
    %v6203 = vunpack.c.l.b16 %v6068
    %v6204 = vunpack.c.l.b16 %v6069
    %v6205 = vunpack.c.l.b16 %v6070
    %v6206 = vunpack.c.l.b16 %v6071
    %v6207 = vunpack.c.l.b16 %v6072
    %v6208 = vunpack.c.l.b16 %v6073
    %v6209 = vunpack.c.l.b16 %v6074
    %v6210 = vunpack.c.l.b16 %v6075
    %v6211 = vunpack.c.l.b16 %v6076
    %v6212 = vunpack.c.l.b16 %v6077
    %v6213 = vunpack.c.l.b16 %v6078
    %v6214 = vunpack.c.l.b16 %v6079
    %v6215 = vunpack.c.l.b16 %v6080
    %v6216 = vunpack.c.l.b16 %v6081
    %v6217 = vunpack.c.l.b16 %v6082
    %v6218 = vunpack.c.l.b16 %v6083
    %v6219 = vunpack.c.l.b16 %v6084
    %v6220 = vunpack.c.l.b16 %v6085
    %v6221 = vunpack.c.l.b16 %v6086
    %v6222 = vunpack.c.l.b16 %v6087
    %v6223 = vunpack.c.l.b16 %v6088
    %v6224 = vunpack.c.l.b16 %v6089
    %v6225 = vunpack.c.l.b16 %v6090
    %v6226 = vunpack.c.l.b16 %v6091
    %v6227 = vunpack.c.l.b16 %v6092
    %v6228 = vunpack.c.l.b16 %v6093
    %v6229 = vunpack.c.l.b16 %v6094
    %v6230 = vunpack.c.l.b16 %v6095
    %v6231 = vunpack.c.l.b16 %v6096
    %v6232 = vunpack.c.l.b16 %v6097
    %v6233 = vunpack.c.l.b16 %v6098
    %v6234 = vunpack.c.l.b16 %v6099
    %v6235 = vunpack.c.l.b16 %v6100
    %v6236 = vunpack.c.l.b16 %v6101
    %v6237 = vunpack.c.l.b16 %v6102
    %v6238 = vunpack.c.l.b16 %v6103
    %v6239 = vunpack.c.l.b16 %v6104
    %v6240 = vunpack.c.l.b16 %v6105
    %v6241 = vunpack.c.l.b16 %v6106
    %v6242 = vunpack.c.l.b16 %v6107
    %v6243 = vunpack.c.l.b16 %v6108
    %v6244 = vunpack.c.l.b16 %v6109
    %v6245 = vunpack.c.l.b16 %v6110
    %v6246 = vpack.c.b16 %v6183, %v6182
    %v6247 = vpack.c.b16 %v6185, %v6184
    %v6248 = vpack.c.b16 %v6187, %v6186
    %v6249 = vpack.c.b16 %v6189, %v6188
    %v6250 = vpack.c.b16 %v6191, %v6190
    %v6251 = vpack.c.b16 %v6193, %v6192
    %v6252 = vpack.c.b16 %v6195, %v6194
    %v6253 = vpack.c.b16 %v6197, %v6196
    %v6254 = vpack.c.b16 %v6199, %v6198
    %v6255 = vpack.c.b16 %v6201, %v6200
    %v6256 = vpack.c.b16 %v6203, %v6202
    %v6257 = vpack.c.b16 %v6205, %v6204
    %v6258 = vpack.c.b16 %v6207, %v6206
    %v6259 = vpack.c.b16 %v6209, %v6208
    %v6260 = vpack.c.b16 %v6211, %v6210
    %v6261 = vpack.c.b16 %v6213, %v6212
    %v6262 = vpack.c.b16 %v6215, %v6214
    %v6263 = vpack.c.b16 %v6217, %v6216
    %v6264 = vpack.c.b16 %v6219, %v6218
    %v6265 = vpack.c.b16 %v6221, %v6220
    %v6266 = vpack.c.b16 %v6223, %v6222
    %v6267 = vpack.c.b16 %v6225, %v6224
    %v6268 = vpack.c.b16 %v6227, %v6226
    %v6269 = vpack.c.b16 %v6229, %v6228
    %v6270 = vpack.c.b16 %v6231, %v6230
    %v6271 = vpack.c.b16 %v6233, %v6232
    %v6272 = vpack.c.b16 %v6235, %v6234
    %v6273 = vpack.c.b16 %v6237, %v6236
    %v6274 = vpack.c.b16 %v6239, %v6238
    %v6275 = vpack.c.b16 %v6241, %v6240
    %v6276 = vpack.c.b16 %v6243, %v6242
    %v6277 = vpack.c.b16 %v6245, %v6244
    %6310 = vmatprep.subr.bf16.mxu0 0
    %6311 = vmatpush1.bf16.msra.mxu0 %v6246
    %6312 = vmatprep.subr.bf16.mxu0 0
    %6313 = vmatpush1.bf16.msra.mxu0 %v6247
    %6314 = vmatprep.subr.bf16.mxu0 0
    %6315 = vmatpush1.bf16.msra.mxu0 %v6248
    %6316 = vmatprep.subr.bf16.mxu0 0
    %6317 = vmatpush1.bf16.msra.mxu0 %v6249
    %6318 = vmatprep.subr.bf16.mxu0 0
    %6319 = vmatpush1.bf16.msra.mxu0 %v6250
    %6320 = vmatprep.subr.bf16.mxu0 0
    %6321 = vmatpush1.bf16.msra.mxu0 %v6251
    %6322 = vmatprep.subr.bf16.mxu0 0
    %6323 = vmatpush1.bf16.msra.mxu0 %v6252
    %6324 = vmatprep.subr.bf16.mxu0 0
    %6325 = vmatpush1.bf16.msra.mxu0 %v6253
    %6326 = vmatprep.subr.bf16.mxu0 0
    %6327 = vmatpush1.bf16.msra.mxu0 %v6254
    %6328 = vmatprep.subr.bf16.mxu0 0
    %6329 = vmatpush1.bf16.msra.mxu0 %v6255
    %6330 = vmatprep.subr.bf16.mxu0 0
    %6331 = vmatpush1.bf16.msra.mxu0 %v6256
    %6332 = vmatprep.subr.bf16.mxu0 0
    %6333 = vmatpush1.bf16.msra.mxu0 %v6257
    %6334 = vmatprep.subr.bf16.mxu0 0
    %6335 = vmatpush1.bf16.msra.mxu0 %v6258
    %6336 = vmatprep.subr.bf16.mxu0 0
    %6337 = vmatpush1.bf16.msra.mxu0 %v6259
    %6338 = vmatprep.subr.bf16.mxu0 0
    %6339 = vmatpush1.bf16.msra.mxu0 %v6260
    %6340 = vmatprep.subr.bf16.mxu0 0
    %6341 = vmatpush1.bf16.msra.mxu0 %v6261
    %6342 = vmatprep.mubr.bf16.mxu0 %v6044
    %6343 = vmatmul.mubr.bf16.gmra.mrb[0].mxu0 %v6043
    %v6344 = vpop.f32.mrb[0].mxu0
    %v6345 = vadd.f32 %v6116, %v6344
    %v6346 = vpop.f32.mrb[0].mxu0
    %v6347 = vpop.f32.mrb[0].mxu0
    %v6348 = vpop.f32.mrb[0].mxu0
    %6349 = vdwg.mxu0
    %6350 = vmatprep.subr.bf16.mxu0 0
    %6351 = vmatpush1.bf16.msra.mxu0 %v6262
    %6352 = vmatprep.subr.bf16.mxu0 0
    %6353 = vmatpush1.bf16.msra.mxu0 %v6263
    %6354 = vmatprep.subr.bf16.mxu0 0
    %6355 = vmatpush1.bf16.msra.mxu0 %v6264
    %6356 = vmatprep.subr.bf16.mxu0 0
    %6357 = vmatpush1.bf16.msra.mxu0 %v6265
    %6358 = vmatprep.subr.bf16.mxu0 0
    %6359 = vmatpush1.bf16.msra.mxu0 %v6266
    %6360 = vmatprep.subr.bf16.mxu0 0
    %6361 = vmatpush1.bf16.msra.mxu0 %v6267
    %6362 = vmatprep.subr.bf16.mxu0 0
    %6363 = vmatpush1.bf16.msra.mxu0 %v6268
    %6364 = vmatprep.subr.bf16.mxu0 0
    %6365 = vmatpush1.bf16.msra.mxu0 %v6269
    %6366 = vmatprep.subr.bf16.mxu0 0
    %6367 = vmatpush1.bf16.msra.mxu0 %v6270
    %6368 = vmatprep.subr.bf16.mxu0 0
    %6369 = vmatpush1.bf16.msra.mxu0 %v6271
    %6370 = vmatprep.subr.bf16.mxu0 0
    %6371 = vmatpush1.bf16.msra.mxu0 %v6272
    %6372 = vmatprep.subr.bf16.mxu0 0
    %6373 = vmatpush1.bf16.msra.mxu0 %v6273
    %6374 = vmatprep.subr.bf16.mxu0 0
    %6375 = vmatpush1.bf16.msra.mxu0 %v6274
    %6376 = vmatprep.subr.bf16.mxu0 0
    %6377 = vmatpush1.bf16.msra.mxu0 %v6275
    %6378 = vmatprep.subr.bf16.mxu0 0
    %6379 = vmatpush1.bf16.msra.mxu0 %v6276
    %6380 = vmatprep.subr.bf16.mxu0 0
    %6381 = vmatpush1.bf16.msra.mxu0 %v6277
    %6382 = vmatprep.mubr.bf16.mxu0 %v6046
    %6383 = vmatmul.mubr.bf16.gmra.mrb[0].mxu0 %v6045
    %v6384 = vpop.f32.mrb[0].mxu0
    %v6385 = vadd.f32 %v6345, %v6384
    %v6386 = vpop.f32.mrb[0].mxu0
    %v6387 = vpop.f32.mrb[0].mxu0
    %v6388 = vpop.f32.mrb[0].mxu0
    %6389 = vdwg.mxu0
    %vm6390 = vcmask 1043456
    %v6391 = vsel %vm6390, %v6385, -inf
    %6392 = vmax.xlane.f32.xlu0 %v6391
    %v6393 = vpop.xlane.xlu0 %6392
    %v6394 = vsub.f32 %v6385, %v6393
    %v6395 = vmul.f32 %v6394, 1.442695
    %v6396 = vpow.pop %v6395
    %v6397 = vsel %vm6390, %v6396, 0.0
    %6398 = vadd.xlane.f32.xlu0 %v6397
    %v6399 = vpop.xlane.xlu0 %6398
    %v6400 = vlog2.pop %v6399
    %v6401 = vmul.f32 %v6400, 0.6931472
    %v6402 = vsub.f32 %v6394, %v6401
    %6403 = vst [vmem:[%s10] sm:$0xf] %v6402
    // Predicated region
    $region49: #{_run_model.3} parent=1 // pred_check
      _
    $region50: #{_run_model.3} parent=1 // pred_check_branch
      %6405 = sbr.rel (0) target = $region52
    $region51: #{_run_model.3} parent=1 // pred_region
      _
    $region52: #{_run_model.3} parent=1 // pred_fallthru
      _
    // Predicated region
    $region53: #{_run_model.3} parent=1 // pred_check
      _
    $region54: #{_run_model.3} parent=1 // pred_check_branch
      %6407 = sbr.rel (0) target = $region56
    $region55: #{_run_model.3} parent=1 // pred_region
      _
    $region56: #{_run_model.3} parent=1 // pred_fallthru
      _
    // Predicated region
    $region57: #{_run_model.3} parent=1 // pred_check
      _
    $region58: #{_run_model.3} parent=1 // pred_check_branch
      %6409 = sbr.rel (0) target = $region60
    $region59: #{_run_model.3} parent=1 // pred_region
      _
    $region60: #{_run_model.3} parent=1 // pred_fallthru
      _
    // Predicated region
    $region61: #{_run_model.3} parent=1 // pred_check
      _
    $region62: #{_run_model.3} parent=1 // pred_check_branch
      %6411 = sbr.rel (0) target = $region64
    $region63: #{_run_model.3} parent=1 // pred_region
      _
    $region64: #{_run_model.3} parent=1 // pred_fallthru
      _
    %6412 = vsyncpa [#allocation9], 1

</llo_original>
